<compile_context>
chip_gen: v5e
topology: v5e:2x2
jax: 0.10.0
libtpu: 0.0.40
codegen_flags: <defaults>
</compile_context>

<pallas_src>
import functools

import jax
import jax.numpy as jnp
import numpy as np
from jax.experimental import pallas as pl
from jax.experimental.pallas import tpu as pltpu

BN_EPS = 1e-5
LANE = 128


def _round_up(x, m):
    return ((x + m - 1) // m) * m


def _pad_axis(a, target, axis):
    pad = target - a.shape[axis]
    if pad <= 0:
        return a
    widths = [(0, 0)] * a.ndim
    widths[axis] = (0, pad)
    return jnp.pad(a, widths)


def _vmem_limit_bytes():
    try:
        kind = jax.devices()[0].device_kind.lower()
    except Exception:
        kind = ""
    if "v7" in kind or "7x" in kind:
        return 48 * 1024 * 1024          # v7x: 64 MiB physical per TC
    if any(v in kind for v in ("v4", "v5", "v6")):
        return 100 * 1024 * 1024         # 128 MiB physical
    return 32 * 1024 * 1024


@functools.lru_cache(maxsize=None)
def _probe_roll(rows, cols):
    """Verify pltpu.roll lowering + direction for the exact shape used by the
    depthwise.  Returns +1 (np.roll convention), -1 (opposite), or 0 (fall back
    to the slicing depthwise)."""
    def kern(x_ref, o_ref):
        o_ref[...] = pltpu.roll(x_ref[...], 1, 0)
    try:
        x = jnp.arange(rows * cols, dtype=jnp.float32).reshape(rows, cols)
        y = np.asarray(pl.pallas_call(
            kern, out_shape=jax.ShapeDtypeStruct((rows, cols), jnp.float32))(x))
        xn = np.asarray(x)
        if np.array_equal(y, np.roll(xn, 1, 0)):
            return 1
        if np.array_equal(y, np.roll(xn, -1, 0)):
            return -1
    except Exception:
        pass
    return 0


def mbconv_kernel(*refs, ksize, H, W, N, expand, use_se, use_res, phase_off,
                  use_roll, roll_sign):
    it = iter(refs)
    x_ref = next(it)
    xres_ref = next(it) if (use_res and expand != 1) else None
    if expand != 1:
        w_exp_ref = next(it)
        g1_ref = next(it)
        b1_ref = next(it)
    w_dw_ref = next(it)
    g2_ref = next(it)
    b2_ref = next(it)
    if use_se:
        w_se1_ref = next(it)
        w_se2_ref = next(it)
    w_proj_ref = next(it)
    g3_ref = next(it)
    b3_ref = next(it)
    o_ref = next(it)
    hp_sc = next(it)
    bn1_sc = next(it)
    bn2_sc = next(it)
    bn3_sc = next(it)
    gate_sc = next(it) if use_se else None

    phase = pl.program_id(0) + phase_off        # canonical phase id 0..3
    n = pl.program_id(1)                        # sample index
    HW = H * W
    p = ksize // 2
    chid = hp_sc.shape[-1]                      # padded hidden channels
    cout = o_ref.shape[-1]                      # padded output channels
    cin = x_ref.shape[-1]                       # padded input channels
    Wb = hp_sc.shape[1]                         # padded-hidden buffer width
    total_rows = float(N * HW)

    ones_row = jnp.ones((1, HW), jnp.float32)

    # One-time init: zero stat accumulators and the padded-hidden scratch; only
    # its interior is (re)written afterwards so the halo stays zero.
    @pl.when((pl.program_id(0) == 0) & (n == 0))
    def _init():
        bn1_sc[...] = jnp.zeros_like(bn1_sc)
        bn2_sc[...] = jnp.zeros_like(bn2_sc)
        bn3_sc[...] = jnp.zeros_like(bn3_sc)
        hp_sc[...] = jnp.zeros_like(hp_sc)

    def col_sums(h2d):
        # per-channel sum / sum-of-squares via a ones-row MXU matmul (f32 acc);
        # the MXU has slack here, leave as-is.
        s = jnp.dot(ones_row, h2d, preferred_element_type=jnp.float32)
        ss = jnp.dot(ones_row, h2d * h2d, preferred_element_type=jnp.float32)
        return s, ss

    def bn_apply(h2d, stats_ref, g_ref, b_ref):
        s = stats_ref[0:1, :]
        ss = stats_ref[1:2, :]
        mean = s * (1.0 / total_rows)
        var = ss * (1.0 / total_rows) - mean * mean
        scale = g_ref[...] * jax.lax.rsqrt(var + BN_EPS)
        shift = b_ref[...] - mean * scale
        return h2d * scale + shift

    def expand_raw():
        # x arrives from the host already in bf16 (matmul LHS only)
        x2d = x_ref[...].reshape(HW, cin)
        return jnp.dot(x2d, w_exp_ref[...], preferred_element_type=jnp.float32)

    def hidden():
        # post-BN1 / ReLU6 hidden activation, (HW, chid) f32
        if expand != 1:
            return jnp.clip(bn_apply(expand_raw(), bn1_sc, g1_ref, b1_ref),
                            0.0, 6.0)
        return x_ref[...].reshape(HW, chid)

    def depthwise(h2d):
        # zero-padded kxk depthwise conv (cross-correlation), f32 MAC
        taps = w_dw_ref[...]                    # (k*k, chid), loaded once
        acc = None
        if use_roll:
            # Aligned interior store (col offset 0, W % 8 == 0); 8 zero halo
            # columns on the right; p zero halo rows top/bottom.  The W-shift
            # per tap column is one roll of the flattened buffer on the sublane
            # axis; row-boundary wraps land in the zero halo columns, so the
            # wrap is exactly zero-fill.  The H-shift is a leading-axis slice.
            hp_sc[p:p + H, 0:W, :] = h2d.reshape(H, W, chid)
            rows = (H + 2 * p) * Wb
            hp2 = hp_sc[...].reshape(rows, chid)
            for dw in range(ksize):
                s = (roll_sign * (p - dw)) % rows
                rolled = hp2 if s == 0 else pltpu.roll(hp2, shift=s, axis=0)
                r3 = rolled.reshape(H + 2 * p, Wb, chid)
                for dh in range(ksize):
                    contrib = r3[dh:dh + H, 0:W, :] * taps[dh * ksize + dw]
                    acc = contrib if acc is None else acc + contrib
        else:
            # Fallback (roll unavailable): original slicing path.
            hp_sc[p:p + H, p:p + W, :] = h2d.reshape(H, W, chid)
            hp = hp_sc[...]
            for dh in range(ksize):
                for dw in range(ksize):
                    contrib = hp[dh:dh + H, dw:dw + W, :] * taps[dh * ksize + dw]
                    acc = contrib if acc is None else acc + contrib
        return acc.reshape(HW, chid)

    def post_bn2(h2d):
        return jnp.clip(bn_apply(depthwise(h2d), bn2_sc, g2_ref, b2_ref),
                        0.0, 6.0)

    def project(d2d):
        return jnp.dot(d2d.astype(jnp.bfloat16), w_proj_ref[...],
                       preferred_element_type=jnp.float32)

    # ---- phase 0: BN1 statistics (expand output) ----
    if expand != 1:
        @pl.when(phase == 0)
        def _bn1_stats():
            s, ss = col_sums(expand_raw())
            bn1_sc[0:1, :] += s
            bn1_sc[1:2, :] += ss

    # ---- phase 1: BN2 statistics (depthwise output) ----
    @pl.when(phase == 1)
    def _bn2_stats():
        s, ss = col_sums(depthwise(hidden()))
        bn2_sc[0:1, :] += s
        bn2_sc[1:2, :] += ss

    # ---- phase 2: SE gate (per sample) + BN3 statistics (projected output) ----
    @pl.when(phase == 2)
    def _se_and_bn3_stats():
        d = post_bn2(hidden())
        if use_se:
            pool = jnp.dot(ones_row, d, preferred_element_type=jnp.float32)
            pool = pool * (1.0 / float(HW))
            y = jnp.dot(pool.astype(jnp.bfloat16), w_se1_ref[...],
                        preferred_element_type=jnp.float32)
            y = jnp.maximum(y, 0.0)
            y = jnp.dot(y.astype(jnp.bfloat16), w_se2_ref[...],
                        preferred_element_type=jnp.float32)
            gate = 1.0 / (1.0 + jnp.exp(-y))          # exact sigmoid, (1, chid)
            gate_sc[n] = gate
            d = d * gate
        s, ss = col_sums(project(d))
        bn3_sc[0:1, :] += s
        bn3_sc[1:2, :] += ss

    # ---- phase 3: apply BN3 (+ residual), write output ----
    @pl.when(phase == 3)
    def _finalize():
        d = post_bn2(hidden())
        if use_se:
            d = d * gate_sc[n]
        o = bn_apply(project(d), bn3_sc, g3_ref, b3_ref)
        if use_res:
            res_ref = xres_ref if expand != 1 else x_ref
            o = o + res_ref[...].reshape(HW, cout)
        o_ref[...] = o.reshape(1, H, W, cout)


def init_mbconv_params(key, inp, oup, k, expand, se, r=4):
    hid = inp * expand
    ks = jax.random.split(key, 12)

    def bf16_exact(a):
        # round MXU weights to bf16-representable values so the in-kernel bf16
        # matmuls and the f32 reference use numerically identical weights
        return a.astype(jnp.bfloat16).astype(jnp.float32)

    p = {}
    p["w_expand"] = bf16_exact(0.3 * jax.random.normal(ks[0], (inp, hid), jnp.float32))
    p["gamma1"] = 1.0 + 0.1 * jax.random.normal(ks[1], (1, hid), jnp.float32)
    p["beta1"] = 0.1 * jax.random.normal(ks[2], (1, hid), jnp.float32)
    p["w_dw"] = 0.3 * jax.random.normal(ks[3], (k * k, hid), jnp.float32)
    p["gamma2"] = 1.0 + 0.1 * jax.random.normal(ks[4], (1, hid), jnp.float32)
    p["beta2"] = 0.1 * jax.random.normal(ks[5], (1, hid), jnp.float32)
    p["w_se1"] = bf16_exact(0.3 * jax.random.normal(ks[6], (hid, max(hid // r, 1)), jnp.float32))
    p["w_se2"] = bf16_exact(0.3 * jax.random.normal(ks[7], (max(hid // r, 1), hid), jnp.float32))
    p["w_proj"] = bf16_exact(0.3 * jax.random.normal(ks[8], (hid, oup), jnp.float32))
    p["gamma3"] = 1.0 + 0.1 * jax.random.normal(ks[9], (1, oup), jnp.float32)
    p["beta3"] = 0.1 * jax.random.normal(ks[10], (1, oup), jnp.float32)
    return p


def mbconv_forward(x_nchw, params, *, inp, oup, k, s, expand, se):
    assert s == 1, "only stride=1 is implemented"
    use_res = (s == 1 and inp == oup)
    hid = inp * expand

    x = jnp.transpose(x_nchw, (0, 2, 3, 1)).astype(jnp.float32)   # NCHW -> NHWC
    N, H, W, _ = x.shape
    assert W % 8 == 0, ("TODO(synk): pad W to a multiple of 8 on the host and "
                        "mask padded pixels out of the BN statistics")

    # lane-dense channel padding (multiples of 128); zero padding is inert
    cin_p = _round_up(inp, LANE)
    chid_p = _round_up(hid, LANE)
    cout_p = _round_up(oup, LANE)
    cse_p = _round_up(max(hid // 4, 1), LANE)
    if use_res:
        assert cin_p == cout_p, "residual path assumes identical channel padding"

    x_p = _pad_axis(x, cin_p, axis=3)

    # depthwise layout: aligned interior + zero halo for the roll-based shifts
    p = k // 2
    halo_w = _round_up(p, 8) if p > 0 else 0
    roll_sign = 1 if p == 0 else _probe_roll((H + 2 * p) * (W + halo_w), chid_p)
    use_roll = roll_sign != 0
    hp_shape = ((H + 2 * p, W + halo_w, chid_p) if use_roll
                else (H + 2 * p, W + 2 * p, chid_p))

    num_ph = 4 if expand != 1 else 3
    grid = (num_ph, N)

    def samp_map(ph, n):
        return (n, 0, 0, 0)

    def last_phase_map(ph, n):
        # stay on block 0 until the final sweep -> fetched/flushed exactly once
        return (jnp.where(ph == num_ph - 1, n, 0), 0, 0, 0)

    def full_spec(arr):
        nd = arr.ndim
        return pl.BlockSpec(arr.shape, lambda ph, n, _nd=nd: (0,) * _nd)

    def pad2(a, rows, cols, dtype=jnp.float32):
        return _pad_axis(_pad_axis(a, rows, 0), cols, 1).astype(dtype)

    args = []
    specs = []

    # x is only the bf16 MXU LHS in the recompute sweeps -> stream it in bf16;
    # the f32 copy is fetched only for the residual in the final phase.
    x_main = x_p.astype(jnp.bfloat16) if expand != 1 else x_p
    args.append(x_main)
    specs.append(pl.BlockSpec((1, H, W, cin_p), samp_map))
    if use_res and expand != 1:
        args.append(x_p)
        specs.append(pl.BlockSpec((1, H, W, cin_p), last_phase_map))

    if expand != 1:
        w_exp = pad2(params["w_expand"], cin_p, chid_p, jnp.bfloat16)
        g1 = pad2(params["gamma1"], 1, chid_p)
        b1 = pad2(params["beta1"], 1, chid_p)
        args += [w_exp, g1, b1]
        specs += [full_spec(w_exp), full_spec(g1), full_spec(b1)]

    w_dw = pad2(params["w_dw"], k * k, chid_p)
    g2 = pad2(params["gamma2"], 1, chid_p)
    b2 = pad2(params["beta2"], 1, chid_p)
    args += [w_dw, g2, b2]
    specs += [full_spec(w_dw), full_spec(g2), full_spec(b2)]

    if se:
        w_se1 = pad2(params["w_se1"], chid_p, cse_p, jnp.bfloat16)
        w_se2 = pad2(params["w_se2"], cse_p, chid_p, jnp.bfloat16)
        args += [w_se1, w_se2]
        specs += [full_spec(w_se1), full_spec(w_se2)]

    w_proj = pad2(params["w_proj"], chid_p, cout_p, jnp.bfloat16)
    g3 = pad2(params["gamma3"], 1, cout_p)
    b3 = pad2(params["beta3"], 1, cout_p)
    args += [w_proj, g3, b3]
    specs += [full_spec(w_proj), full_spec(g3), full_spec(b3)]

    scratch = [
        pltpu.VMEM(hp_shape, jnp.float32),       # padded hidden (halo kept zero)
        pltpu.VMEM((2, chid_p), jnp.float32),    # BN1 sum / sumsq
        pltpu.VMEM((2, chid_p), jnp.float32),    # BN2 sum / sumsq
        pltpu.VMEM((2, cout_p), jnp.float32),    # BN3 sum / sumsq
    ]
    if se:
        scratch.append(pltpu.VMEM((N, 1, chid_p), jnp.float32))   # SE gates

    kern = functools.partial(
        mbconv_kernel, ksize=k, H=H, W=W, N=N, expand=expand,
        use_se=se, use_res=use_res, phase_off=0 if expand != 1 else 1,
        use_roll=use_roll, roll_sign=roll_sign)

    # advisory cost estimate (matmul flops dominate; recompute factor num_ph)
    flops = 2 * N * H * W * num_ph * (cin_p * chid_p + chid_p * cout_p + k * k * chid_p)
    weight_bytes = sum(int(np.prod(a.shape)) * a.dtype.itemsize
                       for a in args if a.ndim == 2)
    bytes_accessed = (num_ph * int(x_main.size) * x_main.dtype.itemsize
                      + (int(x_p.size) * 4 if (use_res and expand != 1) else 0)
                      + N * H * W * cout_p * 4 + weight_bytes)
    cost = pl.CostEstimate(flops=flops,
                           transcendentals=(N * chid_p if se else 0),
                           bytes_accessed=int(bytes_accessed))

    out_p = pl.pallas_call(
        kern,
        out_shape=jax.ShapeDtypeStruct((N, H, W, cout_p), jnp.float32),
        grid=grid,
        in_specs=specs,
        out_specs=pl.BlockSpec((1, H, W, cout_p), last_phase_map),
        scratch_shapes=scratch,
        compiler_params=pltpu.CompilerParams(
            # Training-mode BN stats are accumulated across samples, so both
            # axes are sequential.  TODO(synk): v7x megacore split of the batch
            # axis needs per-core partial sums + a cross-core reduction.
            dimension_semantics=("arbitrary", "arbitrary"),
            vmem_limit_bytes=_vmem_limit_bytes()),
        cost_estimate=cost,
    )(*args)

    out = out_p[..., :oup]
    return jnp.transpose(out, (0, 3, 1, 2))                       # NHWC -> NCHW


def mbconv_reference(x_nchw, params, *, inp, oup, k, s, expand, se):
    """Pure-JAX f32 reference (training-mode BN semantics)."""
    x = jnp.transpose(x_nchw, (0, 2, 3, 1)).astype(jnp.float32)
    hid = inp * expand

    def bn(h, g, b):
        ax = tuple(range(h.ndim - 1))
        m = jnp.mean(h, axis=ax, keepdims=True)
        v = jnp.mean((h - m) ** 2, axis=ax, keepdims=True)
        return (h - m) * jax.lax.rsqrt(v + BN_EPS) * g.reshape(-1) + b.reshape(-1)

    h = x
    if expand != 1:
        h = jnp.einsum('nhwc,cd->nhwd', x, params["w_expand"])
        h = jnp.clip(bn(h, params["gamma1"], params["beta1"]), 0.0, 6.0)
    p = k // 2
    wdw = params["w_dw"].reshape(k, k, 1, hid)
    hd = jax.lax.conv_general_dilated(
        h, wdw, window_strides=(s, s), padding=((p, p), (p, p)),
        dimension_numbers=('NHWC', 'HWIO', 'NHWC'), feature_group_count=hid)
    hd = jnp.clip(bn(hd, params["gamma2"], params["beta2"]), 0.0, 6.0)
    if se:
        y = jnp.mean(hd, axis=(1, 2))
        y = jnp.maximum(y @ params["w_se1"], 0.0)
        y = 1.0 / (1.0 + jnp.exp(-(y @ params["w_se2"])))
        hd = hd * y[:, None, None, :]
    out = jnp.einsum('nhwc,cd->nhwd', hd, params["w_proj"])
    out = bn(out, params["gamma3"], params["beta3"])
    if s == 1 and inp == oup:
        out = out + x
    return jnp.transpose(out, (0, 3, 1, 2))


if __name__ == "__main__":
    inp, oup, k, s, expand, se = 4, 4, 3, 1, 2, True
    N, H, W = 2, 16, 16

    key = jax.random.PRNGKey(0)
    kx, kp = jax.random.split(key)
    x = jax.random.normal(kx, (N, inp, H, W), jnp.float32)
    params = init_mbconv_params(kp, inp, oup, k, expand, se)

    out = mbconv_forward(x, params, inp=inp, oup=oup, k=k, s=s, expand=expand, se=se)
    out = jax.block_until_ready(out)

    ref = mbconv_reference(x, params, inp=inp, oup=oup, k=k, s=s, expand=expand, se=se)
    # bf16 MXU matmuls + one-pass (E[x^2]-E[x]^2) BN stats vs the f32 reference
    np.testing.assert_allclose(np.asarray(out), np.asarray(ref), rtol=2e-2, atol=2e-2)

    print("KERNEL_OK")
</pallas_src>

<mosaic_0001>
module attributes {stable_mosaic.version = 11 : i64} {
  func.func @kern(%arg0: memref<432x128xf32, #tpu.memory_space<vmem>>, %arg1: memref<432x128xf32, #tpu.memory_space<vmem>>) attributes {dimension_semantics = [], scalar_prefetch = 0 : i64, scratch_operands = 0 : i64, tpu.core_type = #tpu.core_type<tc>} {
    %c0 = arith.constant 0 : index
    %c0_0 = arith.constant 0 : index
    %0 = vector.load %arg0[%c0, %c0_0] : memref<432x128xf32, #tpu.memory_space<vmem>>, vector<432x128xf32>
    %c1_i32 = arith.constant 1 : i32
    %1 = tpu.dynamic_rotate %0 by %c1_i32 dim 0 : vector<432x128xf32>, i32 -> vector<432x128xf32>
    %c0_1 = arith.constant 0 : index
    %c0_2 = arith.constant 0 : index
    %2 = vector.load %arg1[%c0_1, %c0_2] : memref<432x128xf32, #tpu.memory_space<vmem>>, vector<432x128xf32>
    tpu.vector_store %arg1[%c0_1, %c0_2], %1 {strides = array<i32>} : memref<432x128xf32, #tpu.memory_space<vmem>>, vector<432x128xf32>,
    return
  }
}

module attributes {stable_mosaic.version = 11 : i64} {
  func.func @mbconv_kernel(%arg0: i32, %arg1: i32, %arg2: memref<1x16x16x128xbf16, #tpu.memory_space<vmem>>, %arg3: memref<1x16x16x128xf32, #tpu.memory_space<vmem>>, %arg4: memref<128x128xbf16, #tpu.memory_space<vmem>>, %arg5: memref<1x128xf32, #tpu.memory_space<vmem>>, %arg6: memref<1x128xf32, #tpu.memory_space<vmem>>, %arg7: memref<9x128xf32, #tpu.memory_space<vmem>>, %arg8: memref<1x128xf32, #tpu.memory_space<vmem>>, %arg9: memref<1x128xf32, #tpu.memory_space<vmem>>, %arg10: memref<128x128xbf16, #tpu.memory_space<vmem>>, %arg11: memref<128x128xbf16, #tpu.memory_space<vmem>>, %arg12: memref<128x128xbf16, #tpu.memory_space<vmem>>, %arg13: memref<1x128xf32, #tpu.memory_space<vmem>>, %arg14: memref<1x128xf32, #tpu.memory_space<vmem>>, %arg15: memref<1x16x16x128xf32, #tpu.memory_space<vmem>>, %arg16: memref<18x18x128xf32, #tpu.memory_space<vmem>>, %arg17: memref<2x128xf32, #tpu.memory_space<vmem>>, %arg18: memref<2x128xf32, #tpu.memory_space<vmem>>, %arg19: memref<2x128xf32, #tpu.memory_space<vmem>>, %arg20: memref<2x1x128xf32, #tpu.memory_space<vmem>>) attributes {dimension_semantics = [#tpu.dimension_semantics<arbitrary>, #tpu.dimension_semantics<arbitrary>], iteration_bounds = array<i64: 4, 2>, scalar_prefetch = 0 : i64, scratch_operands = 5 : i64, tpu.core_type = #tpu.core_type<tc>, window_params = [{transform_indices = @transform_0, window_bounds = array<i64: 1, 16, 16, 128>}, {transform_indices = @transform_1, window_bounds = array<i64: 1, 16, 16, 128>}, {pipeline_mode = #tpu.pipeline_mode<synchronous>, transform_indices = @transform_2, window_bounds = array<i64: 128, 128>}, {pipeline_mode = #tpu.pipeline_mode<synchronous>, transform_indices = @transform_3, window_bounds = array<i64: 1, 128>}, {pipeline_mode = #tpu.pipeline_mode<synchronous>, transform_indices = @transform_4, window_bounds = array<i64: 1, 128>}, {pipeline_mode = #tpu.pipeline_mode<synchronous>, transform_indices = @transform_5, window_bounds = array<i64: 9, 128>}, {pipeline_mode = #tpu.pipeline_mode<synchronous>, transform_indices = @transform_6, window_bounds = array<i64: 1, 128>}, {pipeline_mode = #tpu.pipeline_mode<synchronous>, transform_indices = @transform_7, window_bounds = array<i64: 1, 128>}, {pipeline_mode = #tpu.pipeline_mode<synchronous>, transform_indices = @transform_8, window_bounds = array<i64: 128, 128>}, {pipeline_mode = #tpu.pipeline_mode<synchronous>, transform_indices = @transform_9, window_bounds = array<i64: 128, 128>}, {pipeline_mode = #tpu.pipeline_mode<synchronous>, transform_indices = @transform_10, window_bounds = array<i64: 128, 128>}, {pipeline_mode = #tpu.pipeline_mode<synchronous>, transform_indices = @transform_11, window_bounds = array<i64: 1, 128>}, {pipeline_mode = #tpu.pipeline_mode<synchronous>, transform_indices = @transform_12, window_bounds = array<i64: 1, 128>}, {transform_indices = @transform_13, window_bounds = array<i64: 1, 16, 16, 128>}]} {
    %c0_i32 = arith.constant 0 : i32
    %0 = arith.addi %arg0, %c0_i32 : i32
    %cst = arith.constant 1.000000e+00 : f32
    %1 = vector.broadcast %cst : f32 to vector<1x256xf32>
    %c0_i32_0 = arith.constant 0 : i32
    %2 = arith.cmpi eq, %arg0, %c0_i32_0 : i32
    %c0_i32_1 = arith.constant 0 : i32
    %3 = arith.cmpi eq, %arg1, %c0_i32_1 : i32
    %4 = arith.andi %2, %3 : i1
    %5 = arith.extui %4 : i1 to i32
    %c0_i32_2 = arith.constant 0 : i32
    %6 = arith.cmpi ne, %5, %c0_i32_2 : i32
    scf.if %6 {
      %cst_8 = arith.constant 0.000000e+00 : f32
      %19 = vector.broadcast %cst_8 : f32 to vector<2x128xf32>
      %c0 = arith.constant 0 : index
      %c0_9 = arith.constant 0 : index
      %20 = vector.load %arg17[%c0, %c0_9] : memref<2x128xf32, #tpu.memory_space<vmem>>, vector<2x128xf32>
      tpu.vector_store %arg17[%c0, %c0_9], %19 {strides = array<i32>} : memref<2x128xf32, #tpu.memory_space<vmem>>, vector<2x128xf32>,
      %cst_10 = arith.constant 0.000000e+00 : f32
      %21 = vector.broadcast %cst_10 : f32 to vector<2x128xf32>
      %c0_11 = arith.constant 0 : index
      %c0_12 = arith.constant 0 : index
      %22 = vector.load %arg18[%c0_11, %c0_12] : memref<2x128xf32, #tpu.memory_space<vmem>>, vector<2x128xf32>
      tpu.vector_store %arg18[%c0_11, %c0_12], %21 {strides = array<i32>} : memref<2x128xf32, #tpu.memory_space<vmem>>, vector<2x128xf32>,
      %cst_13 = arith.constant 0.000000e+00 : f32
      %23 = vector.broadcast %cst_13 : f32 to vector<2x128xf32>
      %c0_14 = arith.constant 0 : index
      %c0_15 = arith.constant 0 : index
      %24 = vector.load %arg19[%c0_14, %c0_15] : memref<2x128xf32, #tpu.memory_space<vmem>>, vector<2x128xf32>
      tpu.vector_store %arg19[%c0_14, %c0_15], %23 {strides = array<i32>} : memref<2x128xf32, #tpu.memory_space<vmem>>, vector<2x128xf32>,
      %cst_16 = arith.constant 0.000000e+00 : f32
      %25 = vector.broadcast %cst_16 : f32 to vector<18x18x128xf32>
      %c0_17 = arith.constant 0 : index
      %c0_18 = arith.constant 0 : index
      %c0_19 = arith.constant 0 : index
      %26 = vector.load %arg16[%c0_17, %c0_18, %c0_19] : memref<18x18x128xf32, #tpu.memory_space<vmem>>, vector<18x18x128xf32>
      tpu.vector_store %arg16[%c0_17, %c0_18, %c0_19], %25 {strides = array<i32>} : memref<18x18x128xf32, #tpu.memory_space<vmem>>, vector<18x18x128xf32>,
    } else {
    }
    %c0_i32_3 = arith.constant 0 : i32
    %7 = arith.cmpi eq, %0, %c0_i32_3 : i32
    %8 = arith.extui %7 : i1 to i32
    %c0_i32_4 = arith.constant 0 : i32
    %9 = arith.cmpi ne, %8, %c0_i32_4 : i32
    scf.if %9 {
      %c0 = arith.constant 0 : index
      %c0_8 = arith.constant 0 : index
      %c0_9 = arith.constant 0 : index
      %c0_10 = arith.constant 0 : index
      %19 = vector.load %arg2[%c0, %c0_8, %c0_9, %c0_10] : memref<1x16x16x128xbf16, #tpu.memory_space<vmem>>, vector<1x16x16x128xbf16>
      %20 = vector.shape_cast %19 : vector<1x16x16x128xbf16> to vector<256x128xbf16>
      %c0_11 = arith.constant 0 : index
      %c0_12 = arith.constant 0 : index
      %21 = vector.load %arg4[%c0_11, %c0_12] : memref<128x128xbf16, #tpu.memory_space<vmem>>, vector<128x128xbf16>
      %cst_13 = arith.constant dense<0.000000e+00> : vector<256x128xf32>
      %22 = tpu.matmul %20, %21, %cst_13 {dimension_numbers = #tpu.dot_dimension_numbers<[1], [0], [0], [1], [0, 0, 1, 1], [], []>} : vector<256x128xbf16>, vector<128x128xbf16>, vector<256x128xf32> -> vector<256x128xf32>
      %cst_14 = arith.constant dense<0.000000e+00> : vector<1x128xf32>
      %23 = tpu.matmul %1, %22, %cst_14 {dimension_numbers = #tpu.dot_dimension_numbers<[1], [0], [0], [1], [0, 0, 1, 1], [], []>} : vector<1x256xf32>, vector<256x128xf32>, vector<1x128xf32> -> vector<1x128xf32>
      %24 = arith.mulf %22, %22 : vector<256x128xf32>
      %cst_15 = arith.constant dense<0.000000e+00> : vector<1x128xf32>
      %25 = tpu.matmul %1, %24, %cst_15 {dimension_numbers = #tpu.dot_dimension_numbers<[1], [0], [0], [1], [0, 0, 1, 1], [], []>} : vector<1x256xf32>, vector<256x128xf32>, vector<1x128xf32> -> vector<1x128xf32>
      %c0_16 = arith.constant 0 : index
      %c0_17 = arith.constant 0 : index
      %26 = vector.load %arg17[%c0_16, %c0_17] : memref<2x128xf32, #tpu.memory_space<vmem>>, vector<1x128xf32>
      %27 = arith.addf %26, %23 : vector<1x128xf32>
      %c0_18 = arith.constant 0 : index
      %c0_19 = arith.constant 0 : index
      %28 = vector.load %arg17[%c0_18, %c0_19] : memref<2x128xf32, #tpu.memory_space<vmem>>, vector<1x128xf32>
      tpu.vector_store %arg17[%c0_18, %c0_19], %27 {strides = array<i32>} : memref<2x128xf32, #tpu.memory_space<vmem>>, vector<1x128xf32>,
      %c1 = arith.constant 1 : index
      %c0_20 = arith.constant 0 : index
      %29 = vector.load %arg17[%c1, %c0_20] : memref<2x128xf32, #tpu.memory_space<vmem>>, vector<1x128xf32>
      %30 = arith.addf %29, %25 : vector<1x128xf32>
      %c1_21 = arith.constant 1 : index
      %c0_22 = arith.constant 0 : index
      %31 = vector.load %arg17[%c1_21, %c0_22] : memref<2x128xf32, #tpu.memory_space<vmem>>, vector<1x128xf32>
      tpu.vector_store %arg17[%c1_21, %c0_22], %30 {strides = array<i32>} : memref<2x128xf32, #tpu.memory_space<vmem>>, vector<1x128xf32>,
    } else {
    }
    %c1_i32 = arith.constant 1 : i32
    %10 = arith.cmpi eq, %0, %c1_i32 : i32
    %11 = arith.extui %10 : i1 to i32
    %c0_i32_5 = arith.constant 0 : i32
    %12 = arith.cmpi ne, %11, %c0_i32_5 : i32
    scf.if %12 {
      %c0 = arith.constant 0 : index
      %c0_8 = arith.constant 0 : index
      %c0_9 = arith.constant 0 : index
      %c0_10 = arith.constant 0 : index
      %19 = vector.load %arg2[%c0, %c0_8, %c0_9, %c0_10] : memref<1x16x16x128xbf16, #tpu.memory_space<vmem>>, vector<1x16x16x128xbf16>
      %20 = vector.shape_cast %19 : vector<1x16x16x128xbf16> to vector<256x128xbf16>
      %c0_11 = arith.constant 0 : index
      %c0_12 = arith.constant 0 : index
      %21 = vector.load %arg4[%c0_11, %c0_12] : memref<128x128xbf16, #tpu.memory_space<vmem>>, vector<128x128xbf16>
      %cst_13 = arith.constant dense<0.000000e+00> : vector<256x128xf32>
      %22 = tpu.matmul %20, %21, %cst_13 {dimension_numbers = #tpu.dot_dimension_numbers<[1], [0], [0], [1], [0, 0, 1, 1], [], []>} : vector<256x128xbf16>, vector<128x128xbf16>, vector<256x128xf32> -> vector<256x128xf32>
      %c0_14 = arith.constant 0 : index
      %c0_15 = arith.constant 0 : index
      %23 = vector.load %arg17[%c0_14, %c0_15] : memref<2x128xf32, #tpu.memory_space<vmem>>, vector<1x128xf32>
      %c1 = arith.constant 1 : index
      %c0_16 = arith.constant 0 : index
      %24 = vector.load %arg17[%c1, %c0_16] : memref<2x128xf32, #tpu.memory_space<vmem>>, vector<1x128xf32>
      %cst_17 = arith.constant 0.001953125 : f32
      %25 = vector.broadcast %cst_17 : f32 to vector<1x128xf32>
      %26 = arith.mulf %23, %25 : vector<1x128xf32>
      %cst_18 = arith.constant 0.001953125 : f32
      %27 = vector.broadcast %cst_18 : f32 to vector<1x128xf32>
      %28 = arith.mulf %24, %27 : vector<1x128xf32>
      %29 = arith.mulf %26, %26 : vector<1x128xf32>
      %30 = arith.subf %28, %29 : vector<1x128xf32>
      %c0_19 = arith.constant 0 : index
      %c0_20 = arith.constant 0 : index
      %31 = vector.load %arg5[%c0_19, %c0_20] : memref<1x128xf32, #tpu.memory_space<vmem>>, vector<1x128xf32>
      %cst_21 = arith.constant 9.99999974E-6 : f32
      %32 = vector.broadcast %cst_21 : f32 to vector<1x128xf32>
      %33 = arith.addf %30, %32 : vector<1x128xf32>
      %34 = math.rsqrt %33 : vector<1x128xf32>
      %35 = arith.mulf %31, %34 : vector<1x128xf32>
      %c0_22 = arith.constant 0 : index
      %c0_23 = arith.constant 0 : index
      %36 = vector.load %arg6[%c0_22, %c0_23] : memref<1x128xf32, #tpu.memory_space<vmem>>, vector<1x128xf32>
      %37 = arith.mulf %26, %35 : vector<1x128xf32>
      %38 = arith.subf %36, %37 : vector<1x128xf32>
      %39 = vector.broadcast %35 : vector<1x128xf32> to vector<256x128xf32>
      %40 = arith.mulf %22, %39 : vector<256x128xf32>
      %41 = vector.broadcast %38 : vector<1x128xf32> to vector<256x128xf32>
      %42 = arith.addf %40, %41 : vector<256x128xf32>
      %cst_24 = arith.constant 0.000000e+00 : f32
      %cst_25 = arith.constant 6.000000e+00 : f32
      %43 = vector.broadcast %cst_24 : f32 to vector<256x128xf32>
      %44 = arith.maximumf %43, %42 : vector<256x128xf32>
      %45 = vector.broadcast %cst_25 : f32 to vector<256x128xf32>
      %46 = arith.minimumf %45, %44 : vector<256x128xf32>
      %c0_26 = arith.constant 0 : index
      %c0_27 = arith.constant 0 : index
      %47 = vector.load %arg7[%c0_26, %c0_27] : memref<9x128xf32, #tpu.memory_space<vmem>>, vector<9x128xf32>
      %48 = vector.shape_cast %46 : vector<256x128xf32> to vector<16x16x128xf32>
      %c1_28 = arith.constant 1 : index
      %c1_29 = arith.constant 1 : index
      %c0_30 = arith.constant 0 : index
      %49 = vector.load %arg16[%c1_28, %c1_29, %c0_30] : memref<18x18x128xf32, #tpu.memory_space<vmem>>, vector<16x16x128xf32>
      tpu.vector_store %arg16[%c1_28, %c1_29, %c0_30], %48 {strides = array<i32>} : memref<18x18x128xf32, #tpu.memory_space<vmem>>, vector<16x16x128xf32>,
      %c0_31 = arith.constant 0 : index
      %c0_32 = arith.constant 0 : index
      %c0_33 = arith.constant 0 : index
      %50 = vector.load %arg16[%c0_31, %c0_32, %c0_33] : memref<18x18x128xf32, #tpu.memory_space<vmem>>, vector<18x18x128xf32>
      %51 = vector.extract_strided_slice %50 {offsets = [0, 0, 0], sizes = [16, 16, 128], strides = [1, 1, 1]} : vector<18x18x128xf32> to vector<16x16x128xf32>
      %52 = vector.extract_strided_slice %47 {offsets = [0, 0], sizes = [1, 128], strides = [1, 1]} : vector<9x128xf32> to vector<1x128xf32>
      %53 = vector.shape_cast %52 : vector<1x128xf32> to vector<128xf32>
      %54 = vector.shape_cast %53 : vector<128xf32> to vector<1x1x128xf32>
      %55 = vector.broadcast %54 : vector<1x1x128xf32> to vector<16x16x128xf32>
      %56 = arith.mulf %51, %55 : vector<16x16x128xf32>
      %57 = vector.extract_strided_slice %50 {offsets = [0, 1, 0], sizes = [16, 16, 128], strides = [1, 1, 1]} : vector<18x18x128xf32> to vector<16x16x128xf32>
      %58 = vector.extract_strided_slice %47 {offsets = [1, 0], sizes = [1, 128], strides = [1, 1]} : vector<9x128xf32> to vector<1x128xf32>
      %59 = vector.shape_cast %58 : vector<1x128xf32> to vector<128xf32>
      %60 = vector.shape_cast %59 : vector<128xf32> to vector<1x1x128xf32>
      %61 = vector.broadcast %60 : vector<1x1x128xf32> to vector<16x16x128xf32>
      %62 = arith.mulf %57, %61 : vector<16x16x128xf32>
      %63 = arith.addf %56, %62 : vector<16x16x128xf32>
      %64 = vector.extract_strided_slice %50 {offsets = [0, 2, 0], sizes = [16, 16, 128], strides = [1, 1, 1]} : vector<18x18x128xf32> to vector<16x16x128xf32>
      %65 = vector.extract_strided_slice %47 {offsets = [2, 0], sizes = [1, 128], strides = [1, 1]} : vector<9x128xf32> to vector<1x128xf32>
      %66 = vector.shape_cast %65 : vector<1x128xf32> to vector<128xf32>
      %67 = vector.shape_cast %66 : vector<128xf32> to vector<1x1x128xf32>
      %68 = vector.broadcast %67 : vector<1x1x128xf32> to vector<16x16x128xf32>
      %69 = arith.mulf %64, %68 : vector<16x16x128xf32>
      %70 = arith.addf %63, %69 : vector<16x16x128xf32>
      %71 = vector.extract_strided_slice %50 {offsets = [1, 0, 0], sizes = [16, 16, 128], strides = [1, 1, 1]} : vector<18x18x128xf32> to vector<16x16x128xf32>
      %72 = vector.extract_strided_slice %47 {offsets = [3, 0], sizes = [1, 128], strides = [1, 1]} : vector<9x128xf32> to vector<1x128xf32>
      %73 = vector.shape_cast %72 : vector<1x128xf32> to vector<128xf32>
      %74 = vector.shape_cast %73 : vector<128xf32> to vector<1x1x128xf32>
      %75 = vector.broadcast %74 : vector<1x1x128xf32> to vector<16x16x128xf32>
      %76 = arith.mulf %71, %75 : vector<16x16x128xf32>
      %77 = arith.addf %70, %76 : vector<16x16x128xf32>
      %78 = vector.extract_strided_slice %50 {offsets = [1, 1, 0], sizes = [16, 16, 128], strides = [1, 1, 1]} : vector<18x18x128xf32> to vector<16x16x128xf32>
      %79 = vector.extract_strided_slice %47 {offsets = [4, 0], sizes = [1, 128], strides = [1, 1]} : vector<9x128xf32> to vector<1x128xf32>
      %80 = vector.shape_cast %79 : vector<1x128xf32> to vector<128xf32>
      %81 = vector.shape_cast %80 : vector<128xf32> to vector<1x1x128xf32>
      %82 = vector.broadcast %81 : vector<1x1x128xf32> to vector<16x16x128xf32>
      %83 = arith.mulf %78, %82 : vector<16x16x128xf32>
      %84 = arith.addf %77, %83 : vector<16x16x128xf32>
      %85 = vector.extract_strided_slice %50 {offsets = [1, 2, 0], sizes = [16, 16, 128], strides = [1, 1, 1]} : vector<18x18x128xf32> to vector<16x16x128xf32>
      %86 = vector.extract_strided_slice %47 {offsets = [5, 0], sizes = [1, 128], strides = [1, 1]} : vector<9x128xf32> to vector<1x128xf32>
      %87 = vector.shape_cast %86 : vector<1x128xf32> to vector<128xf32>
      %88 = vector.shape_cast %87 : vector<128xf32> to vector<1x1x128xf32>
      %89 = vector.broadcast %88 : vector<1x1x128xf32> to vector<16x16x128xf32>
      %90 = arith.mulf %85, %89 : vector<16x16x128xf32>
      %91 = arith.addf %84, %90 : vector<16x16x128xf32>
      %92 = vector.extract_strided_slice %50 {offsets = [2, 0, 0], sizes = [16, 16, 128], strides = [1, 1, 1]} : vector<18x18x128xf32> to vector<16x16x128xf32>
      %93 = vector.extract_strided_slice %47 {offsets = [6, 0], sizes = [1, 128], strides = [1, 1]} : vector<9x128xf32> to vector<1x128xf32>
      %94 = vector.shape_cast %93 : vector<1x128xf32> to vector<128xf32>
      %95 = vector.shape_cast %94 : vector<128xf32> to vector<1x1x128xf32>
      %96 = vector.broadcast %95 : vector<1x1x128xf32> to vector<16x16x128xf32>
      %97 = arith.mulf %92, %96 : vector<16x16x128xf32>
      %98 = arith.addf %91, %97 : vector<16x16x128xf32>
      %99 = vector.extract_strided_slice %50 {offsets = [2, 1, 0], sizes = [16, 16, 128], strides = [1, 1, 1]} : vector<18x18x128xf32> to vector<16x16x128xf32>
      %100 = vector.extract_strided_slice %47 {offsets = [7, 0], sizes = [1, 128], strides = [1, 1]} : vector<9x128xf32> to vector<1x128xf32>
      %101 = vector.shape_cast %100 : vector<1x128xf32> to vector<128xf32>
      %102 = vector.shape_cast %101 : vector<128xf32> to vector<1x1x128xf32>
      %103 = vector.broadcast %102 : vector<1x1x128xf32> to vector<16x16x128xf32>
      %104 = arith.mulf %99, %103 : vector<16x16x128xf32>
      %105 = arith.addf %98, %104 : vector<16x16x128xf32>
      %106 = vector.extract_strided_slice %50 {offsets = [2, 2, 0], sizes = [16, 16, 128], strides = [1, 1, 1]} : vector<18x18x128xf32> to vector<16x16x128xf32>
      %107 = vector.extract_strided_slice %47 {offsets = [8, 0], sizes = [1, 128], strides = [1, 1]} : vector<9x128xf32> to vector<1x128xf32>
      %108 = vector.shape_cast %107 : vector<1x128xf32> to vector<128xf32>
      %109 = vector.shape_cast %108 : vector<128xf32> to vector<1x1x128xf32>
      %110 = vector.broadcast %109 : vector<1x1x128xf32> to vector<16x16x128xf32>
      %111 = arith.mulf %106, %110 : vector<16x16x128xf32>
      %112 = arith.addf %105, %111 : vector<16x16x128xf32>
      %113 = vector.shape_cast %112 : vector<16x16x128xf32> to vector<256x128xf32>
      %cst_34 = arith.constant dense<0.000000e+00> : vector<1x128xf32>
      %114 = tpu.matmul %1, %113, %cst_34 {dimension_numbers = #tpu.dot_dimension_numbers<[1], [0], [0], [1], [0, 0, 1, 1], [], []>} : vector<1x256xf32>, vector<256x128xf32>, vector<1x128xf32> -> vector<1x128xf32>
      %115 = arith.mulf %113, %113 : vector<256x128xf32>
      %cst_35 = arith.constant dense<0.000000e+00> : vector<1x128xf32>
      %116 = tpu.matmul %1, %115, %cst_35 {dimension_numbers = #tpu.dot_dimension_numbers<[1], [0], [0], [1], [0, 0, 1, 1], [], []>} : vector<1x256xf32>, vector<256x128xf32>, vector<1x128xf32> -> vector<1x128xf32>
      %c0_36 = arith.constant 0 : index
      %c0_37 = arith.constant 0 : index
      %117 = vector.load %arg18[%c0_36, %c0_37] : memref<2x128xf32, #tpu.memory_space<vmem>>, vector<1x128xf32>
      %118 = arith.addf %117, %114 : vector<1x128xf32>
      %c0_38 = arith.constant 0 : index
      %c0_39 = arith.constant 0 : index
      %119 = vector.load %arg18[%c0_38, %c0_39] : memref<2x128xf32, #tpu.memory_space<vmem>>, vector<1x128xf32>
      tpu.vector_store %arg18[%c0_38, %c0_39], %118 {strides = array<i32>} : memref<2x128xf32, #tpu.memory_space<vmem>>, vector<1x128xf32>,
      %c1_40 = arith.constant 1 : index
      %c0_41 = arith.constant 0 : index
      %120 = vector.load %arg18[%c1_40, %c0_41] : memref<2x128xf32, #tpu.memory_space<vmem>>, vector<1x128xf32>
      %121 = arith.addf %120, %116 : vector<1x128xf32>
      %c1_42 = arith.constant 1 : index
      %c0_43 = arith.constant 0 : index
      %122 = vector.load %arg18[%c1_42, %c0_43] : memref<2x128xf32, #tpu.memory_space<vmem>>, vector<1x128xf32>
      tpu.vector_store %arg18[%c1_42, %c0_43], %121 {strides = array<i32>} : memref<2x128xf32, #tpu.memory_space<vmem>>, vector<1x128xf32>,
    } else {
    }
    %c2_i32 = arith.constant 2 : i32
    %13 = arith.cmpi eq, %0, %c2_i32 : i32
    %14 = arith.extui %13 : i1 to i32
    %c0_i32_6 = arith.constant 0 : i32
    %15 = arith.cmpi ne, %14, %c0_i32_6 : i32
    scf.if %15 {
      %c0 = arith.constant 0 : index
      %c0_8 = arith.constant 0 : index
      %c0_9 = arith.constant 0 : index
      %c0_10 = arith.constant 0 : index
      %19 = vector.load %arg2[%c0, %c0_8, %c0_9, %c0_10] : memref<1x16x16x128xbf16, #tpu.memory_space<vmem>>, vector<1x16x16x128xbf16>
      %20 = vector.shape_cast %19 : vector<1x16x16x128xbf16> to vector<256x128xbf16>
      %c0_11 = arith.constant 0 : index
      %c0_12 = arith.constant 0 : index
      %21 = vector.load %arg4[%c0_11, %c0_12] : memref<128x128xbf16, #tpu.memory_space<vmem>>, vector<128x128xbf16>
      %cst_13 = arith.constant dense<0.000000e+00> : vector<256x128xf32>
      %22 = tpu.matmul %20, %21, %cst_13 {dimension_numbers = #tpu.dot_dimension_numbers<[1], [0], [0], [1], [0, 0, 1, 1], [], []>} : vector<256x128xbf16>, vector<128x128xbf16>, vector<256x128xf32> -> vector<256x128xf32>
      %c0_14 = arith.constant 0 : index
      %c0_15 = arith.constant 0 : index
      %23 = vector.load %arg17[%c0_14, %c0_15] : memref<2x128xf32, #tpu.memory_space<vmem>>, vector<1x128xf32>
      %c1 = arith.constant 1 : index
      %c0_16 = arith.constant 0 : index
      %24 = vector.load %arg17[%c1, %c0_16] : memref<2x128xf32, #tpu.memory_space<vmem>>, vector<1x128xf32>
      %cst_17 = arith.constant 0.001953125 : f32
      %25 = vector.broadcast %cst_17 : f32 to vector<1x128xf32>
      %26 = arith.mulf %23, %25 : vector<1x128xf32>
      %cst_18 = arith.constant 0.001953125 : f32
      %27 = vector.broadcast %cst_18 : f32 to vector<1x128xf32>
      %28 = arith.mulf %24, %27 : vector<1x128xf32>
      %29 = arith.mulf %26, %26 : vector<1x128xf32>
      %30 = arith.subf %28, %29 : vector<1x128xf32>
      %c0_19 = arith.constant 0 : index
      %c0_20 = arith.constant 0 : index
      %31 = vector.load %arg5[%c0_19, %c0_20] : memref<1x128xf32, #tpu.memory_space<vmem>>, vector<1x128xf32>
      %cst_21 = arith.constant 9.99999974E-6 : f32
      %32 = vector.broadcast %cst_21 : f32 to vector<1x128xf32>
      %33 = arith.addf %30, %32 : vector<1x128xf32>
      %34 = math.rsqrt %33 : vector<1x128xf32>
      %35 = arith.mulf %31, %34 : vector<1x128xf32>
      %c0_22 = arith.constant 0 : index
      %c0_23 = arith.constant 0 : index
      %36 = vector.load %arg6[%c0_22, %c0_23] : memref<1x128xf32, #tpu.memory_space<vmem>>, vector<1x128xf32>
      %37 = arith.mulf %26, %35 : vector<1x128xf32>
      %38 = arith.subf %36, %37 : vector<1x128xf32>
      %39 = vector.broadcast %35 : vector<1x128xf32> to vector<256x128xf32>
      %40 = arith.mulf %22, %39 : vector<256x128xf32>
      %41 = vector.broadcast %38 : vector<1x128xf32> to vector<256x128xf32>
      %42 = arith.addf %40, %41 : vector<256x128xf32>
      %cst_24 = arith.constant 0.000000e+00 : f32
      %cst_25 = arith.constant 6.000000e+00 : f32
      %43 = vector.broadcast %cst_24 : f32 to vector<256x128xf32>
      %44 = arith.maximumf %43, %42 : vector<256x128xf32>
      %45 = vector.broadcast %cst_25 : f32 to vector<256x128xf32>
      %46 = arith.minimumf %45, %44 : vector<256x128xf32>
      %c0_26 = arith.constant 0 : index
      %c0_27 = arith.constant 0 : index
      %47 = vector.load %arg7[%c0_26, %c0_27] : memref<9x128xf32, #tpu.memory_space<vmem>>, vector<9x128xf32>
      %48 = vector.shape_cast %46 : vector<256x128xf32> to vector<16x16x128xf32>
      %c1_28 = arith.constant 1 : index
      %c1_29 = arith.constant 1 : index
      %c0_30 = arith.constant 0 : index
      %49 = vector.load %arg16[%c1_28, %c1_29, %c0_30] : memref<18x18x128xf32, #tpu.memory_space<vmem>>, vector<16x16x128xf32>
      tpu.vector_store %arg16[%c1_28, %c1_29, %c0_30], %48 {strides = array<i32>} : memref<18x18x128xf32, #tpu.memory_space<vmem>>, vector<16x16x128xf32>,
      %c0_31 = arith.constant 0 : index
      %c0_32 = arith.constant 0 : index
      %c0_33 = arith.constant 0 : index
      %50 = vector.load %arg16[%c0_31, %c0_32, %c0_33] : memref<18x18x128xf32, #tpu.memory_space<vmem>>, vector<18x18x128xf32>
      %51 = vector.extract_strided_slice %50 {offsets = [0, 0, 0], sizes = [16, 16, 128], strides = [1, 1, 1]} : vector<18x18x128xf32> to vector<16x16x128xf32>
      %52 = vector.extract_strided_slice %47 {offsets = [0, 0], sizes = [1, 128], strides = [1, 1]} : vector<9x128xf32> to vector<1x128xf32>
      %53 = vector.shape_cast %52 : vector<1x128xf32> to vector<128xf32>
      %54 = vector.shape_cast %53 : vector<128xf32> to vector<1x1x128xf32>
      %55 = vector.broadcast %54 : vector<1x1x128xf32> to vector<16x16x128xf32>
      %56 = arith.mulf %51, %55 : vector<16x16x128xf32>
      %57 = vector.extract_strided_slice %50 {offsets = [0, 1, 0], sizes = [16, 16, 128], strides = [1, 1, 1]} : vector<18x18x128xf32> to vector<16x16x128xf32>
      %58 = vector.extract_strided_slice %47 {offsets = [1, 0], sizes = [1, 128], strides = [1, 1]} : vector<9x128xf32> to vector<1x128xf32>
      %59 = vector.shape_cast %58 : vector<1x128xf32> to vector<128xf32>
      %60 = vector.shape_cast %59 : vector<128xf32> to vector<1x1x128xf32>
      %61 = vector.broadcast %60 : vector<1x1x128xf32> to vector<16x16x128xf32>
      %62 = arith.mulf %57, %61 : vector<16x16x128xf32>
      %63 = arith.addf %56, %62 : vector<16x16x128xf32>
      %64 = vector.extract_strided_slice %50 {offsets = [0, 2, 0], sizes = [16, 16, 128], strides = [1, 1, 1]} : vector<18x18x128xf32> to vector<16x16x128xf32>
      %65 = vector.extract_strided_slice %47 {offsets = [2, 0], sizes = [1, 128], strides = [1, 1]} : vector<9x128xf32> to vector<1x128xf32>
      %66 = vector.shape_cast %65 : vector<1x128xf32> to vector<128xf32>
      %67 = vector.shape_cast %66 : vector<128xf32> to vector<1x1x128xf32>
      %68 = vector.broadcast %67 : vector<1x1x128xf32> to vector<16x16x128xf32>
      %69 = arith.mulf %64, %68 : vector<16x16x128xf32>
      %70 = arith.addf %63, %69 : vector<16x16x128xf32>
      %71 = vector.extract_strided_slice %50 {offsets = [1, 0, 0], sizes = [16, 16, 128], strides = [1, 1, 1]} : vector<18x18x128xf32> to vector<16x16x128xf32>
      %72 = vector.extract_strided_slice %47 {offsets = [3, 0], sizes = [1, 128], strides = [1, 1]} : vector<9x128xf32> to vector<1x128xf32>
      %73 = vector.shape_cast %72 : vector<1x128xf32> to vector<128xf32>
      %74 = vector.shape_cast %73 : vector<128xf32> to vector<1x1x128xf32>
      %75 = vector.broadcast %74 : vector<1x1x128xf32> to vector<16x16x128xf32>
      %76 = arith.mulf %71, %75 : vector<16x16x128xf32>
      %77 = arith.addf %70, %76 : vector<16x16x128xf32>
      %78 = vector.extract_strided_slice %50 {offsets = [1, 1, 0], sizes = [16, 16, 128], strides = [1, 1, 1]} : vector<18x18x128xf32> to vector<16x16x128xf32>
      %79 = vector.extract_strided_slice %47 {offsets = [4, 0], sizes = [1, 128], strides = [1, 1]} : vector<9x128xf32> to vector<1x128xf32>
      %80 = vector.shape_cast %79 : vector<1x128xf32> to vector<128xf32>
      %81 = vector.shape_cast %80 : vector<128xf32> to vector<1x1x128xf32>
      %82 = vector.broadcast %81 : vector<1x1x128xf32> to vector<16x16x128xf32>
      %83 = arith.mulf %78, %82 : vector<16x16x128xf32>
      %84 = arith.addf %77, %83 : vector<16x16x128xf32>
      %85 = vector.extract_strided_slice %50 {offsets = [1, 2, 0], sizes = [16, 16, 128], strides = [1, 1, 1]} : vector<18x18x128xf32> to vector<16x16x128xf32>
      %86 = vector.extract_strided_slice %47 {offsets = [5, 0], sizes = [1, 128], strides = [1, 1]} : vector<9x128xf32> to vector<1x128xf32>
      %87 = vector.shape_cast %86 : vector<1x128xf32> to vector<128xf32>
      %88 = vector.shape_cast %87 : vector<128xf32> to vector<1x1x128xf32>
      %89 = vector.broadcast %88 : vector<1x1x128xf32> to vector<16x16x128xf32>
      %90 = arith.mulf %85, %89 : vector<16x16x128xf32>
      %91 = arith.addf %84, %90 : vector<16x16x128xf32>
      %92 = vector.extract_strided_slice %50 {offsets = [2, 0, 0], sizes = [16, 16, 128], strides = [1, 1, 1]} : vector<18x18x128xf32> to vector<16x16x128xf32>
      %93 = vector.extract_strided_slice %47 {offsets = [6, 0], sizes = [1, 128], strides = [1, 1]} : vector<9x128xf32> to vector<1x128xf32>
      %94 = vector.shape_cast %93 : vector<1x128xf32> to vector<128xf32>
      %95 = vector.shape_cast %94 : vector<128xf32> to vector<1x1x128xf32>
      %96 = vector.broadcast %95 : vector<1x1x128xf32> to vector<16x16x128xf32>
      %97 = arith.mulf %92, %96 : vector<16x16x128xf32>
      %98 = arith.addf %91, %97 : vector<16x16x128xf32>
      %99 = vector.extract_strided_slice %50 {offsets = [2, 1, 0], sizes = [16, 16, 128], strides = [1, 1, 1]} : vector<18x18x128xf32> to vector<16x16x128xf32>
      %100 = vector.extract_strided_slice %47 {offsets = [7, 0], sizes = [1, 128], strides = [1, 1]} : vector<9x128xf32> to vector<1x128xf32>
      %101 = vector.shape_cast %100 : vector<1x128xf32> to vector<128xf32>
      %102 = vector.shape_cast %101 : vector<128xf32> to vector<1x1x128xf32>
      %103 = vector.broadcast %102 : vector<1x1x128xf32> to vector<16x16x128xf32>
      %104 = arith.mulf %99, %103 : vector<16x16x128xf32>
      %105 = arith.addf %98, %104 : vector<16x16x128xf32>
      %106 = vector.extract_strided_slice %50 {offsets = [2, 2, 0], sizes = [16, 16, 128], strides = [1, 1, 1]} : vector<18x18x128xf32> to vector<16x16x128xf32>
      %107 = vector.extract_strided_slice %47 {offsets = [8, 0], sizes = [1, 128], strides = [1, 1]} : vector<9x128xf32> to vector<1x128xf32>
      %108 = vector.shape_cast %107 : vector<1x128xf32> to vector<128xf32>
      %109 = vector.shape_cast %108 : vector<128xf32> to vector<1x1x128xf32>
      %110 = vector.broadcast %109 : vector<1x1x128xf32> to vector<16x16x128xf32>
      %111 = arith.mulf %106, %110 : vector<16x16x128xf32>
      %112 = arith.addf %105, %111 : vector<16x16x128xf32>
      %113 = vector.shape_cast %112 : vector<16x16x128xf32> to vector<256x128xf32>
      %c0_34 = arith.constant 0 : index
      %c0_35 = arith.constant 0 : index
      %114 = vector.load %arg18[%c0_34, %c0_35] : memref<2x128xf32, #tpu.memory_space<vmem>>, vector<1x128xf32>
      %c1_36 = arith.constant 1 : index
      %c0_37 = arith.constant 0 : index
      %115 = vector.load %arg18[%c1_36, %c0_37] : memref<2x128xf32, #tpu.memory_space<vmem>>, vector<1x128xf32>
      %cst_38 = arith.constant 0.001953125 : f32
      %116 = vector.broadcast %cst_38 : f32 to vector<1x128xf32>
      %117 = arith.mulf %114, %116 : vector<1x128xf32>
      %cst_39 = arith.constant 0.001953125 : f32
      %118 = vector.broadcast %cst_39 : f32 to vector<1x128xf32>
      %119 = arith.mulf %115, %118 : vector<1x128xf32>
      %120 = arith.mulf %117, %117 : vector<1x128xf32>
      %121 = arith.subf %119, %120 : vector<1x128xf32>
      %c0_40 = arith.constant 0 : index
      %c0_41 = arith.constant 0 : index
      %122 = vector.load %arg8[%c0_40, %c0_41] : memref<1x128xf32, #tpu.memory_space<vmem>>, vector<1x128xf32>
      %cst_42 = arith.constant 9.99999974E-6 : f32
      %123 = vector.broadcast %cst_42 : f32 to vector<1x128xf32>
      %124 = arith.addf %121, %123 : vector<1x128xf32>
      %125 = math.rsqrt %124 : vector<1x128xf32>
      %126 = arith.mulf %122, %125 : vector<1x128xf32>
      %c0_43 = arith.constant 0 : index
      %c0_44 = arith.constant 0 : index
      %127 = vector.load %arg9[%c0_43, %c0_44] : memref<1x128xf32, #tpu.memory_space<vmem>>, vector<1x128xf32>
      %128 = arith.mulf %117, %126 : vector<1x128xf32>
      %129 = arith.subf %127, %128 : vector<1x128xf32>
      %130 = vector.broadcast %126 : vector<1x128xf32> to vector<256x128xf32>
      %131 = arith.mulf %113, %130 : vector<256x128xf32>
      %132 = vector.broadcast %129 : vector<1x128xf32> to vector<256x128xf32>
      %133 = arith.addf %131, %132 : vector<256x128xf32>
      %cst_45 = arith.constant 0.000000e+00 : f32
      %cst_46 = arith.constant 6.000000e+00 : f32
      %134 = vector.broadcast %cst_45 : f32 to vector<256x128xf32>
      %135 = arith.maximumf %134, %133 : vector<256x128xf32>
      %136 = vector.broadcast %cst_46 : f32 to vector<256x128xf32>
      %137 = arith.minimumf %136, %135 : vector<256x128xf32>
      %cst_47 = arith.constant dense<0.000000e+00> : vector<1x128xf32>
      %138 = tpu.matmul %1, %137, %cst_47 {dimension_numbers = #tpu.dot_dimension_numbers<[1], [0], [0], [1], [0, 0, 1, 1], [], []>} : vector<1x256xf32>, vector<256x128xf32>, vector<1x128xf32> -> vector<1x128xf32>
      %cst_48 = arith.constant 3.906250e-03 : f32
      %139 = vector.broadcast %cst_48 : f32 to vector<1x128xf32>
      %140 = arith.mulf %138, %139 : vector<1x128xf32>
      %141 = arith.truncf %140 : vector<1x128xf32> to vector<1x128xbf16>
      %c0_49 = arith.constant 0 : index
      %c0_50 = arith.constant 0 : index
      %142 = vector.load %arg10[%c0_49, %c0_50] : memref<128x128xbf16, #tpu.memory_space<vmem>>, vector<128x128xbf16>
      %cst_51 = arith.constant dense<0.000000e+00> : vector<1x128xf32>
      %143 = tpu.matmul %141, %142, %cst_51 {dimension_numbers = #tpu.dot_dimension_numbers<[1], [0], [0], [1], [0, 0, 1, 1], [], []>} : vector<1x128xbf16>, vector<128x128xbf16>, vector<1x128xf32> -> vector<1x128xf32>
      %cst_52 = arith.constant 0.000000e+00 : f32
      %144 = vector.broadcast %cst_52 : f32 to vector<1x128xf32>
      %145 = arith.maximumf %143, %144 : vector<1x128xf32>
      %146 = arith.truncf %145 : vector<1x128xf32> to vector<1x128xbf16>
      %c0_53 = arith.constant 0 : index
      %c0_54 = arith.constant 0 : index
      %147 = vector.load %arg11[%c0_53, %c0_54] : memref<128x128xbf16, #tpu.memory_space<vmem>>, vector<128x128xbf16>
      %cst_55 = arith.constant dense<0.000000e+00> : vector<1x128xf32>
      %148 = tpu.matmul %146, %147, %cst_55 {dimension_numbers = #tpu.dot_dimension_numbers<[1], [0], [0], [1], [0, 0, 1, 1], [], []>} : vector<1x128xbf16>, vector<128x128xbf16>, vector<1x128xf32> -> vector<1x128xf32>
      %cst_56 = arith.constant 0.000000e+00 : f32
      %149 = vector.broadcast %cst_56 : f32 to vector<1x128xf32>
      %150 = arith.subf %149, %148 : vector<1x128xf32>
      %151 = math.exp %150 : vector<1x128xf32>
      %cst_57 = arith.constant 1.000000e+00 : f32
      %152 = vector.broadcast %cst_57 : f32 to vector<1x128xf32>
      %153 = arith.addf %152, %151 : vector<1x128xf32>
      %cst_58 = arith.constant 1.000000e+00 : f32
      %154 = vector.broadcast %cst_58 : f32 to vector<1x128xf32>
      %155 = arith.divf %154, %153 : vector<1x128xf32>
      %156 = arith.index_cast %arg1 : i32 to index
      %c0_59 = arith.constant 0 : index
      %c0_60 = arith.constant 0 : index
      %157 = vector.load %arg20[%156, %c0_59, %c0_60] : memref<2x1x128xf32, #tpu.memory_space<vmem>>, vector<1x1x128xf32>
      %158 = vector.shape_cast %157 : vector<1x1x128xf32> to vector<1x128xf32>
      %159 = vector.shape_cast %155 : vector<1x128xf32> to vector<1x1x128xf32>
      tpu.vector_store %arg20[%156, %c0_59, %c0_60], %159 {strides = array<i32>} : memref<2x1x128xf32, #tpu.memory_space<vmem>>, vector<1x1x128xf32>,
      %160 = vector.broadcast %155 : vector<1x128xf32> to vector<256x128xf32>
      %161 = arith.mulf %137, %160 : vector<256x128xf32>
      %162 = arith.truncf %161 : vector<256x128xf32> to vector<256x128xbf16>
      %c0_61 = arith.constant 0 : index
      %c0_62 = arith.constant 0 : index
      %163 = vector.load %arg12[%c0_61, %c0_62] : memref<128x128xbf16, #tpu.memory_space<vmem>>, vector<128x128xbf16>
      %cst_63 = arith.constant dense<0.000000e+00> : vector<256x128xf32>
      %164 = tpu.matmul %162, %163, %cst_63 {dimension_numbers = #tpu.dot_dimension_numbers<[1], [0], [0], [1], [0, 0, 1, 1], [], []>} : vector<256x128xbf16>, vector<128x128xbf16>, vector<256x128xf32> -> vector<256x128xf32>
      %cst_64 = arith.constant dense<0.000000e+00> : vector<1x128xf32>
      %165 = tpu.matmul %1, %164, %cst_64 {dimension_numbers = #tpu.dot_dimension_numbers<[1], [0], [0], [1], [0, 0, 1, 1], [], []>} : vector<1x256xf32>, vector<256x128xf32>, vector<1x128xf32> -> vector<1x128xf32>
      %166 = arith.mulf %164, %164 : vector<256x128xf32>
      %cst_65 = arith.constant dense<0.000000e+00> : vector<1x128xf32>
      %167 = tpu.matmul %1, %166, %cst_65 {dimension_numbers = #tpu.dot_dimension_numbers<[1], [0], [0], [1], [0, 0, 1, 1], [], []>} : vector<1x256xf32>, vector<256x128xf32>, vector<1x128xf32> -> vector<1x128xf32>
      %c0_66 = arith.constant 0 : index
      %c0_67 = arith.constant 0 : index
      %168 = vector.load %arg19[%c0_66, %c0_67] : memref<2x128xf32, #tpu.memory_space<vmem>>, vector<1x128xf32>
      %169 = arith.addf %168, %165 : vector<1x128xf32>
      %c0_68 = arith.constant 0 : index
      %c0_69 = arith.constant 0 : index
      %170 = vector.load %arg19[%c0_68, %c0_69] : memref<2x128xf32, #tpu.memory_space<vmem>>, vector<1x128xf32>
      tpu.vector_store %arg19[%c0_68, %c0_69], %169 {strides = array<i32>} : memref<2x128xf32, #tpu.memory_space<vmem>>, vector<1x128xf32>,
      %c1_70 = arith.constant 1 : index
      %c0_71 = arith.constant 0 : index
      %171 = vector.load %arg19[%c1_70, %c0_71] : memref<2x128xf32, #tpu.memory_space<vmem>>, vector<1x128xf32>
      %172 = arith.addf %171, %167 : vector<1x128xf32>
      %c1_72 = arith.constant 1 : index
      %c0_73 = arith.constant 0 : index
      %173 = vector.load %arg19[%c1_72, %c0_73] : memref<2x128xf32, #tpu.memory_space<vmem>>, vector<1x128xf32>
      tpu.vector_store %arg19[%c1_72, %c0_73], %172 {strides = array<i32>} : memref<2x128xf32, #tpu.memory_space<vmem>>, vector<1x128xf32>,
    } else {
    }
    %c3_i32 = arith.constant 3 : i32
    %16 = arith.cmpi eq, %0, %c3_i32 : i32
    %17 = arith.extui %16 : i1 to i32
    %c0_i32_7 = arith.constant 0 : i32
    %18 = arith.cmpi ne, %17, %c0_i32_7 : i32
    scf.if %18 {
      %c0 = arith.constant 0 : index
      %c0_8 = arith.constant 0 : index
      %c0_9 = arith.constant 0 : index
      %c0_10 = arith.constant 0 : index
      %19 = vector.load %arg2[%c0, %c0_8, %c0_9, %c0_10] : memref<1x16x16x128xbf16, #tpu.memory_space<vmem>>, vector<1x16x16x128xbf16>
      %20 = vector.shape_cast %19 : vector<1x16x16x128xbf16> to vector<256x128xbf16>
      %c0_11 = arith.constant 0 : index
      %c0_12 = arith.constant 0 : index
      %21 = vector.load %arg4[%c0_11, %c0_12] : memref<128x128xbf16, #tpu.memory_space<vmem>>, vector<128x128xbf16>
      %cst_13 = arith.constant dense<0.000000e+00> : vector<256x128xf32>
      %22 = tpu.matmul %20, %21, %cst_13 {dimension_numbers = #tpu.dot_dimension_numbers<[1], [0], [0], [1], [0, 0, 1, 1], [], []>} : vector<256x128xbf16>, vector<128x128xbf16>, vector<256x128xf32> -> vector<256x128xf32>
      %c0_14 = arith.constant 0 : index
      %c0_15 = arith.constant 0 : index
      %23 = vector.load %arg17[%c0_14, %c0_15] : memref<2x128xf32, #tpu.memory_space<vmem>>, vector<1x128xf32>
      %c1 = arith.constant 1 : index
      %c0_16 = arith.constant 0 : index
      %24 = vector.load %arg17[%c1, %c0_16] : memref<2x128xf32, #tpu.memory_space<vmem>>, vector<1x128xf32>
      %cst_17 = arith.constant 0.001953125 : f32
      %25 = vector.broadcast %cst_17 : f32 to vector<1x128xf32>
      %26 = arith.mulf %23, %25 : vector<1x128xf32>
      %cst_18 = arith.constant 0.001953125 : f32
      %27 = vector.broadcast %cst_18 : f32 to vector<1x128xf32>
      %28 = arith.mulf %24, %27 : vector<1x128xf32>
      %29 = arith.mulf %26, %26 : vector<1x128xf32>
      %30 = arith.subf %28, %29 : vector<1x128xf32>
      %c0_19 = arith.constant 0 : index
      %c0_20 = arith.constant 0 : index
      %31 = vector.load %arg5[%c0_19, %c0_20] : memref<1x128xf32, #tpu.memory_space<vmem>>, vector<1x128xf32>
      %cst_21 = arith.constant 9.99999974E-6 : f32
      %32 = vector.broadcast %cst_21 : f32 to vector<1x128xf32>
      %33 = arith.addf %30, %32 : vector<1x128xf32>
      %34 = math.rsqrt %33 : vector<1x128xf32>
      %35 = arith.mulf %31, %34 : vector<1x128xf32>
      %c0_22 = arith.constant 0 : index
      %c0_23 = arith.constant 0 : index
      %36 = vector.load %arg6[%c0_22, %c0_23] : memref<1x128xf32, #tpu.memory_space<vmem>>, vector<1x128xf32>
      %37 = arith.mulf %26, %35 : vector<1x128xf32>
      %38 = arith.subf %36, %37 : vector<1x128xf32>
      %39 = vector.broadcast %35 : vector<1x128xf32> to vector<256x128xf32>
      %40 = arith.mulf %22, %39 : vector<256x128xf32>
      %41 = vector.broadcast %38 : vector<1x128xf32> to vector<256x128xf32>
      %42 = arith.addf %40, %41 : vector<256x128xf32>
      %cst_24 = arith.constant 0.000000e+00 : f32
      %cst_25 = arith.constant 6.000000e+00 : f32
      %43 = vector.broadcast %cst_24 : f32 to vector<256x128xf32>
      %44 = arith.maximumf %43, %42 : vector<256x128xf32>
      %45 = vector.broadcast %cst_25 : f32 to vector<256x128xf32>
      %46 = arith.minimumf %45, %44 : vector<256x128xf32>
      %c0_26 = arith.constant 0 : index
      %c0_27 = arith.constant 0 : index
      %47 = vector.load %arg7[%c0_26, %c0_27] : memref<9x128xf32, #tpu.memory_space<vmem>>, vector<9x128xf32>
      %48 = vector.shape_cast %46 : vector<256x128xf32> to vector<16x16x128xf32>
      %c1_28 = arith.constant 1 : index
      %c1_29 = arith.constant 1 : index
      %c0_30 = arith.constant 0 : index
      %49 = vector.load %arg16[%c1_28, %c1_29, %c0_30] : memref<18x18x128xf32, #tpu.memory_space<vmem>>, vector<16x16x128xf32>
      tpu.vector_store %arg16[%c1_28, %c1_29, %c0_30], %48 {strides = array<i32>} : memref<18x18x128xf32, #tpu.memory_space<vmem>>, vector<16x16x128xf32>,
      %c0_31 = arith.constant 0 : index
      %c0_32 = arith.constant 0 : index
      %c0_33 = arith.constant 0 : index
      %50 = vector.load %arg16[%c0_31, %c0_32, %c0_33] : memref<18x18x128xf32, #tpu.memory_space<vmem>>, vector<18x18x128xf32>
      %51 = vector.extract_strided_slice %50 {offsets = [0, 0, 0], sizes = [16, 16, 128], strides = [1, 1, 1]} : vector<18x18x128xf32> to vector<16x16x128xf32>
      %52 = vector.extract_strided_slice %47 {offsets = [0, 0], sizes = [1, 128], strides = [1, 1]} : vector<9x128xf32> to vector<1x128xf32>
      %53 = vector.shape_cast %52 : vector<1x128xf32> to vector<128xf32>
      %54 = vector.shape_cast %53 : vector<128xf32> to vector<1x1x128xf32>
      %55 = vector.broadcast %54 : vector<1x1x128xf32> to vector<16x16x128xf32>
      %56 = arith.mulf %51, %55 : vector<16x16x128xf32>
      %57 = vector.extract_strided_slice %50 {offsets = [0, 1, 0], sizes = [16, 16, 128], strides = [1, 1, 1]} : vector<18x18x128xf32> to vector<16x16x128xf32>
      %58 = vector.extract_strided_slice %47 {offsets = [1, 0], sizes = [1, 128], strides = [1, 1]} : vector<9x128xf32> to vector<1x128xf32>
      %59 = vector.shape_cast %58 : vector<1x128xf32> to vector<128xf32>
      %60 = vector.shape_cast %59 : vector<128xf32> to vector<1x1x128xf32>
      %61 = vector.broadcast %60 : vector<1x1x128xf32> to vector<16x16x128xf32>
      %62 = arith.mulf %57, %61 : vector<16x16x128xf32>
      %63 = arith.addf %56, %62 : vector<16x16x128xf32>
      %64 = vector.extract_strided_slice %50 {offsets = [0, 2, 0], sizes = [16, 16, 128], strides = [1, 1, 1]} : vector<18x18x128xf32> to vector<16x16x128xf32>
      %65 = vector.extract_strided_slice %47 {offsets = [2, 0], sizes = [1, 128], strides = [1, 1]} : vector<9x128xf32> to vector<1x128xf32>
      %66 = vector.shape_cast %65 : vector<1x128xf32> to vector<128xf32>
      %67 = vector.shape_cast %66 : vector<128xf32> to vector<1x1x128xf32>
      %68 = vector.broadcast %67 : vector<1x1x128xf32> to vector<16x16x128xf32>
      %69 = arith.mulf %64, %68 : vector<16x16x128xf32>
      %70 = arith.addf %63, %69 : vector<16x16x128xf32>
      %71 = vector.extract_strided_slice %50 {offsets = [1, 0, 0], sizes = [16, 16, 128], strides = [1, 1, 1]} : vector<18x18x128xf32> to vector<16x16x128xf32>
      %72 = vector.extract_strided_slice %47 {offsets = [3, 0], sizes = [1, 128], strides = [1, 1]} : vector<9x128xf32> to vector<1x128xf32>
      %73 = vector.shape_cast %72 : vector<1x128xf32> to vector<128xf32>
      %74 = vector.shape_cast %73 : vector<128xf32> to vector<1x1x128xf32>
      %75 = vector.broadcast %74 : vector<1x1x128xf32> to vector<16x16x128xf32>
      %76 = arith.mulf %71, %75 : vector<16x16x128xf32>
      %77 = arith.addf %70, %76 : vector<16x16x128xf32>
      %78 = vector.extract_strided_slice %50 {offsets = [1, 1, 0], sizes = [16, 16, 128], strides = [1, 1, 1]} : vector<18x18x128xf32> to vector<16x16x128xf32>
      %79 = vector.extract_strided_slice %47 {offsets = [4, 0], sizes = [1, 128], strides = [1, 1]} : vector<9x128xf32> to vector<1x128xf32>
      %80 = vector.shape_cast %79 : vector<1x128xf32> to vector<128xf32>
      %81 = vector.shape_cast %80 : vector<128xf32> to vector<1x1x128xf32>
      %82 = vector.broadcast %81 : vector<1x1x128xf32> to vector<16x16x128xf32>
      %83 = arith.mulf %78, %82 : vector<16x16x128xf32>
      %84 = arith.addf %77, %83 : vector<16x16x128xf32>
      %85 = vector.extract_strided_slice %50 {offsets = [1, 2, 0], sizes = [16, 16, 128], strides = [1, 1, 1]} : vector<18x18x128xf32> to vector<16x16x128xf32>
      %86 = vector.extract_strided_slice %47 {offsets = [5, 0], sizes = [1, 128], strides = [1, 1]} : vector<9x128xf32> to vector<1x128xf32>
      %87 = vector.shape_cast %86 : vector<1x128xf32> to vector<128xf32>
      %88 = vector.shape_cast %87 : vector<128xf32> to vector<1x1x128xf32>
      %89 = vector.broadcast %88 : vector<1x1x128xf32> to vector<16x16x128xf32>
      %90 = arith.mulf %85, %89 : vector<16x16x128xf32>
      %91 = arith.addf %84, %90 : vector<16x16x128xf32>
      %92 = vector.extract_strided_slice %50 {offsets = [2, 0, 0], sizes = [16, 16, 128], strides = [1, 1, 1]} : vector<18x18x128xf32> to vector<16x16x128xf32>
      %93 = vector.extract_strided_slice %47 {offsets = [6, 0], sizes = [1, 128], strides = [1, 1]} : vector<9x128xf32> to vector<1x128xf32>
      %94 = vector.shape_cast %93 : vector<1x128xf32> to vector<128xf32>
      %95 = vector.shape_cast %94 : vector<128xf32> to vector<1x1x128xf32>
      %96 = vector.broadcast %95 : vector<1x1x128xf32> to vector<16x16x128xf32>
      %97 = arith.mulf %92, %96 : vector<16x16x128xf32>
      %98 = arith.addf %91, %97 : vector<16x16x128xf32>
      %99 = vector.extract_strided_slice %50 {offsets = [2, 1, 0], sizes = [16, 16, 128], strides = [1, 1, 1]} : vector<18x18x128xf32> to vector<16x16x128xf32>
      %100 = vector.extract_strided_slice %47 {offsets = [7, 0], sizes = [1, 128], strides = [1, 1]} : vector<9x128xf32> to vector<1x128xf32>
      %101 = vector.shape_cast %100 : vector<1x128xf32> to vector<128xf32>
      %102 = vector.shape_cast %101 : vector<128xf32> to vector<1x1x128xf32>
      %103 = vector.broadcast %102 : vector<1x1x128xf32> to vector<16x16x128xf32>
      %104 = arith.mulf %99, %103 : vector<16x16x128xf32>
      %105 = arith.addf %98, %104 : vector<16x16x128xf32>
      %106 = vector.extract_strided_slice %50 {offsets = [2, 2, 0], sizes = [16, 16, 128], strides = [1, 1, 1]} : vector<18x18x128xf32> to vector<16x16x128xf32>
      %107 = vector.extract_strided_slice %47 {offsets = [8, 0], sizes = [1, 128], strides = [1, 1]} : vector<9x128xf32> to vector<1x128xf32>
      %108 = vector.shape_cast %107 : vector<1x128xf32> to vector<128xf32>
      %109 = vector.shape_cast %108 : vector<128xf32> to vector<1x1x128xf32>
      %110 = vector.broadcast %109 : vector<1x1x128xf32> to vector<16x16x128xf32>
      %111 = arith.mulf %106, %110 : vector<16x16x128xf32>
      %112 = arith.addf %105, %111 : vector<16x16x128xf32>
      %113 = vector.shape_cast %112 : vector<16x16x128xf32> to vector<256x128xf32>
      %c0_34 = arith.constant 0 : index
      %c0_35 = arith.constant 0 : index
      %114 = vector.load %arg18[%c0_34, %c0_35] : memref<2x128xf32, #tpu.memory_space<vmem>>, vector<1x128xf32>
      %c1_36 = arith.constant 1 : index
      %c0_37 = arith.constant 0 : index
      %115 = vector.load %arg18[%c1_36, %c0_37] : memref<2x128xf32, #tpu.memory_space<vmem>>, vector<1x128xf32>
      %cst_38 = arith.constant 0.001953125 : f32
      %116 = vector.broadcast %cst_38 : f32 to vector<1x128xf32>
      %117 = arith.mulf %114, %116 : vector<1x128xf32>
      %cst_39 = arith.constant 0.001953125 : f32
      %118 = vector.broadcast %cst_39 : f32 to vector<1x128xf32>
      %119 = arith.mulf %115, %118 : vector<1x128xf32>
      %120 = arith.mulf %117, %117 : vector<1x128xf32>
      %121 = arith.subf %119, %120 : vector<1x128xf32>
      %c0_40 = arith.constant 0 : index
      %c0_41 = arith.constant 0 : index
      %122 = vector.load %arg8[%c0_40, %c0_41] : memref<1x128xf32, #tpu.memory_space<vmem>>, vector<1x128xf32>
      %cst_42 = arith.constant 9.99999974E-6 : f32
      %123 = vector.broadcast %cst_42 : f32 to vector<1x128xf32>
      %124 = arith.addf %121, %123 : vector<1x128xf32>
      %125 = math.rsqrt %124 : vector<1x128xf32>
      %126 = arith.mulf %122, %125 : vector<1x128xf32>
      %c0_43 = arith.constant 0 : index
      %c0_44 = arith.constant 0 : index
      %127 = vector.load %arg9[%c0_43, %c0_44] : memref<1x128xf32, #tpu.memory_space<vmem>>, vector<1x128xf32>
      %128 = arith.mulf %117, %126 : vector<1x128xf32>
      %129 = arith.subf %127, %128 : vector<1x128xf32>
      %130 = vector.broadcast %126 : vector<1x128xf32> to vector<256x128xf32>
      %131 = arith.mulf %113, %130 : vector<256x128xf32>
      %132 = vector.broadcast %129 : vector<1x128xf32> to vector<256x128xf32>
      %133 = arith.addf %131, %132 : vector<256x128xf32>
      %cst_45 = arith.constant 0.000000e+00 : f32
      %cst_46 = arith.constant 6.000000e+00 : f32
      %134 = vector.broadcast %cst_45 : f32 to vector<256x128xf32>
      %135 = arith.maximumf %134, %133 : vector<256x128xf32>
      %136 = vector.broadcast %cst_46 : f32 to vector<256x128xf32>
      %137 = arith.minimumf %136, %135 : vector<256x128xf32>
      %138 = arith.index_cast %arg1 : i32 to index
      %c0_47 = arith.constant 0 : index
      %c0_48 = arith.constant 0 : index
      %139 = vector.load %arg20[%138, %c0_47, %c0_48] : memref<2x1x128xf32, #tpu.memory_space<vmem>>, vector<1x1x128xf32>
      %140 = vector.shape_cast %139 : vector<1x1x128xf32> to vector<1x128xf32>
      %141 = vector.broadcast %140 : vector<1x128xf32> to vector<256x128xf32>
      %142 = arith.mulf %137, %141 : vector<256x128xf32>
      %143 = arith.truncf %142 : vector<256x128xf32> to vector<256x128xbf16>
      %c0_49 = arith.constant 0 : index
      %c0_50 = arith.constant 0 : index
      %144 = vector.load %arg12[%c0_49, %c0_50] : memref<128x128xbf16, #tpu.memory_space<vmem>>, vector<128x128xbf16>
      %cst_51 = arith.constant dense<0.000000e+00> : vector<256x128xf32>
      %145 = tpu.matmul %143, %144, %cst_51 {dimension_numbers = #tpu.dot_dimension_numbers<[1], [0], [0], [1], [0, 0, 1, 1], [], []>} : vector<256x128xbf16>, vector<128x128xbf16>, vector<256x128xf32> -> vector<256x128xf32>
      %c0_52 = arith.constant 0 : index
      %c0_53 = arith.constant 0 : index
      %146 = vector.load %arg19[%c0_52, %c0_53] : memref<2x128xf32, #tpu.memory_space<vmem>>, vector<1x128xf32>
      %c1_54 = arith.constant 1 : index
      %c0_55 = arith.constant 0 : index
      %147 = vector.load %arg19[%c1_54, %c0_55] : memref<2x128xf32, #tpu.memory_space<vmem>>, vector<1x128xf32>
      %cst_56 = arith.constant 0.001953125 : f32
      %148 = vector.broadcast %cst_56 : f32 to vector<1x128xf32>
      %149 = arith.mulf %146, %148 : vector<1x128xf32>
      %cst_57 = arith.constant 0.001953125 : f32
      %150 = vector.broadcast %cst_57 : f32 to vector<1x128xf32>
      %151 = arith.mulf %147, %150 : vector<1x128xf32>
      %152 = arith.mulf %149, %149 : vector<1x128xf32>
      %153 = arith.subf %151, %152 : vector<1x128xf32>
      %c0_58 = arith.constant 0 : index
      %c0_59 = arith.constant 0 : index
      %154 = vector.load %arg13[%c0_58, %c0_59] : memref<1x128xf32, #tpu.memory_space<vmem>>, vector<1x128xf32>
      %cst_60 = arith.constant 9.99999974E-6 : f32
      %155 = vector.broadcast %cst_60 : f32 to vector<1x128xf32>
      %156 = arith.addf %153, %155 : vector<1x128xf32>
      %157 = math.rsqrt %156 : vector<1x128xf32>
      %158 = arith.mulf %154, %157 : vector<1x128xf32>
      %c0_61 = arith.constant 0 : index
      %c0_62 = arith.constant 0 : index
      %159 = vector.load %arg14[%c0_61, %c0_62] : memref<1x128xf32, #tpu.memory_space<vmem>>, vector<1x128xf32>
      %160 = arith.mulf %149, %158 : vector<1x128xf32>
      %161 = arith.subf %159, %160 : vector<1x128xf32>
      %162 = vector.broadcast %158 : vector<1x128xf32> to vector<256x128xf32>
      %163 = arith.mulf %145, %162 : vector<256x128xf32>
      %164 = vector.broadcast %161 : vector<1x128xf32> to vector<256x128xf32>
      %165 = arith.addf %163, %164 : vector<256x128xf32>
      %c0_63 = arith.constant 0 : index
      %c0_64 = arith.constant 0 : index
      %c0_65 = arith.constant 0 : index
      %c0_66 = arith.constant 0 : index
      %166 = vector.load %arg3[%c0_63, %c0_64, %c0_65, %c0_66] : memref<1x16x16x128xf32, #tpu.memory_space<vmem>>, vector<1x16x16x128xf32>
      %167 = vector.shape_cast %166 : vector<1x16x16x128xf32> to vector<256x128xf32>
      %168 = arith.addf %165, %167 : vector<256x128xf32>
      %169 = vector.shape_cast %168 : vector<256x128xf32> to vector<1x16x16x128xf32>
      %c0_67 = arith.constant 0 : index
      %c0_68 = arith.constant 0 : index
      %c0_69 = arith.constant 0 : index
      %c0_70 = arith.constant 0 : index
      %170 = vector.load %arg15[%c0_67, %c0_68, %c0_69, %c0_70] : memref<1x16x16x128xf32, #tpu.memory_space<vmem>>, vector<1x16x16x128xf32>
      tpu.vector_store %arg15[%c0_67, %c0_68, %c0_69, %c0_70], %169 {strides = array<i32>} : memref<1x16x16x128xf32, #tpu.memory_space<vmem>>, vector<1x16x16x128xf32>,
    } else {
    }
    return
  }
  func.func @transform_0(%arg0: i32, %arg1: i32) -> (i32, i32, i32, i32) {
    %c0_i32 = arith.constant 0 : i32
    %c0_i32_0 = arith.constant 0 : i32
    %c0_i32_1 = arith.constant 0 : i32
    %c0_i32_2 = arith.constant 0 : i32
    return %arg1, %c0_i32, %c0_i32_0, %c0_i32_1 : i32, i32, i32, i32
  }
  func.func @transform_1(%arg0: i32, %arg1: i32) -> (i32, i32, i32, i32) {
    %c3_i32 = arith.constant 3 : i32
    %0 = arith.cmpi eq, %arg0, %c3_i32 : i32
    %c0_i32 = arith.constant 0 : i32
    %1 = arith.select %0, %arg1, %c0_i32 : i32
    %c0_i32_0 = arith.constant 0 : i32
    %c0_i32_1 = arith.constant 0 : i32
    %c0_i32_2 = arith.constant 0 : i32
    %c0_i32_3 = arith.constant 0 : i32
    return %1, %c0_i32_0, %c0_i32_1, %c0_i32_2 : i32, i32, i32, i32
  }
  func.func @transform_2(%arg0: i32, %arg1: i32) -> (i32, i32) {
    %c0_i32 = arith.constant 0 : i32
    %c0_i32_0 = arith.constant 0 : i32
    %c0_i32_1 = arith.constant 0 : i32
    return %c0_i32, %c0_i32_0 : i32, i32
  }
  func.func @transform_3(%arg0: i32, %arg1: i32) -> (i32, i32) {
    %c0_i32 = arith.constant 0 : i32
    %c0_i32_0 = arith.constant 0 : i32
    %c0_i32_1 = arith.constant 0 : i32
    return %c0_i32, %c0_i32_0 : i32, i32
  }
  func.func @transform_4(%arg0: i32, %arg1: i32) -> (i32, i32) {
    %c0_i32 = arith.constant 0 : i32
    %c0_i32_0 = arith.constant 0 : i32
    %c0_i32_1 = arith.constant 0 : i32
    return %c0_i32, %c0_i32_0 : i32, i32
  }
  func.func @transform_5(%arg0: i32, %arg1: i32) -> (i32, i32) {
    %c0_i32 = arith.constant 0 : i32
    %c0_i32_0 = arith.constant 0 : i32
    %c0_i32_1 = arith.constant 0 : i32
    return %c0_i32, %c0_i32_0 : i32, i32
  }
  func.func @transform_6(%arg0: i32, %arg1: i32) -> (i32, i32) {
    %c0_i32 = arith.constant 0 : i32
    %c0_i32_0 = arith.constant 0 : i32
    %c0_i32_1 = arith.constant 0 : i32
    return %c0_i32, %c0_i32_0 : i32, i32
  }
  func.func @transform_7(%arg0: i32, %arg1: i32) -> (i32, i32) {
    %c0_i32 = arith.constant 0 : i32
    %c0_i32_0 = arith.constant 0 : i32
    %c0_i32_1 = arith.constant 0 : i32
    return %c0_i32, %c0_i32_0 : i32, i32
  }
  func.func @transform_8(%arg0: i32, %arg1: i32) -> (i32, i32) {
    %c0_i32 = arith.constant 0 : i32
    %c0_i32_0 = arith.constant 0 : i32
    %c0_i32_1 = arith.constant 0 : i32
    return %c0_i32, %c0_i32_0 : i32, i32
  }
  func.func @transform_9(%arg0: i32, %arg1: i32) -> (i32, i32) {
    %c0_i32 = arith.constant 0 : i32
    %c0_i32_0 = arith.constant 0 : i32
    %c0_i32_1 = arith.constant 0 : i32
    return %c0_i32, %c0_i32_0 : i32, i32
  }
  func.func @transform_10(%arg0: i32, %arg1: i32) -> (i32, i32) {
    %c0_i32 = arith.constant 0 : i32
    %c0_i32_0 = arith.constant 0 : i32
    %c0_i32_1 = arith.constant 0 : i32
    return %c0_i32, %c0_i32_0 : i32, i32
  }
  func.func @transform_11(%arg0: i32, %arg1: i32) -> (i32, i32) {
    %c0_i32 = arith.constant 0 : i32
    %c0_i32_0 = arith.constant 0 : i32
    %c0_i32_1 = arith.constant 0 : i32
    return %c0_i32, %c0_i32_0 : i32, i32
  }
  func.func @transform_12(%arg0: i32, %arg1: i32) -> (i32, i32) {
    %c0_i32 = arith.constant 0 : i32
    %c0_i32_0 = arith.constant 0 : i32
    %c0_i32_1 = arith.constant 0 : i32
    return %c0_i32, %c0_i32_0 : i32, i32
  }
  func.func @transform_13(%arg0: i32, %arg1: i32) -> (i32, i32, i32, i32) {
    %c3_i32 = arith.constant 3 : i32
    %0 = arith.cmpi eq, %arg0, %c3_i32 : i32
    %c0_i32 = arith.constant 0 : i32
    %1 = arith.select %0, %arg1, %c0_i32 : i32
    %c0_i32_0 = arith.constant 0 : i32
    %c0_i32_1 = arith.constant 0 : i32
    %c0_i32_2 = arith.constant 0 : i32
    %c0_i32_3 = arith.constant 0 : i32
    return %1, %c0_i32_0, %c0_i32_1, %c0_i32_2 : i32, i32, i32, i32
  }
}

</mosaic_0001>

<llo_original>
// kernel: tpu_custom_call.1
$region0: #{tpu_custom_call.1}
  #allocation0 [shape = 'u32[]', space=smem, size = 0x4, offset = 0x4, fixed_abs, tag = 'smem constant byte address 0x4 - core index']
  #allocation1 [shape = 'u32[72,128]{1,0:T(1,128)}', space=vmem, size = 0x9000, scoped, tag = 'internal scratch']
  %s0 = inlined_call_operand.hbm [shape: f32[432,128], index: 0, kind: input, shape index: {}]
  %s1 = inlined_call_operand.hbm [shape: f32[432,128], index: 1, kind: output, shape index: {}]
  %s2 = sld [smem:[#allocation0]]
  $region18: #{tpu_custom_call.1} parent=0
    _
  %s4 = ssub.s32 1, %s2
  %s5 = scalar_select 0, %s4, %s2
  $region1: #{tpu_custom_call.1} parent=0
    #allocation2 [shape = 'u8[221184]{0}', space=vmem, size = 0x36000, scoped, tag = 'input window, operand 0, single buffered']
    #allocation3 [shape = 's32[1]{0}', space=sflag, size = 0x4, scoped, tag = 'scoped memory for tpu_custom_call.1']
    #allocation4 [shape = 's32[1]{0}', space=sflag, size = 0x4, scoped, tag = 'scoped memory for tpu_custom_call.1']
    #allocation5 [shape = 'u8[221184]{0}', space=vmem, size = 0x36000, scoped, tag = 'output window, operand 0, single buffered']
    %6 = vsyncpa [#allocation3], 0
    %7 = vsyncpa [#allocation4], 0
    // Predicated region
    $region2: #{tpu_custom_call.1} parent=1 // pred_check
      _
    $region3: #{tpu_custom_call.1} parent=1 // pred_check_branch
      %9 = sbr.rel (0) target = $region5
    $region4: #{tpu_custom_call.1} parent=1 // pred_region
      %11 = vsyncadd [#allocation3], 0
      %s12 = sshll.u32 %s0, 4
      %s13 = int_to_ptr.hbm [resolvable:$true] %s12
      %s14 = sshll.u32 [#allocation2], 4
      %s15 = int_to_ptr.vmem [resolvable:$true] %s14
      %20 = dma.hbm_to_vmem [thread:$0]  %s13, 6912, %s15, [#allocation3], 128, 128, 8
    $region5: #{tpu_custom_call.1} parent=1 // pred_fallthru
      _
    // Predicated region
    $region6: #{tpu_custom_call.1} parent=1 // pred_check
      _
    $region7: #{tpu_custom_call.1} parent=1 // pred_check_branch
      %22 = sbr.rel (0) target = $region9
    $region8: #{tpu_custom_call.1} parent=1 // pred_region
      %24 = dma.done [#allocation3], 6912
    $region9: #{tpu_custom_call.1} parent=1 // pred_fallthru
      _
    %v25 = vld [vmem:[#allocation2] sm:$0xff]
    %v26 = vld [vmem:[#allocation2 + $0x8] sm:$0xff]
    %v27 = vld [vmem:[#allocation2 + $0x10] sm:$0xff]
    %v28 = vld [vmem:[#allocation2 + $0x18] sm:$0xff]
    %v29 = vld [vmem:[#allocation2 + $0x20] sm:$0xff]
    %v30 = vld [vmem:[#allocation2 + $0x28] sm:$0xff]
    %v31 = vld [vmem:[#allocation2 + $0x30] sm:$0xff]
    %v32 = vld [vmem:[#allocation2 + $0x38] sm:$0xff]
    %v33 = vld [vmem:[#allocation2 + $0x40] sm:$0xff]
    %v34 = vld [vmem:[#allocation2 + $0x48] sm:$0xff]
    %v35 = vld [vmem:[#allocation2 + $0x50] sm:$0xff]
    %v36 = vld [vmem:[#allocation2 + $0x58] sm:$0xff]
    %v37 = vld [vmem:[#allocation2 + $0x60] sm:$0xff]
    %v38 = vld [vmem:[#allocation2 + $0x68] sm:$0xff]
    %v39 = vld [vmem:[#allocation2 + $0x70] sm:$0xff]
    %v40 = vld [vmem:[#allocation2 + $0x78] sm:$0xff]
    %v41 = vld [vmem:[#allocation2 + $0x80] sm:$0xff]
    %v42 = vld [vmem:[#allocation2 + $0x88] sm:$0xff]
    %v43 = vld [vmem:[#allocation2 + $0x90] sm:$0xff]
    %v44 = vld [vmem:[#allocation2 + $0x98] sm:$0xff]
    %v45 = vld [vmem:[#allocation2 + $0xa0] sm:$0xff]
    %v46 = vld [vmem:[#allocation2 + $0xa8] sm:$0xff]
    %v47 = vld [vmem:[#allocation2 + $0xb0] sm:$0xff]
    %v48 = vld [vmem:[#allocation2 + $0xb8] sm:$0xff]
    %v49 = vld [vmem:[#allocation2 + $0xc0] sm:$0xff]
    %v50 = vld [vmem:[#allocation2 + $0xc8] sm:$0xff]
    %v51 = vld [vmem:[#allocation2 + $0xd0] sm:$0xff]
    %v52 = vld [vmem:[#allocation2 + $0xd8] sm:$0xff]
    %v53 = vld [vmem:[#allocation2 + $0xe0] sm:$0xff]
    %v54 = vld [vmem:[#allocation2 + $0xe8] sm:$0xff]
    %v55 = vld [vmem:[#allocation2 + $0xf0] sm:$0xff]
    %v56 = vld [vmem:[#allocation2 + $0xf8] sm:$0xff]
    %v57 = vld [vmem:[#allocation2 + $0x100] sm:$0xff]
    %v58 = vld [vmem:[#allocation2 + $0x108] sm:$0xff]
    %v59 = vld [vmem:[#allocation2 + $0x110] sm:$0xff]
    %v60 = vld [vmem:[#allocation2 + $0x118] sm:$0xff]
    %v61 = vld [vmem:[#allocation2 + $0x120] sm:$0xff]
    %v62 = vld [vmem:[#allocation2 + $0x128] sm:$0xff]
    %v63 = vld [vmem:[#allocation2 + $0x130] sm:$0xff]
    %v64 = vld [vmem:[#allocation2 + $0x138] sm:$0xff]
    %v65 = vld [vmem:[#allocation2 + $0x140] sm:$0xff]
    %v66 = vld [vmem:[#allocation2 + $0x148] sm:$0xff]
    %v67 = vld [vmem:[#allocation2 + $0x150] sm:$0xff]
    %v68 = vld [vmem:[#allocation2 + $0x158] sm:$0xff]
    %v69 = vld [vmem:[#allocation2 + $0x160] sm:$0xff]
    %v70 = vld [vmem:[#allocation2 + $0x168] sm:$0xff]
    %v71 = vld [vmem:[#allocation2 + $0x170] sm:$0xff]
    %v72 = vld [vmem:[#allocation2 + $0x178] sm:$0xff]
    %v73 = vld [vmem:[#allocation2 + $0x180] sm:$0xff]
    %v74 = vld [vmem:[#allocation2 + $0x188] sm:$0xff]
    %v75 = vld [vmem:[#allocation2 + $0x190] sm:$0xff]
    %v76 = vld [vmem:[#allocation2 + $0x198] sm:$0xff]
    %v77 = vld [vmem:[#allocation2 + $0x1a0] sm:$0xff]
    %v78 = vld [vmem:[#allocation2 + $0x1a8] sm:$0xff]
    %v79 = vrot.slane %v25, 7
    %v80 = vrot.slane %v26, 7
    %v81 = vrot.slane %v27, 7
    %v82 = vrot.slane %v28, 7
    %v83 = vrot.slane %v29, 7
    %v84 = vrot.slane %v30, 7
    %v85 = vrot.slane %v31, 7
    %v86 = vrot.slane %v32, 7
    %v87 = vrot.slane %v33, 7
    %v88 = vrot.slane %v34, 7
    %v89 = vrot.slane %v35, 7
    %v90 = vrot.slane %v36, 7
    %v91 = vrot.slane %v37, 7
    %v92 = vrot.slane %v38, 7
    %v93 = vrot.slane %v39, 7
    %v94 = vrot.slane %v40, 7
    %v95 = vrot.slane %v41, 7
    %v96 = vrot.slane %v42, 7
    %v97 = vrot.slane %v43, 7
    %v98 = vrot.slane %v44, 7
    %v99 = vrot.slane %v45, 7
    %v100 = vrot.slane %v46, 7
    %v101 = vrot.slane %v47, 7
    %v102 = vrot.slane %v48, 7
    %v103 = vrot.slane %v49, 7
    %v104 = vrot.slane %v50, 7
    %v105 = vrot.slane %v51, 7
    %v106 = vrot.slane %v52, 7
    %v107 = vrot.slane %v53, 7
    %v108 = vrot.slane %v54, 7
    %v109 = vrot.slane %v55, 7
    %v110 = vrot.slane %v56, 7
    %v111 = vrot.slane %v57, 7
    %v112 = vrot.slane %v58, 7
    %v113 = vrot.slane %v59, 7
    %v114 = vrot.slane %v60, 7
    %v115 = vrot.slane %v61, 7
    %v116 = vrot.slane %v62, 7
    %v117 = vrot.slane %v63, 7
    %v118 = vrot.slane %v64, 7
    %v119 = vrot.slane %v65, 7
    %v120 = vrot.slane %v66, 7
    %v121 = vrot.slane %v67, 7
    %v122 = vrot.slane %v68, 7
    %v123 = vrot.slane %v69, 7
    %v124 = vrot.slane %v70, 7
    %v125 = vrot.slane %v71, 7
    %v126 = vrot.slane %v72, 7
    %v127 = vrot.slane %v73, 7
    %v128 = vrot.slane %v74, 7
    %v129 = vrot.slane %v75, 7
    %v130 = vrot.slane %v76, 7
    %v131 = vrot.slane %v77, 7
    %v132 = vrot.slane %v78, 7
    %v133 = vlaneseq
    %v134 = vshrl.u32 %v133, 7
    %vm135 = vcmp.lt.s32.totalorder %v134, 1
    %v136 = vsel %vm135, %v131, %v132
    %v137 = vsel %vm135, %v130, %v131
    %v138 = vsel %vm135, %v129, %v130
    %v139 = vsel %vm135, %v128, %v129
    %v140 = vsel %vm135, %v127, %v128
    %v141 = vsel %vm135, %v126, %v127
    %v142 = vsel %vm135, %v125, %v126
    %v143 = vsel %vm135, %v124, %v125
    %v144 = vsel %vm135, %v123, %v124
    %v145 = vsel %vm135, %v122, %v123
    %v146 = vsel %vm135, %v121, %v122
    %v147 = vsel %vm135, %v120, %v121
    %v148 = vsel %vm135, %v119, %v120
    %v149 = vsel %vm135, %v118, %v119
    %v150 = vsel %vm135, %v117, %v118
    %v151 = vsel %vm135, %v116, %v117
    %v152 = vsel %vm135, %v115, %v116
    %v153 = vsel %vm135, %v114, %v115
    %v154 = vsel %vm135, %v113, %v114
    %v155 = vsel %vm135, %v112, %v113
    %v156 = vsel %vm135, %v111, %v112
    %v157 = vsel %vm135, %v110, %v111
    %v158 = vsel %vm135, %v109, %v110
    %v159 = vsel %vm135, %v108, %v109
    %v160 = vsel %vm135, %v107, %v108
    %v161 = vsel %vm135, %v106, %v107
    %v162 = vsel %vm135, %v105, %v106
    %v163 = vsel %vm135, %v104, %v105
    %v164 = vsel %vm135, %v103, %v104
    %v165 = vsel %vm135, %v102, %v103
    %v166 = vsel %vm135, %v101, %v102
    %v167 = vsel %vm135, %v100, %v101
    %v168 = vsel %vm135, %v99, %v100
    %v169 = vsel %vm135, %v98, %v99
    %v170 = vsel %vm135, %v97, %v98
    %v171 = vsel %vm135, %v96, %v97
    %v172 = vsel %vm135, %v95, %v96
    %v173 = vsel %vm135, %v94, %v95
    %v174 = vsel %vm135, %v93, %v94
    %v175 = vsel %vm135, %v92, %v93
    %v176 = vsel %vm135, %v91, %v92
    %v177 = vsel %vm135, %v90, %v91
    %v178 = vsel %vm135, %v89, %v90
    %v179 = vsel %vm135, %v88, %v89
    %v180 = vsel %vm135, %v87, %v88
    %v181 = vsel %vm135, %v86, %v87
    %v182 = vsel %vm135, %v85, %v86
    %v183 = vsel %vm135, %v84, %v85
    %v184 = vsel %vm135, %v83, %v84
    %v185 = vsel %vm135, %v82, %v83
    %v186 = vsel %vm135, %v81, %v82
    %v187 = vsel %vm135, %v80, %v81
    %v188 = vsel %vm135, %v79, %v80
    %v189 = vsel %vm135, %v132, %v79
    %190 = vst [vmem:[#allocation5] sm:$0xff] %v189
    %191 = vst [vmem:[#allocation5 + $0x8] sm:$0xff] %v188
    %192 = vst [vmem:[#allocation5 + $0x10] sm:$0xff] %v187
    %193 = vst [vmem:[#allocation5 + $0x18] sm:$0xff] %v186
    %194 = vst [vmem:[#allocation5 + $0x20] sm:$0xff] %v185
    %195 = vst [vmem:[#allocation5 + $0x28] sm:$0xff] %v184
    %196 = vst [vmem:[#allocation5 + $0x30] sm:$0xff] %v183
    %197 = vst [vmem:[#allocation5 + $0x38] sm:$0xff] %v182
    %198 = vst [vmem:[#allocation5 + $0x40] sm:$0xff] %v181
    %199 = vst [vmem:[#allocation5 + $0x48] sm:$0xff] %v180
    %200 = vst [vmem:[#allocation5 + $0x50] sm:$0xff] %v179
    %201 = vst [vmem:[#allocation5 + $0x58] sm:$0xff] %v178
    %202 = vst [vmem:[#allocation5 + $0x60] sm:$0xff] %v177
    %203 = vst [vmem:[#allocation5 + $0x68] sm:$0xff] %v176
    %204 = vst [vmem:[#allocation5 + $0x70] sm:$0xff] %v175
    %205 = vst [vmem:[#allocation5 + $0x78] sm:$0xff] %v174
    %206 = vst [vmem:[#allocation5 + $0x80] sm:$0xff] %v173
    %207 = vst [vmem:[#allocation5 + $0x88] sm:$0xff] %v172
    %208 = vst [vmem:[#allocation5 + $0x90] sm:$0xff] %v171
    %209 = vst [vmem:[#allocation5 + $0x98] sm:$0xff] %v170
    %210 = vst [vmem:[#allocation5 + $0xa0] sm:$0xff] %v169
    %211 = vst [vmem:[#allocation5 + $0xa8] sm:$0xff] %v168
    %212 = vst [vmem:[#allocation5 + $0xb0] sm:$0xff] %v167
    %213 = vst [vmem:[#allocation5 + $0xb8] sm:$0xff] %v166
    %214 = vst [vmem:[#allocation5 + $0xc0] sm:$0xff] %v165
    %215 = vst [vmem:[#allocation5 + $0xc8] sm:$0xff] %v164
    %216 = vst [vmem:[#allocation5 + $0xd0] sm:$0xff] %v163
    %217 = vst [vmem:[#allocation5 + $0xd8] sm:$0xff] %v162
    %218 = vst [vmem:[#allocation5 + $0xe0] sm:$0xff] %v161
    %219 = vst [vmem:[#allocation5 + $0xe8] sm:$0xff] %v160
    %220 = vst [vmem:[#allocation5 + $0xf0] sm:$0xff] %v159
    %221 = vst [vmem:[#allocation5 + $0xf8] sm:$0xff] %v158
    %222 = vst [vmem:[#allocation5 + $0x100] sm:$0xff] %v157
    %223 = vst [vmem:[#allocation5 + $0x108] sm:$0xff] %v156
    %224 = vst [vmem:[#allocation5 + $0x110] sm:$0xff] %v155
    %225 = vst [vmem:[#allocation5 + $0x118] sm:$0xff] %v154
    %226 = vst [vmem:[#allocation5 + $0x120] sm:$0xff] %v153
    %227 = vst [vmem:[#allocation5 + $0x128] sm:$0xff] %v152
    %228 = vst [vmem:[#allocation5 + $0x130] sm:$0xff] %v151
    %229 = vst [vmem:[#allocation5 + $0x138] sm:$0xff] %v150
    %230 = vst [vmem:[#allocation5 + $0x140] sm:$0xff] %v149
    %231 = vst [vmem:[#allocation5 + $0x148] sm:$0xff] %v148
    %232 = vst [vmem:[#allocation5 + $0x150] sm:$0xff] %v147
    %233 = vst [vmem:[#allocation5 + $0x158] sm:$0xff] %v146
    %234 = vst [vmem:[#allocation5 + $0x160] sm:$0xff] %v145
    %235 = vst [vmem:[#allocation5 + $0x168] sm:$0xff] %v144
    %236 = vst [vmem:[#allocation5 + $0x170] sm:$0xff] %v143
    %237 = vst [vmem:[#allocation5 + $0x178] sm:$0xff] %v142
    %238 = vst [vmem:[#allocation5 + $0x180] sm:$0xff] %v141
    %239 = vst [vmem:[#allocation5 + $0x188] sm:$0xff] %v140
    %240 = vst [vmem:[#allocation5 + $0x190] sm:$0xff] %v139
    %241 = vst [vmem:[#allocation5 + $0x198] sm:$0xff] %v138
    %242 = vst [vmem:[#allocation5 + $0x1a0] sm:$0xff] %v137
    %243 = vst [vmem:[#allocation5 + $0x1a8] sm:$0xff] %v136
    // Predicated region
    $region10: #{tpu_custom_call.1} parent=1 // pred_check
      _
    $region11: #{tpu_custom_call.1} parent=1 // pred_check_branch
      %245 = sbr.rel (0) target = $region13
    $region12: #{tpu_custom_call.1} parent=1 // pred_region
      %247 = vsyncadd [#allocation4], 0
      %s248 = sshll.u32 [#allocation5], 4
      %s249 = int_to_ptr.vmem [resolvable:$true] %s248
      %s250 = sshll.u32 %s1, 4
      %s251 = int_to_ptr.hbm [resolvable:$true] %s250
      %256 = dma.vmem_to_hbm [thread:$0]  %s249, 6912, %s251, [#allocation4], 128, 128, 8
    $region13: #{tpu_custom_call.1} parent=1 // pred_fallthru
      _
    // Predicated region
    $region14: #{tpu_custom_call.1} parent=1 // pred_check
      _
    $region15: #{tpu_custom_call.1} parent=1 // pred_check_branch
      %258 = sbr.rel (0) target = $region17
    $region16: #{tpu_custom_call.1} parent=1 // pred_region
      %260 = dma.done [#allocation4], 6912
    $region17: #{tpu_custom_call.1} parent=1 // pred_fallthru
      _
    %261 = vsyncpa [#allocation3], 1
    %262 = vsyncpa [#allocation4], 1

// kernel: tpu_custom_call.1
$region0: #{tpu_custom_call.1}
  #allocation0 [shape = 'u32[]', space=smem, size = 0x4, offset = 0x4, fixed_abs, tag = 'smem constant byte address 0x4 - core index']
  #allocation1 [shape = 'u32[72,128]{1,0:T(1,128)}', space=vmem, size = 0x9000, scoped, tag = 'internal scratch']
  #allocation2 [shape = 'f32[18,18,128]{2,1,0:T(8,128)}', space=vmem, size = 0x36000, scoped, tag = 'scratch operand']
  #allocation3 [shape = 'f32[2,128]{1,0:T(2,128)}', space=vmem, size = 0x400, scoped, tag = 'scratch operand']
  #allocation4 [shape = 'f32[2,128]{1,0:T(2,128)}', space=vmem, size = 0x400, scoped, tag = 'scratch operand']
  #allocation5 [shape = 'f32[2,128]{1,0:T(2,128)}', space=vmem, size = 0x400, scoped, tag = 'scratch operand']
  #allocation6 [shape = 'f32[2,1,128]{2,1,0:T(1,128)}', space=vmem, size = 0x400, scoped, tag = 'scratch operand']
  %s0 = inlined_call_operand.hbm [shape: bf16[2,16,16,128], index: 0, kind: input, shape index: {}]
  %s1 = inlined_call_operand.hbm [shape: f32[2,16,16,128], index: 1, kind: input, shape index: {}]
  %s2 = inlined_call_operand.hbm [shape: bf16[128,128], index: 2, kind: input, shape index: {}]
  %s3 = inlined_call_operand.vmem [shape: f32[1,128], index: 3, kind: input, shape index: {}]
  %s4 = inlined_call_operand.vmem [shape: f32[1,128], index: 4, kind: input, shape index: {}]
  %s5 = inlined_call_operand.hbm [shape: f32[9,128], index: 5, kind: input, shape index: {}]
  %s6 = inlined_call_operand.vmem [shape: f32[1,128], index: 6, kind: input, shape index: {}]
  %s7 = inlined_call_operand.vmem [shape: f32[1,128], index: 7, kind: input, shape index: {}]
  %s8 = inlined_call_operand.hbm [shape: bf16[128,128], index: 8, kind: input, shape index: {}]
  %s9 = inlined_call_operand.hbm [shape: bf16[128,128], index: 9, kind: input, shape index: {}]
  %s10 = inlined_call_operand.hbm [shape: bf16[128,128], index: 10, kind: input, shape index: {}]
  %s11 = inlined_call_operand.vmem [shape: f32[1,128], index: 11, kind: input, shape index: {}]
  %s12 = inlined_call_operand.vmem [shape: f32[1,128], index: 12, kind: input, shape index: {}]
  %s13 = inlined_call_operand.hbm [shape: f32[2,16,16,128], index: 13, kind: output, shape index: {}]
  %s14 = sld [smem:[#allocation0]]
  $region133: #{tpu_custom_call.1} parent=0
    _
  %s16 = ssub.s32 1, %s14
  %s17 = scalar_select 0, %s16, %s14
  $region1: #{tpu_custom_call.1} parent=0
    #allocation7 [shape = 'u8[131072]{0}', space=vmem, size = 0x20000, scoped, tag = 'input window, operand 0']
    #allocation8 [shape = 's32[2]{0}', space=sflag, size = 0x8, scoped, tag = 'scoped memory for tpu_custom_call.1']
    #allocation9 [shape = 's32[2]{0}', space=sflag, size = 0x8, scoped, tag = 'scoped memory for tpu_custom_call.1']
    #allocation10 [shape = 'u8[262144]{0}', space=vmem, size = 0x40000, scoped, tag = 'input window, operand 1']
    #allocation11 [shape = 's32[2]{0}', space=sflag, size = 0x8, scoped, tag = 'scoped memory for tpu_custom_call.1']
    #allocation12 [shape = 'u8[32768]{0}', space=vmem, size = 0x8000, scoped, tag = 'input window, operand 2, single buffered']
    #allocation13 [shape = 'u8[8192]{0}', space=vmem, size = 0x2000, scoped, tag = 'input window, operand 5, single buffered']
    #allocation14 [shape = 's32[1]{0}', space=sflag, size = 0x4, scoped, tag = 'scoped memory for tpu_custom_call.1']
    #allocation15 [shape = 'u8[32768]{0}', space=vmem, size = 0x8000, scoped, tag = 'input window, operand 8, single buffered']
    #allocation16 [shape = 'u8[32768]{0}', space=vmem, size = 0x8000, scoped, tag = 'input window, operand 9, single buffered']
    #allocation17 [shape = 's32[1]{0}', space=sflag, size = 0x4, scoped, tag = 'scoped memory for tpu_custom_call.1']
    #allocation18 [shape = 'u8[32768]{0}', space=vmem, size = 0x8000, scoped, tag = 'input window, operand 10, single buffered']
    #allocation19 [shape = 'u8[262144]{0}', space=vmem, size = 0x40000, scoped, tag = 'output window, operand 0']
    %18 = vsyncpa [#allocation8], 0
    %s19 = scalar_lea.sflag [#allocation8], 1
    %20 = vsyncpa %s19, 0
    %21 = vsyncpa [#allocation11], 0
    %s22 = scalar_lea.sflag [#allocation11], 1
    %23 = vsyncpa %s22, 0
    %24 = vsyncpa [#allocation14], 0
    %25 = vsyncpa [#allocation17], 0
    %26 = vsyncpa [#allocation9], 0
    %s27 = scalar_lea.sflag [#allocation9], 1
    %28 = vsyncpa %s27, 0
    loop: start=0, step=1, limit=10
    $region2: #{tpu_custom_call.1} parent=1 // loop_pre_header
      _
    $region3: #{tpu_custom_call.1} parent=1 // loop_header
      %s30 = sphi 0, %s34
      %p31 = scmp.ge.s32.totalorder %s30, 10
      %s37 = sphi 0, %s49
      %s38 = sphi 0, %s45
      %s39 = sphi 0, %s37
      %s40 = sphi 0, %s38
      %s41 = sphi 0, %s39
      %s42 = sphi 0, %s40
      %s52 = sphi 0, %s54
      %s55 = sphi 0, %s52
      %s56 = sphi 0, %s55
      %s72 = sphi 0, %s56
      %s82 = sphi 0, %s84
      %s85 = sphi 0, %s82
      %s86 = sphi 0, %s85
      %s102 = sphi 0, %s86
      %s106 = sphi 0, %s106
      %s108 = sphi 0, %s106
      %s109 = sphi 0, %s108
      %s123 = sphi 0, %s109
      %s127 = sphi 0, %s127
      %s129 = sphi 0, %s127
      %s130 = sphi 0, %s129
      %s144 = sphi 0, %s130
      %s148 = sphi 0, %s148
      %s150 = sphi 0, %s148
      %s151 = sphi 0, %s150
      %s165 = sphi 0, %s151
      %s169 = sphi 0, %s169
      %s171 = sphi 0, %s169
      %s172 = sphi 0, %s171
      %s186 = sphi 0, %s172
      %s190 = sphi 0, %s190
      %s192 = sphi 0, %s190
      %s193 = sphi 0, %s192
      %s207 = sphi 0, %s193
      %s211 = sphi 0, %s211
      %s213 = sphi 0, %s211
      %s214 = sphi 0, %s213
      %s228 = sphi 0, %s214
      %s232 = sphi 0, %s232
      %s234 = sphi 0, %s232
      %s235 = sphi 0, %s234
      %s249 = sphi 0, %s235
      %s253 = sphi 0, %s253
      %s255 = sphi 0, %s253
      %s256 = sphi 0, %s255
      %s270 = sphi 0, %s256
      %s274 = sphi 0, %s274
      %s276 = sphi 0, %s274
      %s277 = sphi 0, %s276
      %s291 = sphi 0, %s277
      %s295 = sphi 0, %s295
      %s297 = sphi 0, %s295
      %s298 = sphi 0, %s297
      %s312 = sphi 0, %s298
      %s316 = sphi 0, %s316
      %s318 = sphi 0, %s316
      %s319 = sphi 0, %s318
      %s333 = sphi 0, %s319
      %s343 = sphi 0, %s345
      %s346 = sphi 0, %s343
      %s347 = sphi 0, %s346
      %s363 = sphi 0, %s347
    $region4: #{tpu_custom_call.1} parent=1 // loop_header_branch
      %33 = sbr.rel (%p31) target = $region8
    $region5: #{tpu_custom_call.1} parent=1 // loop_body
      %s35 = ssub.s32 %s30, 1
      %s36 = ssub.s32 %s30, 2
      %s43 = sadd.s32 1, %s38
      %p44 = scmp.ge.s32.totalorder %s43, 2
      %s45 = scalar_select %p44, 0, %s43
      %s46 = sadd.s32 1, %s37
      %s47 = scalar_select %p44, %s46, %s37
      %p48 = scmp.ge.s32.totalorder %s47, 4
      %s49 = scalar_select %p48, 0, %s47
      %s50 = ssub.s32 %s38, %s45
      %p51 = scmp.eq.s32.totalorder %s50, 0
      %s53 = sadd.s32 %s52, 1
      %s54 = scalar_select %p51, %s52, %s53
      %p57 = pneg %p51
      %p58 = scmp.eq.s32.totalorder %s30, 7
      %p59 = por %p57, %p58
      %p60 = scmp.ne.s32.totalorder %s52, %s55
      %p61 = scmp.eq.s32.totalorder %s30, 0
      %p62 = por %p60, %p61
      %p63 = scmp.ne.s32.totalorder %s52, %s55
      %p64 = scmp.eq.s32.totalorder %s35, 7
      %p65 = por %p63, %p64
      %p66 = scmp.ne.s32.totalorder %s55, %s56
      %p67 = scmp.eq.s32.totalorder %s35, 0
      %p68 = por %p66, %p67
      %p69 = scmp.ne.s32.totalorder %s55, %s56
      %p70 = scmp.eq.s32.totalorder %s36, 7
      %p71 = por %p69, %p70
      %p73 = scmp.ne.s32.totalorder %s56, %s72
      %p74 = scmp.eq.s32.totalorder %s36, 0
      %p75 = por %p73, %p74
      %p76 = scmp.eq.s32.totalorder %s37, 3
      %s77 = scalar_select %p76, %s38, 0
      %p78 = scmp.eq.s32.totalorder %s49, 3
      %s79 = scalar_select %p78, %s45, 0
      %s80 = ssub.s32 %s77, %s79
      %p81 = scmp.eq.s32.totalorder %s80, 0
      %s83 = sadd.s32 %s82, 1
      %s84 = scalar_select %p81, %s82, %s83
      %p87 = pneg %p81
      %p88 = scmp.eq.s32.totalorder %s30, 7
      %p89 = por %p87, %p88
      %p90 = scmp.ne.s32.totalorder %s82, %s85
      %p91 = scmp.eq.s32.totalorder %s30, 0
      %p92 = por %p90, %p91
      %p93 = scmp.ne.s32.totalorder %s82, %s85
      %p94 = scmp.eq.s32.totalorder %s35, 7
      %p95 = por %p93, %p94
      %p96 = scmp.ne.s32.totalorder %s85, %s86
      %p97 = scmp.eq.s32.totalorder %s35, 0
      %p98 = por %p96, %p97
      %p99 = scmp.ne.s32.totalorder %s85, %s86
      %p100 = scmp.eq.s32.totalorder %s36, 7
      %p101 = por %p99, %p100
      %p103 = scmp.ne.s32.totalorder %s86, %s102
      %p104 = scmp.eq.s32.totalorder %s36, 0
      %p105 = por %p103, %p104
      %s107 = sadd.s32 %s106, 1
      %p110 = scmp.eq.s32.totalorder %s30, 7
      %p111 = scmp.ne.s32.totalorder %s106, %s108
      %p112 = scmp.eq.s32.totalorder %s30, 0
      %p113 = por %p111, %p112
      %p114 = scmp.ne.s32.totalorder %s106, %s108
      %p115 = scmp.eq.s32.totalorder %s35, 7
      %p116 = por %p114, %p115
      %p117 = scmp.ne.s32.totalorder %s108, %s109
      %p118 = scmp.eq.s32.totalorder %s35, 0
      %p119 = por %p117, %p118
      %p120 = scmp.ne.s32.totalorder %s108, %s109
      %p121 = scmp.eq.s32.totalorder %s36, 7
      %p122 = por %p120, %p121
      %p124 = scmp.ne.s32.totalorder %s109, %s123
      %p125 = scmp.eq.s32.totalorder %s36, 0
      %p126 = por %p124, %p125
      %s128 = sadd.s32 %s127, 1
      %p131 = scmp.eq.s32.totalorder %s30, 7
      %p132 = scmp.ne.s32.totalorder %s127, %s129
      %p133 = scmp.eq.s32.totalorder %s30, 0
      %p134 = por %p132, %p133
      %p135 = scmp.ne.s32.totalorder %s127, %s129
      %p136 = scmp.eq.s32.totalorder %s35, 7
      %p137 = por %p135, %p136
      %p138 = scmp.ne.s32.totalorder %s129, %s130
      %p139 = scmp.eq.s32.totalorder %s35, 0
      %p140 = por %p138, %p139
      %p141 = scmp.ne.s32.totalorder %s129, %s130
      %p142 = scmp.eq.s32.totalorder %s36, 7
      %p143 = por %p141, %p142
      %p145 = scmp.ne.s32.totalorder %s130, %s144
      %p146 = scmp.eq.s32.totalorder %s36, 0
      %p147 = por %p145, %p146
      %s149 = sadd.s32 %s148, 1
      %p152 = scmp.eq.s32.totalorder %s30, 7
      %p153 = scmp.ne.s32.totalorder %s148, %s150
      %p154 = scmp.eq.s32.totalorder %s30, 0
      %p155 = por %p153, %p154
      %p156 = scmp.ne.s32.totalorder %s148, %s150
      %p157 = scmp.eq.s32.totalorder %s35, 7
      %p158 = por %p156, %p157
      %p159 = scmp.ne.s32.totalorder %s150, %s151
      %p160 = scmp.eq.s32.totalorder %s35, 0
      %p161 = por %p159, %p160
      %p162 = scmp.ne.s32.totalorder %s150, %s151
      %p163 = scmp.eq.s32.totalorder %s36, 7
      %p164 = por %p162, %p163
      %p166 = scmp.ne.s32.totalorder %s151, %s165
      %p167 = scmp.eq.s32.totalorder %s36, 0
      %p168 = por %p166, %p167
      %s170 = sadd.s32 %s169, 1
      %p173 = scmp.eq.s32.totalorder %s30, 7
      %p174 = scmp.ne.s32.totalorder %s169, %s171
      %p175 = scmp.eq.s32.totalorder %s30, 0
      %p176 = por %p174, %p175
      %p177 = scmp.ne.s32.totalorder %s169, %s171
      %p178 = scmp.eq.s32.totalorder %s35, 7
      %p179 = por %p177, %p178
      %p180 = scmp.ne.s32.totalorder %s171, %s172
      %p181 = scmp.eq.s32.totalorder %s35, 0
      %p182 = por %p180, %p181
      %p183 = scmp.ne.s32.totalorder %s171, %s172
      %p184 = scmp.eq.s32.totalorder %s36, 7
      %p185 = por %p183, %p184
      %p187 = scmp.ne.s32.totalorder %s172, %s186
      %p188 = scmp.eq.s32.totalorder %s36, 0
      %p189 = por %p187, %p188
      %s191 = sadd.s32 %s190, 1
      %p194 = scmp.eq.s32.totalorder %s30, 7
      %p195 = scmp.ne.s32.totalorder %s190, %s192
      %p196 = scmp.eq.s32.totalorder %s30, 0
      %p197 = por %p195, %p196
      %p198 = scmp.ne.s32.totalorder %s190, %s192
      %p199 = scmp.eq.s32.totalorder %s35, 7
      %p200 = por %p198, %p199
      %p201 = scmp.ne.s32.totalorder %s192, %s193
      %p202 = scmp.eq.s32.totalorder %s35, 0
      %p203 = por %p201, %p202
      %p204 = scmp.ne.s32.totalorder %s192, %s193
      %p205 = scmp.eq.s32.totalorder %s36, 7
      %p206 = por %p204, %p205
      %p208 = scmp.ne.s32.totalorder %s193, %s207
      %p209 = scmp.eq.s32.totalorder %s36, 0
      %p210 = por %p208, %p209
      %s212 = sadd.s32 %s211, 1
      %p215 = scmp.eq.s32.totalorder %s30, 7
      %p216 = scmp.ne.s32.totalorder %s211, %s213
      %p217 = scmp.eq.s32.totalorder %s30, 0
      %p218 = por %p216, %p217
      %p219 = scmp.ne.s32.totalorder %s211, %s213
      %p220 = scmp.eq.s32.totalorder %s35, 7
      %p221 = por %p219, %p220
      %p222 = scmp.ne.s32.totalorder %s213, %s214
      %p223 = scmp.eq.s32.totalorder %s35, 0
      %p224 = por %p222, %p223
      %p225 = scmp.ne.s32.totalorder %s213, %s214
      %p226 = scmp.eq.s32.totalorder %s36, 7
      %p227 = por %p225, %p226
      %p229 = scmp.ne.s32.totalorder %s214, %s228
      %p230 = scmp.eq.s32.totalorder %s36, 0
      %p231 = por %p229, %p230
      %s233 = sadd.s32 %s232, 1
      %p236 = scmp.eq.s32.totalorder %s30, 7
      %p237 = scmp.ne.s32.totalorder %s232, %s234
      %p238 = scmp.eq.s32.totalorder %s30, 0
      %p239 = por %p237, %p238
      %p240 = scmp.ne.s32.totalorder %s232, %s234
      %p241 = scmp.eq.s32.totalorder %s35, 7
      %p242 = por %p240, %p241
      %p243 = scmp.ne.s32.totalorder %s234, %s235
      %p244 = scmp.eq.s32.totalorder %s35, 0
      %p245 = por %p243, %p244
      %p246 = scmp.ne.s32.totalorder %s234, %s235
      %p247 = scmp.eq.s32.totalorder %s36, 7
      %p248 = por %p246, %p247
      %p250 = scmp.ne.s32.totalorder %s235, %s249
      %p251 = scmp.eq.s32.totalorder %s36, 0
      %p252 = por %p250, %p251
      %s254 = sadd.s32 %s253, 1
      %p257 = scmp.eq.s32.totalorder %s30, 7
      %p258 = scmp.ne.s32.totalorder %s253, %s255
      %p259 = scmp.eq.s32.totalorder %s30, 0
      %p260 = por %p258, %p259
      %p261 = scmp.ne.s32.totalorder %s253, %s255
      %p262 = scmp.eq.s32.totalorder %s35, 7
      %p263 = por %p261, %p262
      %p264 = scmp.ne.s32.totalorder %s255, %s256
      %p265 = scmp.eq.s32.totalorder %s35, 0
      %p266 = por %p264, %p265
      %p267 = scmp.ne.s32.totalorder %s255, %s256
      %p268 = scmp.eq.s32.totalorder %s36, 7
      %p269 = por %p267, %p268
      %p271 = scmp.ne.s32.totalorder %s256, %s270
      %p272 = scmp.eq.s32.totalorder %s36, 0
      %p273 = por %p271, %p272
      %s275 = sadd.s32 %s274, 1
      %p278 = scmp.eq.s32.totalorder %s30, 7
      %p279 = scmp.ne.s32.totalorder %s274, %s276
      %p280 = scmp.eq.s32.totalorder %s30, 0
      %p281 = por %p279, %p280
      %p282 = scmp.ne.s32.totalorder %s274, %s276
      %p283 = scmp.eq.s32.totalorder %s35, 7
      %p284 = por %p282, %p283
      %p285 = scmp.ne.s32.totalorder %s276, %s277
      %p286 = scmp.eq.s32.totalorder %s35, 0
      %p287 = por %p285, %p286
      %p288 = scmp.ne.s32.totalorder %s276, %s277
      %p289 = scmp.eq.s32.totalorder %s36, 7
      %p290 = por %p288, %p289
      %p292 = scmp.ne.s32.totalorder %s277, %s291
      %p293 = scmp.eq.s32.totalorder %s36, 0
      %p294 = por %p292, %p293
      %s296 = sadd.s32 %s295, 1
      %p299 = scmp.eq.s32.totalorder %s30, 7
      %p300 = scmp.ne.s32.totalorder %s295, %s297
      %p301 = scmp.eq.s32.totalorder %s30, 0
      %p302 = por %p300, %p301
      %p303 = scmp.ne.s32.totalorder %s295, %s297
      %p304 = scmp.eq.s32.totalorder %s35, 7
      %p305 = por %p303, %p304
      %p306 = scmp.ne.s32.totalorder %s297, %s298
      %p307 = scmp.eq.s32.totalorder %s35, 0
      %p308 = por %p306, %p307
      %p309 = scmp.ne.s32.totalorder %s297, %s298
      %p310 = scmp.eq.s32.totalorder %s36, 7
      %p311 = por %p309, %p310
      %p313 = scmp.ne.s32.totalorder %s298, %s312
      %p314 = scmp.eq.s32.totalorder %s36, 0
      %p315 = por %p313, %p314
      %s317 = sadd.s32 %s316, 1
      %p320 = scmp.eq.s32.totalorder %s30, 7
      %p321 = scmp.ne.s32.totalorder %s316, %s318
      %p322 = scmp.eq.s32.totalorder %s30, 0
      %p323 = por %p321, %p322
      %p324 = scmp.ne.s32.totalorder %s316, %s318
      %p325 = scmp.eq.s32.totalorder %s35, 7
      %p326 = por %p324, %p325
      %p327 = scmp.ne.s32.totalorder %s318, %s319
      %p328 = scmp.eq.s32.totalorder %s35, 0
      %p329 = por %p327, %p328
      %p330 = scmp.ne.s32.totalorder %s318, %s319
      %p331 = scmp.eq.s32.totalorder %s36, 7
      %p332 = por %p330, %p331
      %p334 = scmp.ne.s32.totalorder %s319, %s333
      %p335 = scmp.eq.s32.totalorder %s36, 0
      %p336 = por %p334, %p335
      %p337 = scmp.eq.s32.totalorder %s37, 3
      %s338 = scalar_select %p337, %s38, 0
      %p339 = scmp.eq.s32.totalorder %s49, 3
      %s340 = scalar_select %p339, %s45, 0
      %s341 = ssub.s32 %s338, %s340
      %p342 = scmp.eq.s32.totalorder %s341, 0
      %s344 = sadd.s32 %s343, 1
      %s345 = scalar_select %p342, %s343, %s344
      %p348 = pneg %p342
      %p349 = scmp.eq.s32.totalorder %s30, 7
      %p350 = por %p348, %p349
      %p351 = scmp.ne.s32.totalorder %s343, %s346
      %p352 = scmp.eq.s32.totalorder %s30, 0
      %p353 = por %p351, %p352
      %p354 = scmp.ne.s32.totalorder %s343, %s346
      %p355 = scmp.eq.s32.totalorder %s35, 7
      %p356 = por %p354, %p355
      %p357 = scmp.ne.s32.totalorder %s346, %s347
      %p358 = scmp.eq.s32.totalorder %s35, 0
      %p359 = por %p357, %p358
      %p360 = scmp.ne.s32.totalorder %s346, %s347
      %p361 = scmp.eq.s32.totalorder %s36, 7
      %p362 = por %p360, %p361
      %p364 = scmp.ne.s32.totalorder %s347, %s363
      %p365 = scmp.eq.s32.totalorder %s36, 0
      %p366 = por %p364, %p365
      %p367 = scmp.le.s32.totalorder 1, %s30
      %p368 = scmp.lt.s32.totalorder %s30, 9
      %p369 = pnand %p367, %p368
      %p370 = pneg %p369
      // Predicated region
      $region9: #{tpu_custom_call.1} parent=5 // pred_check
        _
      $region10: #{tpu_custom_call.1} parent=5 // pred_check_branch
        %372 = sbr.rel (%p369) target = $region12
      $region11: #{tpu_custom_call.1} parent=5 // pred_region
        %s373 = ssub.s32 %s30, 1
        // Predicated region
        $region13: #{tpu_custom_call.1} parent=11 // pred_check
          %p374 = pneg %p119
        $region14: #{tpu_custom_call.1} parent=11 // pred_check_branch
          %376 = sbr.rel (%p374) target = $region16
        $region15: #{tpu_custom_call.1} parent=11 // pred_region
          %378 = vsyncadd [#allocation11], 0
          %s379 = sshll.u32 %s2, 4
          %s380 = int_to_ptr.hbm [resolvable:$true] %s379
          %s381 = sshll.u32 [#allocation12], 4
          %s382 = int_to_ptr.vmem [resolvable:$true] %s381
          %387 = dma.hbm_to_vmem [thread:$0]  %s380, 1024, %s382, [#allocation11], 64, 64, 4
        $region16: #{tpu_custom_call.1} parent=11 // pred_fallthru
          _
        // Predicated region
        $region17: #{tpu_custom_call.1} parent=11 // pred_check
          %p388 = pneg %p140
        $region18: #{tpu_custom_call.1} parent=11 // pred_check_branch
          %390 = sbr.rel (%p388) target = $region20
        $region19: #{tpu_custom_call.1} parent=11 // pred_region
          _
        $region20: #{tpu_custom_call.1} parent=11 // pred_fallthru
          _
        // Predicated region
        $region21: #{tpu_custom_call.1} parent=11 // pred_check
          %p391 = pneg %p161
        $region22: #{tpu_custom_call.1} parent=11 // pred_check_branch
          %393 = sbr.rel (%p391) target = $region24
        $region23: #{tpu_custom_call.1} parent=11 // pred_region
          _
        $region24: #{tpu_custom_call.1} parent=11 // pred_fallthru
          _
        // Predicated region
        $region25: #{tpu_custom_call.1} parent=11 // pred_check
          %p394 = pneg %p182
        $region26: #{tpu_custom_call.1} parent=11 // pred_check_branch
          %396 = sbr.rel (%p394) target = $region28
        $region27: #{tpu_custom_call.1} parent=11 // pred_region
          %398 = vsyncadd [#allocation14], 0
          %s399 = sshll.u32 %s5, 4
          %s400 = int_to_ptr.hbm [resolvable:$true] %s399
          %s401 = sshll.u32 [#allocation13], 4
          %s402 = int_to_ptr.vmem [resolvable:$true] %s401
          %407 = dma.hbm_to_vmem [thread:$0]  %s400, 256, %s402, [#allocation14], 128, 128, 8
        $region28: #{tpu_custom_call.1} parent=11 // pred_fallthru
          _
        // Predicated region
        $region29: #{tpu_custom_call.1} parent=11 // pred_check
          %p408 = pneg %p203
        $region30: #{tpu_custom_call.1} parent=11 // pred_check_branch
          %410 = sbr.rel (%p408) target = $region32
        $region31: #{tpu_custom_call.1} parent=11 // pred_region
          _
        $region32: #{tpu_custom_call.1} parent=11 // pred_fallthru
          _
        // Predicated region
        $region33: #{tpu_custom_call.1} parent=11 // pred_check
          %p411 = pneg %p224
        $region34: #{tpu_custom_call.1} parent=11 // pred_check_branch
          %413 = sbr.rel (%p411) target = $region36
        $region35: #{tpu_custom_call.1} parent=11 // pred_region
          _
        $region36: #{tpu_custom_call.1} parent=11 // pred_fallthru
          _
        // Predicated region
        $region37: #{tpu_custom_call.1} parent=11 // pred_check
          %p414 = pneg %p245
        $region38: #{tpu_custom_call.1} parent=11 // pred_check_branch
          %416 = sbr.rel (%p414) target = $region40
        $region39: #{tpu_custom_call.1} parent=11 // pred_region
          %418 = vsyncadd [#allocation14], 0
          %s419 = sshll.u32 %s8, 4
          %s420 = int_to_ptr.hbm [resolvable:$true] %s419
          %s421 = sshll.u32 [#allocation15], 4
          %s422 = int_to_ptr.vmem [resolvable:$true] %s421
          %427 = dma.hbm_to_vmem [thread:$0]  %s420, 1024, %s422, [#allocation14], 64, 64, 4
        $region40: #{tpu_custom_call.1} parent=11 // pred_fallthru
          _
        // Predicated region
        $region41: #{tpu_custom_call.1} parent=11 // pred_check
          %p428 = pneg %p266
        $region42: #{tpu_custom_call.1} parent=11 // pred_check_branch
          %430 = sbr.rel (%p428) target = $region44
        $region43: #{tpu_custom_call.1} parent=11 // pred_region
          %432 = vsyncadd [#allocation17], 0
          %s433 = sshll.u32 %s9, 4
          %s434 = int_to_ptr.hbm [resolvable:$true] %s433
          %s435 = sshll.u32 [#allocation16], 4
          %s436 = int_to_ptr.vmem [resolvable:$true] %s435
          %441 = dma.hbm_to_vmem [thread:$0]  %s434, 1024, %s436, [#allocation17], 64, 64, 4
        $region44: #{tpu_custom_call.1} parent=11 // pred_fallthru
          _
        // Predicated region
        $region45: #{tpu_custom_call.1} parent=11 // pred_check
          %p442 = pneg %p287
        $region46: #{tpu_custom_call.1} parent=11 // pred_check_branch
          %444 = sbr.rel (%p442) target = $region48
        $region47: #{tpu_custom_call.1} parent=11 // pred_region
          %446 = vsyncadd [#allocation17], 0
          %s447 = sshll.u32 %s10, 4
          %s448 = int_to_ptr.hbm [resolvable:$true] %s447
          %s449 = sshll.u32 [#allocation18], 4
          %s450 = int_to_ptr.vmem [resolvable:$true] %s449
          %455 = dma.hbm_to_vmem [thread:$0]  %s448, 1024, %s450, [#allocation17], 64, 64, 4
        $region48: #{tpu_custom_call.1} parent=11 // pred_fallthru
          _
        // Predicated region
        $region49: #{tpu_custom_call.1} parent=11 // pred_check
          %p456 = pneg %p308
        $region50: #{tpu_custom_call.1} parent=11 // pred_check_branch
          %458 = sbr.rel (%p456) target = $region52
        $region51: #{tpu_custom_call.1} parent=11 // pred_region
          _
        $region52: #{tpu_custom_call.1} parent=11 // pred_fallthru
          _
        // Predicated region
        $region53: #{tpu_custom_call.1} parent=11 // pred_check
          %p459 = pneg %p329
        $region54: #{tpu_custom_call.1} parent=11 // pred_check_branch
          %461 = sbr.rel (%p459) target = $region56
        $region55: #{tpu_custom_call.1} parent=11 // pred_region
          _
        $region56: #{tpu_custom_call.1} parent=11 // pred_fallthru
          _
      $region12: #{tpu_custom_call.1} parent=5 // pred_fallthru
        _
      %p462 = scmp.lt.s32.totalorder %s30, 8
      // Predicated region
      $region57: #{tpu_custom_call.1} parent=5 // pred_check
        %p463 = pneg %p462
      $region58: #{tpu_custom_call.1} parent=5 // pred_check_branch
        %465 = sbr.rel (%p463) target = $region60
      $region59: #{tpu_custom_call.1} parent=5 // pred_region
        // Predicated region
        $region61: #{tpu_custom_call.1} parent=59 // pred_check
          %p466 = pneg %p62
        $region62: #{tpu_custom_call.1} parent=59 // pred_check_branch
          %468 = sbr.rel (%p466) target = $region64
        $region63: #{tpu_custom_call.1} parent=59 // pred_region
          %s469 = sand.u32 %s52, 1
          %s470 = scalar_lea.sflag [#allocation8], %s469
          %s471 = sand.u32 %s52, 1
          %s472 = smul.addr %s471, 128
          %s473 = scalar_lea.vmem [#allocation7], %s472
          %475 = vsyncadd %s470, 0
          %s476 = smul.addr %s38, 32
          %s477 = smul.addr %s476, 4
          %s478 = scalar_lea.hbm %s0, %s477
          %s479 = sshll.u32 %s478, 4
          %s480 = int_to_ptr.hbm [resolvable:$true] %s479
          %s481 = sshll.u32 %s473, 4
          %s482 = int_to_ptr.vmem [resolvable:$true] %s481
          %487 = dma.hbm_to_vmem [thread:$0]  %s480, 2048, %s482, %s470, 64, 64, 4
        $region64: #{tpu_custom_call.1} parent=59 // pred_fallthru
          _
        // Predicated region
        $region65: #{tpu_custom_call.1} parent=59 // pred_check
          %p488 = pneg %p92
        $region66: #{tpu_custom_call.1} parent=59 // pred_check_branch
          %490 = sbr.rel (%p488) target = $region68
        $region67: #{tpu_custom_call.1} parent=59 // pred_region
          %s491 = sand.u32 %s30, 1
          %s492 = scalar_lea.sflag [#allocation11], %s491
          %s493 = sand.u32 %s82, 1
          %s494 = smul.addr %s493, 256
          %s495 = scalar_lea.vmem [#allocation10], %s494
          %p496 = scmp.eq.s32.totalorder %s37, 3
          %s497 = scalar_select %p496, %s38, 0
          %499 = vsyncadd %s492, 0
          %s500 = smul.addr %s497, 32
          %s501 = smul.addr %s500, 8
          %s502 = scalar_lea.hbm %s1, %s501
          %s503 = sshll.u32 %s502, 4
          %s504 = int_to_ptr.hbm [resolvable:$true] %s503
          %s505 = sshll.u32 %s495, 4
          %s506 = int_to_ptr.vmem [resolvable:$true] %s505
          %511 = dma.hbm_to_vmem [thread:$0]  %s504, 4096, %s506, %s492, 128, 128, 8
        $region68: #{tpu_custom_call.1} parent=59 // pred_fallthru
          _
      $region60: #{tpu_custom_call.1} parent=5 // pred_fallthru
        _
      %p512 = scmp.le.s32.totalorder 1, %s30
      %p513 = scmp.lt.s32.totalorder %s30, 9
      %p514 = pnand %p512, %p513
      %p515 = pneg %p514
      // Predicated region
      $region69: #{tpu_custom_call.1} parent=5 // pred_check
        _
      $region70: #{tpu_custom_call.1} parent=5 // pred_check_branch
        %517 = sbr.rel (%p514) target = $region72
      $region71: #{tpu_custom_call.1} parent=5 // pred_region
        %s518 = ssub.s32 %s30, 1
        %s519 = sand.u32 %s55, 1
        %s520 = scalar_lea.sflag [#allocation8], %s519
        %s521 = sand.u32 %s55, 1
        %s522 = smul.addr %s521, 128
        %s523 = scalar_lea.vmem [#allocation7], %s522
        // Predicated region
        $region73: #{tpu_custom_call.1} parent=71 // pred_check
          %p524 = pneg %p68
        $region74: #{tpu_custom_call.1} parent=71 // pred_check_branch
          %526 = sbr.rel (%p524) target = $region76
        $region75: #{tpu_custom_call.1} parent=71 // pred_region
          %528 = dma.done %s520, 2048
        $region76: #{tpu_custom_call.1} parent=71 // pred_fallthru
          _
        %s529 = sand.u32 %s35, 1
        %s530 = scalar_lea.sflag [#allocation11], %s529
        %s531 = sand.u32 %s85, 1
        %s532 = smul.addr %s531, 256
        %s533 = scalar_lea.vmem [#allocation10], %s532
        // Predicated region
        $region77: #{tpu_custom_call.1} parent=71 // pred_check
          %p534 = pneg %p98
        $region78: #{tpu_custom_call.1} parent=71 // pred_check_branch
          %536 = sbr.rel (%p534) target = $region80
        $region79: #{tpu_custom_call.1} parent=71 // pred_region
          %538 = dma.done %s530, 4096
        $region80: #{tpu_custom_call.1} parent=71 // pred_fallthru
          _
        // Predicated region
        $region81: #{tpu_custom_call.1} parent=71 // pred_check
          %p539 = pneg %p119
        $region82: #{tpu_custom_call.1} parent=71 // pred_check_branch
          %541 = sbr.rel (%p539) target = $region84
        $region83: #{tpu_custom_call.1} parent=71 // pred_region
          %543 = dma.done [#allocation11], 1024
        $region84: #{tpu_custom_call.1} parent=71 // pred_fallthru
          _
        // Predicated region
        $region85: #{tpu_custom_call.1} parent=71 // pred_check
          %p544 = pneg %p182
        $region86: #{tpu_custom_call.1} parent=71 // pred_check_branch
          %546 = sbr.rel (%p544) target = $region88
        $region87: #{tpu_custom_call.1} parent=71 // pred_region
          %548 = dma.done [#allocation14], 256
        $region88: #{tpu_custom_call.1} parent=71 // pred_fallthru
          _
        // Predicated region
        $region89: #{tpu_custom_call.1} parent=71 // pred_check
          %p549 = pneg %p245
        $region90: #{tpu_custom_call.1} parent=71 // pred_check_branch
          %551 = sbr.rel (%p549) target = $region92
        $region91: #{tpu_custom_call.1} parent=71 // pred_region
          %553 = dma.done [#allocation14], 1024
        $region92: #{tpu_custom_call.1} parent=71 // pred_fallthru
          _
        // Predicated region
        $region93: #{tpu_custom_call.1} parent=71 // pred_check
          %p554 = pneg %p266
        $region94: #{tpu_custom_call.1} parent=71 // pred_check_branch
          %556 = sbr.rel (%p554) target = $region96
        $region95: #{tpu_custom_call.1} parent=71 // pred_region
          %558 = dma.done [#allocation17], 1024
        $region96: #{tpu_custom_call.1} parent=71 // pred_fallthru
          _
        // Predicated region
        $region97: #{tpu_custom_call.1} parent=71 // pred_check
          %p559 = pneg %p287
        $region98: #{tpu_custom_call.1} parent=71 // pred_check_branch
          %561 = sbr.rel (%p559) target = $region100
        $region99: #{tpu_custom_call.1} parent=71 // pred_region
          %563 = dma.done [#allocation17], 1024
        $region100: #{tpu_custom_call.1} parent=71 // pred_fallthru
          _
        %s564 = sand.u32 %s55, 1
        %s565 = scalar_lea.sflag [#allocation8], %s564
        %s566 = sand.u32 %s55, 1
        %s567 = smul.addr %s566, 128
        %s568 = scalar_lea.vmem [#allocation7], %s567
        %p569 = pneg %p68
        %p570 = pneg %p65
        %s571 = sand.u32 %s35, 1
        %s572 = scalar_lea.sflag [#allocation11], %s571
        %s573 = sand.u32 %s85, 1
        %s574 = smul.addr %s573, 256
        %s575 = scalar_lea.vmem [#allocation10], %s574
        %p576 = pneg %p98
        %p577 = pneg %p95
        %p578 = pneg %p119
        %p579 = pneg %p116
        %p580 = pneg %p140
        %p581 = pneg %p137
        %p582 = pneg %p161
        %p583 = pneg %p158
        %p584 = pneg %p182
        %p585 = pneg %p179
        %p586 = pneg %p203
        %p587 = pneg %p200
        %p588 = pneg %p224
        %p589 = pneg %p221
        %p590 = pneg %p245
        %p591 = pneg %p242
        %p592 = pneg %p266
        %p593 = pneg %p263
        %p594 = pneg %p287
        %p595 = pneg %p284
        %p596 = pneg %p308
        %p597 = pneg %p305
        %p598 = pneg %p329
        %p599 = pneg %p326
        %p600 = pneg %p359
        %p601 = pneg %p356
        %s602 = sand.u32 %s346, 1
        %s603 = scalar_lea.sflag [#allocation9], %s602
        %s604 = sand.u32 %s346, 1
        %s605 = smul.addr %s604, 256
        %s606 = scalar_lea.vmem [#allocation19], %s605
        %p607 = scmp.eq.s32.totalorder %s39, 3
        %s608 = scalar_select %p607, %s40, 0
        %p609 = scmp.eq.s32.totalorder %s39, 3
        %s610 = scalar_select %p609, %s40, 0
        %p611 = scmp.eq.s32.totalorder %s39, 0
        %p612 = scmp.eq.s32.totalorder %s40, 0
        %p613 = pnand %p611, %p612
        %p614 = pneg %p613
        // Predicated region
        $region101: #{tpu_custom_call.1} parent=71 // pred_check
          _
        $region102: #{tpu_custom_call.1} parent=71 // pred_check_branch
          %616 = sbr.rel (%p613) target = $region104
        $region103: #{tpu_custom_call.1} parent=71 // pred_region
          %617 = vst [vmem:[#allocation3] sm:$0x3] 0.0
          %618 = vst [vmem:[#allocation4] sm:$0x3] 0.0
          %619 = vst [vmem:[#allocation5] sm:$0x3] 0.0
          %620 = vst [vmem:[#allocation2] sm:$0xff] 0.0
          %621 = vst [vmem:[#allocation2 + $0x8] sm:$0xff] 0.0
          %622 = vst [vmem:[#allocation2 + $0x10] sm:$0x3] 0.0
          %623 = vst [vmem:[#allocation2 + $0x18] sm:$0xff] 0.0
          %624 = vst [vmem:[#allocation2 + $0x20] sm:$0xff] 0.0
          %625 = vst [vmem:[#allocation2 + $0x28] sm:$0x3] 0.0
          %626 = vst [vmem:[#allocation2 + $0x30] sm:$0xff] 0.0
          %627 = vst [vmem:[#allocation2 + $0x38] sm:$0xff] 0.0
          %628 = vst [vmem:[#allocation2 + $0x40] sm:$0x3] 0.0
          %629 = vst [vmem:[#allocation2 + $0x48] sm:$0xff] 0.0
          %630 = vst [vmem:[#allocation2 + $0x50] sm:$0xff] 0.0
          %631 = vst [vmem:[#allocation2 + $0x58] sm:$0x3] 0.0
          %632 = vst [vmem:[#allocation2 + $0x60] sm:$0xff] 0.0
          %633 = vst [vmem:[#allocation2 + $0x68] sm:$0xff] 0.0
          %634 = vst [vmem:[#allocation2 + $0x70] sm:$0x3] 0.0
          %635 = vst [vmem:[#allocation2 + $0x78] sm:$0xff] 0.0
          %636 = vst [vmem:[#allocation2 + $0x80] sm:$0xff] 0.0
          %637 = vst [vmem:[#allocation2 + $0x88] sm:$0x3] 0.0
          %638 = vst [vmem:[#allocation2 + $0x90] sm:$0xff] 0.0
          %639 = vst [vmem:[#allocation2 + $0x98] sm:$0xff] 0.0
          %640 = vst [vmem:[#allocation2 + $0xa0] sm:$0x3] 0.0
          %641 = vst [vmem:[#allocation2 + $0xa8] sm:$0xff] 0.0
          %642 = vst [vmem:[#allocation2 + $0xb0] sm:$0xff] 0.0
          %643 = vst [vmem:[#allocation2 + $0xb8] sm:$0x3] 0.0
          %644 = vst [vmem:[#allocation2 + $0xc0] sm:$0xff] 0.0
          %645 = vst [vmem:[#allocation2 + $0xc8] sm:$0xff] 0.0
          %646 = vst [vmem:[#allocation2 + $0xd0] sm:$0x3] 0.0
          %647 = vst [vmem:[#allocation2 + $0xd8] sm:$0xff] 0.0
          %648 = vst [vmem:[#allocation2 + $0xe0] sm:$0xff] 0.0
          %649 = vst [vmem:[#allocation2 + $0xe8] sm:$0x3] 0.0
          %650 = vst [vmem:[#allocation2 + $0xf0] sm:$0xff] 0.0
          %651 = vst [vmem:[#allocation2 + $0xf8] sm:$0xff] 0.0
          %652 = vst [vmem:[#allocation2 + $0x100] sm:$0x3] 0.0
          %653 = vst [vmem:[#allocation2 + $0x108] sm:$0xff] 0.0
          %654 = vst [vmem:[#allocation2 + $0x110] sm:$0xff] 0.0
          %655 = vst [vmem:[#allocation2 + $0x118] sm:$0x3] 0.0
          %656 = vst [vmem:[#allocation2 + $0x120] sm:$0xff] 0.0
          %657 = vst [vmem:[#allocation2 + $0x128] sm:$0xff] 0.0
          %658 = vst [vmem:[#allocation2 + $0x130] sm:$0x3] 0.0
          %659 = vst [vmem:[#allocation2 + $0x138] sm:$0xff] 0.0
          %660 = vst [vmem:[#allocation2 + $0x140] sm:$0xff] 0.0
          %661 = vst [vmem:[#allocation2 + $0x148] sm:$0x3] 0.0
          %662 = vst [vmem:[#allocation2 + $0x150] sm:$0xff] 0.0
          %663 = vst [vmem:[#allocation2 + $0x158] sm:$0xff] 0.0
          %664 = vst [vmem:[#allocation2 + $0x160] sm:$0x3] 0.0
          %665 = vst [vmem:[#allocation2 + $0x168] sm:$0xff] 0.0
          %666 = vst [vmem:[#allocation2 + $0x170] sm:$0xff] 0.0
          %667 = vst [vmem:[#allocation2 + $0x178] sm:$0x3] 0.0
          %668 = vst [vmem:[#allocation2 + $0x180] sm:$0xff] 0.0
          %669 = vst [vmem:[#allocation2 + $0x188] sm:$0xff] 0.0
          %670 = vst [vmem:[#allocation2 + $0x190] sm:$0x3] 0.0
          %671 = vst [vmem:[#allocation2 + $0x198] sm:$0xff] 0.0
          %672 = vst [vmem:[#allocation2 + $0x1a0] sm:$0xff] 0.0
          %673 = vst [vmem:[#allocation2 + $0x1a8] sm:$0x3] 0.0
        $region104: #{tpu_custom_call.1} parent=71 // pred_fallthru
          _
        // Predicated region
        $region105: #{tpu_custom_call.1} parent=71 // pred_check
          %p674 = pneg %p611
        $region106: #{tpu_custom_call.1} parent=71 // pred_check_branch
          %676 = sbr.rel (%p674) target = $region108
        $region107: #{tpu_custom_call.1} parent=71 // pred_region
          %v677 = vld [vmem:[%s523] sm:$0xf]
          %v678 = vld [vmem:[%s523 + $0x4] sm:$0xf]
          %v679 = vld [vmem:[%s523 + $0x8] sm:$0xf]
          %v680 = vld [vmem:[%s523 + $0xc] sm:$0xf]
          %v681 = vld [vmem:[%s523 + $0x10] sm:$0xf]
          %v682 = vld [vmem:[%s523 + $0x14] sm:$0xf]
          %v683 = vld [vmem:[%s523 + $0x18] sm:$0xf]
          %v684 = vld [vmem:[%s523 + $0x1c] sm:$0xf]
          %v685 = vld [vmem:[%s523 + $0x20] sm:$0xf]
          %v686 = vld [vmem:[%s523 + $0x24] sm:$0xf]
          %v687 = vld [vmem:[%s523 + $0x28] sm:$0xf]
          %v688 = vld [vmem:[%s523 + $0x2c] sm:$0xf]
          %v689 = vld [vmem:[%s523 + $0x30] sm:$0xf]
          %v690 = vld [vmem:[%s523 + $0x34] sm:$0xf]
          %v691 = vld [vmem:[%s523 + $0x38] sm:$0xf]
          %v692 = vld [vmem:[%s523 + $0x3c] sm:$0xf]
          %v693 = vld [vmem:[%s523 + $0x40] sm:$0xf]
          %v694 = vld [vmem:[%s523 + $0x44] sm:$0xf]
          %v695 = vld [vmem:[%s523 + $0x48] sm:$0xf]
          %v696 = vld [vmem:[%s523 + $0x4c] sm:$0xf]
          %v697 = vld [vmem:[%s523 + $0x50] sm:$0xf]
          %v698 = vld [vmem:[%s523 + $0x54] sm:$0xf]
          %v699 = vld [vmem:[%s523 + $0x58] sm:$0xf]
          %v700 = vld [vmem:[%s523 + $0x5c] sm:$0xf]
          %v701 = vld [vmem:[%s523 + $0x60] sm:$0xf]
          %v702 = vld [vmem:[%s523 + $0x64] sm:$0xf]
          %v703 = vld [vmem:[%s523 + $0x68] sm:$0xf]
          %v704 = vld [vmem:[%s523 + $0x6c] sm:$0xf]
          %v705 = vld [vmem:[%s523 + $0x70] sm:$0xf]
          %v706 = vld [vmem:[%s523 + $0x74] sm:$0xf]
          %v707 = vld [vmem:[%s523 + $0x78] sm:$0xf]
          %v708 = vld [vmem:[%s523 + $0x7c] sm:$0xf]
          %v709 = vld [vmem:[#allocation12] sm:$0xf]
          %v710 = vld [vmem:[#allocation12 + $0x4] sm:$0xf]
          %v711 = vld [vmem:[#allocation12 + $0x8] sm:$0xf]
          %v712 = vld [vmem:[#allocation12 + $0xc] sm:$0xf]
          %v713 = vld [vmem:[#allocation12 + $0x10] sm:$0xf]
          %v714 = vld [vmem:[#allocation12 + $0x14] sm:$0xf]
          %v715 = vld [vmem:[#allocation12 + $0x18] sm:$0xf]
          %v716 = vld [vmem:[#allocation12 + $0x1c] sm:$0xf]
          %v717 = vld [vmem:[#allocation12 + $0x20] sm:$0xf]
          %v718 = vld [vmem:[#allocation12 + $0x24] sm:$0xf]
          %v719 = vld [vmem:[#allocation12 + $0x28] sm:$0xf]
          %v720 = vld [vmem:[#allocation12 + $0x2c] sm:$0xf]
          %v721 = vld [vmem:[#allocation12 + $0x30] sm:$0xf]
          %v722 = vld [vmem:[#allocation12 + $0x34] sm:$0xf]
          %v723 = vld [vmem:[#allocation12 + $0x38] sm:$0xf]
          %v724 = vld [vmem:[#allocation12 + $0x3c] sm:$0xf]
          %v757 = vunpack.c.l.b16 %v677
          %v758 = vunpack.c.l.b16 %v678
          %v759 = vunpack.c.l.b16 %v679
          %v760 = vunpack.c.l.b16 %v680
          %v761 = vunpack.c.l.b16 %v681
          %v762 = vunpack.c.l.b16 %v682
          %v763 = vunpack.c.l.b16 %v683
          %v764 = vunpack.c.l.b16 %v684
          %v765 = vunpack.c.l.b16 %v685
          %v766 = vunpack.c.l.b16 %v686
          %v767 = vunpack.c.l.b16 %v687
          %v768 = vunpack.c.l.b16 %v688
          %v769 = vunpack.c.l.b16 %v689
          %v770 = vunpack.c.l.b16 %v690
          %v771 = vunpack.c.l.b16 %v691
          %v772 = vunpack.c.l.b16 %v692
          %v773 = vunpack.c.l.b16 %v693
          %v774 = vunpack.c.l.b16 %v694
          %v775 = vunpack.c.l.b16 %v695
          %v776 = vunpack.c.l.b16 %v696
          %v777 = vunpack.c.l.b16 %v697
          %v778 = vunpack.c.l.b16 %v698
          %v779 = vunpack.c.l.b16 %v699
          %v780 = vunpack.c.l.b16 %v700
          %v781 = vunpack.c.l.b16 %v701
          %v782 = vunpack.c.l.b16 %v702
          %v783 = vunpack.c.l.b16 %v703
          %v784 = vunpack.c.l.b16 %v704
          %v785 = vunpack.c.l.b16 %v705
          %v786 = vunpack.c.l.b16 %v706
          %v787 = vunpack.c.l.b16 %v707
          %v788 = vunpack.c.l.b16 %v708
          %v789 = vpack.c.b16 %v758, %v757
          %v790 = vpack.c.b16 %v760, %v759
          %v791 = vpack.c.b16 %v762, %v761
          %v792 = vpack.c.b16 %v764, %v763
          %v793 = vpack.c.b16 %v766, %v765
          %v794 = vpack.c.b16 %v768, %v767
          %v795 = vpack.c.b16 %v770, %v769
          %v796 = vpack.c.b16 %v772, %v771
          %v797 = vpack.c.b16 %v774, %v773
          %v798 = vpack.c.b16 %v776, %v775
          %v799 = vpack.c.b16 %v778, %v777
          %v800 = vpack.c.b16 %v780, %v779
          %v801 = vpack.c.b16 %v782, %v781
          %v802 = vpack.c.b16 %v784, %v783
          %v803 = vpack.c.b16 %v786, %v785
          %v804 = vpack.c.b16 %v788, %v787
          %v837 = vunpack.c.l.b16 %v709
          %v838 = vunpack.c.l.b16 %v710
          %v839 = vunpack.c.l.b16 %v711
          %v840 = vunpack.c.l.b16 %v712
          %v841 = vunpack.c.l.b16 %v713
          %v842 = vunpack.c.l.b16 %v714
          %v843 = vunpack.c.l.b16 %v715
          %v844 = vunpack.c.l.b16 %v716
          %v845 = vunpack.c.l.b16 %v717
          %v846 = vunpack.c.l.b16 %v718
          %v847 = vunpack.c.l.b16 %v719
          %v848 = vunpack.c.l.b16 %v720
          %v849 = vunpack.c.l.b16 %v721
          %v850 = vunpack.c.l.b16 %v722
          %v851 = vunpack.c.l.b16 %v723
          %v852 = vunpack.c.l.b16 %v724
          %v853 = vpack.c.b16 %v838, %v837
          %v854 = vpack.c.b16 %v840, %v839
          %v855 = vpack.c.b16 %v842, %v841
          %v856 = vpack.c.b16 %v844, %v843
          %v857 = vpack.c.b16 %v846, %v845
          %v858 = vpack.c.b16 %v848, %v847
          %v859 = vpack.c.b16 %v850, %v849
          %v860 = vpack.c.b16 %v852, %v851
          %869 = vmatpush.bf16.msra.mxu0 %v860
          %870 = vmatpush.bf16.msra.mxu0 %v859
          %871 = vmatpush.bf16.msra.mxu0 %v858
          %872 = vmatpush.bf16.msra.mxu0 %v857
          %873 = vmatpush.bf16.msra.mxu0 %v856
          %874 = vmatpush.bf16.msra.mxu0 %v855
          %875 = vmatpush.bf16.msra.mxu0 %v854
          %876 = vmatpush.bf16.msra.mxu0 %v853
          %877 = vmatmul.bf16.gmra.mxu0 %v789
          %v878 = vpop.f32.mrf.mxu0
          %v879 = vadd.f32 0.0, %v878
          %v880 = vpop.f32.mrf.mxu0
          %v881 = vadd.f32 0.0, %v880
          %882 = vmatmul.bf16.gmra.mxu0 %v790
          %v883 = vpop.f32.mrf.mxu0
          %v884 = vadd.f32 0.0, %v883
          %v885 = vpop.f32.mrf.mxu0
          %v886 = vadd.f32 0.0, %v885
          %887 = vmatmul.bf16.gmra.mxu0 %v791
          %v888 = vpop.f32.mrf.mxu0
          %v889 = vadd.f32 0.0, %v888
          %v890 = vpop.f32.mrf.mxu0
          %v891 = vadd.f32 0.0, %v890
          %892 = vmatmul.bf16.gmra.mxu0 %v792
          %v893 = vpop.f32.mrf.mxu0
          %v894 = vadd.f32 0.0, %v893
          %v895 = vpop.f32.mrf.mxu0
          %v896 = vadd.f32 0.0, %v895
          %897 = vmatmul.bf16.gmra.mxu0 %v793
          %v898 = vpop.f32.mrf.mxu0
          %v899 = vadd.f32 0.0, %v898
          %v900 = vpop.f32.mrf.mxu0
          %v901 = vadd.f32 0.0, %v900
          %902 = vmatmul.bf16.gmra.mxu0 %v794
          %v903 = vpop.f32.mrf.mxu0
          %v904 = vadd.f32 0.0, %v903
          %v905 = vpop.f32.mrf.mxu0
          %v906 = vadd.f32 0.0, %v905
          %907 = vmatmul.bf16.gmra.mxu0 %v795
          %v908 = vpop.f32.mrf.mxu0
          %v909 = vadd.f32 0.0, %v908
          %v910 = vpop.f32.mrf.mxu0
          %v911 = vadd.f32 0.0, %v910
          %912 = vmatmul.bf16.gmra.mxu0 %v796
          %v913 = vpop.f32.mrf.mxu0
          %v914 = vadd.f32 0.0, %v913
          %v915 = vpop.f32.mrf.mxu0
          %v916 = vadd.f32 0.0, %v915
          %917 = vmatmul.bf16.gmra.mxu0 %v797
          %v918 = vpop.f32.mrf.mxu0
          %v919 = vadd.f32 0.0, %v918
          %v920 = vpop.f32.mrf.mxu0
          %v921 = vadd.f32 0.0, %v920
          %922 = vmatmul.bf16.gmra.mxu0 %v798
          %v923 = vpop.f32.mrf.mxu0
          %v924 = vadd.f32 0.0, %v923
          %v925 = vpop.f32.mrf.mxu0
          %v926 = vadd.f32 0.0, %v925
          %927 = vmatmul.bf16.gmra.mxu0 %v799
          %v928 = vpop.f32.mrf.mxu0
          %v929 = vadd.f32 0.0, %v928
          %v930 = vpop.f32.mrf.mxu0
          %v931 = vadd.f32 0.0, %v930
          %932 = vmatmul.bf16.gmra.mxu0 %v800
          %v933 = vpop.f32.mrf.mxu0
          %v934 = vadd.f32 0.0, %v933
          %v935 = vpop.f32.mrf.mxu0
          %v936 = vadd.f32 0.0, %v935
          %937 = vmatmul.bf16.gmra.mxu0 %v801
          %v938 = vpop.f32.mrf.mxu0
          %v939 = vadd.f32 0.0, %v938
          %v940 = vpop.f32.mrf.mxu0
          %v941 = vadd.f32 0.0, %v940
          %942 = vmatmul.bf16.gmra.mxu0 %v802
          %v943 = vpop.f32.mrf.mxu0
          %v944 = vadd.f32 0.0, %v943
          %v945 = vpop.f32.mrf.mxu0
          %v946 = vadd.f32 0.0, %v945
          %947 = vmatmul.bf16.gmra.mxu0 %v803
          %v948 = vpop.f32.mrf.mxu0
          %v949 = vadd.f32 0.0, %v948
          %v950 = vpop.f32.mrf.mxu0
          %v951 = vadd.f32 0.0, %v950
          %952 = vmatmul.bf16.gmra.mxu0 %v804
          %v953 = vpop.f32.mrf.mxu0
          %v954 = vadd.f32 0.0, %v953
          %v955 = vpop.f32.mrf.mxu0
          %v956 = vadd.f32 0.0, %v955
          %957 = vdwg.mxu0
          %958 = vmatpush.msra.mxu0 %v916
          %959 = vmatpush.msra.mxu0 %v914
          %960 = vmatpush.msra.mxu0 %v911
          %961 = vmatpush.msra.mxu0 %v909
          %962 = vmatpush.msra.mxu0 %v906
          %963 = vmatpush.msra.mxu0 %v904
          %964 = vmatpush.msra.mxu0 %v901
          %965 = vmatpush.msra.mxu0 %v899
          %966 = vmatpush.msra.mxu0 %v896
          %967 = vmatpush.msra.mxu0 %v894
          %968 = vmatpush.msra.mxu0 %v891
          %969 = vmatpush.msra.mxu0 %v889
          %970 = vmatpush.msra.mxu0 %v886
          %971 = vmatpush.msra.mxu0 %v884
          %972 = vmatpush.msra.mxu0 %v881
          %973 = vmatpush.msra.mxu0 %v879
          %974 = vmatmul.f32.gmra.mxu0 1.0
          %v975 = vpop.f32.mrf.mxu0
          %v976 = vadd.f32 0.0, %v975
          %977 = vdwg.mxu0
          %978 = vmatpush.msra.mxu0 %v956
          %979 = vmatpush.msra.mxu0 %v954
          %980 = vmatpush.msra.mxu0 %v951
          %981 = vmatpush.msra.mxu0 %v949
          %982 = vmatpush.msra.mxu0 %v946
          %983 = vmatpush.msra.mxu0 %v944
          %984 = vmatpush.msra.mxu0 %v941
          %985 = vmatpush.msra.mxu0 %v939
          %986 = vmatpush.msra.mxu0 %v936
          %987 = vmatpush.msra.mxu0 %v934
          %988 = vmatpush.msra.mxu0 %v931
          %989 = vmatpush.msra.mxu0 %v929
          %990 = vmatpush.msra.mxu0 %v926
          %991 = vmatpush.msra.mxu0 %v924
          %992 = vmatpush.msra.mxu0 %v921
          %993 = vmatpush.msra.mxu0 %v919
          %994 = vmatmul.f32.gmra.mxu0 1.0
          %v995 = vpop.f32.mrf.mxu0
          %v996 = vadd.f32 %v976, %v995
          %997 = vdwg.mxu0
          %v998 = vmul.f32 %v879, %v879
          %v999 = vmul.f32 %v881, %v881
          %v1000 = vmul.f32 %v884, %v884
          %v1001 = vmul.f32 %v886, %v886
          %v1002 = vmul.f32 %v889, %v889
          %v1003 = vmul.f32 %v891, %v891
          %v1004 = vmul.f32 %v894, %v894
          %v1005 = vmul.f32 %v896, %v896
          %v1006 = vmul.f32 %v899, %v899
          %v1007 = vmul.f32 %v901, %v901
          %v1008 = vmul.f32 %v904, %v904
          %v1009 = vmul.f32 %v906, %v906
          %v1010 = vmul.f32 %v909, %v909
          %v1011 = vmul.f32 %v911, %v911
          %v1012 = vmul.f32 %v914, %v914
          %v1013 = vmul.f32 %v916, %v916
          %v1014 = vmul.f32 %v919, %v919
          %v1015 = vmul.f32 %v921, %v921
          %v1016 = vmul.f32 %v924, %v924
          %v1017 = vmul.f32 %v926, %v926
          %v1018 = vmul.f32 %v929, %v929
          %v1019 = vmul.f32 %v931, %v931
          %v1020 = vmul.f32 %v934, %v934
          %v1021 = vmul.f32 %v936, %v936
          %v1022 = vmul.f32 %v939, %v939
          %v1023 = vmul.f32 %v941, %v941
          %v1024 = vmul.f32 %v944, %v944
          %v1025 = vmul.f32 %v946, %v946
          %v1026 = vmul.f32 %v949, %v949
          %v1027 = vmul.f32 %v951, %v951
          %v1028 = vmul.f32 %v954, %v954
          %v1029 = vmul.f32 %v956, %v956
          %1030 = vmatpush.msra.mxu0 %v1013
          %1031 = vmatpush.msra.mxu0 %v1012
          %1032 = vmatpush.msra.mxu0 %v1011
          %1033 = vmatpush.msra.mxu0 %v1010
          %1034 = vmatpush.msra.mxu0 %v1009
          %1035 = vmatpush.msra.mxu0 %v1008
          %1036 = vmatpush.msra.mxu0 %v1007
          %1037 = vmatpush.msra.mxu0 %v1006
          %1038 = vmatpush.msra.mxu0 %v1005
          %1039 = vmatpush.msra.mxu0 %v1004
          %1040 = vmatpush.msra.mxu0 %v1003
          %1041 = vmatpush.msra.mxu0 %v1002
          %1042 = vmatpush.msra.mxu0 %v1001
          %1043 = vmatpush.msra.mxu0 %v1000
          %1044 = vmatpush.msra.mxu0 %v999
          %1045 = vmatpush.msra.mxu0 %v998
          %1046 = vmatmul.f32.gmra.mxu0 1.0
          %v1047 = vpop.f32.mrf.mxu0
          %v1048 = vadd.f32 0.0, %v1047
          %1049 = vdwg.mxu0
          %1050 = vmatpush.msra.mxu0 %v1029
          %1051 = vmatpush.msra.mxu0 %v1028
          %1052 = vmatpush.msra.mxu0 %v1027
          %1053 = vmatpush.msra.mxu0 %v1026
          %1054 = vmatpush.msra.mxu0 %v1025
          %1055 = vmatpush.msra.mxu0 %v1024
          %1056 = vmatpush.msra.mxu0 %v1023
          %1057 = vmatpush.msra.mxu0 %v1022
          %1058 = vmatpush.msra.mxu0 %v1021
          %1059 = vmatpush.msra.mxu0 %v1020
          %1060 = vmatpush.msra.mxu0 %v1019
          %1061 = vmatpush.msra.mxu0 %v1018
          %1062 = vmatpush.msra.mxu0 %v1017
          %1063 = vmatpush.msra.mxu0 %v1016
          %1064 = vmatpush.msra.mxu0 %v1015
          %1065 = vmatpush.msra.mxu0 %v1014
          %1066 = vmatmul.f32.gmra.mxu0 1.0
          %v1067 = vpop.f32.mrf.mxu0
          %v1068 = vadd.f32 %v1048, %v1067
          %1069 = vdwg.mxu0
          %v1070 = vld [vmem:[#allocation3] sm:$0x1]
          %v1071 = vadd.f32 %v1070, %v996
          %1072 = vst [vmem:[#allocation3] sm:$0x1] %v1071
          %v1073 = vld [vmem:[#allocation3 + $0x1] sm:$0x1]
          %v1074 = vadd.f32 %v1073, %v1068
          %1075 = vst [vmem:[#allocation3 + $0x1] sm:$0x1] %v1074
        $region108: #{tpu_custom_call.1} parent=71 // pred_fallthru
          _
        %p1076 = scmp.eq.s32.totalorder %s39, 1
        // Predicated region
        $region109: #{tpu_custom_call.1} parent=71 // pred_check
          %p1077 = pneg %p1076
        $region110: #{tpu_custom_call.1} parent=71 // pred_check_branch
          %1079 = sbr.rel (%p1077) target = $region112
        $region111: #{tpu_custom_call.1} parent=71 // pred_region
          %v1080 = vld [vmem:[%s523] sm:$0xf]
          %v1081 = vld [vmem:[%s523 + $0x4] sm:$0xf]
          %v1082 = vld [vmem:[%s523 + $0x8] sm:$0xf]
          %v1083 = vld [vmem:[%s523 + $0xc] sm:$0xf]
          %v1084 = vld [vmem:[%s523 + $0x10] sm:$0xf]
          %v1085 = vld [vmem:[%s523 + $0x14] sm:$0xf]
          %v1086 = vld [vmem:[%s523 + $0x18] sm:$0xf]
          %v1087 = vld [vmem:[%s523 + $0x1c] sm:$0xf]
          %v1088 = vld [vmem:[%s523 + $0x20] sm:$0xf]
          %v1089 = vld [vmem:[%s523 + $0x24] sm:$0xf]
          %v1090 = vld [vmem:[%s523 + $0x28] sm:$0xf]
          %v1091 = vld [vmem:[%s523 + $0x2c] sm:$0xf]
          %v1092 = vld [vmem:[%s523 + $0x30] sm:$0xf]
          %v1093 = vld [vmem:[%s523 + $0x34] sm:$0xf]
          %v1094 = vld [vmem:[%s523 + $0x38] sm:$0xf]
          %v1095 = vld [vmem:[%s523 + $0x3c] sm:$0xf]
          %v1096 = vld [vmem:[%s523 + $0x40] sm:$0xf]
          %v1097 = vld [vmem:[%s523 + $0x44] sm:$0xf]
          %v1098 = vld [vmem:[%s523 + $0x48] sm:$0xf]
          %v1099 = vld [vmem:[%s523 + $0x4c] sm:$0xf]
          %v1100 = vld [vmem:[%s523 + $0x50] sm:$0xf]
          %v1101 = vld [vmem:[%s523 + $0x54] sm:$0xf]
          %v1102 = vld [vmem:[%s523 + $0x58] sm:$0xf]
          %v1103 = vld [vmem:[%s523 + $0x5c] sm:$0xf]
          %v1104 = vld [vmem:[%s523 + $0x60] sm:$0xf]
          %v1105 = vld [vmem:[%s523 + $0x64] sm:$0xf]
          %v1106 = vld [vmem:[%s523 + $0x68] sm:$0xf]
          %v1107 = vld [vmem:[%s523 + $0x6c] sm:$0xf]
          %v1108 = vld [vmem:[%s523 + $0x70] sm:$0xf]
          %v1109 = vld [vmem:[%s523 + $0x74] sm:$0xf]
          %v1110 = vld [vmem:[%s523 + $0x78] sm:$0xf]
          %v1111 = vld [vmem:[%s523 + $0x7c] sm:$0xf]
          %v1112 = vld [vmem:[#allocation12] sm:$0xf]
          %v1113 = vld [vmem:[#allocation12 + $0x4] sm:$0xf]
          %v1114 = vld [vmem:[#allocation12 + $0x8] sm:$0xf]
          %v1115 = vld [vmem:[#allocation12 + $0xc] sm:$0xf]
          %v1116 = vld [vmem:[#allocation12 + $0x10] sm:$0xf]
          %v1117 = vld [vmem:[#allocation12 + $0x14] sm:$0xf]
          %v1118 = vld [vmem:[#allocation12 + $0x18] sm:$0xf]
          %v1119 = vld [vmem:[#allocation12 + $0x1c] sm:$0xf]
          %v1120 = vld [vmem:[#allocation12 + $0x20] sm:$0xf]
          %v1121 = vld [vmem:[#allocation12 + $0x24] sm:$0xf]
          %v1122 = vld [vmem:[#allocation12 + $0x28] sm:$0xf]
          %v1123 = vld [vmem:[#allocation12 + $0x2c] sm:$0xf]
          %v1124 = vld [vmem:[#allocation12 + $0x30] sm:$0xf]
          %v1125 = vld [vmem:[#allocation12 + $0x34] sm:$0xf]
          %v1126 = vld [vmem:[#allocation12 + $0x38] sm:$0xf]
          %v1127 = vld [vmem:[#allocation12 + $0x3c] sm:$0xf]
          %v1160 = vunpack.c.l.b16 %v1080
          %v1161 = vunpack.c.l.b16 %v1081
          %v1162 = vunpack.c.l.b16 %v1082
          %v1163 = vunpack.c.l.b16 %v1083
          %v1164 = vunpack.c.l.b16 %v1084
          %v1165 = vunpack.c.l.b16 %v1085
          %v1166 = vunpack.c.l.b16 %v1086
          %v1167 = vunpack.c.l.b16 %v1087
          %v1168 = vunpack.c.l.b16 %v1088
          %v1169 = vunpack.c.l.b16 %v1089
          %v1170 = vunpack.c.l.b16 %v1090
          %v1171 = vunpack.c.l.b16 %v1091
          %v1172 = vunpack.c.l.b16 %v1092
          %v1173 = vunpack.c.l.b16 %v1093
          %v1174 = vunpack.c.l.b16 %v1094
          %v1175 = vunpack.c.l.b16 %v1095
          %v1176 = vunpack.c.l.b16 %v1096
          %v1177 = vunpack.c.l.b16 %v1097
          %v1178 = vunpack.c.l.b16 %v1098
          %v1179 = vunpack.c.l.b16 %v1099
          %v1180 = vunpack.c.l.b16 %v1100
          %v1181 = vunpack.c.l.b16 %v1101
          %v1182 = vunpack.c.l.b16 %v1102
          %v1183 = vunpack.c.l.b16 %v1103
          %v1184 = vunpack.c.l.b16 %v1104
          %v1185 = vunpack.c.l.b16 %v1105
          %v1186 = vunpack.c.l.b16 %v1106
          %v1187 = vunpack.c.l.b16 %v1107
          %v1188 = vunpack.c.l.b16 %v1108
          %v1189 = vunpack.c.l.b16 %v1109
          %v1190 = vunpack.c.l.b16 %v1110
          %v1191 = vunpack.c.l.b16 %v1111
          %v1192 = vpack.c.b16 %v1161, %v1160
          %v1193 = vpack.c.b16 %v1163, %v1162
          %v1194 = vpack.c.b16 %v1165, %v1164
          %v1195 = vpack.c.b16 %v1167, %v1166
          %v1196 = vpack.c.b16 %v1169, %v1168
          %v1197 = vpack.c.b16 %v1171, %v1170
          %v1198 = vpack.c.b16 %v1173, %v1172
          %v1199 = vpack.c.b16 %v1175, %v1174
          %v1200 = vpack.c.b16 %v1177, %v1176
          %v1201 = vpack.c.b16 %v1179, %v1178
          %v1202 = vpack.c.b16 %v1181, %v1180
          %v1203 = vpack.c.b16 %v1183, %v1182
          %v1204 = vpack.c.b16 %v1185, %v1184
          %v1205 = vpack.c.b16 %v1187, %v1186
          %v1206 = vpack.c.b16 %v1189, %v1188
          %v1207 = vpack.c.b16 %v1191, %v1190
          %v1240 = vunpack.c.l.b16 %v1112
          %v1241 = vunpack.c.l.b16 %v1113
          %v1242 = vunpack.c.l.b16 %v1114
          %v1243 = vunpack.c.l.b16 %v1115
          %v1244 = vunpack.c.l.b16 %v1116
          %v1245 = vunpack.c.l.b16 %v1117
          %v1246 = vunpack.c.l.b16 %v1118
          %v1247 = vunpack.c.l.b16 %v1119
          %v1248 = vunpack.c.l.b16 %v1120
          %v1249 = vunpack.c.l.b16 %v1121
          %v1250 = vunpack.c.l.b16 %v1122
          %v1251 = vunpack.c.l.b16 %v1123
          %v1252 = vunpack.c.l.b16 %v1124
          %v1253 = vunpack.c.l.b16 %v1125
          %v1254 = vunpack.c.l.b16 %v1126
          %v1255 = vunpack.c.l.b16 %v1127
          %v1256 = vpack.c.b16 %v1241, %v1240
          %v1257 = vpack.c.b16 %v1243, %v1242
          %v1258 = vpack.c.b16 %v1245, %v1244
          %v1259 = vpack.c.b16 %v1247, %v1246
          %v1260 = vpack.c.b16 %v1249, %v1248
          %v1261 = vpack.c.b16 %v1251, %v1250
          %v1262 = vpack.c.b16 %v1253, %v1252
          %v1263 = vpack.c.b16 %v1255, %v1254
          %1272 = vmatpush.bf16.msra.mxu0 %v1263
          %1273 = vmatpush.bf16.msra.mxu0 %v1262
          %1274 = vmatpush.bf16.msra.mxu0 %v1261
          %1275 = vmatpush.bf16.msra.mxu0 %v1260
          %1276 = vmatpush.bf16.msra.mxu0 %v1259
          %1277 = vmatpush.bf16.msra.mxu0 %v1258
          %1278 = vmatpush.bf16.msra.mxu0 %v1257
          %1279 = vmatpush.bf16.msra.mxu0 %v1256
          %1280 = vmatmul.bf16.gmra.mxu0 %v1192
          %v1281 = vpop.f32.mrf.mxu0
          %v1282 = vadd.f32 0.0, %v1281
          %v1283 = vpop.f32.mrf.mxu0
          %v1284 = vadd.f32 0.0, %v1283
          %1285 = vmatmul.bf16.gmra.mxu0 %v1193
          %v1286 = vpop.f32.mrf.mxu0
          %v1287 = vadd.f32 0.0, %v1286
          %v1288 = vpop.f32.mrf.mxu0
          %v1289 = vadd.f32 0.0, %v1288
          %1290 = vmatmul.bf16.gmra.mxu0 %v1194
          %v1291 = vpop.f32.mrf.mxu0
          %v1292 = vadd.f32 0.0, %v1291
          %v1293 = vpop.f32.mrf.mxu0
          %v1294 = vadd.f32 0.0, %v1293
          %1295 = vmatmul.bf16.gmra.mxu0 %v1195
          %v1296 = vpop.f32.mrf.mxu0
          %v1297 = vadd.f32 0.0, %v1296
          %v1298 = vpop.f32.mrf.mxu0
          %v1299 = vadd.f32 0.0, %v1298
          %1300 = vmatmul.bf16.gmra.mxu0 %v1196
          %v1301 = vpop.f32.mrf.mxu0
          %v1302 = vadd.f32 0.0, %v1301
          %v1303 = vpop.f32.mrf.mxu0
          %v1304 = vadd.f32 0.0, %v1303
          %1305 = vmatmul.bf16.gmra.mxu0 %v1197
          %v1306 = vpop.f32.mrf.mxu0
          %v1307 = vadd.f32 0.0, %v1306
          %v1308 = vpop.f32.mrf.mxu0
          %v1309 = vadd.f32 0.0, %v1308
          %1310 = vmatmul.bf16.gmra.mxu0 %v1198
          %v1311 = vpop.f32.mrf.mxu0
          %v1312 = vadd.f32 0.0, %v1311
          %v1313 = vpop.f32.mrf.mxu0
          %v1314 = vadd.f32 0.0, %v1313
          %1315 = vmatmul.bf16.gmra.mxu0 %v1199
          %v1316 = vpop.f32.mrf.mxu0
          %v1317 = vadd.f32 0.0, %v1316
          %v1318 = vpop.f32.mrf.mxu0
          %v1319 = vadd.f32 0.0, %v1318
          %1320 = vmatmul.bf16.gmra.mxu0 %v1200
          %v1321 = vpop.f32.mrf.mxu0
          %v1322 = vadd.f32 0.0, %v1321
          %v1323 = vpop.f32.mrf.mxu0
          %v1324 = vadd.f32 0.0, %v1323
          %1325 = vmatmul.bf16.gmra.mxu0 %v1201
          %v1326 = vpop.f32.mrf.mxu0
          %v1327 = vadd.f32 0.0, %v1326
          %v1328 = vpop.f32.mrf.mxu0
          %v1329 = vadd.f32 0.0, %v1328
          %1330 = vmatmul.bf16.gmra.mxu0 %v1202
          %v1331 = vpop.f32.mrf.mxu0
          %v1332 = vadd.f32 0.0, %v1331
          %v1333 = vpop.f32.mrf.mxu0
          %v1334 = vadd.f32 0.0, %v1333
          %1335 = vmatmul.bf16.gmra.mxu0 %v1203
          %v1336 = vpop.f32.mrf.mxu0
          %v1337 = vadd.f32 0.0, %v1336
          %v1338 = vpop.f32.mrf.mxu0
          %v1339 = vadd.f32 0.0, %v1338
          %1340 = vmatmul.bf16.gmra.mxu0 %v1204
          %v1341 = vpop.f32.mrf.mxu0
          %v1342 = vadd.f32 0.0, %v1341
          %v1343 = vpop.f32.mrf.mxu0
          %v1344 = vadd.f32 0.0, %v1343
          %1345 = vmatmul.bf16.gmra.mxu0 %v1205
          %v1346 = vpop.f32.mrf.mxu0
          %v1347 = vadd.f32 0.0, %v1346
          %v1348 = vpop.f32.mrf.mxu0
          %v1349 = vadd.f32 0.0, %v1348
          %1350 = vmatmul.bf16.gmra.mxu0 %v1206
          %v1351 = vpop.f32.mrf.mxu0
          %v1352 = vadd.f32 0.0, %v1351
          %v1353 = vpop.f32.mrf.mxu0
          %v1354 = vadd.f32 0.0, %v1353
          %1355 = vmatmul.bf16.gmra.mxu0 %v1207
          %v1356 = vpop.f32.mrf.mxu0
          %v1357 = vadd.f32 0.0, %v1356
          %v1358 = vpop.f32.mrf.mxu0
          %v1359 = vadd.f32 0.0, %v1358
          %1360 = vdwg.mxu0
          %v1361 = vld [vmem:[#allocation3] sm:$0x1]
          %v1362 = vld [vmem:[#allocation3 + $0x1] sm:$0x1]
          %v1363 = vmul.f32 %v1361, 0.001953125
          %v1364 = vmul.f32 %v1362, 0.001953125
          %v1365 = vmul.f32 %v1363, %v1363
          %v1366 = vsub.f32 %v1364, %v1365
          %v1367 = vld [vmem:[%s3] sm:$0x1]
          %v1368 = vadd.f32 %v1366, 1e-05
          %v1369 = vrsqrt.pop %v1368
          %v1370 = vmul.f32 %v1369, %v1368
          %v1371 = vmul.f32 %v1370, %v1369
          %v1372 = vmul.f32 0.5, %v1371
          %v1373 = vsub.f32 1.5, %v1372
          %v1374 = vmul.f32 %v1369, %v1373
          %vm1375 = vweird.f32 %v1368
          %vm1376 = vweird.f32 %v1369
          %vm1377 = vmor %vm1375, %vm1376
          %v1378 = vsel %vm1377, %v1369, %v1374
          %v1379 = vmul.f32 %v1367, %v1378
          %v1380 = vld [vmem:[%s4] sm:$0x1]
          %v1381 = vmul.f32 %v1363, %v1379
          %v1382 = vsub.f32 %v1380, %v1381
          %v1384 = vperm.slane %v1379, 0
          %v1386 = vmul.f32 %v1282, %v1384
          %v1387 = vmul.f32 %v1284, %v1384
          %v1388 = vmul.f32 %v1287, %v1384
          %v1389 = vmul.f32 %v1289, %v1384
          %v1390 = vmul.f32 %v1292, %v1384
          %v1391 = vmul.f32 %v1294, %v1384
          %v1392 = vmul.f32 %v1297, %v1384
          %v1393 = vmul.f32 %v1299, %v1384
          %v1394 = vmul.f32 %v1302, %v1384
          %v1395 = vmul.f32 %v1304, %v1384
          %v1396 = vmul.f32 %v1307, %v1384
          %v1397 = vmul.f32 %v1309, %v1384
          %v1398 = vmul.f32 %v1312, %v1384
          %v1399 = vmul.f32 %v1314, %v1384
          %v1400 = vmul.f32 %v1317, %v1384
          %v1401 = vmul.f32 %v1319, %v1384
          %v1402 = vmul.f32 %v1322, %v1384
          %v1403 = vmul.f32 %v1324, %v1384
          %v1404 = vmul.f32 %v1327, %v1384
          %v1405 = vmul.f32 %v1329, %v1384
          %v1406 = vmul.f32 %v1332, %v1384
          %v1407 = vmul.f32 %v1334, %v1384
          %v1408 = vmul.f32 %v1337, %v1384
          %v1409 = vmul.f32 %v1339, %v1384
          %v1410 = vmul.f32 %v1342, %v1384
          %v1411 = vmul.f32 %v1344, %v1384
          %v1412 = vmul.f32 %v1347, %v1384
          %v1413 = vmul.f32 %v1349, %v1384
          %v1414 = vmul.f32 %v1352, %v1384
          %v1415 = vmul.f32 %v1354, %v1384
          %v1416 = vmul.f32 %v1357, %v1384
          %v1417 = vmul.f32 %v1359, %v1384
          %v1419 = vperm.slane %v1382, 0
          %v1421 = vadd.f32 %v1386, %v1419
          %v1422 = vadd.f32 %v1387, %v1419
          %v1423 = vadd.f32 %v1388, %v1419
          %v1424 = vadd.f32 %v1389, %v1419
          %v1425 = vadd.f32 %v1390, %v1419
          %v1426 = vadd.f32 %v1391, %v1419
          %v1427 = vadd.f32 %v1392, %v1419
          %v1428 = vadd.f32 %v1393, %v1419
          %v1429 = vadd.f32 %v1394, %v1419
          %v1430 = vadd.f32 %v1395, %v1419
          %v1431 = vadd.f32 %v1396, %v1419
          %v1432 = vadd.f32 %v1397, %v1419
          %v1433 = vadd.f32 %v1398, %v1419
          %v1434 = vadd.f32 %v1399, %v1419
          %v1435 = vadd.f32 %v1400, %v1419
          %v1436 = vadd.f32 %v1401, %v1419
          %v1437 = vadd.f32 %v1402, %v1419
          %v1438 = vadd.f32 %v1403, %v1419
          %v1439 = vadd.f32 %v1404, %v1419
          %v1440 = vadd.f32 %v1405, %v1419
          %v1441 = vadd.f32 %v1406, %v1419
          %v1442 = vadd.f32 %v1407, %v1419
          %v1443 = vadd.f32 %v1408, %v1419
          %v1444 = vadd.f32 %v1409, %v1419
          %v1445 = vadd.f32 %v1410, %v1419
          %v1446 = vadd.f32 %v1411, %v1419
          %v1447 = vadd.f32 %v1412, %v1419
          %v1448 = vadd.f32 %v1413, %v1419
          %v1449 = vadd.f32 %v1414, %v1419
          %v1450 = vadd.f32 %v1415, %v1419
          %v1451 = vadd.f32 %v1416, %v1419
          %v1452 = vadd.f32 %v1417, %v1419
          %v1453 = vmax.f32 %v1421, 0.0
          %v1454 = vmax.f32 %v1422, 0.0
          %v1455 = vmax.f32 %v1423, 0.0
          %v1456 = vmax.f32 %v1424, 0.0
          %v1457 = vmax.f32 %v1425, 0.0
          %v1458 = vmax.f32 %v1426, 0.0
          %v1459 = vmax.f32 %v1427, 0.0
          %v1460 = vmax.f32 %v1428, 0.0
          %v1461 = vmax.f32 %v1429, 0.0
          %v1462 = vmax.f32 %v1430, 0.0
          %v1463 = vmax.f32 %v1431, 0.0
          %v1464 = vmax.f32 %v1432, 0.0
          %v1465 = vmax.f32 %v1433, 0.0
          %v1466 = vmax.f32 %v1434, 0.0
          %v1467 = vmax.f32 %v1435, 0.0
          %v1468 = vmax.f32 %v1436, 0.0
          %v1469 = vmax.f32 %v1437, 0.0
          %v1470 = vmax.f32 %v1438, 0.0
          %v1471 = vmax.f32 %v1439, 0.0
          %v1472 = vmax.f32 %v1440, 0.0
          %v1473 = vmax.f32 %v1441, 0.0
          %v1474 = vmax.f32 %v1442, 0.0
          %v1475 = vmax.f32 %v1443, 0.0
          %v1476 = vmax.f32 %v1444, 0.0
          %v1477 = vmax.f32 %v1445, 0.0
          %v1478 = vmax.f32 %v1446, 0.0
          %v1479 = vmax.f32 %v1447, 0.0
          %v1480 = vmax.f32 %v1448, 0.0
          %v1481 = vmax.f32 %v1449, 0.0
          %v1482 = vmax.f32 %v1450, 0.0
          %v1483 = vmax.f32 %v1451, 0.0
          %v1484 = vmax.f32 %v1452, 0.0
          %v1485 = vmin.f32 %v1453, 6.0
          %v1486 = vmin.f32 %v1454, 6.0
          %v1487 = vmin.f32 %v1455, 6.0
          %v1488 = vmin.f32 %v1456, 6.0
          %v1489 = vmin.f32 %v1457, 6.0
          %v1490 = vmin.f32 %v1458, 6.0
          %v1491 = vmin.f32 %v1459, 6.0
          %v1492 = vmin.f32 %v1460, 6.0
          %v1493 = vmin.f32 %v1461, 6.0
          %v1494 = vmin.f32 %v1462, 6.0
          %v1495 = vmin.f32 %v1463, 6.0
          %v1496 = vmin.f32 %v1464, 6.0
          %v1497 = vmin.f32 %v1465, 6.0
          %v1498 = vmin.f32 %v1466, 6.0
          %v1499 = vmin.f32 %v1467, 6.0
          %v1500 = vmin.f32 %v1468, 6.0
          %v1501 = vmin.f32 %v1469, 6.0
          %v1502 = vmin.f32 %v1470, 6.0
          %v1503 = vmin.f32 %v1471, 6.0
          %v1504 = vmin.f32 %v1472, 6.0
          %v1505 = vmin.f32 %v1473, 6.0
          %v1506 = vmin.f32 %v1474, 6.0
          %v1507 = vmin.f32 %v1475, 6.0
          %v1508 = vmin.f32 %v1476, 6.0
          %v1509 = vmin.f32 %v1477, 6.0
          %v1510 = vmin.f32 %v1478, 6.0
          %v1511 = vmin.f32 %v1479, 6.0
          %v1512 = vmin.f32 %v1480, 6.0
          %v1513 = vmin.f32 %v1481, 6.0
          %v1514 = vmin.f32 %v1482, 6.0
          %v1515 = vmin.f32 %v1483, 6.0
          %v1516 = vmin.f32 %v1484, 6.0
          %v1517 = vld [vmem:[#allocation13] sm:$0xff]
          %v1518 = vld [vmem:[#allocation13 + $0x8] sm:$0x1]
          %s1519 = scalar_lea.vmem [#allocation2], 24
          %1520 = vst [vmem:[%s1519 + $0x1] sm:$0xff] %v1485
          %1521 = vst [vmem:[%s1519 + $0x9] sm:$0xff] %v1486
          %1522 = vst [vmem:[%s1519 + $0x19] sm:$0xff] %v1487
          %1523 = vst [vmem:[%s1519 + $0x21] sm:$0xff] %v1488
          %1524 = vst [vmem:[%s1519 + $0x31] sm:$0xff] %v1489
          %1525 = vst [vmem:[%s1519 + $0x39] sm:$0xff] %v1490
          %1526 = vst [vmem:[%s1519 + $0x49] sm:$0xff] %v1491
          %1527 = vst [vmem:[%s1519 + $0x51] sm:$0xff] %v1492
          %1528 = vst [vmem:[%s1519 + $0x61] sm:$0xff] %v1493
          %1529 = vst [vmem:[%s1519 + $0x69] sm:$0xff] %v1494
          %1530 = vst [vmem:[%s1519 + $0x79] sm:$0xff] %v1495
          %1531 = vst [vmem:[%s1519 + $0x81] sm:$0xff] %v1496
          %1532 = vst [vmem:[%s1519 + $0x91] sm:$0xff] %v1497
          %1533 = vst [vmem:[%s1519 + $0x99] sm:$0xff] %v1498
          %1534 = vst [vmem:[%s1519 + $0xa9] sm:$0xff] %v1499
          %1535 = vst [vmem:[%s1519 + $0xb1] sm:$0xff] %v1500
          %1536 = vst [vmem:[%s1519 + $0xc1] sm:$0xff] %v1501
          %1537 = vst [vmem:[%s1519 + $0xc9] sm:$0xff] %v1502
          %1538 = vst [vmem:[%s1519 + $0xd9] sm:$0xff] %v1503
          %1539 = vst [vmem:[%s1519 + $0xe1] sm:$0xff] %v1504
          %1540 = vst [vmem:[%s1519 + $0xf1] sm:$0xff] %v1505
          %1541 = vst [vmem:[%s1519 + $0xf9] sm:$0xff] %v1506
          %1542 = vst [vmem:[%s1519 + $0x109] sm:$0xff] %v1507
          %1543 = vst [vmem:[%s1519 + $0x111] sm:$0xff] %v1508
          %1544 = vst [vmem:[%s1519 + $0x121] sm:$0xff] %v1509
          %1545 = vst [vmem:[%s1519 + $0x129] sm:$0xff] %v1510
          %1546 = vst [vmem:[%s1519 + $0x139] sm:$0xff] %v1511
          %1547 = vst [vmem:[%s1519 + $0x141] sm:$0xff] %v1512
          %1548 = vst [vmem:[%s1519 + $0x151] sm:$0xff] %v1513
          %1549 = vst [vmem:[%s1519 + $0x159] sm:$0xff] %v1514
          %1550 = vst [vmem:[%s1519 + $0x169] sm:$0xff] %v1515
          %1551 = vst [vmem:[%s1519 + $0x171] sm:$0xff] %v1516
          %v1552 = vld [vmem:[#allocation2] sm:$0xff]
          %v1553 = vld [vmem:[#allocation2 + $0x8] sm:$0xff]
          %v1554 = vld [vmem:[#allocation2 + $0x10] sm:$0x3]
          %v1555 = vld [vmem:[#allocation2 + $0x18] sm:$0xff]
          %v1556 = vld [vmem:[#allocation2 + $0x20] sm:$0xff]
          %v1557 = vld [vmem:[#allocation2 + $0x28] sm:$0x3]
          %v1558 = vld [vmem:[#allocation2 + $0x30] sm:$0xff]
          %v1559 = vld [vmem:[#allocation2 + $0x38] sm:$0xff]
          %v1560 = vld [vmem:[#allocation2 + $0x40] sm:$0x3]
          %v1561 = vld [vmem:[#allocation2 + $0x48] sm:$0xff]
          %v1562 = vld [vmem:[#allocation2 + $0x50] sm:$0xff]
          %v1563 = vld [vmem:[#allocation2 + $0x58] sm:$0x3]
          %v1564 = vld [vmem:[#allocation2 + $0x60] sm:$0xff]
          %v1565 = vld [vmem:[#allocation2 + $0x68] sm:$0xff]
          %v1566 = vld [vmem:[#allocation2 + $0x70] sm:$0x3]
          %v1567 = vld [vmem:[#allocation2 + $0x78] sm:$0xff]
          %v1568 = vld [vmem:[#allocation2 + $0x80] sm:$0xff]
          %v1569 = vld [vmem:[#allocation2 + $0x88] sm:$0x3]
          %v1570 = vld [vmem:[#allocation2 + $0x90] sm:$0xff]
          %v1571 = vld [vmem:[#allocation2 + $0x98] sm:$0xff]
          %v1572 = vld [vmem:[#allocation2 + $0xa0] sm:$0x3]
          %v1573 = vld [vmem:[#allocation2 + $0xa8] sm:$0xff]
          %v1574 = vld [vmem:[#allocation2 + $0xb0] sm:$0xff]
          %v1575 = vld [vmem:[#allocation2 + $0xb8] sm:$0x3]
          %v1576 = vld [vmem:[#allocation2 + $0xc0] sm:$0xff]
          %v1577 = vld [vmem:[#allocation2 + $0xc8] sm:$0xff]
          %v1578 = vld [vmem:[#allocation2 + $0xd0] sm:$0x3]
          %v1579 = vld [vmem:[#allocation2 + $0xd8] sm:$0xff]
          %v1580 = vld [vmem:[#allocation2 + $0xe0] sm:$0xff]
          %v1581 = vld [vmem:[#allocation2 + $0xe8] sm:$0x3]
          %v1582 = vld [vmem:[#allocation2 + $0xf0] sm:$0xff]
          %v1583 = vld [vmem:[#allocation2 + $0xf8] sm:$0xff]
          %v1584 = vld [vmem:[#allocation2 + $0x100] sm:$0x3]
          %v1585 = vld [vmem:[#allocation2 + $0x108] sm:$0xff]
          %v1586 = vld [vmem:[#allocation2 + $0x110] sm:$0xff]
          %v1587 = vld [vmem:[#allocation2 + $0x118] sm:$0x3]
          %v1588 = vld [vmem:[#allocation2 + $0x120] sm:$0xff]
          %v1589 = vld [vmem:[#allocation2 + $0x128] sm:$0xff]
          %v1590 = vld [vmem:[#allocation2 + $0x130] sm:$0x3]
          %v1591 = vld [vmem:[#allocation2 + $0x138] sm:$0xff]
          %v1592 = vld [vmem:[#allocation2 + $0x140] sm:$0xff]
          %v1593 = vld [vmem:[#allocation2 + $0x148] sm:$0x3]
          %v1594 = vld [vmem:[#allocation2 + $0x150] sm:$0xff]
          %v1595 = vld [vmem:[#allocation2 + $0x158] sm:$0xff]
          %v1596 = vld [vmem:[#allocation2 + $0x160] sm:$0x3]
          %v1597 = vld [vmem:[#allocation2 + $0x168] sm:$0xff]
          %v1598 = vld [vmem:[#allocation2 + $0x170] sm:$0xff]
          %v1599 = vld [vmem:[#allocation2 + $0x178] sm:$0x3]
          %v1600 = vld [vmem:[#allocation2 + $0x180] sm:$0xff]
          %v1601 = vld [vmem:[#allocation2 + $0x188] sm:$0xff]
          %v1602 = vld [vmem:[#allocation2 + $0x190] sm:$0x3]
          %v1603 = vld [vmem:[#allocation2 + $0x198] sm:$0xff]
          %v1604 = vld [vmem:[#allocation2 + $0x1a0] sm:$0xff]
          %v1605 = vld [vmem:[#allocation2 + $0x1a8] sm:$0x3]
          %v1606 = vperm.slane %v1517, 0
          %v1607 = vmul.f32 %v1552, %v1606
          %v1608 = vmul.f32 %v1553, %v1606
          %v1609 = vmul.f32 %v1555, %v1606
          %v1610 = vmul.f32 %v1556, %v1606
          %v1611 = vmul.f32 %v1558, %v1606
          %v1612 = vmul.f32 %v1559, %v1606
          %v1613 = vmul.f32 %v1561, %v1606
          %v1614 = vmul.f32 %v1562, %v1606
          %v1615 = vmul.f32 %v1564, %v1606
          %v1616 = vmul.f32 %v1565, %v1606
          %v1617 = vmul.f32 %v1567, %v1606
          %v1618 = vmul.f32 %v1568, %v1606
          %v1619 = vmul.f32 %v1570, %v1606
          %v1620 = vmul.f32 %v1571, %v1606
          %v1621 = vmul.f32 %v1573, %v1606
          %v1622 = vmul.f32 %v1574, %v1606
          %v1623 = vmul.f32 %v1576, %v1606
          %v1624 = vmul.f32 %v1577, %v1606
          %v1625 = vmul.f32 %v1579, %v1606
          %v1626 = vmul.f32 %v1580, %v1606
          %v1627 = vmul.f32 %v1582, %v1606
          %v1628 = vmul.f32 %v1583, %v1606
          %v1629 = vmul.f32 %v1585, %v1606
          %v1630 = vmul.f32 %v1586, %v1606
          %v1631 = vmul.f32 %v1588, %v1606
          %v1632 = vmul.f32 %v1589, %v1606
          %v1633 = vmul.f32 %v1591, %v1606
          %v1634 = vmul.f32 %v1592, %v1606
          %v1635 = vmul.f32 %v1594, %v1606
          %v1636 = vmul.f32 %v1595, %v1606
          %v1637 = vmul.f32 %v1597, %v1606
          %v1638 = vmul.f32 %v1598, %v1606
          %v1639 = vperm.slane %v1517, 1
          %v1640 = vmul.f32 %v1552, %v1639
          %v1641 = vmul.f32 %v1553, %v1639
          %v1642 = vmul.f32 %v1554, %v1639
          %v1643 = vmul.f32 %v1555, %v1639
          %v1644 = vmul.f32 %v1556, %v1639
          %v1645 = vmul.f32 %v1557, %v1639
          %v1646 = vmul.f32 %v1558, %v1639
          %v1647 = vmul.f32 %v1559, %v1639
          %v1648 = vmul.f32 %v1560, %v1639
          %v1649 = vmul.f32 %v1561, %v1639
          %v1650 = vmul.f32 %v1562, %v1639
          %v1651 = vmul.f32 %v1563, %v1639
          %v1652 = vmul.f32 %v1564, %v1639
          %v1653 = vmul.f32 %v1565, %v1639
          %v1654 = vmul.f32 %v1566, %v1639
          %v1655 = vmul.f32 %v1567, %v1639
          %v1656 = vmul.f32 %v1568, %v1639
          %v1657 = vmul.f32 %v1569, %v1639
          %v1658 = vmul.f32 %v1570, %v1639
          %v1659 = vmul.f32 %v1571, %v1639
          %v1660 = vmul.f32 %v1572, %v1639
          %v1661 = vmul.f32 %v1573, %v1639
          %v1662 = vmul.f32 %v1574, %v1639
          %v1663 = vmul.f32 %v1575, %v1639
          %v1664 = vmul.f32 %v1576, %v1639
          %v1665 = vmul.f32 %v1577, %v1639
          %v1666 = vmul.f32 %v1578, %v1639
          %v1667 = vmul.f32 %v1579, %v1639
          %v1668 = vmul.f32 %v1580, %v1639
          %v1669 = vmul.f32 %v1581, %v1639
          %v1670 = vmul.f32 %v1582, %v1639
          %v1671 = vmul.f32 %v1583, %v1639
          %v1672 = vmul.f32 %v1584, %v1639
          %v1673 = vmul.f32 %v1585, %v1639
          %v1674 = vmul.f32 %v1586, %v1639
          %v1675 = vmul.f32 %v1587, %v1639
          %v1676 = vmul.f32 %v1588, %v1639
          %v1677 = vmul.f32 %v1589, %v1639
          %v1678 = vmul.f32 %v1590, %v1639
          %v1679 = vmul.f32 %v1591, %v1639
          %v1680 = vmul.f32 %v1592, %v1639
          %v1681 = vmul.f32 %v1593, %v1639
          %v1682 = vmul.f32 %v1594, %v1639
          %v1683 = vmul.f32 %v1595, %v1639
          %v1684 = vmul.f32 %v1596, %v1639
          %v1685 = vmul.f32 %v1597, %v1639
          %v1686 = vmul.f32 %v1598, %v1639
          %v1687 = vmul.f32 %v1599, %v1639
          %vm1736 = vcmask 1046528
          %v1737 = vrot.slane %v1640, 1
          %v1738 = vrot.slane %v1641, 1
          %v1739 = vsel %vm1736, %v1737, %v1738
          %v1740 = vrot.slane %v1642, 1
          %v1741 = vsel %vm1736, %v1738, %v1740
          %v1742 = vrot.slane %v1643, 1
          %v1743 = vrot.slane %v1644, 1
          %v1744 = vsel %vm1736, %v1742, %v1743
          %v1745 = vrot.slane %v1645, 1
          %v1746 = vsel %vm1736, %v1743, %v1745
          %v1747 = vrot.slane %v1646, 1
          %v1748 = vrot.slane %v1647, 1
          %v1749 = vsel %vm1736, %v1747, %v1748
          %v1750 = vrot.slane %v1648, 1
          %v1751 = vsel %vm1736, %v1748, %v1750
          %v1752 = vrot.slane %v1649, 1
          %v1753 = vrot.slane %v1650, 1
          %v1754 = vsel %vm1736, %v1752, %v1753
          %v1755 = vrot.slane %v1651, 1
          %v1756 = vsel %vm1736, %v1753, %v1755
          %v1757 = vrot.slane %v1652, 1
          %v1758 = vrot.slane %v1653, 1
          %v1759 = vsel %vm1736, %v1757, %v1758
          %v1760 = vrot.slane %v1654, 1
          %v1761 = vsel %vm1736, %v1758, %v1760
          %v1762 = vrot.slane %v1655, 1
          %v1763 = vrot.slane %v1656, 1
          %v1764 = vsel %vm1736, %v1762, %v1763
          %v1765 = vrot.slane %v1657, 1
          %v1766 = vsel %vm1736, %v1763, %v1765
          %v1767 = vrot.slane %v1658, 1
          %v1768 = vrot.slane %v1659, 1
          %v1769 = vsel %vm1736, %v1767, %v1768
          %v1770 = vrot.slane %v1660, 1
          %v1771 = vsel %vm1736, %v1768, %v1770
          %v1772 = vrot.slane %v1661, 1
          %v1773 = vrot.slane %v1662, 1
          %v1774 = vsel %vm1736, %v1772, %v1773
          %v1775 = vrot.slane %v1663, 1
          %v1776 = vsel %vm1736, %v1773, %v1775
          %v1777 = vrot.slane %v1664, 1
          %v1778 = vrot.slane %v1665, 1
          %v1779 = vsel %vm1736, %v1777, %v1778
          %v1780 = vrot.slane %v1666, 1
          %v1781 = vsel %vm1736, %v1778, %v1780
          %v1782 = vrot.slane %v1667, 1
          %v1783 = vrot.slane %v1668, 1
          %v1784 = vsel %vm1736, %v1782, %v1783
          %v1785 = vrot.slane %v1669, 1
          %v1786 = vsel %vm1736, %v1783, %v1785
          %v1787 = vrot.slane %v1670, 1
          %v1788 = vrot.slane %v1671, 1
          %v1789 = vsel %vm1736, %v1787, %v1788
          %v1790 = vrot.slane %v1672, 1
          %v1791 = vsel %vm1736, %v1788, %v1790
          %v1792 = vrot.slane %v1673, 1
          %v1793 = vrot.slane %v1674, 1
          %v1794 = vsel %vm1736, %v1792, %v1793
          %v1795 = vrot.slane %v1675, 1
          %v1796 = vsel %vm1736, %v1793, %v1795
          %v1797 = vrot.slane %v1676, 1
          %v1798 = vrot.slane %v1677, 1
          %v1799 = vsel %vm1736, %v1797, %v1798
          %v1800 = vrot.slane %v1678, 1
          %v1801 = vsel %vm1736, %v1798, %v1800
          %v1802 = vrot.slane %v1679, 1
          %v1803 = vrot.slane %v1680, 1
          %v1804 = vsel %vm1736, %v1802, %v1803
          %v1805 = vrot.slane %v1681, 1
          %v1806 = vsel %vm1736, %v1803, %v1805
          %v1807 = vrot.slane %v1682, 1
          %v1808 = vrot.slane %v1683, 1
          %v1809 = vsel %vm1736, %v1807, %v1808
          %v1810 = vrot.slane %v1684, 1
          %v1811 = vsel %vm1736, %v1808, %v1810
          %v1812 = vrot.slane %v1685, 1
          %v1813 = vrot.slane %v1686, 1
          %v1814 = vsel %vm1736, %v1812, %v1813
          %v1815 = vrot.slane %v1687, 1
          %v1816 = vsel %vm1736, %v1813, %v1815
          %v1849 = vadd.f32 %v1607, %v1739
          %v1850 = vadd.f32 %v1608, %v1741
          %v1851 = vadd.f32 %v1609, %v1744
          %v1852 = vadd.f32 %v1610, %v1746
          %v1853 = vadd.f32 %v1611, %v1749
          %v1854 = vadd.f32 %v1612, %v1751
          %v1855 = vadd.f32 %v1613, %v1754
          %v1856 = vadd.f32 %v1614, %v1756
          %v1857 = vadd.f32 %v1615, %v1759
          %v1858 = vadd.f32 %v1616, %v1761
          %v1859 = vadd.f32 %v1617, %v1764
          %v1860 = vadd.f32 %v1618, %v1766
          %v1861 = vadd.f32 %v1619, %v1769
          %v1862 = vadd.f32 %v1620, %v1771
          %v1863 = vadd.f32 %v1621, %v1774
          %v1864 = vadd.f32 %v1622, %v1776
          %v1865 = vadd.f32 %v1623, %v1779
          %v1866 = vadd.f32 %v1624, %v1781
          %v1867 = vadd.f32 %v1625, %v1784
          %v1868 = vadd.f32 %v1626, %v1786
          %v1869 = vadd.f32 %v1627, %v1789
          %v1870 = vadd.f32 %v1628, %v1791
          %v1871 = vadd.f32 %v1629, %v1794
          %v1872 = vadd.f32 %v1630, %v1796
          %v1873 = vadd.f32 %v1631, %v1799
          %v1874 = vadd.f32 %v1632, %v1801
          %v1875 = vadd.f32 %v1633, %v1804
          %v1876 = vadd.f32 %v1634, %v1806
          %v1877 = vadd.f32 %v1635, %v1809
          %v1878 = vadd.f32 %v1636, %v1811
          %v1879 = vadd.f32 %v1637, %v1814
          %v1880 = vadd.f32 %v1638, %v1816
          %v1881 = vperm.slane %v1517, 2
          %v1882 = vmul.f32 %v1552, %v1881
          %v1883 = vmul.f32 %v1553, %v1881
          %v1884 = vmul.f32 %v1554, %v1881
          %v1885 = vmul.f32 %v1555, %v1881
          %v1886 = vmul.f32 %v1556, %v1881
          %v1887 = vmul.f32 %v1557, %v1881
          %v1888 = vmul.f32 %v1558, %v1881
          %v1889 = vmul.f32 %v1559, %v1881
          %v1890 = vmul.f32 %v1560, %v1881
          %v1891 = vmul.f32 %v1561, %v1881
          %v1892 = vmul.f32 %v1562, %v1881
          %v1893 = vmul.f32 %v1563, %v1881
          %v1894 = vmul.f32 %v1564, %v1881
          %v1895 = vmul.f32 %v1565, %v1881
          %v1896 = vmul.f32 %v1566, %v1881
          %v1897 = vmul.f32 %v1567, %v1881
          %v1898 = vmul.f32 %v1568, %v1881
          %v1899 = vmul.f32 %v1569, %v1881
          %v1900 = vmul.f32 %v1570, %v1881
          %v1901 = vmul.f32 %v1571, %v1881
          %v1902 = vmul.f32 %v1572, %v1881
          %v1903 = vmul.f32 %v1573, %v1881
          %v1904 = vmul.f32 %v1574, %v1881
          %v1905 = vmul.f32 %v1575, %v1881
          %v1906 = vmul.f32 %v1576, %v1881
          %v1907 = vmul.f32 %v1577, %v1881
          %v1908 = vmul.f32 %v1578, %v1881
          %v1909 = vmul.f32 %v1579, %v1881
          %v1910 = vmul.f32 %v1580, %v1881
          %v1911 = vmul.f32 %v1581, %v1881
          %v1912 = vmul.f32 %v1582, %v1881
          %v1913 = vmul.f32 %v1583, %v1881
          %v1914 = vmul.f32 %v1584, %v1881
          %v1915 = vmul.f32 %v1585, %v1881
          %v1916 = vmul.f32 %v1586, %v1881
          %v1917 = vmul.f32 %v1587, %v1881
          %v1918 = vmul.f32 %v1588, %v1881
          %v1919 = vmul.f32 %v1589, %v1881
          %v1920 = vmul.f32 %v1590, %v1881
          %v1921 = vmul.f32 %v1591, %v1881
          %v1922 = vmul.f32 %v1592, %v1881
          %v1923 = vmul.f32 %v1593, %v1881
          %v1924 = vmul.f32 %v1594, %v1881
          %v1925 = vmul.f32 %v1595, %v1881
          %v1926 = vmul.f32 %v1596, %v1881
          %v1927 = vmul.f32 %v1597, %v1881
          %v1928 = vmul.f32 %v1598, %v1881
          %v1929 = vmul.f32 %v1599, %v1881
          %vm1978 = vcmask 1045504
          %v1979 = vrot.slane %v1882, 2
          %v1980 = vrot.slane %v1883, 2
          %v1981 = vsel %vm1978, %v1979, %v1980
          %v1982 = vrot.slane %v1884, 2
          %v1983 = vsel %vm1978, %v1980, %v1982
          %v1984 = vrot.slane %v1885, 2
          %v1985 = vrot.slane %v1886, 2
          %v1986 = vsel %vm1978, %v1984, %v1985
          %v1987 = vrot.slane %v1887, 2
          %v1988 = vsel %vm1978, %v1985, %v1987
          %v1989 = vrot.slane %v1888, 2
          %v1990 = vrot.slane %v1889, 2
          %v1991 = vsel %vm1978, %v1989, %v1990
          %v1992 = vrot.slane %v1890, 2
          %v1993 = vsel %vm1978, %v1990, %v1992
          %v1994 = vrot.slane %v1891, 2
          %v1995 = vrot.slane %v1892, 2
          %v1996 = vsel %vm1978, %v1994, %v1995
          %v1997 = vrot.slane %v1893, 2
          %v1998 = vsel %vm1978, %v1995, %v1997
          %v1999 = vrot.slane %v1894, 2
          %v2000 = vrot.slane %v1895, 2
          %v2001 = vsel %vm1978, %v1999, %v2000
          %v2002 = vrot.slane %v1896, 2
          %v2003 = vsel %vm1978, %v2000, %v2002
          %v2004 = vrot.slane %v1897, 2
          %v2005 = vrot.slane %v1898, 2
          %v2006 = vsel %vm1978, %v2004, %v2005
          %v2007 = vrot.slane %v1899, 2
          %v2008 = vsel %vm1978, %v2005, %v2007
          %v2009 = vrot.slane %v1900, 2
          %v2010 = vrot.slane %v1901, 2
          %v2011 = vsel %vm1978, %v2009, %v2010
          %v2012 = vrot.slane %v1902, 2
          %v2013 = vsel %vm1978, %v2010, %v2012
          %v2014 = vrot.slane %v1903, 2
          %v2015 = vrot.slane %v1904, 2
          %v2016 = vsel %vm1978, %v2014, %v2015
          %v2017 = vrot.slane %v1905, 2
          %v2018 = vsel %vm1978, %v2015, %v2017
          %v2019 = vrot.slane %v1906, 2
          %v2020 = vrot.slane %v1907, 2
          %v2021 = vsel %vm1978, %v2019, %v2020
          %v2022 = vrot.slane %v1908, 2
          %v2023 = vsel %vm1978, %v2020, %v2022
          %v2024 = vrot.slane %v1909, 2
          %v2025 = vrot.slane %v1910, 2
          %v2026 = vsel %vm1978, %v2024, %v2025
          %v2027 = vrot.slane %v1911, 2
          %v2028 = vsel %vm1978, %v2025, %v2027
          %v2029 = vrot.slane %v1912, 2
          %v2030 = vrot.slane %v1913, 2
          %v2031 = vsel %vm1978, %v2029, %v2030
          %v2032 = vrot.slane %v1914, 2
          %v2033 = vsel %vm1978, %v2030, %v2032
          %v2034 = vrot.slane %v1915, 2
          %v2035 = vrot.slane %v1916, 2
          %v2036 = vsel %vm1978, %v2034, %v2035
          %v2037 = vrot.slane %v1917, 2
          %v2038 = vsel %vm1978, %v2035, %v2037
          %v2039 = vrot.slane %v1918, 2
          %v2040 = vrot.slane %v1919, 2
          %v2041 = vsel %vm1978, %v2039, %v2040
          %v2042 = vrot.slane %v1920, 2
          %v2043 = vsel %vm1978, %v2040, %v2042
          %v2044 = vrot.slane %v1921, 2
          %v2045 = vrot.slane %v1922, 2
          %v2046 = vsel %vm1978, %v2044, %v2045
          %v2047 = vrot.slane %v1923, 2
          %v2048 = vsel %vm1978, %v2045, %v2047
          %v2049 = vrot.slane %v1924, 2
          %v2050 = vrot.slane %v1925, 2
          %v2051 = vsel %vm1978, %v2049, %v2050
          %v2052 = vrot.slane %v1926, 2
          %v2053 = vsel %vm1978, %v2050, %v2052
          %v2054 = vrot.slane %v1927, 2
          %v2055 = vrot.slane %v1928, 2
          %v2056 = vsel %vm1978, %v2054, %v2055
          %v2057 = vrot.slane %v1929, 2
          %v2058 = vsel %vm1978, %v2055, %v2057
          %v2091 = vadd.f32 %v1849, %v1981
          %v2092 = vadd.f32 %v1850, %v1983
          %v2093 = vadd.f32 %v1851, %v1986
          %v2094 = vadd.f32 %v1852, %v1988
          %v2095 = vadd.f32 %v1853, %v1991
          %v2096 = vadd.f32 %v1854, %v1993
          %v2097 = vadd.f32 %v1855, %v1996
          %v2098 = vadd.f32 %v1856, %v1998
          %v2099 = vadd.f32 %v1857, %v2001
          %v2100 = vadd.f32 %v1858, %v2003
          %v2101 = vadd.f32 %v1859, %v2006
          %v2102 = vadd.f32 %v1860, %v2008
          %v2103 = vadd.f32 %v1861, %v2011
          %v2104 = vadd.f32 %v1862, %v2013
          %v2105 = vadd.f32 %v1863, %v2016
          %v2106 = vadd.f32 %v1864, %v2018
          %v2107 = vadd.f32 %v1865, %v2021
          %v2108 = vadd.f32 %v1866, %v2023
          %v2109 = vadd.f32 %v1867, %v2026
          %v2110 = vadd.f32 %v1868, %v2028
          %v2111 = vadd.f32 %v1869, %v2031
          %v2112 = vadd.f32 %v1870, %v2033
          %v2113 = vadd.f32 %v1871, %v2036
          %v2114 = vadd.f32 %v1872, %v2038
          %v2115 = vadd.f32 %v1873, %v2041
          %v2116 = vadd.f32 %v1874, %v2043
          %v2117 = vadd.f32 %v1875, %v2046
          %v2118 = vadd.f32 %v1876, %v2048
          %v2119 = vadd.f32 %v1877, %v2051
          %v2120 = vadd.f32 %v1878, %v2053
          %v2121 = vadd.f32 %v1879, %v2056
          %v2122 = vadd.f32 %v1880, %v2058
          %v2123 = vperm.slane %v1517, 3
          %v2124 = vmul.f32 %v1555, %v2123
          %v2125 = vmul.f32 %v1556, %v2123
          %v2126 = vmul.f32 %v1558, %v2123
          %v2127 = vmul.f32 %v1559, %v2123
          %v2128 = vmul.f32 %v1561, %v2123
          %v2129 = vmul.f32 %v1562, %v2123
          %v2130 = vmul.f32 %v1564, %v2123
          %v2131 = vmul.f32 %v1565, %v2123
          %v2132 = vmul.f32 %v1567, %v2123
          %v2133 = vmul.f32 %v1568, %v2123
          %v2134 = vmul.f32 %v1570, %v2123
          %v2135 = vmul.f32 %v1571, %v2123
          %v2136 = vmul.f32 %v1573, %v2123
          %v2137 = vmul.f32 %v1574, %v2123
          %v2138 = vmul.f32 %v1576, %v2123
          %v2139 = vmul.f32 %v1577, %v2123
          %v2140 = vmul.f32 %v1579, %v2123
          %v2141 = vmul.f32 %v1580, %v2123
          %v2142 = vmul.f32 %v1582, %v2123
          %v2143 = vmul.f32 %v1583, %v2123
          %v2144 = vmul.f32 %v1585, %v2123
          %v2145 = vmul.f32 %v1586, %v2123
          %v2146 = vmul.f32 %v1588, %v2123
          %v2147 = vmul.f32 %v1589, %v2123
          %v2148 = vmul.f32 %v1591, %v2123
          %v2149 = vmul.f32 %v1592, %v2123
          %v2150 = vmul.f32 %v1594, %v2123
          %v2151 = vmul.f32 %v1595, %v2123
          %v2152 = vmul.f32 %v1597, %v2123
          %v2153 = vmul.f32 %v1598, %v2123
          %v2154 = vmul.f32 %v1600, %v2123
          %v2155 = vmul.f32 %v1601, %v2123
          %v2156 = vadd.f32 %v2091, %v2124
          %v2157 = vadd.f32 %v2092, %v2125
          %v2158 = vadd.f32 %v2093, %v2126
          %v2159 = vadd.f32 %v2094, %v2127
          %v2160 = vadd.f32 %v2095, %v2128
          %v2161 = vadd.f32 %v2096, %v2129
          %v2162 = vadd.f32 %v2097, %v2130
          %v2163 = vadd.f32 %v2098, %v2131
          %v2164 = vadd.f32 %v2099, %v2132
          %v2165 = vadd.f32 %v2100, %v2133
          %v2166 = vadd.f32 %v2101, %v2134
          %v2167 = vadd.f32 %v2102, %v2135
          %v2168 = vadd.f32 %v2103, %v2136
          %v2169 = vadd.f32 %v2104, %v2137
          %v2170 = vadd.f32 %v2105, %v2138
          %v2171 = vadd.f32 %v2106, %v2139
          %v2172 = vadd.f32 %v2107, %v2140
          %v2173 = vadd.f32 %v2108, %v2141
          %v2174 = vadd.f32 %v2109, %v2142
          %v2175 = vadd.f32 %v2110, %v2143
          %v2176 = vadd.f32 %v2111, %v2144
          %v2177 = vadd.f32 %v2112, %v2145
          %v2178 = vadd.f32 %v2113, %v2146
          %v2179 = vadd.f32 %v2114, %v2147
          %v2180 = vadd.f32 %v2115, %v2148
          %v2181 = vadd.f32 %v2116, %v2149
          %v2182 = vadd.f32 %v2117, %v2150
          %v2183 = vadd.f32 %v2118, %v2151
          %v2184 = vadd.f32 %v2119, %v2152
          %v2185 = vadd.f32 %v2120, %v2153
          %v2186 = vadd.f32 %v2121, %v2154
          %v2187 = vadd.f32 %v2122, %v2155
          %v2188 = vperm.slane %v1517, 4
          %v2189 = vmul.f32 %v1555, %v2188
          %v2190 = vmul.f32 %v1556, %v2188
          %v2191 = vmul.f32 %v1557, %v2188
          %v2192 = vmul.f32 %v1558, %v2188
          %v2193 = vmul.f32 %v1559, %v2188
          %v2194 = vmul.f32 %v1560, %v2188
          %v2195 = vmul.f32 %v1561, %v2188
          %v2196 = vmul.f32 %v1562, %v2188
          %v2197 = vmul.f32 %v1563, %v2188
          %v2198 = vmul.f32 %v1564, %v2188
          %v2199 = vmul.f32 %v1565, %v2188
          %v2200 = vmul.f32 %v1566, %v2188
          %v2201 = vmul.f32 %v1567, %v2188
          %v2202 = vmul.f32 %v1568, %v2188
          %v2203 = vmul.f32 %v1569, %v2188
          %v2204 = vmul.f32 %v1570, %v2188
          %v2205 = vmul.f32 %v1571, %v2188
          %v2206 = vmul.f32 %v1572, %v2188
          %v2207 = vmul.f32 %v1573, %v2188
          %v2208 = vmul.f32 %v1574, %v2188
          %v2209 = vmul.f32 %v1575, %v2188
          %v2210 = vmul.f32 %v1576, %v2188
          %v2211 = vmul.f32 %v1577, %v2188
          %v2212 = vmul.f32 %v1578, %v2188
          %v2213 = vmul.f32 %v1579, %v2188
          %v2214 = vmul.f32 %v1580, %v2188
          %v2215 = vmul.f32 %v1581, %v2188
          %v2216 = vmul.f32 %v1582, %v2188
          %v2217 = vmul.f32 %v1583, %v2188
          %v2218 = vmul.f32 %v1584, %v2188
          %v2219 = vmul.f32 %v1585, %v2188
          %v2220 = vmul.f32 %v1586, %v2188
          %v2221 = vmul.f32 %v1587, %v2188
          %v2222 = vmul.f32 %v1588, %v2188
          %v2223 = vmul.f32 %v1589, %v2188
          %v2224 = vmul.f32 %v1590, %v2188
          %v2225 = vmul.f32 %v1591, %v2188
          %v2226 = vmul.f32 %v1592, %v2188
          %v2227 = vmul.f32 %v1593, %v2188
          %v2228 = vmul.f32 %v1594, %v2188
          %v2229 = vmul.f32 %v1595, %v2188
          %v2230 = vmul.f32 %v1596, %v2188
          %v2231 = vmul.f32 %v1597, %v2188
          %v2232 = vmul.f32 %v1598, %v2188
          %v2233 = vmul.f32 %v1599, %v2188
          %v2234 = vmul.f32 %v1600, %v2188
          %v2235 = vmul.f32 %v1601, %v2188
          %v2236 = vmul.f32 %v1602, %v2188
          %v2285 = vrot.slane %v2189, 1
          %v2286 = vrot.slane %v2190, 1
          %v2287 = vsel %vm1736, %v2285, %v2286
          %v2288 = vrot.slane %v2191, 1
          %v2289 = vsel %vm1736, %v2286, %v2288
          %v2290 = vrot.slane %v2192, 1
          %v2291 = vrot.slane %v2193, 1
          %v2292 = vsel %vm1736, %v2290, %v2291
          %v2293 = vrot.slane %v2194, 1
          %v2294 = vsel %vm1736, %v2291, %v2293
          %v2295 = vrot.slane %v2195, 1
          %v2296 = vrot.slane %v2196, 1
          %v2297 = vsel %vm1736, %v2295, %v2296
          %v2298 = vrot.slane %v2197, 1
          %v2299 = vsel %vm1736, %v2296, %v2298
          %v2300 = vrot.slane %v2198, 1
          %v2301 = vrot.slane %v2199, 1
          %v2302 = vsel %vm1736, %v2300, %v2301
          %v2303 = vrot.slane %v2200, 1
          %v2304 = vsel %vm1736, %v2301, %v2303
          %v2305 = vrot.slane %v2201, 1
          %v2306 = vrot.slane %v2202, 1
          %v2307 = vsel %vm1736, %v2305, %v2306
          %v2308 = vrot.slane %v2203, 1
          %v2309 = vsel %vm1736, %v2306, %v2308
          %v2310 = vrot.slane %v2204, 1
          %v2311 = vrot.slane %v2205, 1
          %v2312 = vsel %vm1736, %v2310, %v2311
          %v2313 = vrot.slane %v2206, 1
          %v2314 = vsel %vm1736, %v2311, %v2313
          %v2315 = vrot.slane %v2207, 1
          %v2316 = vrot.slane %v2208, 1
          %v2317 = vsel %vm1736, %v2315, %v2316
          %v2318 = vrot.slane %v2209, 1
          %v2319 = vsel %vm1736, %v2316, %v2318
          %v2320 = vrot.slane %v2210, 1
          %v2321 = vrot.slane %v2211, 1
          %v2322 = vsel %vm1736, %v2320, %v2321
          %v2323 = vrot.slane %v2212, 1
          %v2324 = vsel %vm1736, %v2321, %v2323
          %v2325 = vrot.slane %v2213, 1
          %v2326 = vrot.slane %v2214, 1
          %v2327 = vsel %vm1736, %v2325, %v2326
          %v2328 = vrot.slane %v2215, 1
          %v2329 = vsel %vm1736, %v2326, %v2328
          %v2330 = vrot.slane %v2216, 1
          %v2331 = vrot.slane %v2217, 1
          %v2332 = vsel %vm1736, %v2330, %v2331
          %v2333 = vrot.slane %v2218, 1
          %v2334 = vsel %vm1736, %v2331, %v2333
          %v2335 = vrot.slane %v2219, 1
          %v2336 = vrot.slane %v2220, 1
          %v2337 = vsel %vm1736, %v2335, %v2336
          %v2338 = vrot.slane %v2221, 1
          %v2339 = vsel %vm1736, %v2336, %v2338
          %v2340 = vrot.slane %v2222, 1
          %v2341 = vrot.slane %v2223, 1
          %v2342 = vsel %vm1736, %v2340, %v2341
          %v2343 = vrot.slane %v2224, 1
          %v2344 = vsel %vm1736, %v2341, %v2343
          %v2345 = vrot.slane %v2225, 1
          %v2346 = vrot.slane %v2226, 1
          %v2347 = vsel %vm1736, %v2345, %v2346
          %v2348 = vrot.slane %v2227, 1
          %v2349 = vsel %vm1736, %v2346, %v2348
          %v2350 = vrot.slane %v2228, 1
          %v2351 = vrot.slane %v2229, 1
          %v2352 = vsel %vm1736, %v2350, %v2351
          %v2353 = vrot.slane %v2230, 1
          %v2354 = vsel %vm1736, %v2351, %v2353
          %v2355 = vrot.slane %v2231, 1
          %v2356 = vrot.slane %v2232, 1
          %v2357 = vsel %vm1736, %v2355, %v2356
          %v2358 = vrot.slane %v2233, 1
          %v2359 = vsel %vm1736, %v2356, %v2358
          %v2360 = vrot.slane %v2234, 1
          %v2361 = vrot.slane %v2235, 1
          %v2362 = vsel %vm1736, %v2360, %v2361
          %v2363 = vrot.slane %v2236, 1
          %v2364 = vsel %vm1736, %v2361, %v2363
          %v2397 = vadd.f32 %v2156, %v2287
          %v2398 = vadd.f32 %v2157, %v2289
          %v2399 = vadd.f32 %v2158, %v2292
          %v2400 = vadd.f32 %v2159, %v2294
          %v2401 = vadd.f32 %v2160, %v2297
          %v2402 = vadd.f32 %v2161, %v2299
          %v2403 = vadd.f32 %v2162, %v2302
          %v2404 = vadd.f32 %v2163, %v2304
          %v2405 = vadd.f32 %v2164, %v2307
          %v2406 = vadd.f32 %v2165, %v2309
          %v2407 = vadd.f32 %v2166, %v2312
          %v2408 = vadd.f32 %v2167, %v2314
          %v2409 = vadd.f32 %v2168, %v2317
          %v2410 = vadd.f32 %v2169, %v2319
          %v2411 = vadd.f32 %v2170, %v2322
          %v2412 = vadd.f32 %v2171, %v2324
          %v2413 = vadd.f32 %v2172, %v2327
          %v2414 = vadd.f32 %v2173, %v2329
          %v2415 = vadd.f32 %v2174, %v2332
          %v2416 = vadd.f32 %v2175, %v2334
          %v2417 = vadd.f32 %v2176, %v2337
          %v2418 = vadd.f32 %v2177, %v2339
          %v2419 = vadd.f32 %v2178, %v2342
          %v2420 = vadd.f32 %v2179, %v2344
          %v2421 = vadd.f32 %v2180, %v2347
          %v2422 = vadd.f32 %v2181, %v2349
          %v2423 = vadd.f32 %v2182, %v2352
          %v2424 = vadd.f32 %v2183, %v2354
          %v2425 = vadd.f32 %v2184, %v2357
          %v2426 = vadd.f32 %v2185, %v2359
          %v2427 = vadd.f32 %v2186, %v2362
          %v2428 = vadd.f32 %v2187, %v2364
          %v2429 = vperm.slane %v1517, 5
          %v2430 = vmul.f32 %v1555, %v2429
          %v2431 = vmul.f32 %v1556, %v2429
          %v2432 = vmul.f32 %v1557, %v2429
          %v2433 = vmul.f32 %v1558, %v2429
          %v2434 = vmul.f32 %v1559, %v2429
          %v2435 = vmul.f32 %v1560, %v2429
          %v2436 = vmul.f32 %v1561, %v2429
          %v2437 = vmul.f32 %v1562, %v2429
          %v2438 = vmul.f32 %v1563, %v2429
          %v2439 = vmul.f32 %v1564, %v2429
          %v2440 = vmul.f32 %v1565, %v2429
          %v2441 = vmul.f32 %v1566, %v2429
          %v2442 = vmul.f32 %v1567, %v2429
          %v2443 = vmul.f32 %v1568, %v2429
          %v2444 = vmul.f32 %v1569, %v2429
          %v2445 = vmul.f32 %v1570, %v2429
          %v2446 = vmul.f32 %v1571, %v2429
          %v2447 = vmul.f32 %v1572, %v2429
          %v2448 = vmul.f32 %v1573, %v2429
          %v2449 = vmul.f32 %v1574, %v2429
          %v2450 = vmul.f32 %v1575, %v2429
          %v2451 = vmul.f32 %v1576, %v2429
          %v2452 = vmul.f32 %v1577, %v2429
          %v2453 = vmul.f32 %v1578, %v2429
          %v2454 = vmul.f32 %v1579, %v2429
          %v2455 = vmul.f32 %v1580, %v2429
          %v2456 = vmul.f32 %v1581, %v2429
          %v2457 = vmul.f32 %v1582, %v2429
          %v2458 = vmul.f32 %v1583, %v2429
          %v2459 = vmul.f32 %v1584, %v2429
          %v2460 = vmul.f32 %v1585, %v2429
          %v2461 = vmul.f32 %v1586, %v2429
          %v2462 = vmul.f32 %v1587, %v2429
          %v2463 = vmul.f32 %v1588, %v2429
          %v2464 = vmul.f32 %v1589, %v2429
          %v2465 = vmul.f32 %v1590, %v2429
          %v2466 = vmul.f32 %v1591, %v2429
          %v2467 = vmul.f32 %v1592, %v2429
          %v2468 = vmul.f32 %v1593, %v2429
          %v2469 = vmul.f32 %v1594, %v2429
          %v2470 = vmul.f32 %v1595, %v2429
          %v2471 = vmul.f32 %v1596, %v2429
          %v2472 = vmul.f32 %v1597, %v2429
          %v2473 = vmul.f32 %v1598, %v2429
          %v2474 = vmul.f32 %v1599, %v2429
          %v2475 = vmul.f32 %v1600, %v2429
          %v2476 = vmul.f32 %v1601, %v2429
          %v2477 = vmul.f32 %v1602, %v2429
          %v2526 = vrot.slane %v2430, 2
          %v2527 = vrot.slane %v2431, 2
          %v2528 = vsel %vm1978, %v2526, %v2527
          %v2529 = vrot.slane %v2432, 2
          %v2530 = vsel %vm1978, %v2527, %v2529
          %v2531 = vrot.slane %v2433, 2
          %v2532 = vrot.slane %v2434, 2
          %v2533 = vsel %vm1978, %v2531, %v2532
          %v2534 = vrot.slane %v2435, 2
          %v2535 = vsel %vm1978, %v2532, %v2534
          %v2536 = vrot.slane %v2436, 2
          %v2537 = vrot.slane %v2437, 2
          %v2538 = vsel %vm1978, %v2536, %v2537
          %v2539 = vrot.slane %v2438, 2
          %v2540 = vsel %vm1978, %v2537, %v2539
          %v2541 = vrot.slane %v2439, 2
          %v2542 = vrot.slane %v2440, 2
          %v2543 = vsel %vm1978, %v2541, %v2542
          %v2544 = vrot.slane %v2441, 2
          %v2545 = vsel %vm1978, %v2542, %v2544
          %v2546 = vrot.slane %v2442, 2
          %v2547 = vrot.slane %v2443, 2
          %v2548 = vsel %vm1978, %v2546, %v2547
          %v2549 = vrot.slane %v2444, 2
          %v2550 = vsel %vm1978, %v2547, %v2549
          %v2551 = vrot.slane %v2445, 2
          %v2552 = vrot.slane %v2446, 2
          %v2553 = vsel %vm1978, %v2551, %v2552
          %v2554 = vrot.slane %v2447, 2
          %v2555 = vsel %vm1978, %v2552, %v2554
          %v2556 = vrot.slane %v2448, 2
          %v2557 = vrot.slane %v2449, 2
          %v2558 = vsel %vm1978, %v2556, %v2557
          %v2559 = vrot.slane %v2450, 2
          %v2560 = vsel %vm1978, %v2557, %v2559
          %v2561 = vrot.slane %v2451, 2
          %v2562 = vrot.slane %v2452, 2
          %v2563 = vsel %vm1978, %v2561, %v2562
          %v2564 = vrot.slane %v2453, 2
          %v2565 = vsel %vm1978, %v2562, %v2564
          %v2566 = vrot.slane %v2454, 2
          %v2567 = vrot.slane %v2455, 2
          %v2568 = vsel %vm1978, %v2566, %v2567
          %v2569 = vrot.slane %v2456, 2
          %v2570 = vsel %vm1978, %v2567, %v2569
          %v2571 = vrot.slane %v2457, 2
          %v2572 = vrot.slane %v2458, 2
          %v2573 = vsel %vm1978, %v2571, %v2572
          %v2574 = vrot.slane %v2459, 2
          %v2575 = vsel %vm1978, %v2572, %v2574
          %v2576 = vrot.slane %v2460, 2
          %v2577 = vrot.slane %v2461, 2
          %v2578 = vsel %vm1978, %v2576, %v2577
          %v2579 = vrot.slane %v2462, 2
          %v2580 = vsel %vm1978, %v2577, %v2579
          %v2581 = vrot.slane %v2463, 2
          %v2582 = vrot.slane %v2464, 2
          %v2583 = vsel %vm1978, %v2581, %v2582
          %v2584 = vrot.slane %v2465, 2
          %v2585 = vsel %vm1978, %v2582, %v2584
          %v2586 = vrot.slane %v2466, 2
          %v2587 = vrot.slane %v2467, 2
          %v2588 = vsel %vm1978, %v2586, %v2587
          %v2589 = vrot.slane %v2468, 2
          %v2590 = vsel %vm1978, %v2587, %v2589
          %v2591 = vrot.slane %v2469, 2
          %v2592 = vrot.slane %v2470, 2
          %v2593 = vsel %vm1978, %v2591, %v2592
          %v2594 = vrot.slane %v2471, 2
          %v2595 = vsel %vm1978, %v2592, %v2594
          %v2596 = vrot.slane %v2472, 2
          %v2597 = vrot.slane %v2473, 2
          %v2598 = vsel %vm1978, %v2596, %v2597
          %v2599 = vrot.slane %v2474, 2
          %v2600 = vsel %vm1978, %v2597, %v2599
          %v2601 = vrot.slane %v2475, 2
          %v2602 = vrot.slane %v2476, 2
          %v2603 = vsel %vm1978, %v2601, %v2602
          %v2604 = vrot.slane %v2477, 2
          %v2605 = vsel %vm1978, %v2602, %v2604
          %v2638 = vadd.f32 %v2397, %v2528
          %v2639 = vadd.f32 %v2398, %v2530
          %v2640 = vadd.f32 %v2399, %v2533
          %v2641 = vadd.f32 %v2400, %v2535
          %v2642 = vadd.f32 %v2401, %v2538
          %v2643 = vadd.f32 %v2402, %v2540
          %v2644 = vadd.f32 %v2403, %v2543
          %v2645 = vadd.f32 %v2404, %v2545
          %v2646 = vadd.f32 %v2405, %v2548
          %v2647 = vadd.f32 %v2406, %v2550
          %v2648 = vadd.f32 %v2407, %v2553
          %v2649 = vadd.f32 %v2408, %v2555
          %v2650 = vadd.f32 %v2409, %v2558
          %v2651 = vadd.f32 %v2410, %v2560
          %v2652 = vadd.f32 %v2411, %v2563
          %v2653 = vadd.f32 %v2412, %v2565
          %v2654 = vadd.f32 %v2413, %v2568
          %v2655 = vadd.f32 %v2414, %v2570
          %v2656 = vadd.f32 %v2415, %v2573
          %v2657 = vadd.f32 %v2416, %v2575
          %v2658 = vadd.f32 %v2417, %v2578
          %v2659 = vadd.f32 %v2418, %v2580
          %v2660 = vadd.f32 %v2419, %v2583
          %v2661 = vadd.f32 %v2420, %v2585
          %v2662 = vadd.f32 %v2421, %v2588
          %v2663 = vadd.f32 %v2422, %v2590
          %v2664 = vadd.f32 %v2423, %v2593
          %v2665 = vadd.f32 %v2424, %v2595
          %v2666 = vadd.f32 %v2425, %v2598
          %v2667 = vadd.f32 %v2426, %v2600
          %v2668 = vadd.f32 %v2427, %v2603
          %v2669 = vadd.f32 %v2428, %v2605
          %v2670 = vperm.slane %v1517, 6
          %v2671 = vmul.f32 %v1558, %v2670
          %v2672 = vmul.f32 %v1559, %v2670
          %v2673 = vmul.f32 %v1561, %v2670
          %v2674 = vmul.f32 %v1562, %v2670
          %v2675 = vmul.f32 %v1564, %v2670
          %v2676 = vmul.f32 %v1565, %v2670
          %v2677 = vmul.f32 %v1567, %v2670
          %v2678 = vmul.f32 %v1568, %v2670
          %v2679 = vmul.f32 %v1570, %v2670
          %v2680 = vmul.f32 %v1571, %v2670
          %v2681 = vmul.f32 %v1573, %v2670
          %v2682 = vmul.f32 %v1574, %v2670
          %v2683 = vmul.f32 %v1576, %v2670
          %v2684 = vmul.f32 %v1577, %v2670
          %v2685 = vmul.f32 %v1579, %v2670
          %v2686 = vmul.f32 %v1580, %v2670
          %v2687 = vmul.f32 %v1582, %v2670
          %v2688 = vmul.f32 %v1583, %v2670
          %v2689 = vmul.f32 %v1585, %v2670
          %v2690 = vmul.f32 %v1586, %v2670
          %v2691 = vmul.f32 %v1588, %v2670
          %v2692 = vmul.f32 %v1589, %v2670
          %v2693 = vmul.f32 %v1591, %v2670
          %v2694 = vmul.f32 %v1592, %v2670
          %v2695 = vmul.f32 %v1594, %v2670
          %v2696 = vmul.f32 %v1595, %v2670
          %v2697 = vmul.f32 %v1597, %v2670
          %v2698 = vmul.f32 %v1598, %v2670
          %v2699 = vmul.f32 %v1600, %v2670
          %v2700 = vmul.f32 %v1601, %v2670
          %v2701 = vmul.f32 %v1603, %v2670
          %v2702 = vmul.f32 %v1604, %v2670
          %v2703 = vadd.f32 %v2638, %v2671
          %v2704 = vadd.f32 %v2639, %v2672
          %v2705 = vadd.f32 %v2640, %v2673
          %v2706 = vadd.f32 %v2641, %v2674
          %v2707 = vadd.f32 %v2642, %v2675
          %v2708 = vadd.f32 %v2643, %v2676
          %v2709 = vadd.f32 %v2644, %v2677
          %v2710 = vadd.f32 %v2645, %v2678
          %v2711 = vadd.f32 %v2646, %v2679
          %v2712 = vadd.f32 %v2647, %v2680
          %v2713 = vadd.f32 %v2648, %v2681
          %v2714 = vadd.f32 %v2649, %v2682
          %v2715 = vadd.f32 %v2650, %v2683
          %v2716 = vadd.f32 %v2651, %v2684
          %v2717 = vadd.f32 %v2652, %v2685
          %v2718 = vadd.f32 %v2653, %v2686
          %v2719 = vadd.f32 %v2654, %v2687
          %v2720 = vadd.f32 %v2655, %v2688
          %v2721 = vadd.f32 %v2656, %v2689
          %v2722 = vadd.f32 %v2657, %v2690
          %v2723 = vadd.f32 %v2658, %v2691
          %v2724 = vadd.f32 %v2659, %v2692
          %v2725 = vadd.f32 %v2660, %v2693
          %v2726 = vadd.f32 %v2661, %v2694
          %v2727 = vadd.f32 %v2662, %v2695
          %v2728 = vadd.f32 %v2663, %v2696
          %v2729 = vadd.f32 %v2664, %v2697
          %v2730 = vadd.f32 %v2665, %v2698
          %v2731 = vadd.f32 %v2666, %v2699
          %v2732 = vadd.f32 %v2667, %v2700
          %v2733 = vadd.f32 %v2668, %v2701
          %v2734 = vadd.f32 %v2669, %v2702
          %v2735 = vperm.slane %v1517, 7
          %v2736 = vmul.f32 %v1558, %v2735
          %v2737 = vmul.f32 %v1559, %v2735
          %v2738 = vmul.f32 %v1560, %v2735
          %v2739 = vmul.f32 %v1561, %v2735
          %v2740 = vmul.f32 %v1562, %v2735
          %v2741 = vmul.f32 %v1563, %v2735
          %v2742 = vmul.f32 %v1564, %v2735
          %v2743 = vmul.f32 %v1565, %v2735
          %v2744 = vmul.f32 %v1566, %v2735
          %v2745 = vmul.f32 %v1567, %v2735
          %v2746 = vmul.f32 %v1568, %v2735
          %v2747 = vmul.f32 %v1569, %v2735
          %v2748 = vmul.f32 %v1570, %v2735
          %v2749 = vmul.f32 %v1571, %v2735
          %v2750 = vmul.f32 %v1572, %v2735
          %v2751 = vmul.f32 %v1573, %v2735
          %v2752 = vmul.f32 %v1574, %v2735
          %v2753 = vmul.f32 %v1575, %v2735
          %v2754 = vmul.f32 %v1576, %v2735
          %v2755 = vmul.f32 %v1577, %v2735
          %v2756 = vmul.f32 %v1578, %v2735
          %v2757 = vmul.f32 %v1579, %v2735
          %v2758 = vmul.f32 %v1580, %v2735
          %v2759 = vmul.f32 %v1581, %v2735
          %v2760 = vmul.f32 %v1582, %v2735
          %v2761 = vmul.f32 %v1583, %v2735
          %v2762 = vmul.f32 %v1584, %v2735
          %v2763 = vmul.f32 %v1585, %v2735
          %v2764 = vmul.f32 %v1586, %v2735
          %v2765 = vmul.f32 %v1587, %v2735
          %v2766 = vmul.f32 %v1588, %v2735
          %v2767 = vmul.f32 %v1589, %v2735
          %v2768 = vmul.f32 %v1590, %v2735
          %v2769 = vmul.f32 %v1591, %v2735
          %v2770 = vmul.f32 %v1592, %v2735
          %v2771 = vmul.f32 %v1593, %v2735
          %v2772 = vmul.f32 %v1594, %v2735
          %v2773 = vmul.f32 %v1595, %v2735
          %v2774 = vmul.f32 %v1596, %v2735
          %v2775 = vmul.f32 %v1597, %v2735
          %v2776 = vmul.f32 %v1598, %v2735
          %v2777 = vmul.f32 %v1599, %v2735
          %v2778 = vmul.f32 %v1600, %v2735
          %v2779 = vmul.f32 %v1601, %v2735
          %v2780 = vmul.f32 %v1602, %v2735
          %v2781 = vmul.f32 %v1603, %v2735
          %v2782 = vmul.f32 %v1604, %v2735
          %v2783 = vmul.f32 %v1605, %v2735
          %v2832 = vrot.slane %v2736, 1
          %v2833 = vrot.slane %v2737, 1
          %v2834 = vsel %vm1736, %v2832, %v2833
          %v2835 = vrot.slane %v2738, 1
          %v2836 = vsel %vm1736, %v2833, %v2835
          %v2837 = vrot.slane %v2739, 1
          %v2838 = vrot.slane %v2740, 1
          %v2839 = vsel %vm1736, %v2837, %v2838
          %v2840 = vrot.slane %v2741, 1
          %v2841 = vsel %vm1736, %v2838, %v2840
          %v2842 = vrot.slane %v2742, 1
          %v2843 = vrot.slane %v2743, 1
          %v2844 = vsel %vm1736, %v2842, %v2843
          %v2845 = vrot.slane %v2744, 1
          %v2846 = vsel %vm1736, %v2843, %v2845
          %v2847 = vrot.slane %v2745, 1
          %v2848 = vrot.slane %v2746, 1
          %v2849 = vsel %vm1736, %v2847, %v2848
          %v2850 = vrot.slane %v2747, 1
          %v2851 = vsel %vm1736, %v2848, %v2850
          %v2852 = vrot.slane %v2748, 1
          %v2853 = vrot.slane %v2749, 1
          %v2854 = vsel %vm1736, %v2852, %v2853
          %v2855 = vrot.slane %v2750, 1
          %v2856 = vsel %vm1736, %v2853, %v2855
          %v2857 = vrot.slane %v2751, 1
          %v2858 = vrot.slane %v2752, 1
          %v2859 = vsel %vm1736, %v2857, %v2858
          %v2860 = vrot.slane %v2753, 1
          %v2861 = vsel %vm1736, %v2858, %v2860
          %v2862 = vrot.slane %v2754, 1
          %v2863 = vrot.slane %v2755, 1
          %v2864 = vsel %vm1736, %v2862, %v2863
          %v2865 = vrot.slane %v2756, 1
          %v2866 = vsel %vm1736, %v2863, %v2865
          %v2867 = vrot.slane %v2757, 1
          %v2868 = vrot.slane %v2758, 1
          %v2869 = vsel %vm1736, %v2867, %v2868
          %v2870 = vrot.slane %v2759, 1
          %v2871 = vsel %vm1736, %v2868, %v2870
          %v2872 = vrot.slane %v2760, 1
          %v2873 = vrot.slane %v2761, 1
          %v2874 = vsel %vm1736, %v2872, %v2873
          %v2875 = vrot.slane %v2762, 1
          %v2876 = vsel %vm1736, %v2873, %v2875
          %v2877 = vrot.slane %v2763, 1
          %v2878 = vrot.slane %v2764, 1
          %v2879 = vsel %vm1736, %v2877, %v2878
          %v2880 = vrot.slane %v2765, 1
          %v2881 = vsel %vm1736, %v2878, %v2880
          %v2882 = vrot.slane %v2766, 1
          %v2883 = vrot.slane %v2767, 1
          %v2884 = vsel %vm1736, %v2882, %v2883
          %v2885 = vrot.slane %v2768, 1
          %v2886 = vsel %vm1736, %v2883, %v2885
          %v2887 = vrot.slane %v2769, 1
          %v2888 = vrot.slane %v2770, 1
          %v2889 = vsel %vm1736, %v2887, %v2888
          %v2890 = vrot.slane %v2771, 1
          %v2891 = vsel %vm1736, %v2888, %v2890
          %v2892 = vrot.slane %v2772, 1
          %v2893 = vrot.slane %v2773, 1
          %v2894 = vsel %vm1736, %v2892, %v2893
          %v2895 = vrot.slane %v2774, 1
          %v2896 = vsel %vm1736, %v2893, %v2895
          %v2897 = vrot.slane %v2775, 1
          %v2898 = vrot.slane %v2776, 1
          %v2899 = vsel %vm1736, %v2897, %v2898
          %v2900 = vrot.slane %v2777, 1
          %v2901 = vsel %vm1736, %v2898, %v2900
          %v2902 = vrot.slane %v2778, 1
          %v2903 = vrot.slane %v2779, 1
          %v2904 = vsel %vm1736, %v2902, %v2903
          %v2905 = vrot.slane %v2780, 1
          %v2906 = vsel %vm1736, %v2903, %v2905
          %v2907 = vrot.slane %v2781, 1
          %v2908 = vrot.slane %v2782, 1
          %v2909 = vsel %vm1736, %v2907, %v2908
          %v2910 = vrot.slane %v2783, 1
          %v2911 = vsel %vm1736, %v2908, %v2910
          %v2944 = vadd.f32 %v2703, %v2834
          %v2945 = vadd.f32 %v2704, %v2836
          %v2946 = vadd.f32 %v2705, %v2839
          %v2947 = vadd.f32 %v2706, %v2841
          %v2948 = vadd.f32 %v2707, %v2844
          %v2949 = vadd.f32 %v2708, %v2846
          %v2950 = vadd.f32 %v2709, %v2849
          %v2951 = vadd.f32 %v2710, %v2851
          %v2952 = vadd.f32 %v2711, %v2854
          %v2953 = vadd.f32 %v2712, %v2856
          %v2954 = vadd.f32 %v2713, %v2859
          %v2955 = vadd.f32 %v2714, %v2861
          %v2956 = vadd.f32 %v2715, %v2864
          %v2957 = vadd.f32 %v2716, %v2866
          %v2958 = vadd.f32 %v2717, %v2869
          %v2959 = vadd.f32 %v2718, %v2871
          %v2960 = vadd.f32 %v2719, %v2874
          %v2961 = vadd.f32 %v2720, %v2876
          %v2962 = vadd.f32 %v2721, %v2879
          %v2963 = vadd.f32 %v2722, %v2881
          %v2964 = vadd.f32 %v2723, %v2884
          %v2965 = vadd.f32 %v2724, %v2886
          %v2966 = vadd.f32 %v2725, %v2889
          %v2967 = vadd.f32 %v2726, %v2891
          %v2968 = vadd.f32 %v2727, %v2894
          %v2969 = vadd.f32 %v2728, %v2896
          %v2970 = vadd.f32 %v2729, %v2899
          %v2971 = vadd.f32 %v2730, %v2901
          %v2972 = vadd.f32 %v2731, %v2904
          %v2973 = vadd.f32 %v2732, %v2906
          %v2974 = vadd.f32 %v2733, %v2909
          %v2975 = vadd.f32 %v2734, %v2911
          %v2976 = vperm.slane %v1518, 0
          %v2977 = vmul.f32 %v1558, %v2976
          %v2978 = vmul.f32 %v1559, %v2976
          %v2979 = vmul.f32 %v1560, %v2976
          %v2980 = vmul.f32 %v1561, %v2976
          %v2981 = vmul.f32 %v1562, %v2976
          %v2982 = vmul.f32 %v1563, %v2976
          %v2983 = vmul.f32 %v1564, %v2976
          %v2984 = vmul.f32 %v1565, %v2976
          %v2985 = vmul.f32 %v1566, %v2976
          %v2986 = vmul.f32 %v1567, %v2976
          %v2987 = vmul.f32 %v1568, %v2976
          %v2988 = vmul.f32 %v1569, %v2976
          %v2989 = vmul.f32 %v1570, %v2976
          %v2990 = vmul.f32 %v1571, %v2976
          %v2991 = vmul.f32 %v1572, %v2976
          %v2992 = vmul.f32 %v1573, %v2976
          %v2993 = vmul.f32 %v1574, %v2976
          %v2994 = vmul.f32 %v1575, %v2976
          %v2995 = vmul.f32 %v1576, %v2976
          %v2996 = vmul.f32 %v1577, %v2976
          %v2997 = vmul.f32 %v1578, %v2976
          %v2998 = vmul.f32 %v1579, %v2976
          %v2999 = vmul.f32 %v1580, %v2976
          %v3000 = vmul.f32 %v1581, %v2976
          %v3001 = vmul.f32 %v1582, %v2976
          %v3002 = vmul.f32 %v1583, %v2976
          %v3003 = vmul.f32 %v1584, %v2976
          %v3004 = vmul.f32 %v1585, %v2976
          %v3005 = vmul.f32 %v1586, %v2976
          %v3006 = vmul.f32 %v1587, %v2976
          %v3007 = vmul.f32 %v1588, %v2976
          %v3008 = vmul.f32 %v1589, %v2976
          %v3009 = vmul.f32 %v1590, %v2976
          %v3010 = vmul.f32 %v1591, %v2976
          %v3011 = vmul.f32 %v1592, %v2976
          %v3012 = vmul.f32 %v1593, %v2976
          %v3013 = vmul.f32 %v1594, %v2976
          %v3014 = vmul.f32 %v1595, %v2976
          %v3015 = vmul.f32 %v1596, %v2976
          %v3016 = vmul.f32 %v1597, %v2976
          %v3017 = vmul.f32 %v1598, %v2976
          %v3018 = vmul.f32 %v1599, %v2976
          %v3019 = vmul.f32 %v1600, %v2976
          %v3020 = vmul.f32 %v1601, %v2976
          %v3021 = vmul.f32 %v1602, %v2976
          %v3022 = vmul.f32 %v1603, %v2976
          %v3023 = vmul.f32 %v1604, %v2976
          %v3024 = vmul.f32 %v1605, %v2976
          %v3073 = vrot.slane %v2977, 2
          %v3074 = vrot.slane %v2978, 2
          %v3075 = vsel %vm1978, %v3073, %v3074
          %v3076 = vrot.slane %v2979, 2
          %v3077 = vsel %vm1978, %v3074, %v3076
          %v3078 = vrot.slane %v2980, 2
          %v3079 = vrot.slane %v2981, 2
          %v3080 = vsel %vm1978, %v3078, %v3079
          %v3081 = vrot.slane %v2982, 2
          %v3082 = vsel %vm1978, %v3079, %v3081
          %v3083 = vrot.slane %v2983, 2
          %v3084 = vrot.slane %v2984, 2
          %v3085 = vsel %vm1978, %v3083, %v3084
          %v3086 = vrot.slane %v2985, 2
          %v3087 = vsel %vm1978, %v3084, %v3086
          %v3088 = vrot.slane %v2986, 2
          %v3089 = vrot.slane %v2987, 2
          %v3090 = vsel %vm1978, %v3088, %v3089
          %v3091 = vrot.slane %v2988, 2
          %v3092 = vsel %vm1978, %v3089, %v3091
          %v3093 = vrot.slane %v2989, 2
          %v3094 = vrot.slane %v2990, 2
          %v3095 = vsel %vm1978, %v3093, %v3094
          %v3096 = vrot.slane %v2991, 2
          %v3097 = vsel %vm1978, %v3094, %v3096
          %v3098 = vrot.slane %v2992, 2
          %v3099 = vrot.slane %v2993, 2
          %v3100 = vsel %vm1978, %v3098, %v3099
          %v3101 = vrot.slane %v2994, 2
          %v3102 = vsel %vm1978, %v3099, %v3101
          %v3103 = vrot.slane %v2995, 2
          %v3104 = vrot.slane %v2996, 2
          %v3105 = vsel %vm1978, %v3103, %v3104
          %v3106 = vrot.slane %v2997, 2
          %v3107 = vsel %vm1978, %v3104, %v3106
          %v3108 = vrot.slane %v2998, 2
          %v3109 = vrot.slane %v2999, 2
          %v3110 = vsel %vm1978, %v3108, %v3109
          %v3111 = vrot.slane %v3000, 2
          %v3112 = vsel %vm1978, %v3109, %v3111
          %v3113 = vrot.slane %v3001, 2
          %v3114 = vrot.slane %v3002, 2
          %v3115 = vsel %vm1978, %v3113, %v3114
          %v3116 = vrot.slane %v3003, 2
          %v3117 = vsel %vm1978, %v3114, %v3116
          %v3118 = vrot.slane %v3004, 2
          %v3119 = vrot.slane %v3005, 2
          %v3120 = vsel %vm1978, %v3118, %v3119
          %v3121 = vrot.slane %v3006, 2
          %v3122 = vsel %vm1978, %v3119, %v3121
          %v3123 = vrot.slane %v3007, 2
          %v3124 = vrot.slane %v3008, 2
          %v3125 = vsel %vm1978, %v3123, %v3124
          %v3126 = vrot.slane %v3009, 2
          %v3127 = vsel %vm1978, %v3124, %v3126
          %v3128 = vrot.slane %v3010, 2
          %v3129 = vrot.slane %v3011, 2
          %v3130 = vsel %vm1978, %v3128, %v3129
          %v3131 = vrot.slane %v3012, 2
          %v3132 = vsel %vm1978, %v3129, %v3131
          %v3133 = vrot.slane %v3013, 2
          %v3134 = vrot.slane %v3014, 2
          %v3135 = vsel %vm1978, %v3133, %v3134
          %v3136 = vrot.slane %v3015, 2
          %v3137 = vsel %vm1978, %v3134, %v3136
          %v3138 = vrot.slane %v3016, 2
          %v3139 = vrot.slane %v3017, 2
          %v3140 = vsel %vm1978, %v3138, %v3139
          %v3141 = vrot.slane %v3018, 2
          %v3142 = vsel %vm1978, %v3139, %v3141
          %v3143 = vrot.slane %v3019, 2
          %v3144 = vrot.slane %v3020, 2
          %v3145 = vsel %vm1978, %v3143, %v3144
          %v3146 = vrot.slane %v3021, 2
          %v3147 = vsel %vm1978, %v3144, %v3146
          %v3148 = vrot.slane %v3022, 2
          %v3149 = vrot.slane %v3023, 2
          %v3150 = vsel %vm1978, %v3148, %v3149
          %v3151 = vrot.slane %v3024, 2
          %v3152 = vsel %vm1978, %v3149, %v3151
          %v3185 = vadd.f32 %v2944, %v3075
          %v3186 = vadd.f32 %v2945, %v3077
          %v3187 = vadd.f32 %v2946, %v3080
          %v3188 = vadd.f32 %v2947, %v3082
          %v3189 = vadd.f32 %v2948, %v3085
          %v3190 = vadd.f32 %v2949, %v3087
          %v3191 = vadd.f32 %v2950, %v3090
          %v3192 = vadd.f32 %v2951, %v3092
          %v3193 = vadd.f32 %v2952, %v3095
          %v3194 = vadd.f32 %v2953, %v3097
          %v3195 = vadd.f32 %v2954, %v3100
          %v3196 = vadd.f32 %v2955, %v3102
          %v3197 = vadd.f32 %v2956, %v3105
          %v3198 = vadd.f32 %v2957, %v3107
          %v3199 = vadd.f32 %v2958, %v3110
          %v3200 = vadd.f32 %v2959, %v3112
          %v3201 = vadd.f32 %v2960, %v3115
          %v3202 = vadd.f32 %v2961, %v3117
          %v3203 = vadd.f32 %v2962, %v3120
          %v3204 = vadd.f32 %v2963, %v3122
          %v3205 = vadd.f32 %v2964, %v3125
          %v3206 = vadd.f32 %v2965, %v3127
          %v3207 = vadd.f32 %v2966, %v3130
          %v3208 = vadd.f32 %v2967, %v3132
          %v3209 = vadd.f32 %v2968, %v3135
          %v3210 = vadd.f32 %v2969, %v3137
          %v3211 = vadd.f32 %v2970, %v3140
          %v3212 = vadd.f32 %v2971, %v3142
          %v3213 = vadd.f32 %v2972, %v3145
          %v3214 = vadd.f32 %v2973, %v3147
          %v3215 = vadd.f32 %v2974, %v3150
          %v3216 = vadd.f32 %v2975, %v3152
          %3217 = vmatpush.msra.mxu0 %v3200
          %3218 = vmatpush.msra.mxu0 %v3199
          %3219 = vmatpush.msra.mxu0 %v3198
          %3220 = vmatpush.msra.mxu0 %v3197
          %3221 = vmatpush.msra.mxu0 %v3196
          %3222 = vmatpush.msra.mxu0 %v3195
          %3223 = vmatpush.msra.mxu0 %v3194
          %3224 = vmatpush.msra.mxu0 %v3193
          %3225 = vmatpush.msra.mxu0 %v3192
          %3226 = vmatpush.msra.mxu0 %v3191
          %3227 = vmatpush.msra.mxu0 %v3190
          %3228 = vmatpush.msra.mxu0 %v3189
          %3229 = vmatpush.msra.mxu0 %v3188
          %3230 = vmatpush.msra.mxu0 %v3187
          %3231 = vmatpush.msra.mxu0 %v3186
          %3232 = vmatpush.msra.mxu0 %v3185
          %3233 = vmatmul.f32.gmra.mxu0 1.0
          %v3234 = vpop.f32.mrf.mxu0
          %v3235 = vadd.f32 0.0, %v3234
          %3236 = vdwg.mxu0
          %3237 = vmatpush.msra.mxu0 %v3216
          %3238 = vmatpush.msra.mxu0 %v3215
          %3239 = vmatpush.msra.mxu0 %v3214
          %3240 = vmatpush.msra.mxu0 %v3213
          %3241 = vmatpush.msra.mxu0 %v3212
          %3242 = vmatpush.msra.mxu0 %v3211
          %3243 = vmatpush.msra.mxu0 %v3210
          %3244 = vmatpush.msra.mxu0 %v3209
          %3245 = vmatpush.msra.mxu0 %v3208
          %3246 = vmatpush.msra.mxu0 %v3207
          %3247 = vmatpush.msra.mxu0 %v3206
          %3248 = vmatpush.msra.mxu0 %v3205
          %3249 = vmatpush.msra.mxu0 %v3204
          %3250 = vmatpush.msra.mxu0 %v3203
          %3251 = vmatpush.msra.mxu0 %v3202
          %3252 = vmatpush.msra.mxu0 %v3201
          %3253 = vmatmul.f32.gmra.mxu0 1.0
          %v3254 = vpop.f32.mrf.mxu0
          %v3255 = vadd.f32 %v3235, %v3254
          %3256 = vdwg.mxu0
          %v3257 = vmul.f32 %v3185, %v3185
          %v3258 = vmul.f32 %v3186, %v3186
          %v3259 = vmul.f32 %v3187, %v3187
          %v3260 = vmul.f32 %v3188, %v3188
          %v3261 = vmul.f32 %v3189, %v3189
          %v3262 = vmul.f32 %v3190, %v3190
          %v3263 = vmul.f32 %v3191, %v3191
          %v3264 = vmul.f32 %v3192, %v3192
          %v3265 = vmul.f32 %v3193, %v3193
          %v3266 = vmul.f32 %v3194, %v3194
          %v3267 = vmul.f32 %v3195, %v3195
          %v3268 = vmul.f32 %v3196, %v3196
          %v3269 = vmul.f32 %v3197, %v3197
          %v3270 = vmul.f32 %v3198, %v3198
          %v3271 = vmul.f32 %v3199, %v3199
          %v3272 = vmul.f32 %v3200, %v3200
          %v3273 = vmul.f32 %v3201, %v3201
          %v3274 = vmul.f32 %v3202, %v3202
          %v3275 = vmul.f32 %v3203, %v3203
          %v3276 = vmul.f32 %v3204, %v3204
          %v3277 = vmul.f32 %v3205, %v3205
          %v3278 = vmul.f32 %v3206, %v3206
          %v3279 = vmul.f32 %v3207, %v3207
          %v3280 = vmul.f32 %v3208, %v3208
          %v3281 = vmul.f32 %v3209, %v3209
          %v3282 = vmul.f32 %v3210, %v3210
          %v3283 = vmul.f32 %v3211, %v3211
          %v3284 = vmul.f32 %v3212, %v3212
          %v3285 = vmul.f32 %v3213, %v3213
          %v3286 = vmul.f32 %v3214, %v3214
          %v3287 = vmul.f32 %v3215, %v3215
          %v3288 = vmul.f32 %v3216, %v3216
          %3289 = vmatpush.msra.mxu0 %v3272
          %3290 = vmatpush.msra.mxu0 %v3271
          %3291 = vmatpush.msra.mxu0 %v3270
          %3292 = vmatpush.msra.mxu0 %v3269
          %3293 = vmatpush.msra.mxu0 %v3268
          %3294 = vmatpush.msra.mxu0 %v3267
          %3295 = vmatpush.msra.mxu0 %v3266
          %3296 = vmatpush.msra.mxu0 %v3265
          %3297 = vmatpush.msra.mxu0 %v3264
          %3298 = vmatpush.msra.mxu0 %v3263
          %3299 = vmatpush.msra.mxu0 %v3262
          %3300 = vmatpush.msra.mxu0 %v3261
          %3301 = vmatpush.msra.mxu0 %v3260
          %3302 = vmatpush.msra.mxu0 %v3259
          %3303 = vmatpush.msra.mxu0 %v3258
          %3304 = vmatpush.msra.mxu0 %v3257
          %3305 = vmatmul.f32.gmra.mxu0 1.0
          %v3306 = vpop.f32.mrf.mxu0
          %v3307 = vadd.f32 0.0, %v3306
          %3308 = vdwg.mxu0
          %3309 = vmatpush.msra.mxu0 %v3288
          %3310 = vmatpush.msra.mxu0 %v3287
          %3311 = vmatpush.msra.mxu0 %v3286
          %3312 = vmatpush.msra.mxu0 %v3285
          %3313 = vmatpush.msra.mxu0 %v3284
          %3314 = vmatpush.msra.mxu0 %v3283
          %3315 = vmatpush.msra.mxu0 %v3282
          %3316 = vmatpush.msra.mxu0 %v3281
          %3317 = vmatpush.msra.mxu0 %v3280
          %3318 = vmatpush.msra.mxu0 %v3279
          %3319 = vmatpush.msra.mxu0 %v3278
          %3320 = vmatpush.msra.mxu0 %v3277
          %3321 = vmatpush.msra.mxu0 %v3276
          %3322 = vmatpush.msra.mxu0 %v3275
          %3323 = vmatpush.msra.mxu0 %v3274
          %3324 = vmatpush.msra.mxu0 %v3273
          %3325 = vmatmul.f32.gmra.mxu0 1.0
          %v3326 = vpop.f32.mrf.mxu0
          %v3327 = vadd.f32 %v3307, %v3326
          %3328 = vdwg.mxu0
          %v3329 = vld [vmem:[#allocation4] sm:$0x1]
          %v3330 = vadd.f32 %v3329, %v3255
          %3331 = vst [vmem:[#allocation4] sm:$0x1] %v3330
          %v3332 = vld [vmem:[#allocation4 + $0x1] sm:$0x1]
          %v3333 = vadd.f32 %v3332, %v3327
          %3334 = vst [vmem:[#allocation4 + $0x1] sm:$0x1] %v3333
        $region112: #{tpu_custom_call.1} parent=71 // pred_fallthru
          _
        %p3335 = scmp.eq.s32.totalorder %s39, 2
        // Predicated region
        $region113: #{tpu_custom_call.1} parent=71 // pred_check
          %p3336 = pneg %p3335
        $region114: #{tpu_custom_call.1} parent=71 // pred_check_branch
          %3338 = sbr.rel (%p3336) target = $region116
        $region115: #{tpu_custom_call.1} parent=71 // pred_region
          %v3339 = vld [vmem:[%s523] sm:$0xf]
          %v3340 = vld [vmem:[%s523 + $0x4] sm:$0xf]
          %v3341 = vld [vmem:[%s523 + $0x8] sm:$0xf]
          %v3342 = vld [vmem:[%s523 + $0xc] sm:$0xf]
          %v3343 = vld [vmem:[%s523 + $0x10] sm:$0xf]
          %v3344 = vld [vmem:[%s523 + $0x14] sm:$0xf]
          %v3345 = vld [vmem:[%s523 + $0x18] sm:$0xf]
          %v3346 = vld [vmem:[%s523 + $0x1c] sm:$0xf]
          %v3347 = vld [vmem:[%s523 + $0x20] sm:$0xf]
          %v3348 = vld [vmem:[%s523 + $0x24] sm:$0xf]
          %v3349 = vld [vmem:[%s523 + $0x28] sm:$0xf]
          %v3350 = vld [vmem:[%s523 + $0x2c] sm:$0xf]
          %v3351 = vld [vmem:[%s523 + $0x30] sm:$0xf]
          %v3352 = vld [vmem:[%s523 + $0x34] sm:$0xf]
          %v3353 = vld [vmem:[%s523 + $0x38] sm:$0xf]
          %v3354 = vld [vmem:[%s523 + $0x3c] sm:$0xf]
          %v3355 = vld [vmem:[%s523 + $0x40] sm:$0xf]
          %v3356 = vld [vmem:[%s523 + $0x44] sm:$0xf]
          %v3357 = vld [vmem:[%s523 + $0x48] sm:$0xf]
          %v3358 = vld [vmem:[%s523 + $0x4c] sm:$0xf]
          %v3359 = vld [vmem:[%s523 + $0x50] sm:$0xf]
          %v3360 = vld [vmem:[%s523 + $0x54] sm:$0xf]
          %v3361 = vld [vmem:[%s523 + $0x58] sm:$0xf]
          %v3362 = vld [vmem:[%s523 + $0x5c] sm:$0xf]
          %v3363 = vld [vmem:[%s523 + $0x60] sm:$0xf]
          %v3364 = vld [vmem:[%s523 + $0x64] sm:$0xf]
          %v3365 = vld [vmem:[%s523 + $0x68] sm:$0xf]
          %v3366 = vld [vmem:[%s523 + $0x6c] sm:$0xf]
          %v3367 = vld [vmem:[%s523 + $0x70] sm:$0xf]
          %v3368 = vld [vmem:[%s523 + $0x74] sm:$0xf]
          %v3369 = vld [vmem:[%s523 + $0x78] sm:$0xf]
          %v3370 = vld [vmem:[%s523 + $0x7c] sm:$0xf]
          %v3371 = vld [vmem:[#allocation12] sm:$0xf]
          %v3372 = vld [vmem:[#allocation12 + $0x4] sm:$0xf]
          %v3373 = vld [vmem:[#allocation12 + $0x8] sm:$0xf]
          %v3374 = vld [vmem:[#allocation12 + $0xc] sm:$0xf]
          %v3375 = vld [vmem:[#allocation12 + $0x10] sm:$0xf]
          %v3376 = vld [vmem:[#allocation12 + $0x14] sm:$0xf]
          %v3377 = vld [vmem:[#allocation12 + $0x18] sm:$0xf]
          %v3378 = vld [vmem:[#allocation12 + $0x1c] sm:$0xf]
          %v3379 = vld [vmem:[#allocation12 + $0x20] sm:$0xf]
          %v3380 = vld [vmem:[#allocation12 + $0x24] sm:$0xf]
          %v3381 = vld [vmem:[#allocation12 + $0x28] sm:$0xf]
          %v3382 = vld [vmem:[#allocation12 + $0x2c] sm:$0xf]
          %v3383 = vld [vmem:[#allocation12 + $0x30] sm:$0xf]
          %v3384 = vld [vmem:[#allocation12 + $0x34] sm:$0xf]
          %v3385 = vld [vmem:[#allocation12 + $0x38] sm:$0xf]
          %v3386 = vld [vmem:[#allocation12 + $0x3c] sm:$0xf]
          %v3419 = vunpack.c.l.b16 %v3339
          %v3420 = vunpack.c.l.b16 %v3340
          %v3421 = vunpack.c.l.b16 %v3341
          %v3422 = vunpack.c.l.b16 %v3342
          %v3423 = vunpack.c.l.b16 %v3343
          %v3424 = vunpack.c.l.b16 %v3344
          %v3425 = vunpack.c.l.b16 %v3345
          %v3426 = vunpack.c.l.b16 %v3346
          %v3427 = vunpack.c.l.b16 %v3347
          %v3428 = vunpack.c.l.b16 %v3348
          %v3429 = vunpack.c.l.b16 %v3349
          %v3430 = vunpack.c.l.b16 %v3350
          %v3431 = vunpack.c.l.b16 %v3351
          %v3432 = vunpack.c.l.b16 %v3352
          %v3433 = vunpack.c.l.b16 %v3353
          %v3434 = vunpack.c.l.b16 %v3354
          %v3435 = vunpack.c.l.b16 %v3355
          %v3436 = vunpack.c.l.b16 %v3356
          %v3437 = vunpack.c.l.b16 %v3357
          %v3438 = vunpack.c.l.b16 %v3358
          %v3439 = vunpack.c.l.b16 %v3359
          %v3440 = vunpack.c.l.b16 %v3360
          %v3441 = vunpack.c.l.b16 %v3361
          %v3442 = vunpack.c.l.b16 %v3362
          %v3443 = vunpack.c.l.b16 %v3363
          %v3444 = vunpack.c.l.b16 %v3364
          %v3445 = vunpack.c.l.b16 %v3365
          %v3446 = vunpack.c.l.b16 %v3366
          %v3447 = vunpack.c.l.b16 %v3367
          %v3448 = vunpack.c.l.b16 %v3368
          %v3449 = vunpack.c.l.b16 %v3369
          %v3450 = vunpack.c.l.b16 %v3370
          %v3451 = vpack.c.b16 %v3420, %v3419
          %v3452 = vpack.c.b16 %v3422, %v3421
          %v3453 = vpack.c.b16 %v3424, %v3423
          %v3454 = vpack.c.b16 %v3426, %v3425
          %v3455 = vpack.c.b16 %v3428, %v3427
          %v3456 = vpack.c.b16 %v3430, %v3429
          %v3457 = vpack.c.b16 %v3432, %v3431
          %v3458 = vpack.c.b16 %v3434, %v3433
          %v3459 = vpack.c.b16 %v3436, %v3435
          %v3460 = vpack.c.b16 %v3438, %v3437
          %v3461 = vpack.c.b16 %v3440, %v3439
          %v3462 = vpack.c.b16 %v3442, %v3441
          %v3463 = vpack.c.b16 %v3444, %v3443
          %v3464 = vpack.c.b16 %v3446, %v3445
          %v3465 = vpack.c.b16 %v3448, %v3447
          %v3466 = vpack.c.b16 %v3450, %v3449
          %v3499 = vunpack.c.l.b16 %v3371
          %v3500 = vunpack.c.l.b16 %v3372
          %v3501 = vunpack.c.l.b16 %v3373
          %v3502 = vunpack.c.l.b16 %v3374
          %v3503 = vunpack.c.l.b16 %v3375
          %v3504 = vunpack.c.l.b16 %v3376
          %v3505 = vunpack.c.l.b16 %v3377
          %v3506 = vunpack.c.l.b16 %v3378
          %v3507 = vunpack.c.l.b16 %v3379
          %v3508 = vunpack.c.l.b16 %v3380
          %v3509 = vunpack.c.l.b16 %v3381
          %v3510 = vunpack.c.l.b16 %v3382
          %v3511 = vunpack.c.l.b16 %v3383
          %v3512 = vunpack.c.l.b16 %v3384
          %v3513 = vunpack.c.l.b16 %v3385
          %v3514 = vunpack.c.l.b16 %v3386
          %v3515 = vpack.c.b16 %v3500, %v3499
          %v3516 = vpack.c.b16 %v3502, %v3501
          %v3517 = vpack.c.b16 %v3504, %v3503
          %v3518 = vpack.c.b16 %v3506, %v3505
          %v3519 = vpack.c.b16 %v3508, %v3507
          %v3520 = vpack.c.b16 %v3510, %v3509
          %v3521 = vpack.c.b16 %v3512, %v3511
          %v3522 = vpack.c.b16 %v3514, %v3513
          %3531 = vmatpush.bf16.msra.mxu0 %v3522
          %3532 = vmatpush.bf16.msra.mxu0 %v3521
          %3533 = vmatpush.bf16.msra.mxu0 %v3520
          %3534 = vmatpush.bf16.msra.mxu0 %v3519
          %3535 = vmatpush.bf16.msra.mxu0 %v3518
          %3536 = vmatpush.bf16.msra.mxu0 %v3517
          %3537 = vmatpush.bf16.msra.mxu0 %v3516
          %3538 = vmatpush.bf16.msra.mxu0 %v3515
          %3539 = vmatmul.bf16.gmra.mxu0 %v3451
          %v3540 = vpop.f32.mrf.mxu0
          %v3541 = vadd.f32 0.0, %v3540
          %v3542 = vpop.f32.mrf.mxu0
          %v3543 = vadd.f32 0.0, %v3542
          %3544 = vmatmul.bf16.gmra.mxu0 %v3452
          %v3545 = vpop.f32.mrf.mxu0
          %v3546 = vadd.f32 0.0, %v3545
          %v3547 = vpop.f32.mrf.mxu0
          %v3548 = vadd.f32 0.0, %v3547
          %3549 = vmatmul.bf16.gmra.mxu0 %v3453
          %v3550 = vpop.f32.mrf.mxu0
          %v3551 = vadd.f32 0.0, %v3550
          %v3552 = vpop.f32.mrf.mxu0
          %v3553 = vadd.f32 0.0, %v3552
          %3554 = vmatmul.bf16.gmra.mxu0 %v3454
          %v3555 = vpop.f32.mrf.mxu0
          %v3556 = vadd.f32 0.0, %v3555
          %v3557 = vpop.f32.mrf.mxu0
          %v3558 = vadd.f32 0.0, %v3557
          %3559 = vmatmul.bf16.gmra.mxu0 %v3455
          %v3560 = vpop.f32.mrf.mxu0
          %v3561 = vadd.f32 0.0, %v3560
          %v3562 = vpop.f32.mrf.mxu0
          %v3563 = vadd.f32 0.0, %v3562
          %3564 = vmatmul.bf16.gmra.mxu0 %v3456
          %v3565 = vpop.f32.mrf.mxu0
          %v3566 = vadd.f32 0.0, %v3565
          %v3567 = vpop.f32.mrf.mxu0
          %v3568 = vadd.f32 0.0, %v3567
          %3569 = vmatmul.bf16.gmra.mxu0 %v3457
          %v3570 = vpop.f32.mrf.mxu0
          %v3571 = vadd.f32 0.0, %v3570
          %v3572 = vpop.f32.mrf.mxu0
          %v3573 = vadd.f32 0.0, %v3572
          %3574 = vmatmul.bf16.gmra.mxu0 %v3458
          %v3575 = vpop.f32.mrf.mxu0
          %v3576 = vadd.f32 0.0, %v3575
          %v3577 = vpop.f32.mrf.mxu0
          %v3578 = vadd.f32 0.0, %v3577
          %3579 = vmatmul.bf16.gmra.mxu0 %v3459
          %v3580 = vpop.f32.mrf.mxu0
          %v3581 = vadd.f32 0.0, %v3580
          %v3582 = vpop.f32.mrf.mxu0
          %v3583 = vadd.f32 0.0, %v3582
          %3584 = vmatmul.bf16.gmra.mxu0 %v3460
          %v3585 = vpop.f32.mrf.mxu0
          %v3586 = vadd.f32 0.0, %v3585
          %v3587 = vpop.f32.mrf.mxu0
          %v3588 = vadd.f32 0.0, %v3587
          %3589 = vmatmul.bf16.gmra.mxu0 %v3461
          %v3590 = vpop.f32.mrf.mxu0
          %v3591 = vadd.f32 0.0, %v3590
          %v3592 = vpop.f32.mrf.mxu0
          %v3593 = vadd.f32 0.0, %v3592
          %3594 = vmatmul.bf16.gmra.mxu0 %v3462
          %v3595 = vpop.f32.mrf.mxu0
          %v3596 = vadd.f32 0.0, %v3595
          %v3597 = vpop.f32.mrf.mxu0
          %v3598 = vadd.f32 0.0, %v3597
          %3599 = vmatmul.bf16.gmra.mxu0 %v3463
          %v3600 = vpop.f32.mrf.mxu0
          %v3601 = vadd.f32 0.0, %v3600
          %v3602 = vpop.f32.mrf.mxu0
          %v3603 = vadd.f32 0.0, %v3602
          %3604 = vmatmul.bf16.gmra.mxu0 %v3464
          %v3605 = vpop.f32.mrf.mxu0
          %v3606 = vadd.f32 0.0, %v3605
          %v3607 = vpop.f32.mrf.mxu0
          %v3608 = vadd.f32 0.0, %v3607
          %3609 = vmatmul.bf16.gmra.mxu0 %v3465
          %v3610 = vpop.f32.mrf.mxu0
          %v3611 = vadd.f32 0.0, %v3610
          %v3612 = vpop.f32.mrf.mxu0
          %v3613 = vadd.f32 0.0, %v3612
          %3614 = vmatmul.bf16.gmra.mxu0 %v3466
          %v3615 = vpop.f32.mrf.mxu0
          %v3616 = vadd.f32 0.0, %v3615
          %v3617 = vpop.f32.mrf.mxu0
          %v3618 = vadd.f32 0.0, %v3617
          %3619 = vdwg.mxu0
          %v3620 = vld [vmem:[#allocation3] sm:$0x1]
          %v3621 = vld [vmem:[#allocation3 + $0x1] sm:$0x1]
          %v3622 = vmul.f32 %v3620, 0.001953125
          %v3623 = vmul.f32 %v3621, 0.001953125
          %v3624 = vmul.f32 %v3622, %v3622
          %v3625 = vsub.f32 %v3623, %v3624
          %v3626 = vld [vmem:[%s3] sm:$0x1]
          %v3627 = vadd.f32 %v3625, 1e-05
          %v3628 = vrsqrt.pop %v3627
          %v3629 = vmul.f32 %v3628, %v3627
          %v3630 = vmul.f32 %v3629, %v3628
          %v3631 = vmul.f32 0.5, %v3630
          %v3632 = vsub.f32 1.5, %v3631
          %v3633 = vmul.f32 %v3628, %v3632
          %vm3634 = vweird.f32 %v3627
          %vm3635 = vweird.f32 %v3628
          %vm3636 = vmor %vm3634, %vm3635
          %v3637 = vsel %vm3636, %v3628, %v3633
          %v3638 = vmul.f32 %v3626, %v3637
          %v3639 = vld [vmem:[%s4] sm:$0x1]
          %v3640 = vmul.f32 %v3622, %v3638
          %v3641 = vsub.f32 %v3639, %v3640
          %v3643 = vperm.slane %v3638, 0
          %v3645 = vmul.f32 %v3541, %v3643
          %v3646 = vmul.f32 %v3543, %v3643
          %v3647 = vmul.f32 %v3546, %v3643
          %v3648 = vmul.f32 %v3548, %v3643
          %v3649 = vmul.f32 %v3551, %v3643
          %v3650 = vmul.f32 %v3553, %v3643
          %v3651 = vmul.f32 %v3556, %v3643
          %v3652 = vmul.f32 %v3558, %v3643
          %v3653 = vmul.f32 %v3561, %v3643
          %v3654 = vmul.f32 %v3563, %v3643
          %v3655 = vmul.f32 %v3566, %v3643
          %v3656 = vmul.f32 %v3568, %v3643
          %v3657 = vmul.f32 %v3571, %v3643
          %v3658 = vmul.f32 %v3573, %v3643
          %v3659 = vmul.f32 %v3576, %v3643
          %v3660 = vmul.f32 %v3578, %v3643
          %v3661 = vmul.f32 %v3581, %v3643
          %v3662 = vmul.f32 %v3583, %v3643
          %v3663 = vmul.f32 %v3586, %v3643
          %v3664 = vmul.f32 %v3588, %v3643
          %v3665 = vmul.f32 %v3591, %v3643
          %v3666 = vmul.f32 %v3593, %v3643
          %v3667 = vmul.f32 %v3596, %v3643
          %v3668 = vmul.f32 %v3598, %v3643
          %v3669 = vmul.f32 %v3601, %v3643
          %v3670 = vmul.f32 %v3603, %v3643
          %v3671 = vmul.f32 %v3606, %v3643
          %v3672 = vmul.f32 %v3608, %v3643
          %v3673 = vmul.f32 %v3611, %v3643
          %v3674 = vmul.f32 %v3613, %v3643
          %v3675 = vmul.f32 %v3616, %v3643
          %v3676 = vmul.f32 %v3618, %v3643
          %v3678 = vperm.slane %v3641, 0
          %v3680 = vadd.f32 %v3645, %v3678
          %v3681 = vadd.f32 %v3646, %v3678
          %v3682 = vadd.f32 %v3647, %v3678
          %v3683 = vadd.f32 %v3648, %v3678
          %v3684 = vadd.f32 %v3649, %v3678
          %v3685 = vadd.f32 %v3650, %v3678
          %v3686 = vadd.f32 %v3651, %v3678
          %v3687 = vadd.f32 %v3652, %v3678
          %v3688 = vadd.f32 %v3653, %v3678
          %v3689 = vadd.f32 %v3654, %v3678
          %v3690 = vadd.f32 %v3655, %v3678
          %v3691 = vadd.f32 %v3656, %v3678
          %v3692 = vadd.f32 %v3657, %v3678
          %v3693 = vadd.f32 %v3658, %v3678
          %v3694 = vadd.f32 %v3659, %v3678
          %v3695 = vadd.f32 %v3660, %v3678
          %v3696 = vadd.f32 %v3661, %v3678
          %v3697 = vadd.f32 %v3662, %v3678
          %v3698 = vadd.f32 %v3663, %v3678
          %v3699 = vadd.f32 %v3664, %v3678
          %v3700 = vadd.f32 %v3665, %v3678
          %v3701 = vadd.f32 %v3666, %v3678
          %v3702 = vadd.f32 %v3667, %v3678
          %v3703 = vadd.f32 %v3668, %v3678
          %v3704 = vadd.f32 %v3669, %v3678
          %v3705 = vadd.f32 %v3670, %v3678
          %v3706 = vadd.f32 %v3671, %v3678
          %v3707 = vadd.f32 %v3672, %v3678
          %v3708 = vadd.f32 %v3673, %v3678
          %v3709 = vadd.f32 %v3674, %v3678
          %v3710 = vadd.f32 %v3675, %v3678
          %v3711 = vadd.f32 %v3676, %v3678
          %v3712 = vmax.f32 %v3680, 0.0
          %v3713 = vmax.f32 %v3681, 0.0
          %v3714 = vmax.f32 %v3682, 0.0
          %v3715 = vmax.f32 %v3683, 0.0
          %v3716 = vmax.f32 %v3684, 0.0
          %v3717 = vmax.f32 %v3685, 0.0
          %v3718 = vmax.f32 %v3686, 0.0
          %v3719 = vmax.f32 %v3687, 0.0
          %v3720 = vmax.f32 %v3688, 0.0
          %v3721 = vmax.f32 %v3689, 0.0
          %v3722 = vmax.f32 %v3690, 0.0
          %v3723 = vmax.f32 %v3691, 0.0
          %v3724 = vmax.f32 %v3692, 0.0
          %v3725 = vmax.f32 %v3693, 0.0
          %v3726 = vmax.f32 %v3694, 0.0
          %v3727 = vmax.f32 %v3695, 0.0
          %v3728 = vmax.f32 %v3696, 0.0
          %v3729 = vmax.f32 %v3697, 0.0
          %v3730 = vmax.f32 %v3698, 0.0
          %v3731 = vmax.f32 %v3699, 0.0
          %v3732 = vmax.f32 %v3700, 0.0
          %v3733 = vmax.f32 %v3701, 0.0
          %v3734 = vmax.f32 %v3702, 0.0
          %v3735 = vmax.f32 %v3703, 0.0
          %v3736 = vmax.f32 %v3704, 0.0
          %v3737 = vmax.f32 %v3705, 0.0
          %v3738 = vmax.f32 %v3706, 0.0
          %v3739 = vmax.f32 %v3707, 0.0
          %v3740 = vmax.f32 %v3708, 0.0
          %v3741 = vmax.f32 %v3709, 0.0
          %v3742 = vmax.f32 %v3710, 0.0
          %v3743 = vmax.f32 %v3711, 0.0
          %v3744 = vmin.f32 %v3712, 6.0
          %v3745 = vmin.f32 %v3713, 6.0
          %v3746 = vmin.f32 %v3714, 6.0
          %v3747 = vmin.f32 %v3715, 6.0
          %v3748 = vmin.f32 %v3716, 6.0
          %v3749 = vmin.f32 %v3717, 6.0
          %v3750 = vmin.f32 %v3718, 6.0
          %v3751 = vmin.f32 %v3719, 6.0
          %v3752 = vmin.f32 %v3720, 6.0
          %v3753 = vmin.f32 %v3721, 6.0
          %v3754 = vmin.f32 %v3722, 6.0
          %v3755 = vmin.f32 %v3723, 6.0
          %v3756 = vmin.f32 %v3724, 6.0
          %v3757 = vmin.f32 %v3725, 6.0
          %v3758 = vmin.f32 %v3726, 6.0
          %v3759 = vmin.f32 %v3727, 6.0
          %v3760 = vmin.f32 %v3728, 6.0
          %v3761 = vmin.f32 %v3729, 6.0
          %v3762 = vmin.f32 %v3730, 6.0
          %v3763 = vmin.f32 %v3731, 6.0
          %v3764 = vmin.f32 %v3732, 6.0
          %v3765 = vmin.f32 %v3733, 6.0
          %v3766 = vmin.f32 %v3734, 6.0
          %v3767 = vmin.f32 %v3735, 6.0
          %v3768 = vmin.f32 %v3736, 6.0
          %v3769 = vmin.f32 %v3737, 6.0
          %v3770 = vmin.f32 %v3738, 6.0
          %v3771 = vmin.f32 %v3739, 6.0
          %v3772 = vmin.f32 %v3740, 6.0
          %v3773 = vmin.f32 %v3741, 6.0
          %v3774 = vmin.f32 %v3742, 6.0
          %v3775 = vmin.f32 %v3743, 6.0
          %v3776 = vld [vmem:[#allocation13] sm:$0xff]
          %v3777 = vld [vmem:[#allocation13 + $0x8] sm:$0x1]
          %s3778 = scalar_lea.vmem [#allocation2], 24
          %3779 = vst [vmem:[%s3778 + $0x1] sm:$0xff] %v3744
          %3780 = vst [vmem:[%s3778 + $0x9] sm:$0xff] %v3745
          %3781 = vst [vmem:[%s3778 + $0x19] sm:$0xff] %v3746
          %3782 = vst [vmem:[%s3778 + $0x21] sm:$0xff] %v3747
          %3783 = vst [vmem:[%s3778 + $0x31] sm:$0xff] %v3748
          %3784 = vst [vmem:[%s3778 + $0x39] sm:$0xff] %v3749
          %3785 = vst [vmem:[%s3778 + $0x49] sm:$0xff] %v3750
          %3786 = vst [vmem:[%s3778 + $0x51] sm:$0xff] %v3751
          %3787 = vst [vmem:[%s3778 + $0x61] sm:$0xff] %v3752
          %3788 = vst [vmem:[%s3778 + $0x69] sm:$0xff] %v3753
          %3789 = vst [vmem:[%s3778 + $0x79] sm:$0xff] %v3754
          %3790 = vst [vmem:[%s3778 + $0x81] sm:$0xff] %v3755
          %3791 = vst [vmem:[%s3778 + $0x91] sm:$0xff] %v3756
          %3792 = vst [vmem:[%s3778 + $0x99] sm:$0xff] %v3757
          %3793 = vst [vmem:[%s3778 + $0xa9] sm:$0xff] %v3758
          %3794 = vst [vmem:[%s3778 + $0xb1] sm:$0xff] %v3759
          %3795 = vst [vmem:[%s3778 + $0xc1] sm:$0xff] %v3760
          %3796 = vst [vmem:[%s3778 + $0xc9] sm:$0xff] %v3761
          %3797 = vst [vmem:[%s3778 + $0xd9] sm:$0xff] %v3762
          %3798 = vst [vmem:[%s3778 + $0xe1] sm:$0xff] %v3763
          %3799 = vst [vmem:[%s3778 + $0xf1] sm:$0xff] %v3764
          %3800 = vst [vmem:[%s3778 + $0xf9] sm:$0xff] %v3765
          %3801 = vst [vmem:[%s3778 + $0x109] sm:$0xff] %v3766
          %3802 = vst [vmem:[%s3778 + $0x111] sm:$0xff] %v3767
          %3803 = vst [vmem:[%s3778 + $0x121] sm:$0xff] %v3768
          %3804 = vst [vmem:[%s3778 + $0x129] sm:$0xff] %v3769
          %3805 = vst [vmem:[%s3778 + $0x139] sm:$0xff] %v3770
          %3806 = vst [vmem:[%s3778 + $0x141] sm:$0xff] %v3771
          %3807 = vst [vmem:[%s3778 + $0x151] sm:$0xff] %v3772
          %3808 = vst [vmem:[%s3778 + $0x159] sm:$0xff] %v3773
          %3809 = vst [vmem:[%s3778 + $0x169] sm:$0xff] %v3774
          %3810 = vst [vmem:[%s3778 + $0x171] sm:$0xff] %v3775
          %v3811 = vld [vmem:[#allocation2] sm:$0xff]
          %v3812 = vld [vmem:[#allocation2 + $0x8] sm:$0xff]
          %v3813 = vld [vmem:[#allocation2 + $0x10] sm:$0x3]
          %v3814 = vld [vmem:[#allocation2 + $0x18] sm:$0xff]
          %v3815 = vld [vmem:[#allocation2 + $0x20] sm:$0xff]
          %v3816 = vld [vmem:[#allocation2 + $0x28] sm:$0x3]
          %v3817 = vld [vmem:[#allocation2 + $0x30] sm:$0xff]
          %v3818 = vld [vmem:[#allocation2 + $0x38] sm:$0xff]
          %v3819 = vld [vmem:[#allocation2 + $0x40] sm:$0x3]
          %v3820 = vld [vmem:[#allocation2 + $0x48] sm:$0xff]
          %v3821 = vld [vmem:[#allocation2 + $0x50] sm:$0xff]
          %v3822 = vld [vmem:[#allocation2 + $0x58] sm:$0x3]
          %v3823 = vld [vmem:[#allocation2 + $0x60] sm:$0xff]
          %v3824 = vld [vmem:[#allocation2 + $0x68] sm:$0xff]
          %v3825 = vld [vmem:[#allocation2 + $0x70] sm:$0x3]
          %v3826 = vld [vmem:[#allocation2 + $0x78] sm:$0xff]
          %v3827 = vld [vmem:[#allocation2 + $0x80] sm:$0xff]
          %v3828 = vld [vmem:[#allocation2 + $0x88] sm:$0x3]
          %v3829 = vld [vmem:[#allocation2 + $0x90] sm:$0xff]
          %v3830 = vld [vmem:[#allocation2 + $0x98] sm:$0xff]
          %v3831 = vld [vmem:[#allocation2 + $0xa0] sm:$0x3]
          %v3832 = vld [vmem:[#allocation2 + $0xa8] sm:$0xff]
          %v3833 = vld [vmem:[#allocation2 + $0xb0] sm:$0xff]
          %v3834 = vld [vmem:[#allocation2 + $0xb8] sm:$0x3]
          %v3835 = vld [vmem:[#allocation2 + $0xc0] sm:$0xff]
          %v3836 = vld [vmem:[#allocation2 + $0xc8] sm:$0xff]
          %v3837 = vld [vmem:[#allocation2 + $0xd0] sm:$0x3]
          %v3838 = vld [vmem:[#allocation2 + $0xd8] sm:$0xff]
          %v3839 = vld [vmem:[#allocation2 + $0xe0] sm:$0xff]
          %v3840 = vld [vmem:[#allocation2 + $0xe8] sm:$0x3]
          %v3841 = vld [vmem:[#allocation2 + $0xf0] sm:$0xff]
          %v3842 = vld [vmem:[#allocation2 + $0xf8] sm:$0xff]
          %v3843 = vld [vmem:[#allocation2 + $0x100] sm:$0x3]
          %v3844 = vld [vmem:[#allocation2 + $0x108] sm:$0xff]
          %v3845 = vld [vmem:[#allocation2 + $0x110] sm:$0xff]
          %v3846 = vld [vmem:[#allocation2 + $0x118] sm:$0x3]
          %v3847 = vld [vmem:[#allocation2 + $0x120] sm:$0xff]
          %v3848 = vld [vmem:[#allocation2 + $0x128] sm:$0xff]
          %v3849 = vld [vmem:[#allocation2 + $0x130] sm:$0x3]
          %v3850 = vld [vmem:[#allocation2 + $0x138] sm:$0xff]
          %v3851 = vld [vmem:[#allocation2 + $0x140] sm:$0xff]
          %v3852 = vld [vmem:[#allocation2 + $0x148] sm:$0x3]
          %v3853 = vld [vmem:[#allocation2 + $0x150] sm:$0xff]
          %v3854 = vld [vmem:[#allocation2 + $0x158] sm:$0xff]
          %v3855 = vld [vmem:[#allocation2 + $0x160] sm:$0x3]
          %v3856 = vld [vmem:[#allocation2 + $0x168] sm:$0xff]
          %v3857 = vld [vmem:[#allocation2 + $0x170] sm:$0xff]
          %v3858 = vld [vmem:[#allocation2 + $0x178] sm:$0x3]
          %v3859 = vld [vmem:[#allocation2 + $0x180] sm:$0xff]
          %v3860 = vld [vmem:[#allocation2 + $0x188] sm:$0xff]
          %v3861 = vld [vmem:[#allocation2 + $0x190] sm:$0x3]
          %v3862 = vld [vmem:[#allocation2 + $0x198] sm:$0xff]
          %v3863 = vld [vmem:[#allocation2 + $0x1a0] sm:$0xff]
          %v3864 = vld [vmem:[#allocation2 + $0x1a8] sm:$0x3]
          %v3865 = vperm.slane %v3776, 0
          %v3866 = vmul.f32 %v3811, %v3865
          %v3867 = vmul.f32 %v3812, %v3865
          %v3868 = vmul.f32 %v3814, %v3865
          %v3869 = vmul.f32 %v3815, %v3865
          %v3870 = vmul.f32 %v3817, %v3865
          %v3871 = vmul.f32 %v3818, %v3865
          %v3872 = vmul.f32 %v3820, %v3865
          %v3873 = vmul.f32 %v3821, %v3865
          %v3874 = vmul.f32 %v3823, %v3865
          %v3875 = vmul.f32 %v3824, %v3865
          %v3876 = vmul.f32 %v3826, %v3865
          %v3877 = vmul.f32 %v3827, %v3865
          %v3878 = vmul.f32 %v3829, %v3865
          %v3879 = vmul.f32 %v3830, %v3865
          %v3880 = vmul.f32 %v3832, %v3865
          %v3881 = vmul.f32 %v3833, %v3865
          %v3882 = vmul.f32 %v3835, %v3865
          %v3883 = vmul.f32 %v3836, %v3865
          %v3884 = vmul.f32 %v3838, %v3865
          %v3885 = vmul.f32 %v3839, %v3865
          %v3886 = vmul.f32 %v3841, %v3865
          %v3887 = vmul.f32 %v3842, %v3865
          %v3888 = vmul.f32 %v3844, %v3865
          %v3889 = vmul.f32 %v3845, %v3865
          %v3890 = vmul.f32 %v3847, %v3865
          %v3891 = vmul.f32 %v3848, %v3865
          %v3892 = vmul.f32 %v3850, %v3865
          %v3893 = vmul.f32 %v3851, %v3865
          %v3894 = vmul.f32 %v3853, %v3865
          %v3895 = vmul.f32 %v3854, %v3865
          %v3896 = vmul.f32 %v3856, %v3865
          %v3897 = vmul.f32 %v3857, %v3865
          %v3898 = vperm.slane %v3776, 1
          %v3899 = vmul.f32 %v3811, %v3898
          %v3900 = vmul.f32 %v3812, %v3898
          %v3901 = vmul.f32 %v3813, %v3898
          %v3902 = vmul.f32 %v3814, %v3898
          %v3903 = vmul.f32 %v3815, %v3898
          %v3904 = vmul.f32 %v3816, %v3898
          %v3905 = vmul.f32 %v3817, %v3898
          %v3906 = vmul.f32 %v3818, %v3898
          %v3907 = vmul.f32 %v3819, %v3898
          %v3908 = vmul.f32 %v3820, %v3898
          %v3909 = vmul.f32 %v3821, %v3898
          %v3910 = vmul.f32 %v3822, %v3898
          %v3911 = vmul.f32 %v3823, %v3898
          %v3912 = vmul.f32 %v3824, %v3898
          %v3913 = vmul.f32 %v3825, %v3898
          %v3914 = vmul.f32 %v3826, %v3898
          %v3915 = vmul.f32 %v3827, %v3898
          %v3916 = vmul.f32 %v3828, %v3898
          %v3917 = vmul.f32 %v3829, %v3898
          %v3918 = vmul.f32 %v3830, %v3898
          %v3919 = vmul.f32 %v3831, %v3898
          %v3920 = vmul.f32 %v3832, %v3898
          %v3921 = vmul.f32 %v3833, %v3898
          %v3922 = vmul.f32 %v3834, %v3898
          %v3923 = vmul.f32 %v3835, %v3898
          %v3924 = vmul.f32 %v3836, %v3898
          %v3925 = vmul.f32 %v3837, %v3898
          %v3926 = vmul.f32 %v3838, %v3898
          %v3927 = vmul.f32 %v3839, %v3898
          %v3928 = vmul.f32 %v3840, %v3898
          %v3929 = vmul.f32 %v3841, %v3898
          %v3930 = vmul.f32 %v3842, %v3898
          %v3931 = vmul.f32 %v3843, %v3898
          %v3932 = vmul.f32 %v3844, %v3898
          %v3933 = vmul.f32 %v3845, %v3898
          %v3934 = vmul.f32 %v3846, %v3898
          %v3935 = vmul.f32 %v3847, %v3898
          %v3936 = vmul.f32 %v3848, %v3898
          %v3937 = vmul.f32 %v3849, %v3898
          %v3938 = vmul.f32 %v3850, %v3898
          %v3939 = vmul.f32 %v3851, %v3898
          %v3940 = vmul.f32 %v3852, %v3898
          %v3941 = vmul.f32 %v3853, %v3898
          %v3942 = vmul.f32 %v3854, %v3898
          %v3943 = vmul.f32 %v3855, %v3898
          %v3944 = vmul.f32 %v3856, %v3898
          %v3945 = vmul.f32 %v3857, %v3898
          %v3946 = vmul.f32 %v3858, %v3898
          %vm3995 = vcmask 1046528
          %v3996 = vrot.slane %v3899, 1
          %v3997 = vrot.slane %v3900, 1
          %v3998 = vsel %vm3995, %v3996, %v3997
          %v3999 = vrot.slane %v3901, 1
          %v4000 = vsel %vm3995, %v3997, %v3999
          %v4001 = vrot.slane %v3902, 1
          %v4002 = vrot.slane %v3903, 1
          %v4003 = vsel %vm3995, %v4001, %v4002
          %v4004 = vrot.slane %v3904, 1
          %v4005 = vsel %vm3995, %v4002, %v4004
          %v4006 = vrot.slane %v3905, 1
          %v4007 = vrot.slane %v3906, 1
          %v4008 = vsel %vm3995, %v4006, %v4007
          %v4009 = vrot.slane %v3907, 1
          %v4010 = vsel %vm3995, %v4007, %v4009
          %v4011 = vrot.slane %v3908, 1
          %v4012 = vrot.slane %v3909, 1
          %v4013 = vsel %vm3995, %v4011, %v4012
          %v4014 = vrot.slane %v3910, 1
          %v4015 = vsel %vm3995, %v4012, %v4014
          %v4016 = vrot.slane %v3911, 1
          %v4017 = vrot.slane %v3912, 1
          %v4018 = vsel %vm3995, %v4016, %v4017
          %v4019 = vrot.slane %v3913, 1
          %v4020 = vsel %vm3995, %v4017, %v4019
          %v4021 = vrot.slane %v3914, 1
          %v4022 = vrot.slane %v3915, 1
          %v4023 = vsel %vm3995, %v4021, %v4022
          %v4024 = vrot.slane %v3916, 1
          %v4025 = vsel %vm3995, %v4022, %v4024
          %v4026 = vrot.slane %v3917, 1
          %v4027 = vrot.slane %v3918, 1
          %v4028 = vsel %vm3995, %v4026, %v4027
          %v4029 = vrot.slane %v3919, 1
          %v4030 = vsel %vm3995, %v4027, %v4029
          %v4031 = vrot.slane %v3920, 1
          %v4032 = vrot.slane %v3921, 1
          %v4033 = vsel %vm3995, %v4031, %v4032
          %v4034 = vrot.slane %v3922, 1
          %v4035 = vsel %vm3995, %v4032, %v4034
          %v4036 = vrot.slane %v3923, 1
          %v4037 = vrot.slane %v3924, 1
          %v4038 = vsel %vm3995, %v4036, %v4037
          %v4039 = vrot.slane %v3925, 1
          %v4040 = vsel %vm3995, %v4037, %v4039
          %v4041 = vrot.slane %v3926, 1
          %v4042 = vrot.slane %v3927, 1
          %v4043 = vsel %vm3995, %v4041, %v4042
          %v4044 = vrot.slane %v3928, 1
          %v4045 = vsel %vm3995, %v4042, %v4044
          %v4046 = vrot.slane %v3929, 1
          %v4047 = vrot.slane %v3930, 1
          %v4048 = vsel %vm3995, %v4046, %v4047
          %v4049 = vrot.slane %v3931, 1
          %v4050 = vsel %vm3995, %v4047, %v4049
          %v4051 = vrot.slane %v3932, 1
          %v4052 = vrot.slane %v3933, 1
          %v4053 = vsel %vm3995, %v4051, %v4052
          %v4054 = vrot.slane %v3934, 1
          %v4055 = vsel %vm3995, %v4052, %v4054
          %v4056 = vrot.slane %v3935, 1
          %v4057 = vrot.slane %v3936, 1
          %v4058 = vsel %vm3995, %v4056, %v4057
          %v4059 = vrot.slane %v3937, 1
          %v4060 = vsel %vm3995, %v4057, %v4059
          %v4061 = vrot.slane %v3938, 1
          %v4062 = vrot.slane %v3939, 1
          %v4063 = vsel %vm3995, %v4061, %v4062
          %v4064 = vrot.slane %v3940, 1
          %v4065 = vsel %vm3995, %v4062, %v4064
          %v4066 = vrot.slane %v3941, 1
          %v4067 = vrot.slane %v3942, 1
          %v4068 = vsel %vm3995, %v4066, %v4067
          %v4069 = vrot.slane %v3943, 1
          %v4070 = vsel %vm3995, %v4067, %v4069
          %v4071 = vrot.slane %v3944, 1
          %v4072 = vrot.slane %v3945, 1
          %v4073 = vsel %vm3995, %v4071, %v4072
          %v4074 = vrot.slane %v3946, 1
          %v4075 = vsel %vm3995, %v4072, %v4074
          %v4108 = vadd.f32 %v3866, %v3998
          %v4109 = vadd.f32 %v3867, %v4000
          %v4110 = vadd.f32 %v3868, %v4003
          %v4111 = vadd.f32 %v3869, %v4005
          %v4112 = vadd.f32 %v3870, %v4008
          %v4113 = vadd.f32 %v3871, %v4010
          %v4114 = vadd.f32 %v3872, %v4013
          %v4115 = vadd.f32 %v3873, %v4015
          %v4116 = vadd.f32 %v3874, %v4018
          %v4117 = vadd.f32 %v3875, %v4020
          %v4118 = vadd.f32 %v3876, %v4023
          %v4119 = vadd.f32 %v3877, %v4025
          %v4120 = vadd.f32 %v3878, %v4028
          %v4121 = vadd.f32 %v3879, %v4030
          %v4122 = vadd.f32 %v3880, %v4033
          %v4123 = vadd.f32 %v3881, %v4035
          %v4124 = vadd.f32 %v3882, %v4038
          %v4125 = vadd.f32 %v3883, %v4040
          %v4126 = vadd.f32 %v3884, %v4043
          %v4127 = vadd.f32 %v3885, %v4045
          %v4128 = vadd.f32 %v3886, %v4048
          %v4129 = vadd.f32 %v3887, %v4050
          %v4130 = vadd.f32 %v3888, %v4053
          %v4131 = vadd.f32 %v3889, %v4055
          %v4132 = vadd.f32 %v3890, %v4058
          %v4133 = vadd.f32 %v3891, %v4060
          %v4134 = vadd.f32 %v3892, %v4063
          %v4135 = vadd.f32 %v3893, %v4065
          %v4136 = vadd.f32 %v3894, %v4068
          %v4137 = vadd.f32 %v3895, %v4070
          %v4138 = vadd.f32 %v3896, %v4073
          %v4139 = vadd.f32 %v3897, %v4075
          %v4140 = vperm.slane %v3776, 2
          %v4141 = vmul.f32 %v3811, %v4140
          %v4142 = vmul.f32 %v3812, %v4140
          %v4143 = vmul.f32 %v3813, %v4140
          %v4144 = vmul.f32 %v3814, %v4140
          %v4145 = vmul.f32 %v3815, %v4140
          %v4146 = vmul.f32 %v3816, %v4140
          %v4147 = vmul.f32 %v3817, %v4140
          %v4148 = vmul.f32 %v3818, %v4140
          %v4149 = vmul.f32 %v3819, %v4140
          %v4150 = vmul.f32 %v3820, %v4140
          %v4151 = vmul.f32 %v3821, %v4140
          %v4152 = vmul.f32 %v3822, %v4140
          %v4153 = vmul.f32 %v3823, %v4140
          %v4154 = vmul.f32 %v3824, %v4140
          %v4155 = vmul.f32 %v3825, %v4140
          %v4156 = vmul.f32 %v3826, %v4140
          %v4157 = vmul.f32 %v3827, %v4140
          %v4158 = vmul.f32 %v3828, %v4140
          %v4159 = vmul.f32 %v3829, %v4140
          %v4160 = vmul.f32 %v3830, %v4140
          %v4161 = vmul.f32 %v3831, %v4140
          %v4162 = vmul.f32 %v3832, %v4140
          %v4163 = vmul.f32 %v3833, %v4140
          %v4164 = vmul.f32 %v3834, %v4140
          %v4165 = vmul.f32 %v3835, %v4140
          %v4166 = vmul.f32 %v3836, %v4140
          %v4167 = vmul.f32 %v3837, %v4140
          %v4168 = vmul.f32 %v3838, %v4140
          %v4169 = vmul.f32 %v3839, %v4140
          %v4170 = vmul.f32 %v3840, %v4140
          %v4171 = vmul.f32 %v3841, %v4140
          %v4172 = vmul.f32 %v3842, %v4140
          %v4173 = vmul.f32 %v3843, %v4140
          %v4174 = vmul.f32 %v3844, %v4140
          %v4175 = vmul.f32 %v3845, %v4140
          %v4176 = vmul.f32 %v3846, %v4140
          %v4177 = vmul.f32 %v3847, %v4140
          %v4178 = vmul.f32 %v3848, %v4140
          %v4179 = vmul.f32 %v3849, %v4140
          %v4180 = vmul.f32 %v3850, %v4140
          %v4181 = vmul.f32 %v3851, %v4140
          %v4182 = vmul.f32 %v3852, %v4140
          %v4183 = vmul.f32 %v3853, %v4140
          %v4184 = vmul.f32 %v3854, %v4140
          %v4185 = vmul.f32 %v3855, %v4140
          %v4186 = vmul.f32 %v3856, %v4140
          %v4187 = vmul.f32 %v3857, %v4140
          %v4188 = vmul.f32 %v3858, %v4140
          %vm4237 = vcmask 1045504
          %v4238 = vrot.slane %v4141, 2
          %v4239 = vrot.slane %v4142, 2
          %v4240 = vsel %vm4237, %v4238, %v4239
          %v4241 = vrot.slane %v4143, 2
          %v4242 = vsel %vm4237, %v4239, %v4241
          %v4243 = vrot.slane %v4144, 2
          %v4244 = vrot.slane %v4145, 2
          %v4245 = vsel %vm4237, %v4243, %v4244
          %v4246 = vrot.slane %v4146, 2
          %v4247 = vsel %vm4237, %v4244, %v4246
          %v4248 = vrot.slane %v4147, 2
          %v4249 = vrot.slane %v4148, 2
          %v4250 = vsel %vm4237, %v4248, %v4249
          %v4251 = vrot.slane %v4149, 2
          %v4252 = vsel %vm4237, %v4249, %v4251
          %v4253 = vrot.slane %v4150, 2
          %v4254 = vrot.slane %v4151, 2
          %v4255 = vsel %vm4237, %v4253, %v4254
          %v4256 = vrot.slane %v4152, 2
          %v4257 = vsel %vm4237, %v4254, %v4256
          %v4258 = vrot.slane %v4153, 2
          %v4259 = vrot.slane %v4154, 2
          %v4260 = vsel %vm4237, %v4258, %v4259
          %v4261 = vrot.slane %v4155, 2
          %v4262 = vsel %vm4237, %v4259, %v4261
          %v4263 = vrot.slane %v4156, 2
          %v4264 = vrot.slane %v4157, 2
          %v4265 = vsel %vm4237, %v4263, %v4264
          %v4266 = vrot.slane %v4158, 2
          %v4267 = vsel %vm4237, %v4264, %v4266
          %v4268 = vrot.slane %v4159, 2
          %v4269 = vrot.slane %v4160, 2
          %v4270 = vsel %vm4237, %v4268, %v4269
          %v4271 = vrot.slane %v4161, 2
          %v4272 = vsel %vm4237, %v4269, %v4271
          %v4273 = vrot.slane %v4162, 2
          %v4274 = vrot.slane %v4163, 2
          %v4275 = vsel %vm4237, %v4273, %v4274
          %v4276 = vrot.slane %v4164, 2
          %v4277 = vsel %vm4237, %v4274, %v4276
          %v4278 = vrot.slane %v4165, 2
          %v4279 = vrot.slane %v4166, 2
          %v4280 = vsel %vm4237, %v4278, %v4279
          %v4281 = vrot.slane %v4167, 2
          %v4282 = vsel %vm4237, %v4279, %v4281
          %v4283 = vrot.slane %v4168, 2
          %v4284 = vrot.slane %v4169, 2
          %v4285 = vsel %vm4237, %v4283, %v4284
          %v4286 = vrot.slane %v4170, 2
          %v4287 = vsel %vm4237, %v4284, %v4286
          %v4288 = vrot.slane %v4171, 2
          %v4289 = vrot.slane %v4172, 2
          %v4290 = vsel %vm4237, %v4288, %v4289
          %v4291 = vrot.slane %v4173, 2
          %v4292 = vsel %vm4237, %v4289, %v4291
          %v4293 = vrot.slane %v4174, 2
          %v4294 = vrot.slane %v4175, 2
          %v4295 = vsel %vm4237, %v4293, %v4294
          %v4296 = vrot.slane %v4176, 2
          %v4297 = vsel %vm4237, %v4294, %v4296
          %v4298 = vrot.slane %v4177, 2
          %v4299 = vrot.slane %v4178, 2
          %v4300 = vsel %vm4237, %v4298, %v4299
          %v4301 = vrot.slane %v4179, 2
          %v4302 = vsel %vm4237, %v4299, %v4301
          %v4303 = vrot.slane %v4180, 2
          %v4304 = vrot.slane %v4181, 2
          %v4305 = vsel %vm4237, %v4303, %v4304
          %v4306 = vrot.slane %v4182, 2
          %v4307 = vsel %vm4237, %v4304, %v4306
          %v4308 = vrot.slane %v4183, 2
          %v4309 = vrot.slane %v4184, 2
          %v4310 = vsel %vm4237, %v4308, %v4309
          %v4311 = vrot.slane %v4185, 2
          %v4312 = vsel %vm4237, %v4309, %v4311
          %v4313 = vrot.slane %v4186, 2
          %v4314 = vrot.slane %v4187, 2
          %v4315 = vsel %vm4237, %v4313, %v4314
          %v4316 = vrot.slane %v4188, 2
          %v4317 = vsel %vm4237, %v4314, %v4316
          %v4350 = vadd.f32 %v4108, %v4240
          %v4351 = vadd.f32 %v4109, %v4242
          %v4352 = vadd.f32 %v4110, %v4245
          %v4353 = vadd.f32 %v4111, %v4247
          %v4354 = vadd.f32 %v4112, %v4250
          %v4355 = vadd.f32 %v4113, %v4252
          %v4356 = vadd.f32 %v4114, %v4255
          %v4357 = vadd.f32 %v4115, %v4257
          %v4358 = vadd.f32 %v4116, %v4260
          %v4359 = vadd.f32 %v4117, %v4262
          %v4360 = vadd.f32 %v4118, %v4265
          %v4361 = vadd.f32 %v4119, %v4267
          %v4362 = vadd.f32 %v4120, %v4270
          %v4363 = vadd.f32 %v4121, %v4272
          %v4364 = vadd.f32 %v4122, %v4275
          %v4365 = vadd.f32 %v4123, %v4277
          %v4366 = vadd.f32 %v4124, %v4280
          %v4367 = vadd.f32 %v4125, %v4282
          %v4368 = vadd.f32 %v4126, %v4285
          %v4369 = vadd.f32 %v4127, %v4287
          %v4370 = vadd.f32 %v4128, %v4290
          %v4371 = vadd.f32 %v4129, %v4292
          %v4372 = vadd.f32 %v4130, %v4295
          %v4373 = vadd.f32 %v4131, %v4297
          %v4374 = vadd.f32 %v4132, %v4300
          %v4375 = vadd.f32 %v4133, %v4302
          %v4376 = vadd.f32 %v4134, %v4305
          %v4377 = vadd.f32 %v4135, %v4307
          %v4378 = vadd.f32 %v4136, %v4310
          %v4379 = vadd.f32 %v4137, %v4312
          %v4380 = vadd.f32 %v4138, %v4315
          %v4381 = vadd.f32 %v4139, %v4317
          %v4382 = vperm.slane %v3776, 3
          %v4383 = vmul.f32 %v3814, %v4382
          %v4384 = vmul.f32 %v3815, %v4382
          %v4385 = vmul.f32 %v3817, %v4382
          %v4386 = vmul.f32 %v3818, %v4382
          %v4387 = vmul.f32 %v3820, %v4382
          %v4388 = vmul.f32 %v3821, %v4382
          %v4389 = vmul.f32 %v3823, %v4382
          %v4390 = vmul.f32 %v3824, %v4382
          %v4391 = vmul.f32 %v3826, %v4382
          %v4392 = vmul.f32 %v3827, %v4382
          %v4393 = vmul.f32 %v3829, %v4382
          %v4394 = vmul.f32 %v3830, %v4382
          %v4395 = vmul.f32 %v3832, %v4382
          %v4396 = vmul.f32 %v3833, %v4382
          %v4397 = vmul.f32 %v3835, %v4382
          %v4398 = vmul.f32 %v3836, %v4382
          %v4399 = vmul.f32 %v3838, %v4382
          %v4400 = vmul.f32 %v3839, %v4382
          %v4401 = vmul.f32 %v3841, %v4382
          %v4402 = vmul.f32 %v3842, %v4382
          %v4403 = vmul.f32 %v3844, %v4382
          %v4404 = vmul.f32 %v3845, %v4382
          %v4405 = vmul.f32 %v3847, %v4382
          %v4406 = vmul.f32 %v3848, %v4382
          %v4407 = vmul.f32 %v3850, %v4382
          %v4408 = vmul.f32 %v3851, %v4382
          %v4409 = vmul.f32 %v3853, %v4382
          %v4410 = vmul.f32 %v3854, %v4382
          %v4411 = vmul.f32 %v3856, %v4382
          %v4412 = vmul.f32 %v3857, %v4382
          %v4413 = vmul.f32 %v3859, %v4382
          %v4414 = vmul.f32 %v3860, %v4382
          %v4415 = vadd.f32 %v4350, %v4383
          %v4416 = vadd.f32 %v4351, %v4384
          %v4417 = vadd.f32 %v4352, %v4385
          %v4418 = vadd.f32 %v4353, %v4386
          %v4419 = vadd.f32 %v4354, %v4387
          %v4420 = vadd.f32 %v4355, %v4388
          %v4421 = vadd.f32 %v4356, %v4389
          %v4422 = vadd.f32 %v4357, %v4390
          %v4423 = vadd.f32 %v4358, %v4391
          %v4424 = vadd.f32 %v4359, %v4392
          %v4425 = vadd.f32 %v4360, %v4393
          %v4426 = vadd.f32 %v4361, %v4394
          %v4427 = vadd.f32 %v4362, %v4395
          %v4428 = vadd.f32 %v4363, %v4396
          %v4429 = vadd.f32 %v4364, %v4397
          %v4430 = vadd.f32 %v4365, %v4398
          %v4431 = vadd.f32 %v4366, %v4399
          %v4432 = vadd.f32 %v4367, %v4400
          %v4433 = vadd.f32 %v4368, %v4401
          %v4434 = vadd.f32 %v4369, %v4402
          %v4435 = vadd.f32 %v4370, %v4403
          %v4436 = vadd.f32 %v4371, %v4404
          %v4437 = vadd.f32 %v4372, %v4405
          %v4438 = vadd.f32 %v4373, %v4406
          %v4439 = vadd.f32 %v4374, %v4407
          %v4440 = vadd.f32 %v4375, %v4408
          %v4441 = vadd.f32 %v4376, %v4409
          %v4442 = vadd.f32 %v4377, %v4410
          %v4443 = vadd.f32 %v4378, %v4411
          %v4444 = vadd.f32 %v4379, %v4412
          %v4445 = vadd.f32 %v4380, %v4413
          %v4446 = vadd.f32 %v4381, %v4414
          %v4447 = vperm.slane %v3776, 4
          %v4448 = vmul.f32 %v3814, %v4447
          %v4449 = vmul.f32 %v3815, %v4447
          %v4450 = vmul.f32 %v3816, %v4447
          %v4451 = vmul.f32 %v3817, %v4447
          %v4452 = vmul.f32 %v3818, %v4447
          %v4453 = vmul.f32 %v3819, %v4447
          %v4454 = vmul.f32 %v3820, %v4447
          %v4455 = vmul.f32 %v3821, %v4447
          %v4456 = vmul.f32 %v3822, %v4447
          %v4457 = vmul.f32 %v3823, %v4447
          %v4458 = vmul.f32 %v3824, %v4447
          %v4459 = vmul.f32 %v3825, %v4447
          %v4460 = vmul.f32 %v3826, %v4447
          %v4461 = vmul.f32 %v3827, %v4447
          %v4462 = vmul.f32 %v3828, %v4447
          %v4463 = vmul.f32 %v3829, %v4447
          %v4464 = vmul.f32 %v3830, %v4447
          %v4465 = vmul.f32 %v3831, %v4447
          %v4466 = vmul.f32 %v3832, %v4447
          %v4467 = vmul.f32 %v3833, %v4447
          %v4468 = vmul.f32 %v3834, %v4447
          %v4469 = vmul.f32 %v3835, %v4447
          %v4470 = vmul.f32 %v3836, %v4447
          %v4471 = vmul.f32 %v3837, %v4447
          %v4472 = vmul.f32 %v3838, %v4447
          %v4473 = vmul.f32 %v3839, %v4447
          %v4474 = vmul.f32 %v3840, %v4447
          %v4475 = vmul.f32 %v3841, %v4447
          %v4476 = vmul.f32 %v3842, %v4447
          %v4477 = vmul.f32 %v3843, %v4447
          %v4478 = vmul.f32 %v3844, %v4447
          %v4479 = vmul.f32 %v3845, %v4447
          %v4480 = vmul.f32 %v3846, %v4447
          %v4481 = vmul.f32 %v3847, %v4447
          %v4482 = vmul.f32 %v3848, %v4447
          %v4483 = vmul.f32 %v3849, %v4447
          %v4484 = vmul.f32 %v3850, %v4447
          %v4485 = vmul.f32 %v3851, %v4447
          %v4486 = vmul.f32 %v3852, %v4447
          %v4487 = vmul.f32 %v3853, %v4447
          %v4488 = vmul.f32 %v3854, %v4447
          %v4489 = vmul.f32 %v3855, %v4447
          %v4490 = vmul.f32 %v3856, %v4447
          %v4491 = vmul.f32 %v3857, %v4447
          %v4492 = vmul.f32 %v3858, %v4447
          %v4493 = vmul.f32 %v3859, %v4447
          %v4494 = vmul.f32 %v3860, %v4447
          %v4495 = vmul.f32 %v3861, %v4447
          %v4544 = vrot.slane %v4448, 1
          %v4545 = vrot.slane %v4449, 1
          %v4546 = vsel %vm3995, %v4544, %v4545
          %v4547 = vrot.slane %v4450, 1
          %v4548 = vsel %vm3995, %v4545, %v4547
          %v4549 = vrot.slane %v4451, 1
          %v4550 = vrot.slane %v4452, 1
          %v4551 = vsel %vm3995, %v4549, %v4550
          %v4552 = vrot.slane %v4453, 1
          %v4553 = vsel %vm3995, %v4550, %v4552
          %v4554 = vrot.slane %v4454, 1
          %v4555 = vrot.slane %v4455, 1
          %v4556 = vsel %vm3995, %v4554, %v4555
          %v4557 = vrot.slane %v4456, 1
          %v4558 = vsel %vm3995, %v4555, %v4557
          %v4559 = vrot.slane %v4457, 1
          %v4560 = vrot.slane %v4458, 1
          %v4561 = vsel %vm3995, %v4559, %v4560
          %v4562 = vrot.slane %v4459, 1
          %v4563 = vsel %vm3995, %v4560, %v4562
          %v4564 = vrot.slane %v4460, 1
          %v4565 = vrot.slane %v4461, 1
          %v4566 = vsel %vm3995, %v4564, %v4565
          %v4567 = vrot.slane %v4462, 1
          %v4568 = vsel %vm3995, %v4565, %v4567
          %v4569 = vrot.slane %v4463, 1
          %v4570 = vrot.slane %v4464, 1
          %v4571 = vsel %vm3995, %v4569, %v4570
          %v4572 = vrot.slane %v4465, 1
          %v4573 = vsel %vm3995, %v4570, %v4572
          %v4574 = vrot.slane %v4466, 1
          %v4575 = vrot.slane %v4467, 1
          %v4576 = vsel %vm3995, %v4574, %v4575
          %v4577 = vrot.slane %v4468, 1
          %v4578 = vsel %vm3995, %v4575, %v4577
          %v4579 = vrot.slane %v4469, 1
          %v4580 = vrot.slane %v4470, 1
          %v4581 = vsel %vm3995, %v4579, %v4580
          %v4582 = vrot.slane %v4471, 1
          %v4583 = vsel %vm3995, %v4580, %v4582
          %v4584 = vrot.slane %v4472, 1
          %v4585 = vrot.slane %v4473, 1
          %v4586 = vsel %vm3995, %v4584, %v4585
          %v4587 = vrot.slane %v4474, 1
          %v4588 = vsel %vm3995, %v4585, %v4587
          %v4589 = vrot.slane %v4475, 1
          %v4590 = vrot.slane %v4476, 1
          %v4591 = vsel %vm3995, %v4589, %v4590
          %v4592 = vrot.slane %v4477, 1
          %v4593 = vsel %vm3995, %v4590, %v4592
          %v4594 = vrot.slane %v4478, 1
          %v4595 = vrot.slane %v4479, 1
          %v4596 = vsel %vm3995, %v4594, %v4595
          %v4597 = vrot.slane %v4480, 1
          %v4598 = vsel %vm3995, %v4595, %v4597
          %v4599 = vrot.slane %v4481, 1
          %v4600 = vrot.slane %v4482, 1
          %v4601 = vsel %vm3995, %v4599, %v4600
          %v4602 = vrot.slane %v4483, 1
          %v4603 = vsel %vm3995, %v4600, %v4602
          %v4604 = vrot.slane %v4484, 1
          %v4605 = vrot.slane %v4485, 1
          %v4606 = vsel %vm3995, %v4604, %v4605
          %v4607 = vrot.slane %v4486, 1
          %v4608 = vsel %vm3995, %v4605, %v4607
          %v4609 = vrot.slane %v4487, 1
          %v4610 = vrot.slane %v4488, 1
          %v4611 = vsel %vm3995, %v4609, %v4610
          %v4612 = vrot.slane %v4489, 1
          %v4613 = vsel %vm3995, %v4610, %v4612
          %v4614 = vrot.slane %v4490, 1
          %v4615 = vrot.slane %v4491, 1
          %v4616 = vsel %vm3995, %v4614, %v4615
          %v4617 = vrot.slane %v4492, 1
          %v4618 = vsel %vm3995, %v4615, %v4617
          %v4619 = vrot.slane %v4493, 1
          %v4620 = vrot.slane %v4494, 1
          %v4621 = vsel %vm3995, %v4619, %v4620
          %v4622 = vrot.slane %v4495, 1
          %v4623 = vsel %vm3995, %v4620, %v4622
          %v4656 = vadd.f32 %v4415, %v4546
          %v4657 = vadd.f32 %v4416, %v4548
          %v4658 = vadd.f32 %v4417, %v4551
          %v4659 = vadd.f32 %v4418, %v4553
          %v4660 = vadd.f32 %v4419, %v4556
          %v4661 = vadd.f32 %v4420, %v4558
          %v4662 = vadd.f32 %v4421, %v4561
          %v4663 = vadd.f32 %v4422, %v4563
          %v4664 = vadd.f32 %v4423, %v4566
          %v4665 = vadd.f32 %v4424, %v4568
          %v4666 = vadd.f32 %v4425, %v4571
          %v4667 = vadd.f32 %v4426, %v4573
          %v4668 = vadd.f32 %v4427, %v4576
          %v4669 = vadd.f32 %v4428, %v4578
          %v4670 = vadd.f32 %v4429, %v4581
          %v4671 = vadd.f32 %v4430, %v4583
          %v4672 = vadd.f32 %v4431, %v4586
          %v4673 = vadd.f32 %v4432, %v4588
          %v4674 = vadd.f32 %v4433, %v4591
          %v4675 = vadd.f32 %v4434, %v4593
          %v4676 = vadd.f32 %v4435, %v4596
          %v4677 = vadd.f32 %v4436, %v4598
          %v4678 = vadd.f32 %v4437, %v4601
          %v4679 = vadd.f32 %v4438, %v4603
          %v4680 = vadd.f32 %v4439, %v4606
          %v4681 = vadd.f32 %v4440, %v4608
          %v4682 = vadd.f32 %v4441, %v4611
          %v4683 = vadd.f32 %v4442, %v4613
          %v4684 = vadd.f32 %v4443, %v4616
          %v4685 = vadd.f32 %v4444, %v4618
          %v4686 = vadd.f32 %v4445, %v4621
          %v4687 = vadd.f32 %v4446, %v4623
          %v4688 = vperm.slane %v3776, 5
          %v4689 = vmul.f32 %v3814, %v4688
          %v4690 = vmul.f32 %v3815, %v4688
          %v4691 = vmul.f32 %v3816, %v4688
          %v4692 = vmul.f32 %v3817, %v4688
          %v4693 = vmul.f32 %v3818, %v4688
          %v4694 = vmul.f32 %v3819, %v4688
          %v4695 = vmul.f32 %v3820, %v4688
          %v4696 = vmul.f32 %v3821, %v4688
          %v4697 = vmul.f32 %v3822, %v4688
          %v4698 = vmul.f32 %v3823, %v4688
          %v4699 = vmul.f32 %v3824, %v4688
          %v4700 = vmul.f32 %v3825, %v4688
          %v4701 = vmul.f32 %v3826, %v4688
          %v4702 = vmul.f32 %v3827, %v4688
          %v4703 = vmul.f32 %v3828, %v4688
          %v4704 = vmul.f32 %v3829, %v4688
          %v4705 = vmul.f32 %v3830, %v4688
          %v4706 = vmul.f32 %v3831, %v4688
          %v4707 = vmul.f32 %v3832, %v4688
          %v4708 = vmul.f32 %v3833, %v4688
          %v4709 = vmul.f32 %v3834, %v4688
          %v4710 = vmul.f32 %v3835, %v4688
          %v4711 = vmul.f32 %v3836, %v4688
          %v4712 = vmul.f32 %v3837, %v4688
          %v4713 = vmul.f32 %v3838, %v4688
          %v4714 = vmul.f32 %v3839, %v4688
          %v4715 = vmul.f32 %v3840, %v4688
          %v4716 = vmul.f32 %v3841, %v4688
          %v4717 = vmul.f32 %v3842, %v4688
          %v4718 = vmul.f32 %v3843, %v4688
          %v4719 = vmul.f32 %v3844, %v4688
          %v4720 = vmul.f32 %v3845, %v4688
          %v4721 = vmul.f32 %v3846, %v4688
          %v4722 = vmul.f32 %v3847, %v4688
          %v4723 = vmul.f32 %v3848, %v4688
          %v4724 = vmul.f32 %v3849, %v4688
          %v4725 = vmul.f32 %v3850, %v4688
          %v4726 = vmul.f32 %v3851, %v4688
          %v4727 = vmul.f32 %v3852, %v4688
          %v4728 = vmul.f32 %v3853, %v4688
          %v4729 = vmul.f32 %v3854, %v4688
          %v4730 = vmul.f32 %v3855, %v4688
          %v4731 = vmul.f32 %v3856, %v4688
          %v4732 = vmul.f32 %v3857, %v4688
          %v4733 = vmul.f32 %v3858, %v4688
          %v4734 = vmul.f32 %v3859, %v4688
          %v4735 = vmul.f32 %v3860, %v4688
          %v4736 = vmul.f32 %v3861, %v4688
          %v4785 = vrot.slane %v4689, 2
          %v4786 = vrot.slane %v4690, 2
          %v4787 = vsel %vm4237, %v4785, %v4786
          %v4788 = vrot.slane %v4691, 2
          %v4789 = vsel %vm4237, %v4786, %v4788
          %v4790 = vrot.slane %v4692, 2
          %v4791 = vrot.slane %v4693, 2
          %v4792 = vsel %vm4237, %v4790, %v4791
          %v4793 = vrot.slane %v4694, 2
          %v4794 = vsel %vm4237, %v4791, %v4793
          %v4795 = vrot.slane %v4695, 2
          %v4796 = vrot.slane %v4696, 2
          %v4797 = vsel %vm4237, %v4795, %v4796
          %v4798 = vrot.slane %v4697, 2
          %v4799 = vsel %vm4237, %v4796, %v4798
          %v4800 = vrot.slane %v4698, 2
          %v4801 = vrot.slane %v4699, 2
          %v4802 = vsel %vm4237, %v4800, %v4801
          %v4803 = vrot.slane %v4700, 2
          %v4804 = vsel %vm4237, %v4801, %v4803
          %v4805 = vrot.slane %v4701, 2
          %v4806 = vrot.slane %v4702, 2
          %v4807 = vsel %vm4237, %v4805, %v4806
          %v4808 = vrot.slane %v4703, 2
          %v4809 = vsel %vm4237, %v4806, %v4808
          %v4810 = vrot.slane %v4704, 2
          %v4811 = vrot.slane %v4705, 2
          %v4812 = vsel %vm4237, %v4810, %v4811
          %v4813 = vrot.slane %v4706, 2
          %v4814 = vsel %vm4237, %v4811, %v4813
          %v4815 = vrot.slane %v4707, 2
          %v4816 = vrot.slane %v4708, 2
          %v4817 = vsel %vm4237, %v4815, %v4816
          %v4818 = vrot.slane %v4709, 2
          %v4819 = vsel %vm4237, %v4816, %v4818
          %v4820 = vrot.slane %v4710, 2
          %v4821 = vrot.slane %v4711, 2
          %v4822 = vsel %vm4237, %v4820, %v4821
          %v4823 = vrot.slane %v4712, 2
          %v4824 = vsel %vm4237, %v4821, %v4823
          %v4825 = vrot.slane %v4713, 2
          %v4826 = vrot.slane %v4714, 2
          %v4827 = vsel %vm4237, %v4825, %v4826
          %v4828 = vrot.slane %v4715, 2
          %v4829 = vsel %vm4237, %v4826, %v4828
          %v4830 = vrot.slane %v4716, 2
          %v4831 = vrot.slane %v4717, 2
          %v4832 = vsel %vm4237, %v4830, %v4831
          %v4833 = vrot.slane %v4718, 2
          %v4834 = vsel %vm4237, %v4831, %v4833
          %v4835 = vrot.slane %v4719, 2
          %v4836 = vrot.slane %v4720, 2
          %v4837 = vsel %vm4237, %v4835, %v4836
          %v4838 = vrot.slane %v4721, 2
          %v4839 = vsel %vm4237, %v4836, %v4838
          %v4840 = vrot.slane %v4722, 2
          %v4841 = vrot.slane %v4723, 2
          %v4842 = vsel %vm4237, %v4840, %v4841
          %v4843 = vrot.slane %v4724, 2
          %v4844 = vsel %vm4237, %v4841, %v4843
          %v4845 = vrot.slane %v4725, 2
          %v4846 = vrot.slane %v4726, 2
          %v4847 = vsel %vm4237, %v4845, %v4846
          %v4848 = vrot.slane %v4727, 2
          %v4849 = vsel %vm4237, %v4846, %v4848
          %v4850 = vrot.slane %v4728, 2
          %v4851 = vrot.slane %v4729, 2
          %v4852 = vsel %vm4237, %v4850, %v4851
          %v4853 = vrot.slane %v4730, 2
          %v4854 = vsel %vm4237, %v4851, %v4853
          %v4855 = vrot.slane %v4731, 2
          %v4856 = vrot.slane %v4732, 2
          %v4857 = vsel %vm4237, %v4855, %v4856
          %v4858 = vrot.slane %v4733, 2
          %v4859 = vsel %vm4237, %v4856, %v4858
          %v4860 = vrot.slane %v4734, 2
          %v4861 = vrot.slane %v4735, 2
          %v4862 = vsel %vm4237, %v4860, %v4861
          %v4863 = vrot.slane %v4736, 2
          %v4864 = vsel %vm4237, %v4861, %v4863
          %v4897 = vadd.f32 %v4656, %v4787
          %v4898 = vadd.f32 %v4657, %v4789
          %v4899 = vadd.f32 %v4658, %v4792
          %v4900 = vadd.f32 %v4659, %v4794
          %v4901 = vadd.f32 %v4660, %v4797
          %v4902 = vadd.f32 %v4661, %v4799
          %v4903 = vadd.f32 %v4662, %v4802
          %v4904 = vadd.f32 %v4663, %v4804
          %v4905 = vadd.f32 %v4664, %v4807
          %v4906 = vadd.f32 %v4665, %v4809
          %v4907 = vadd.f32 %v4666, %v4812
          %v4908 = vadd.f32 %v4667, %v4814
          %v4909 = vadd.f32 %v4668, %v4817
          %v4910 = vadd.f32 %v4669, %v4819
          %v4911 = vadd.f32 %v4670, %v4822
          %v4912 = vadd.f32 %v4671, %v4824
          %v4913 = vadd.f32 %v4672, %v4827
          %v4914 = vadd.f32 %v4673, %v4829
          %v4915 = vadd.f32 %v4674, %v4832
          %v4916 = vadd.f32 %v4675, %v4834
          %v4917 = vadd.f32 %v4676, %v4837
          %v4918 = vadd.f32 %v4677, %v4839
          %v4919 = vadd.f32 %v4678, %v4842
          %v4920 = vadd.f32 %v4679, %v4844
          %v4921 = vadd.f32 %v4680, %v4847
          %v4922 = vadd.f32 %v4681, %v4849
          %v4923 = vadd.f32 %v4682, %v4852
          %v4924 = vadd.f32 %v4683, %v4854
          %v4925 = vadd.f32 %v4684, %v4857
          %v4926 = vadd.f32 %v4685, %v4859
          %v4927 = vadd.f32 %v4686, %v4862
          %v4928 = vadd.f32 %v4687, %v4864
          %v4929 = vperm.slane %v3776, 6
          %v4930 = vmul.f32 %v3817, %v4929
          %v4931 = vmul.f32 %v3818, %v4929
          %v4932 = vmul.f32 %v3820, %v4929
          %v4933 = vmul.f32 %v3821, %v4929
          %v4934 = vmul.f32 %v3823, %v4929
          %v4935 = vmul.f32 %v3824, %v4929
          %v4936 = vmul.f32 %v3826, %v4929
          %v4937 = vmul.f32 %v3827, %v4929
          %v4938 = vmul.f32 %v3829, %v4929
          %v4939 = vmul.f32 %v3830, %v4929
          %v4940 = vmul.f32 %v3832, %v4929
          %v4941 = vmul.f32 %v3833, %v4929
          %v4942 = vmul.f32 %v3835, %v4929
          %v4943 = vmul.f32 %v3836, %v4929
          %v4944 = vmul.f32 %v3838, %v4929
          %v4945 = vmul.f32 %v3839, %v4929
          %v4946 = vmul.f32 %v3841, %v4929
          %v4947 = vmul.f32 %v3842, %v4929
          %v4948 = vmul.f32 %v3844, %v4929
          %v4949 = vmul.f32 %v3845, %v4929
          %v4950 = vmul.f32 %v3847, %v4929
          %v4951 = vmul.f32 %v3848, %v4929
          %v4952 = vmul.f32 %v3850, %v4929
          %v4953 = vmul.f32 %v3851, %v4929
          %v4954 = vmul.f32 %v3853, %v4929
          %v4955 = vmul.f32 %v3854, %v4929
          %v4956 = vmul.f32 %v3856, %v4929
          %v4957 = vmul.f32 %v3857, %v4929
          %v4958 = vmul.f32 %v3859, %v4929
          %v4959 = vmul.f32 %v3860, %v4929
          %v4960 = vmul.f32 %v3862, %v4929
          %v4961 = vmul.f32 %v3863, %v4929
          %v4962 = vadd.f32 %v4897, %v4930
          %v4963 = vadd.f32 %v4898, %v4931
          %v4964 = vadd.f32 %v4899, %v4932
          %v4965 = vadd.f32 %v4900, %v4933
          %v4966 = vadd.f32 %v4901, %v4934
          %v4967 = vadd.f32 %v4902, %v4935
          %v4968 = vadd.f32 %v4903, %v4936
          %v4969 = vadd.f32 %v4904, %v4937
          %v4970 = vadd.f32 %v4905, %v4938
          %v4971 = vadd.f32 %v4906, %v4939
          %v4972 = vadd.f32 %v4907, %v4940
          %v4973 = vadd.f32 %v4908, %v4941
          %v4974 = vadd.f32 %v4909, %v4942
          %v4975 = vadd.f32 %v4910, %v4943
          %v4976 = vadd.f32 %v4911, %v4944
          %v4977 = vadd.f32 %v4912, %v4945
          %v4978 = vadd.f32 %v4913, %v4946
          %v4979 = vadd.f32 %v4914, %v4947
          %v4980 = vadd.f32 %v4915, %v4948
          %v4981 = vadd.f32 %v4916, %v4949
          %v4982 = vadd.f32 %v4917, %v4950
          %v4983 = vadd.f32 %v4918, %v4951
          %v4984 = vadd.f32 %v4919, %v4952
          %v4985 = vadd.f32 %v4920, %v4953
          %v4986 = vadd.f32 %v4921, %v4954
          %v4987 = vadd.f32 %v4922, %v4955
          %v4988 = vadd.f32 %v4923, %v4956
          %v4989 = vadd.f32 %v4924, %v4957
          %v4990 = vadd.f32 %v4925, %v4958
          %v4991 = vadd.f32 %v4926, %v4959
          %v4992 = vadd.f32 %v4927, %v4960
          %v4993 = vadd.f32 %v4928, %v4961
          %v4994 = vperm.slane %v3776, 7
          %v4995 = vmul.f32 %v3817, %v4994
          %v4996 = vmul.f32 %v3818, %v4994
          %v4997 = vmul.f32 %v3819, %v4994
          %v4998 = vmul.f32 %v3820, %v4994
          %v4999 = vmul.f32 %v3821, %v4994
          %v5000 = vmul.f32 %v3822, %v4994
          %v5001 = vmul.f32 %v3823, %v4994
          %v5002 = vmul.f32 %v3824, %v4994
          %v5003 = vmul.f32 %v3825, %v4994
          %v5004 = vmul.f32 %v3826, %v4994
          %v5005 = vmul.f32 %v3827, %v4994
          %v5006 = vmul.f32 %v3828, %v4994
          %v5007 = vmul.f32 %v3829, %v4994
          %v5008 = vmul.f32 %v3830, %v4994
          %v5009 = vmul.f32 %v3831, %v4994
          %v5010 = vmul.f32 %v3832, %v4994
          %v5011 = vmul.f32 %v3833, %v4994
          %v5012 = vmul.f32 %v3834, %v4994
          %v5013 = vmul.f32 %v3835, %v4994
          %v5014 = vmul.f32 %v3836, %v4994
          %v5015 = vmul.f32 %v3837, %v4994
          %v5016 = vmul.f32 %v3838, %v4994
          %v5017 = vmul.f32 %v3839, %v4994
          %v5018 = vmul.f32 %v3840, %v4994
          %v5019 = vmul.f32 %v3841, %v4994
          %v5020 = vmul.f32 %v3842, %v4994
          %v5021 = vmul.f32 %v3843, %v4994
          %v5022 = vmul.f32 %v3844, %v4994
          %v5023 = vmul.f32 %v3845, %v4994
          %v5024 = vmul.f32 %v3846, %v4994
          %v5025 = vmul.f32 %v3847, %v4994
          %v5026 = vmul.f32 %v3848, %v4994
          %v5027 = vmul.f32 %v3849, %v4994
          %v5028 = vmul.f32 %v3850, %v4994
          %v5029 = vmul.f32 %v3851, %v4994
          %v5030 = vmul.f32 %v3852, %v4994
          %v5031 = vmul.f32 %v3853, %v4994
          %v5032 = vmul.f32 %v3854, %v4994
          %v5033 = vmul.f32 %v3855, %v4994
          %v5034 = vmul.f32 %v3856, %v4994
          %v5035 = vmul.f32 %v3857, %v4994
          %v5036 = vmul.f32 %v3858, %v4994
          %v5037 = vmul.f32 %v3859, %v4994
          %v5038 = vmul.f32 %v3860, %v4994
          %v5039 = vmul.f32 %v3861, %v4994
          %v5040 = vmul.f32 %v3862, %v4994
          %v5041 = vmul.f32 %v3863, %v4994
          %v5042 = vmul.f32 %v3864, %v4994
          %v5091 = vrot.slane %v4995, 1
          %v5092 = vrot.slane %v4996, 1
          %v5093 = vsel %vm3995, %v5091, %v5092
          %v5094 = vrot.slane %v4997, 1
          %v5095 = vsel %vm3995, %v5092, %v5094
          %v5096 = vrot.slane %v4998, 1
          %v5097 = vrot.slane %v4999, 1
          %v5098 = vsel %vm3995, %v5096, %v5097
          %v5099 = vrot.slane %v5000, 1
          %v5100 = vsel %vm3995, %v5097, %v5099
          %v5101 = vrot.slane %v5001, 1
          %v5102 = vrot.slane %v5002, 1
          %v5103 = vsel %vm3995, %v5101, %v5102
          %v5104 = vrot.slane %v5003, 1
          %v5105 = vsel %vm3995, %v5102, %v5104
          %v5106 = vrot.slane %v5004, 1
          %v5107 = vrot.slane %v5005, 1
          %v5108 = vsel %vm3995, %v5106, %v5107
          %v5109 = vrot.slane %v5006, 1
          %v5110 = vsel %vm3995, %v5107, %v5109
          %v5111 = vrot.slane %v5007, 1
          %v5112 = vrot.slane %v5008, 1
          %v5113 = vsel %vm3995, %v5111, %v5112
          %v5114 = vrot.slane %v5009, 1
          %v5115 = vsel %vm3995, %v5112, %v5114
          %v5116 = vrot.slane %v5010, 1
          %v5117 = vrot.slane %v5011, 1
          %v5118 = vsel %vm3995, %v5116, %v5117
          %v5119 = vrot.slane %v5012, 1
          %v5120 = vsel %vm3995, %v5117, %v5119
          %v5121 = vrot.slane %v5013, 1
          %v5122 = vrot.slane %v5014, 1
          %v5123 = vsel %vm3995, %v5121, %v5122
          %v5124 = vrot.slane %v5015, 1
          %v5125 = vsel %vm3995, %v5122, %v5124
          %v5126 = vrot.slane %v5016, 1
          %v5127 = vrot.slane %v5017, 1
          %v5128 = vsel %vm3995, %v5126, %v5127
          %v5129 = vrot.slane %v5018, 1
          %v5130 = vsel %vm3995, %v5127, %v5129
          %v5131 = vrot.slane %v5019, 1
          %v5132 = vrot.slane %v5020, 1
          %v5133 = vsel %vm3995, %v5131, %v5132
          %v5134 = vrot.slane %v5021, 1
          %v5135 = vsel %vm3995, %v5132, %v5134
          %v5136 = vrot.slane %v5022, 1
          %v5137 = vrot.slane %v5023, 1
          %v5138 = vsel %vm3995, %v5136, %v5137
          %v5139 = vrot.slane %v5024, 1
          %v5140 = vsel %vm3995, %v5137, %v5139
          %v5141 = vrot.slane %v5025, 1
          %v5142 = vrot.slane %v5026, 1
          %v5143 = vsel %vm3995, %v5141, %v5142
          %v5144 = vrot.slane %v5027, 1
          %v5145 = vsel %vm3995, %v5142, %v5144
          %v5146 = vrot.slane %v5028, 1
          %v5147 = vrot.slane %v5029, 1
          %v5148 = vsel %vm3995, %v5146, %v5147
          %v5149 = vrot.slane %v5030, 1
          %v5150 = vsel %vm3995, %v5147, %v5149
          %v5151 = vrot.slane %v5031, 1
          %v5152 = vrot.slane %v5032, 1
          %v5153 = vsel %vm3995, %v5151, %v5152
          %v5154 = vrot.slane %v5033, 1
          %v5155 = vsel %vm3995, %v5152, %v5154
          %v5156 = vrot.slane %v5034, 1
          %v5157 = vrot.slane %v5035, 1
          %v5158 = vsel %vm3995, %v5156, %v5157
          %v5159 = vrot.slane %v5036, 1
          %v5160 = vsel %vm3995, %v5157, %v5159
          %v5161 = vrot.slane %v5037, 1
          %v5162 = vrot.slane %v5038, 1
          %v5163 = vsel %vm3995, %v5161, %v5162
          %v5164 = vrot.slane %v5039, 1
          %v5165 = vsel %vm3995, %v5162, %v5164
          %v5166 = vrot.slane %v5040, 1
          %v5167 = vrot.slane %v5041, 1
          %v5168 = vsel %vm3995, %v5166, %v5167
          %v5169 = vrot.slane %v5042, 1
          %v5170 = vsel %vm3995, %v5167, %v5169
          %v5203 = vadd.f32 %v4962, %v5093
          %v5204 = vadd.f32 %v4963, %v5095
          %v5205 = vadd.f32 %v4964, %v5098
          %v5206 = vadd.f32 %v4965, %v5100
          %v5207 = vadd.f32 %v4966, %v5103
          %v5208 = vadd.f32 %v4967, %v5105
          %v5209 = vadd.f32 %v4968, %v5108
          %v5210 = vadd.f32 %v4969, %v5110
          %v5211 = vadd.f32 %v4970, %v5113
          %v5212 = vadd.f32 %v4971, %v5115
          %v5213 = vadd.f32 %v4972, %v5118
          %v5214 = vadd.f32 %v4973, %v5120
          %v5215 = vadd.f32 %v4974, %v5123
          %v5216 = vadd.f32 %v4975, %v5125
          %v5217 = vadd.f32 %v4976, %v5128
          %v5218 = vadd.f32 %v4977, %v5130
          %v5219 = vadd.f32 %v4978, %v5133
          %v5220 = vadd.f32 %v4979, %v5135
          %v5221 = vadd.f32 %v4980, %v5138
          %v5222 = vadd.f32 %v4981, %v5140
          %v5223 = vadd.f32 %v4982, %v5143
          %v5224 = vadd.f32 %v4983, %v5145
          %v5225 = vadd.f32 %v4984, %v5148
          %v5226 = vadd.f32 %v4985, %v5150
          %v5227 = vadd.f32 %v4986, %v5153
          %v5228 = vadd.f32 %v4987, %v5155
          %v5229 = vadd.f32 %v4988, %v5158
          %v5230 = vadd.f32 %v4989, %v5160
          %v5231 = vadd.f32 %v4990, %v5163
          %v5232 = vadd.f32 %v4991, %v5165
          %v5233 = vadd.f32 %v4992, %v5168
          %v5234 = vadd.f32 %v4993, %v5170
          %v5235 = vperm.slane %v3777, 0
          %v5236 = vmul.f32 %v3817, %v5235
          %v5237 = vmul.f32 %v3818, %v5235
          %v5238 = vmul.f32 %v3819, %v5235
          %v5239 = vmul.f32 %v3820, %v5235
          %v5240 = vmul.f32 %v3821, %v5235
          %v5241 = vmul.f32 %v3822, %v5235
          %v5242 = vmul.f32 %v3823, %v5235
          %v5243 = vmul.f32 %v3824, %v5235
          %v5244 = vmul.f32 %v3825, %v5235
          %v5245 = vmul.f32 %v3826, %v5235
          %v5246 = vmul.f32 %v3827, %v5235
          %v5247 = vmul.f32 %v3828, %v5235
          %v5248 = vmul.f32 %v3829, %v5235
          %v5249 = vmul.f32 %v3830, %v5235
          %v5250 = vmul.f32 %v3831, %v5235
          %v5251 = vmul.f32 %v3832, %v5235
          %v5252 = vmul.f32 %v3833, %v5235
          %v5253 = vmul.f32 %v3834, %v5235
          %v5254 = vmul.f32 %v3835, %v5235
          %v5255 = vmul.f32 %v3836, %v5235
          %v5256 = vmul.f32 %v3837, %v5235
          %v5257 = vmul.f32 %v3838, %v5235
          %v5258 = vmul.f32 %v3839, %v5235
          %v5259 = vmul.f32 %v3840, %v5235
          %v5260 = vmul.f32 %v3841, %v5235
          %v5261 = vmul.f32 %v3842, %v5235
          %v5262 = vmul.f32 %v3843, %v5235
          %v5263 = vmul.f32 %v3844, %v5235
          %v5264 = vmul.f32 %v3845, %v5235
          %v5265 = vmul.f32 %v3846, %v5235
          %v5266 = vmul.f32 %v3847, %v5235
          %v5267 = vmul.f32 %v3848, %v5235
          %v5268 = vmul.f32 %v3849, %v5235
          %v5269 = vmul.f32 %v3850, %v5235
          %v5270 = vmul.f32 %v3851, %v5235
          %v5271 = vmul.f32 %v3852, %v5235
          %v5272 = vmul.f32 %v3853, %v5235
          %v5273 = vmul.f32 %v3854, %v5235
          %v5274 = vmul.f32 %v3855, %v5235
          %v5275 = vmul.f32 %v3856, %v5235
          %v5276 = vmul.f32 %v3857, %v5235
          %v5277 = vmul.f32 %v3858, %v5235
          %v5278 = vmul.f32 %v3859, %v5235
          %v5279 = vmul.f32 %v3860, %v5235
          %v5280 = vmul.f32 %v3861, %v5235
          %v5281 = vmul.f32 %v3862, %v5235
          %v5282 = vmul.f32 %v3863, %v5235
          %v5283 = vmul.f32 %v3864, %v5235
          %v5332 = vrot.slane %v5236, 2
          %v5333 = vrot.slane %v5237, 2
          %v5334 = vsel %vm4237, %v5332, %v5333
          %v5335 = vrot.slane %v5238, 2
          %v5336 = vsel %vm4237, %v5333, %v5335
          %v5337 = vrot.slane %v5239, 2
          %v5338 = vrot.slane %v5240, 2
          %v5339 = vsel %vm4237, %v5337, %v5338
          %v5340 = vrot.slane %v5241, 2
          %v5341 = vsel %vm4237, %v5338, %v5340
          %v5342 = vrot.slane %v5242, 2
          %v5343 = vrot.slane %v5243, 2
          %v5344 = vsel %vm4237, %v5342, %v5343
          %v5345 = vrot.slane %v5244, 2
          %v5346 = vsel %vm4237, %v5343, %v5345
          %v5347 = vrot.slane %v5245, 2
          %v5348 = vrot.slane %v5246, 2
          %v5349 = vsel %vm4237, %v5347, %v5348
          %v5350 = vrot.slane %v5247, 2
          %v5351 = vsel %vm4237, %v5348, %v5350
          %v5352 = vrot.slane %v5248, 2
          %v5353 = vrot.slane %v5249, 2
          %v5354 = vsel %vm4237, %v5352, %v5353
          %v5355 = vrot.slane %v5250, 2
          %v5356 = vsel %vm4237, %v5353, %v5355
          %v5357 = vrot.slane %v5251, 2
          %v5358 = vrot.slane %v5252, 2
          %v5359 = vsel %vm4237, %v5357, %v5358
          %v5360 = vrot.slane %v5253, 2
          %v5361 = vsel %vm4237, %v5358, %v5360
          %v5362 = vrot.slane %v5254, 2
          %v5363 = vrot.slane %v5255, 2
          %v5364 = vsel %vm4237, %v5362, %v5363
          %v5365 = vrot.slane %v5256, 2
          %v5366 = vsel %vm4237, %v5363, %v5365
          %v5367 = vrot.slane %v5257, 2
          %v5368 = vrot.slane %v5258, 2
          %v5369 = vsel %vm4237, %v5367, %v5368
          %v5370 = vrot.slane %v5259, 2
          %v5371 = vsel %vm4237, %v5368, %v5370
          %v5372 = vrot.slane %v5260, 2
          %v5373 = vrot.slane %v5261, 2
          %v5374 = vsel %vm4237, %v5372, %v5373
          %v5375 = vrot.slane %v5262, 2
          %v5376 = vsel %vm4237, %v5373, %v5375
          %v5377 = vrot.slane %v5263, 2
          %v5378 = vrot.slane %v5264, 2
          %v5379 = vsel %vm4237, %v5377, %v5378
          %v5380 = vrot.slane %v5265, 2
          %v5381 = vsel %vm4237, %v5378, %v5380
          %v5382 = vrot.slane %v5266, 2
          %v5383 = vrot.slane %v5267, 2
          %v5384 = vsel %vm4237, %v5382, %v5383
          %v5385 = vrot.slane %v5268, 2
          %v5386 = vsel %vm4237, %v5383, %v5385
          %v5387 = vrot.slane %v5269, 2
          %v5388 = vrot.slane %v5270, 2
          %v5389 = vsel %vm4237, %v5387, %v5388
          %v5390 = vrot.slane %v5271, 2
          %v5391 = vsel %vm4237, %v5388, %v5390
          %v5392 = vrot.slane %v5272, 2
          %v5393 = vrot.slane %v5273, 2
          %v5394 = vsel %vm4237, %v5392, %v5393
          %v5395 = vrot.slane %v5274, 2
          %v5396 = vsel %vm4237, %v5393, %v5395
          %v5397 = vrot.slane %v5275, 2
          %v5398 = vrot.slane %v5276, 2
          %v5399 = vsel %vm4237, %v5397, %v5398
          %v5400 = vrot.slane %v5277, 2
          %v5401 = vsel %vm4237, %v5398, %v5400
          %v5402 = vrot.slane %v5278, 2
          %v5403 = vrot.slane %v5279, 2
          %v5404 = vsel %vm4237, %v5402, %v5403
          %v5405 = vrot.slane %v5280, 2
          %v5406 = vsel %vm4237, %v5403, %v5405
          %v5407 = vrot.slane %v5281, 2
          %v5408 = vrot.slane %v5282, 2
          %v5409 = vsel %vm4237, %v5407, %v5408
          %v5410 = vrot.slane %v5283, 2
          %v5411 = vsel %vm4237, %v5408, %v5410
          %v5444 = vadd.f32 %v5203, %v5334
          %v5445 = vadd.f32 %v5204, %v5336
          %v5446 = vadd.f32 %v5205, %v5339
          %v5447 = vadd.f32 %v5206, %v5341
          %v5448 = vadd.f32 %v5207, %v5344
          %v5449 = vadd.f32 %v5208, %v5346
          %v5450 = vadd.f32 %v5209, %v5349
          %v5451 = vadd.f32 %v5210, %v5351
          %v5452 = vadd.f32 %v5211, %v5354
          %v5453 = vadd.f32 %v5212, %v5356
          %v5454 = vadd.f32 %v5213, %v5359
          %v5455 = vadd.f32 %v5214, %v5361
          %v5456 = vadd.f32 %v5215, %v5364
          %v5457 = vadd.f32 %v5216, %v5366
          %v5458 = vadd.f32 %v5217, %v5369
          %v5459 = vadd.f32 %v5218, %v5371
          %v5460 = vadd.f32 %v5219, %v5374
          %v5461 = vadd.f32 %v5220, %v5376
          %v5462 = vadd.f32 %v5221, %v5379
          %v5463 = vadd.f32 %v5222, %v5381
          %v5464 = vadd.f32 %v5223, %v5384
          %v5465 = vadd.f32 %v5224, %v5386
          %v5466 = vadd.f32 %v5225, %v5389
          %v5467 = vadd.f32 %v5226, %v5391
          %v5468 = vadd.f32 %v5227, %v5394
          %v5469 = vadd.f32 %v5228, %v5396
          %v5470 = vadd.f32 %v5229, %v5399
          %v5471 = vadd.f32 %v5230, %v5401
          %v5472 = vadd.f32 %v5231, %v5404
          %v5473 = vadd.f32 %v5232, %v5406
          %v5474 = vadd.f32 %v5233, %v5409
          %v5475 = vadd.f32 %v5234, %v5411
          %v5476 = vld [vmem:[#allocation4] sm:$0x1]
          %v5477 = vld [vmem:[#allocation4 + $0x1] sm:$0x1]
          %v5478 = vmul.f32 %v5476, 0.001953125
          %v5479 = vmul.f32 %v5477, 0.001953125
          %v5480 = vmul.f32 %v5478, %v5478
          %v5481 = vsub.f32 %v5479, %v5480
          %v5482 = vld [vmem:[%s6] sm:$0x1]
          %v5483 = vadd.f32 %v5481, 1e-05
          %v5484 = vrsqrt.pop %v5483
          %v5485 = vmul.f32 %v5484, %v5483
          %v5486 = vmul.f32 %v5485, %v5484
          %v5487 = vmul.f32 0.5, %v5486
          %v5488 = vsub.f32 1.5, %v5487
          %v5489 = vmul.f32 %v5484, %v5488
          %vm5490 = vweird.f32 %v5483
          %vm5491 = vweird.f32 %v5484
          %vm5492 = vmor %vm5490, %vm5491
          %v5493 = vsel %vm5492, %v5484, %v5489
          %v5494 = vmul.f32 %v5482, %v5493
          %v5495 = vld [vmem:[%s7] sm:$0x1]
          %v5496 = vmul.f32 %v5478, %v5494
          %v5497 = vsub.f32 %v5495, %v5496
          %v5499 = vperm.slane %v5494, 0
          %v5501 = vmul.f32 %v5444, %v5499
          %v5502 = vmul.f32 %v5445, %v5499
          %v5503 = vmul.f32 %v5446, %v5499
          %v5504 = vmul.f32 %v5447, %v5499
          %v5505 = vmul.f32 %v5448, %v5499
          %v5506 = vmul.f32 %v5449, %v5499
          %v5507 = vmul.f32 %v5450, %v5499
          %v5508 = vmul.f32 %v5451, %v5499
          %v5509 = vmul.f32 %v5452, %v5499
          %v5510 = vmul.f32 %v5453, %v5499
          %v5511 = vmul.f32 %v5454, %v5499
          %v5512 = vmul.f32 %v5455, %v5499
          %v5513 = vmul.f32 %v5456, %v5499
          %v5514 = vmul.f32 %v5457, %v5499
          %v5515 = vmul.f32 %v5458, %v5499
          %v5516 = vmul.f32 %v5459, %v5499
          %v5517 = vmul.f32 %v5460, %v5499
          %v5518 = vmul.f32 %v5461, %v5499
          %v5519 = vmul.f32 %v5462, %v5499
          %v5520 = vmul.f32 %v5463, %v5499
          %v5521 = vmul.f32 %v5464, %v5499
          %v5522 = vmul.f32 %v5465, %v5499
          %v5523 = vmul.f32 %v5466, %v5499
          %v5524 = vmul.f32 %v5467, %v5499
          %v5525 = vmul.f32 %v5468, %v5499
          %v5526 = vmul.f32 %v5469, %v5499
          %v5527 = vmul.f32 %v5470, %v5499
          %v5528 = vmul.f32 %v5471, %v5499
          %v5529 = vmul.f32 %v5472, %v5499
          %v5530 = vmul.f32 %v5473, %v5499
          %v5531 = vmul.f32 %v5474, %v5499
          %v5532 = vmul.f32 %v5475, %v5499
          %v5534 = vperm.slane %v5497, 0
          %v5536 = vadd.f32 %v5501, %v5534
          %v5537 = vadd.f32 %v5502, %v5534
          %v5538 = vadd.f32 %v5503, %v5534
          %v5539 = vadd.f32 %v5504, %v5534
          %v5540 = vadd.f32 %v5505, %v5534
          %v5541 = vadd.f32 %v5506, %v5534
          %v5542 = vadd.f32 %v5507, %v5534
          %v5543 = vadd.f32 %v5508, %v5534
          %v5544 = vadd.f32 %v5509, %v5534
          %v5545 = vadd.f32 %v5510, %v5534
          %v5546 = vadd.f32 %v5511, %v5534
          %v5547 = vadd.f32 %v5512, %v5534
          %v5548 = vadd.f32 %v5513, %v5534
          %v5549 = vadd.f32 %v5514, %v5534
          %v5550 = vadd.f32 %v5515, %v5534
          %v5551 = vadd.f32 %v5516, %v5534
          %v5552 = vadd.f32 %v5517, %v5534
          %v5553 = vadd.f32 %v5518, %v5534
          %v5554 = vadd.f32 %v5519, %v5534
          %v5555 = vadd.f32 %v5520, %v5534
          %v5556 = vadd.f32 %v5521, %v5534
          %v5557 = vadd.f32 %v5522, %v5534
          %v5558 = vadd.f32 %v5523, %v5534
          %v5559 = vadd.f32 %v5524, %v5534
          %v5560 = vadd.f32 %v5525, %v5534
          %v5561 = vadd.f32 %v5526, %v5534
          %v5562 = vadd.f32 %v5527, %v5534
          %v5563 = vadd.f32 %v5528, %v5534
          %v5564 = vadd.f32 %v5529, %v5534
          %v5565 = vadd.f32 %v5530, %v5534
          %v5566 = vadd.f32 %v5531, %v5534
          %v5567 = vadd.f32 %v5532, %v5534
          %v5568 = vmax.f32 %v5536, 0.0
          %v5569 = vmax.f32 %v5537, 0.0
          %v5570 = vmax.f32 %v5538, 0.0
          %v5571 = vmax.f32 %v5539, 0.0
          %v5572 = vmax.f32 %v5540, 0.0
          %v5573 = vmax.f32 %v5541, 0.0
          %v5574 = vmax.f32 %v5542, 0.0
          %v5575 = vmax.f32 %v5543, 0.0
          %v5576 = vmax.f32 %v5544, 0.0
          %v5577 = vmax.f32 %v5545, 0.0
          %v5578 = vmax.f32 %v5546, 0.0
          %v5579 = vmax.f32 %v5547, 0.0
          %v5580 = vmax.f32 %v5548, 0.0
          %v5581 = vmax.f32 %v5549, 0.0
          %v5582 = vmax.f32 %v5550, 0.0
          %v5583 = vmax.f32 %v5551, 0.0
          %v5584 = vmax.f32 %v5552, 0.0
          %v5585 = vmax.f32 %v5553, 0.0
          %v5586 = vmax.f32 %v5554, 0.0
          %v5587 = vmax.f32 %v5555, 0.0
          %v5588 = vmax.f32 %v5556, 0.0
          %v5589 = vmax.f32 %v5557, 0.0
          %v5590 = vmax.f32 %v5558, 0.0
          %v5591 = vmax.f32 %v5559, 0.0
          %v5592 = vmax.f32 %v5560, 0.0
          %v5593 = vmax.f32 %v5561, 0.0
          %v5594 = vmax.f32 %v5562, 0.0
          %v5595 = vmax.f32 %v5563, 0.0
          %v5596 = vmax.f32 %v5564, 0.0
          %v5597 = vmax.f32 %v5565, 0.0
          %v5598 = vmax.f32 %v5566, 0.0
          %v5599 = vmax.f32 %v5567, 0.0
          %v5600 = vmin.f32 %v5568, 6.0
          %v5601 = vmin.f32 %v5569, 6.0
          %v5602 = vmin.f32 %v5570, 6.0
          %v5603 = vmin.f32 %v5571, 6.0
          %v5604 = vmin.f32 %v5572, 6.0
          %v5605 = vmin.f32 %v5573, 6.0
          %v5606 = vmin.f32 %v5574, 6.0
          %v5607 = vmin.f32 %v5575, 6.0
          %v5608 = vmin.f32 %v5576, 6.0
          %v5609 = vmin.f32 %v5577, 6.0
          %v5610 = vmin.f32 %v5578, 6.0
          %v5611 = vmin.f32 %v5579, 6.0
          %v5612 = vmin.f32 %v5580, 6.0
          %v5613 = vmin.f32 %v5581, 6.0
          %v5614 = vmin.f32 %v5582, 6.0
          %v5615 = vmin.f32 %v5583, 6.0
          %v5616 = vmin.f32 %v5584, 6.0
          %v5617 = vmin.f32 %v5585, 6.0
          %v5618 = vmin.f32 %v5586, 6.0
          %v5619 = vmin.f32 %v5587, 6.0
          %v5620 = vmin.f32 %v5588, 6.0
          %v5621 = vmin.f32 %v5589, 6.0
          %v5622 = vmin.f32 %v5590, 6.0
          %v5623 = vmin.f32 %v5591, 6.0
          %v5624 = vmin.f32 %v5592, 6.0
          %v5625 = vmin.f32 %v5593, 6.0
          %v5626 = vmin.f32 %v5594, 6.0
          %v5627 = vmin.f32 %v5595, 6.0
          %v5628 = vmin.f32 %v5596, 6.0
          %v5629 = vmin.f32 %v5597, 6.0
          %v5630 = vmin.f32 %v5598, 6.0
          %v5631 = vmin.f32 %v5599, 6.0
          %5632 = vmatpush.msra.mxu0 %v5615
          %5633 = vmatpush.msra.mxu0 %v5614
          %5634 = vmatpush.msra.mxu0 %v5613
          %5635 = vmatpush.msra.mxu0 %v5612
          %5636 = vmatpush.msra.mxu0 %v5611
          %5637 = vmatpush.msra.mxu0 %v5610
          %5638 = vmatpush.msra.mxu0 %v5609
          %5639 = vmatpush.msra.mxu0 %v5608
          %5640 = vmatpush.msra.mxu0 %v5607
          %5641 = vmatpush.msra.mxu0 %v5606
          %5642 = vmatpush.msra.mxu0 %v5605
          %5643 = vmatpush.msra.mxu0 %v5604
          %5644 = vmatpush.msra.mxu0 %v5603
          %5645 = vmatpush.msra.mxu0 %v5602
          %5646 = vmatpush.msra.mxu0 %v5601
          %5647 = vmatpush.msra.mxu0 %v5600
          %5648 = vmatmul.f32.gmra.mxu0 1.0
          %v5649 = vpop.f32.mrf.mxu0
          %v5650 = vadd.f32 0.0, %v5649
          %5651 = vdwg.mxu0
          %5652 = vmatpush.msra.mxu0 %v5631
          %5653 = vmatpush.msra.mxu0 %v5630
          %5654 = vmatpush.msra.mxu0 %v5629
          %5655 = vmatpush.msra.mxu0 %v5628
          %5656 = vmatpush.msra.mxu0 %v5627
          %5657 = vmatpush.msra.mxu0 %v5626
          %5658 = vmatpush.msra.mxu0 %v5625
          %5659 = vmatpush.msra.mxu0 %v5624
          %5660 = vmatpush.msra.mxu0 %v5623
          %5661 = vmatpush.msra.mxu0 %v5622
          %5662 = vmatpush.msra.mxu0 %v5621
          %5663 = vmatpush.msra.mxu0 %v5620
          %5664 = vmatpush.msra.mxu0 %v5619
          %5665 = vmatpush.msra.mxu0 %v5618
          %5666 = vmatpush.msra.mxu0 %v5617
          %5667 = vmatpush.msra.mxu0 %v5616
          %5668 = vmatmul.f32.gmra.mxu0 1.0
          %v5669 = vpop.f32.mrf.mxu0
          %v5670 = vadd.f32 %v5650, %v5669
          %5671 = vdwg.mxu0
          %v5672 = vmul.f32 %v5670, 0.00390625
          %v5673 = vpack.c.bf16 %v5672, %v5672
          %v5674 = vld [vmem:[#allocation15] sm:$0xf]
          %v5675 = vld [vmem:[#allocation15 + $0x4] sm:$0xf]
          %v5676 = vld [vmem:[#allocation15 + $0x8] sm:$0xf]
          %v5677 = vld [vmem:[#allocation15 + $0xc] sm:$0xf]
          %v5678 = vld [vmem:[#allocation15 + $0x10] sm:$0xf]
          %v5679 = vld [vmem:[#allocation15 + $0x14] sm:$0xf]
          %v5680 = vld [vmem:[#allocation15 + $0x18] sm:$0xf]
          %v5681 = vld [vmem:[#allocation15 + $0x1c] sm:$0xf]
          %v5682 = vld [vmem:[#allocation15 + $0x20] sm:$0xf]
          %v5683 = vld [vmem:[#allocation15 + $0x24] sm:$0xf]
          %v5684 = vld [vmem:[#allocation15 + $0x28] sm:$0xf]
          %v5685 = vld [vmem:[#allocation15 + $0x2c] sm:$0xf]
          %v5686 = vld [vmem:[#allocation15 + $0x30] sm:$0xf]
          %v5687 = vld [vmem:[#allocation15 + $0x34] sm:$0xf]
          %v5688 = vld [vmem:[#allocation15 + $0x38] sm:$0xf]
          %v5689 = vld [vmem:[#allocation15 + $0x3c] sm:$0xf]
          %v5706 = vunpack.c.l.b16 %v5674
          %v5707 = vunpack.c.l.b16 %v5675
          %v5708 = vunpack.c.l.b16 %v5676
          %v5709 = vunpack.c.l.b16 %v5677
          %v5710 = vunpack.c.l.b16 %v5678
          %v5711 = vunpack.c.l.b16 %v5679
          %v5712 = vunpack.c.l.b16 %v5680
          %v5713 = vunpack.c.l.b16 %v5681
          %v5714 = vunpack.c.l.b16 %v5682
          %v5715 = vunpack.c.l.b16 %v5683
          %v5716 = vunpack.c.l.b16 %v5684
          %v5717 = vunpack.c.l.b16 %v5685
          %v5718 = vunpack.c.l.b16 %v5686
          %v5719 = vunpack.c.l.b16 %v5687
          %v5720 = vunpack.c.l.b16 %v5688
          %v5721 = vunpack.c.l.b16 %v5689
          %v5722 = vpack.c.b16 %v5707, %v5706
          %v5723 = vpack.c.b16 %v5709, %v5708
          %v5724 = vpack.c.b16 %v5711, %v5710
          %v5725 = vpack.c.b16 %v5713, %v5712
          %v5726 = vpack.c.b16 %v5715, %v5714
          %v5727 = vpack.c.b16 %v5717, %v5716
          %v5728 = vpack.c.b16 %v5719, %v5718
          %v5729 = vpack.c.b16 %v5721, %v5720
          %5738 = vmatpush.bf16.msra.mxu0 %v5729
          %5739 = vmatpush.bf16.msra.mxu0 %v5728
          %5740 = vmatpush.bf16.msra.mxu0 %v5727
          %5741 = vmatpush.bf16.msra.mxu0 %v5726
          %5742 = vmatpush.bf16.msra.mxu0 %v5725
          %5743 = vmatpush.bf16.msra.mxu0 %v5724
          %5744 = vmatpush.bf16.msra.mxu0 %v5723
          %5745 = vmatpush.bf16.msra.mxu0 %v5722
          %5746 = vmatmul.bf16.gmra.mxu0 %v5673
          %v5747 = vpop.f32.mrf.mxu0
          %v5748 = vadd.f32 0.0, %v5747
          %v5749 = vpop.f32.mrf.mxu0
          %5750 = vdwg.mxu0
          %v5751 = vmax.f32 %v5748, 0.0
          %v5752 = vpack.c.bf16 %v5751, %v5751
          %v5753 = vld [vmem:[#allocation16] sm:$0xf]
          %v5754 = vld [vmem:[#allocation16 + $0x4] sm:$0xf]
          %v5755 = vld [vmem:[#allocation16 + $0x8] sm:$0xf]
          %v5756 = vld [vmem:[#allocation16 + $0xc] sm:$0xf]
          %v5757 = vld [vmem:[#allocation16 + $0x10] sm:$0xf]
          %v5758 = vld [vmem:[#allocation16 + $0x14] sm:$0xf]
          %v5759 = vld [vmem:[#allocation16 + $0x18] sm:$0xf]
          %v5760 = vld [vmem:[#allocation16 + $0x1c] sm:$0xf]
          %v5761 = vld [vmem:[#allocation16 + $0x20] sm:$0xf]
          %v5762 = vld [vmem:[#allocation16 + $0x24] sm:$0xf]
          %v5763 = vld [vmem:[#allocation16 + $0x28] sm:$0xf]
          %v5764 = vld [vmem:[#allocation16 + $0x2c] sm:$0xf]
          %v5765 = vld [vmem:[#allocation16 + $0x30] sm:$0xf]
          %v5766 = vld [vmem:[#allocation16 + $0x34] sm:$0xf]
          %v5767 = vld [vmem:[#allocation16 + $0x38] sm:$0xf]
          %v5768 = vld [vmem:[#allocation16 + $0x3c] sm:$0xf]
          %v5785 = vunpack.c.l.b16 %v5753
          %v5786 = vunpack.c.l.b16 %v5754
          %v5787 = vunpack.c.l.b16 %v5755
          %v5788 = vunpack.c.l.b16 %v5756
          %v5789 = vunpack.c.l.b16 %v5757
          %v5790 = vunpack.c.l.b16 %v5758
          %v5791 = vunpack.c.l.b16 %v5759
          %v5792 = vunpack.c.l.b16 %v5760
          %v5793 = vunpack.c.l.b16 %v5761
          %v5794 = vunpack.c.l.b16 %v5762
          %v5795 = vunpack.c.l.b16 %v5763
          %v5796 = vunpack.c.l.b16 %v5764
          %v5797 = vunpack.c.l.b16 %v5765
          %v5798 = vunpack.c.l.b16 %v5766
          %v5799 = vunpack.c.l.b16 %v5767
          %v5800 = vunpack.c.l.b16 %v5768
          %v5801 = vpack.c.b16 %v5786, %v5785
          %v5802 = vpack.c.b16 %v5788, %v5787
          %v5803 = vpack.c.b16 %v5790, %v5789
          %v5804 = vpack.c.b16 %v5792, %v5791
          %v5805 = vpack.c.b16 %v5794, %v5793
          %v5806 = vpack.c.b16 %v5796, %v5795
          %v5807 = vpack.c.b16 %v5798, %v5797
          %v5808 = vpack.c.b16 %v5800, %v5799
          %5817 = vmatpush.bf16.msra.mxu0 %v5808
          %5818 = vmatpush.bf16.msra.mxu0 %v5807
          %5819 = vmatpush.bf16.msra.mxu0 %v5806
          %5820 = vmatpush.bf16.msra.mxu0 %v5805
          %5821 = vmatpush.bf16.msra.mxu0 %v5804
          %5822 = vmatpush.bf16.msra.mxu0 %v5803
          %5823 = vmatpush.bf16.msra.mxu0 %v5802
          %5824 = vmatpush.bf16.msra.mxu0 %v5801
          %5825 = vmatmul.bf16.gmra.mxu0 %v5752
          %v5826 = vpop.f32.mrf.mxu0
          %v5827 = vadd.f32 0.0, %v5826
          %v5828 = vpop.f32.mrf.mxu0
          %5829 = vdwg.mxu0
          %v5830 = vsub.f32 0.0, %v5827
          %v5831 = vmul.f32 %v5830, 1.442695
          %v5832 = vpow.pop %v5831
          %v5833 = vadd.f32 %v5832, 1.0
          %v5834 = vrcp.pop %v5833
          %v5835 = vmul.f32 %v5833, %v5834
          %v5836 = vsub.f32 1.0, %v5835
          %v5837 = vmul.f32 %v5834, %v5836
          %v5838 = vadd.f32 %v5834, %v5837
          %vm5839 = vweird.f32 %v5833
          %vm5840 = vweird.f32 %v5834
          %vm5841 = vmor %vm5839, %vm5840
          %v5842 = vsel %vm5841, %v5834, %v5838
          %v5843 = vand.u32 2147483647, %v5833
          %vm5844 = vcmp.eq.f32.partialorder %v5843, 8.507059e+37
          %v5845 = vand.u32 %v5833, 2147483648
          %v5846 = vor.u32 1.1754944e-38, %v5845
          %v5847 = vsel %vm5844, %v5846, %v5842
          %v5848 = vmul.f32 1.0, %v5847
          %s5849 = scalar_lea.vmem [#allocation6], %s40
          %5850 = vst [vmem:[%s5849] sm:$0x1] %v5848
          %v5851 = vperm.slane %v5848, 0
          %v5852 = vmul.f32 %v5600, %v5851
          %v5853 = vmul.f32 %v5601, %v5851
          %v5854 = vmul.f32 %v5602, %v5851
          %v5855 = vmul.f32 %v5603, %v5851
          %v5856 = vmul.f32 %v5604, %v5851
          %v5857 = vmul.f32 %v5605, %v5851
          %v5858 = vmul.f32 %v5606, %v5851
          %v5859 = vmul.f32 %v5607, %v5851
          %v5860 = vmul.f32 %v5608, %v5851
          %v5861 = vmul.f32 %v5609, %v5851
          %v5862 = vmul.f32 %v5610, %v5851
          %v5863 = vmul.f32 %v5611, %v5851
          %v5864 = vmul.f32 %v5612, %v5851
          %v5865 = vmul.f32 %v5613, %v5851
          %v5866 = vmul.f32 %v5614, %v5851
          %v5867 = vmul.f32 %v5615, %v5851
          %v5868 = vmul.f32 %v5616, %v5851
          %v5869 = vmul.f32 %v5617, %v5851
          %v5870 = vmul.f32 %v5618, %v5851
          %v5871 = vmul.f32 %v5619, %v5851
          %v5872 = vmul.f32 %v5620, %v5851
          %v5873 = vmul.f32 %v5621, %v5851
          %v5874 = vmul.f32 %v5622, %v5851
          %v5875 = vmul.f32 %v5623, %v5851
          %v5876 = vmul.f32 %v5624, %v5851
          %v5877 = vmul.f32 %v5625, %v5851
          %v5878 = vmul.f32 %v5626, %v5851
          %v5879 = vmul.f32 %v5627, %v5851
          %v5880 = vmul.f32 %v5628, %v5851
          %v5881 = vmul.f32 %v5629, %v5851
          %v5882 = vmul.f32 %v5630, %v5851
          %v5883 = vmul.f32 %v5631, %v5851
          %v5884 = vpack.c.bf16 %v5853, %v5852
          %v5885 = vpack.c.bf16 %v5855, %v5854
          %v5886 = vpack.c.bf16 %v5857, %v5856
          %v5887 = vpack.c.bf16 %v5859, %v5858
          %v5888 = vpack.c.bf16 %v5861, %v5860
          %v5889 = vpack.c.bf16 %v5863, %v5862
          %v5890 = vpack.c.bf16 %v5865, %v5864
          %v5891 = vpack.c.bf16 %v5867, %v5866
          %v5892 = vpack.c.bf16 %v5869, %v5868
          %v5893 = vpack.c.bf16 %v5871, %v5870
          %v5894 = vpack.c.bf16 %v5873, %v5872
          %v5895 = vpack.c.bf16 %v5875, %v5874
          %v5896 = vpack.c.bf16 %v5877, %v5876
          %v5897 = vpack.c.bf16 %v5879, %v5878
          %v5898 = vpack.c.bf16 %v5881, %v5880
          %v5899 = vpack.c.bf16 %v5883, %v5882
          %v5900 = vld [vmem:[#allocation18] sm:$0xf]
          %v5901 = vld [vmem:[#allocation18 + $0x4] sm:$0xf]
          %v5902 = vld [vmem:[#allocation18 + $0x8] sm:$0xf]
          %v5903 = vld [vmem:[#allocation18 + $0xc] sm:$0xf]
          %v5904 = vld [vmem:[#allocation18 + $0x10] sm:$0xf]
          %v5905 = vld [vmem:[#allocation18 + $0x14] sm:$0xf]
          %v5906 = vld [vmem:[#allocation18 + $0x18] sm:$0xf]
          %v5907 = vld [vmem:[#allocation18 + $0x1c] sm:$0xf]
          %v5908 = vld [vmem:[#allocation18 + $0x20] sm:$0xf]
          %v5909 = vld [vmem:[#allocation18 + $0x24] sm:$0xf]
          %v5910 = vld [vmem:[#allocation18 + $0x28] sm:$0xf]
          %v5911 = vld [vmem:[#allocation18 + $0x2c] sm:$0xf]
          %v5912 = vld [vmem:[#allocation18 + $0x30] sm:$0xf]
          %v5913 = vld [vmem:[#allocation18 + $0x34] sm:$0xf]
          %v5914 = vld [vmem:[#allocation18 + $0x38] sm:$0xf]
          %v5915 = vld [vmem:[#allocation18 + $0x3c] sm:$0xf]
          %v5932 = vunpack.c.l.b16 %v5900
          %v5933 = vunpack.c.l.b16 %v5901
          %v5934 = vunpack.c.l.b16 %v5902
          %v5935 = vunpack.c.l.b16 %v5903
          %v5936 = vunpack.c.l.b16 %v5904
          %v5937 = vunpack.c.l.b16 %v5905
          %v5938 = vunpack.c.l.b16 %v5906
          %v5939 = vunpack.c.l.b16 %v5907
          %v5940 = vunpack.c.l.b16 %v5908
          %v5941 = vunpack.c.l.b16 %v5909
          %v5942 = vunpack.c.l.b16 %v5910
          %v5943 = vunpack.c.l.b16 %v5911
          %v5944 = vunpack.c.l.b16 %v5912
          %v5945 = vunpack.c.l.b16 %v5913
          %v5946 = vunpack.c.l.b16 %v5914
          %v5947 = vunpack.c.l.b16 %v5915
          %v5948 = vpack.c.b16 %v5933, %v5932
          %v5949 = vpack.c.b16 %v5935, %v5934
          %v5950 = vpack.c.b16 %v5937, %v5936
          %v5951 = vpack.c.b16 %v5939, %v5938
          %v5952 = vpack.c.b16 %v5941, %v5940
          %v5953 = vpack.c.b16 %v5943, %v5942
          %v5954 = vpack.c.b16 %v5945, %v5944
          %v5955 = vpack.c.b16 %v5947, %v5946
          %5964 = vmatpush.bf16.msra.mxu0 %v5955
          %5965 = vmatpush.bf16.msra.mxu0 %v5954
          %5966 = vmatpush.bf16.msra.mxu0 %v5953
          %5967 = vmatpush.bf16.msra.mxu0 %v5952
          %5968 = vmatpush.bf16.msra.mxu0 %v5951
          %5969 = vmatpush.bf16.msra.mxu0 %v5950
          %5970 = vmatpush.bf16.msra.mxu0 %v5949
          %5971 = vmatpush.bf16.msra.mxu0 %v5948
          %5972 = vmatmul.bf16.gmra.mxu0 %v5884
          %v5973 = vpop.f32.mrf.mxu0
          %v5974 = vadd.f32 0.0, %v5973
          %v5975 = vpop.f32.mrf.mxu0
          %v5976 = vadd.f32 0.0, %v5975
          %5977 = vmatmul.bf16.gmra.mxu0 %v5885
          %v5978 = vpop.f32.mrf.mxu0
          %v5979 = vadd.f32 0.0, %v5978
          %v5980 = vpop.f32.mrf.mxu0
          %v5981 = vadd.f32 0.0, %v5980
          %5982 = vmatmul.bf16.gmra.mxu0 %v5886
          %v5983 = vpop.f32.mrf.mxu0
          %v5984 = vadd.f32 0.0, %v5983
          %v5985 = vpop.f32.mrf.mxu0
          %v5986 = vadd.f32 0.0, %v5985
          %5987 = vmatmul.bf16.gmra.mxu0 %v5887
          %v5988 = vpop.f32.mrf.mxu0
          %v5989 = vadd.f32 0.0, %v5988
          %v5990 = vpop.f32.mrf.mxu0
          %v5991 = vadd.f32 0.0, %v5990
          %5992 = vmatmul.bf16.gmra.mxu0 %v5888
          %v5993 = vpop.f32.mrf.mxu0
          %v5994 = vadd.f32 0.0, %v5993
          %v5995 = vpop.f32.mrf.mxu0
          %v5996 = vadd.f32 0.0, %v5995
          %5997 = vmatmul.bf16.gmra.mxu0 %v5889
          %v5998 = vpop.f32.mrf.mxu0
          %v5999 = vadd.f32 0.0, %v5998
          %v6000 = vpop.f32.mrf.mxu0
          %v6001 = vadd.f32 0.0, %v6000
          %6002 = vmatmul.bf16.gmra.mxu0 %v5890
          %v6003 = vpop.f32.mrf.mxu0
          %v6004 = vadd.f32 0.0, %v6003
          %v6005 = vpop.f32.mrf.mxu0
          %v6006 = vadd.f32 0.0, %v6005
          %6007 = vmatmul.bf16.gmra.mxu0 %v5891
          %v6008 = vpop.f32.mrf.mxu0
          %v6009 = vadd.f32 0.0, %v6008
          %v6010 = vpop.f32.mrf.mxu0
          %v6011 = vadd.f32 0.0, %v6010
          %6012 = vmatmul.bf16.gmra.mxu0 %v5892
          %v6013 = vpop.f32.mrf.mxu0
          %v6014 = vadd.f32 0.0, %v6013
          %v6015 = vpop.f32.mrf.mxu0
          %v6016 = vadd.f32 0.0, %v6015
          %6017 = vmatmul.bf16.gmra.mxu0 %v5893
          %v6018 = vpop.f32.mrf.mxu0
          %v6019 = vadd.f32 0.0, %v6018
          %v6020 = vpop.f32.mrf.mxu0
          %v6021 = vadd.f32 0.0, %v6020
          %6022 = vmatmul.bf16.gmra.mxu0 %v5894
          %v6023 = vpop.f32.mrf.mxu0
          %v6024 = vadd.f32 0.0, %v6023
          %v6025 = vpop.f32.mrf.mxu0
          %v6026 = vadd.f32 0.0, %v6025
          %6027 = vmatmul.bf16.gmra.mxu0 %v5895
          %v6028 = vpop.f32.mrf.mxu0
          %v6029 = vadd.f32 0.0, %v6028
          %v6030 = vpop.f32.mrf.mxu0
          %v6031 = vadd.f32 0.0, %v6030
          %6032 = vmatmul.bf16.gmra.mxu0 %v5896
          %v6033 = vpop.f32.mrf.mxu0
          %v6034 = vadd.f32 0.0, %v6033
          %v6035 = vpop.f32.mrf.mxu0
          %v6036 = vadd.f32 0.0, %v6035
          %6037 = vmatmul.bf16.gmra.mxu0 %v5897
          %v6038 = vpop.f32.mrf.mxu0
          %v6039 = vadd.f32 0.0, %v6038
          %v6040 = vpop.f32.mrf.mxu0
          %v6041 = vadd.f32 0.0, %v6040
          %6042 = vmatmul.bf16.gmra.mxu0 %v5898
          %v6043 = vpop.f32.mrf.mxu0
          %v6044 = vadd.f32 0.0, %v6043
          %v6045 = vpop.f32.mrf.mxu0
          %v6046 = vadd.f32 0.0, %v6045
          %6047 = vmatmul.bf16.gmra.mxu0 %v5899
          %v6048 = vpop.f32.mrf.mxu0
          %v6049 = vadd.f32 0.0, %v6048
          %v6050 = vpop.f32.mrf.mxu0
          %v6051 = vadd.f32 0.0, %v6050
          %6052 = vdwg.mxu0
          %6053 = vmatpush.msra.mxu0 %v6011
          %6054 = vmatpush.msra.mxu0 %v6009
          %6055 = vmatpush.msra.mxu0 %v6006
          %6056 = vmatpush.msra.mxu0 %v6004
          %6057 = vmatpush.msra.mxu0 %v6001
          %6058 = vmatpush.msra.mxu0 %v5999
          %6059 = vmatpush.msra.mxu0 %v5996
          %6060 = vmatpush.msra.mxu0 %v5994
          %6061 = vmatpush.msra.mxu0 %v5991
          %6062 = vmatpush.msra.mxu0 %v5989
          %6063 = vmatpush.msra.mxu0 %v5986
          %6064 = vmatpush.msra.mxu0 %v5984
          %6065 = vmatpush.msra.mxu0 %v5981
          %6066 = vmatpush.msra.mxu0 %v5979
          %6067 = vmatpush.msra.mxu0 %v5976
          %6068 = vmatpush.msra.mxu0 %v5974
          %6069 = vmatmul.f32.gmra.mxu0 1.0
          %v6070 = vpop.f32.mrf.mxu0
          %v6071 = vadd.f32 0.0, %v6070
          %6072 = vdwg.mxu0
          %6073 = vmatpush.msra.mxu0 %v6051
          %6074 = vmatpush.msra.mxu0 %v6049
          %6075 = vmatpush.msra.mxu0 %v6046
          %6076 = vmatpush.msra.mxu0 %v6044
          %6077 = vmatpush.msra.mxu0 %v6041
          %6078 = vmatpush.msra.mxu0 %v6039
          %6079 = vmatpush.msra.mxu0 %v6036
          %6080 = vmatpush.msra.mxu0 %v6034
          %6081 = vmatpush.msra.mxu0 %v6031
          %6082 = vmatpush.msra.mxu0 %v6029
          %6083 = vmatpush.msra.mxu0 %v6026
          %6084 = vmatpush.msra.mxu0 %v6024
          %6085 = vmatpush.msra.mxu0 %v6021
          %6086 = vmatpush.msra.mxu0 %v6019
          %6087 = vmatpush.msra.mxu0 %v6016
          %6088 = vmatpush.msra.mxu0 %v6014
          %6089 = vmatmul.f32.gmra.mxu0 1.0
          %v6090 = vpop.f32.mrf.mxu0
          %v6091 = vadd.f32 %v6071, %v6090
          %6092 = vdwg.mxu0
          %v6093 = vmul.f32 %v5974, %v5974
          %v6094 = vmul.f32 %v5976, %v5976
          %v6095 = vmul.f32 %v5979, %v5979
          %v6096 = vmul.f32 %v5981, %v5981
          %v6097 = vmul.f32 %v5984, %v5984
          %v6098 = vmul.f32 %v5986, %v5986
          %v6099 = vmul.f32 %v5989, %v5989
          %v6100 = vmul.f32 %v5991, %v5991
          %v6101 = vmul.f32 %v5994, %v5994
          %v6102 = vmul.f32 %v5996, %v5996
          %v6103 = vmul.f32 %v5999, %v5999
          %v6104 = vmul.f32 %v6001, %v6001
          %v6105 = vmul.f32 %v6004, %v6004
          %v6106 = vmul.f32 %v6006, %v6006
          %v6107 = vmul.f32 %v6009, %v6009
          %v6108 = vmul.f32 %v6011, %v6011
          %v6109 = vmul.f32 %v6014, %v6014
          %v6110 = vmul.f32 %v6016, %v6016
          %v6111 = vmul.f32 %v6019, %v6019
          %v6112 = vmul.f32 %v6021, %v6021
          %v6113 = vmul.f32 %v6024, %v6024
          %v6114 = vmul.f32 %v6026, %v6026
          %v6115 = vmul.f32 %v6029, %v6029
          %v6116 = vmul.f32 %v6031, %v6031
          %v6117 = vmul.f32 %v6034, %v6034
          %v6118 = vmul.f32 %v6036, %v6036
          %v6119 = vmul.f32 %v6039, %v6039
          %v6120 = vmul.f32 %v6041, %v6041
          %v6121 = vmul.f32 %v6044, %v6044
          %v6122 = vmul.f32 %v6046, %v6046
          %v6123 = vmul.f32 %v6049, %v6049
          %v6124 = vmul.f32 %v6051, %v6051
          %6125 = vmatpush.msra.mxu0 %v6108
          %6126 = vmatpush.msra.mxu0 %v6107
          %6127 = vmatpush.msra.mxu0 %v6106
          %6128 = vmatpush.msra.mxu0 %v6105
          %6129 = vmatpush.msra.mxu0 %v6104
          %6130 = vmatpush.msra.mxu0 %v6103
          %6131 = vmatpush.msra.mxu0 %v6102
          %6132 = vmatpush.msra.mxu0 %v6101
          %6133 = vmatpush.msra.mxu0 %v6100
          %6134 = vmatpush.msra.mxu0 %v6099
          %6135 = vmatpush.msra.mxu0 %v6098
          %6136 = vmatpush.msra.mxu0 %v6097
          %6137 = vmatpush.msra.mxu0 %v6096
          %6138 = vmatpush.msra.mxu0 %v6095
          %6139 = vmatpush.msra.mxu0 %v6094
          %6140 = vmatpush.msra.mxu0 %v6093
          %6141 = vmatmul.f32.gmra.mxu0 1.0
          %v6142 = vpop.f32.mrf.mxu0
          %v6143 = vadd.f32 0.0, %v6142
          %6144 = vdwg.mxu0
          %6145 = vmatpush.msra.mxu0 %v6124
          %6146 = vmatpush.msra.mxu0 %v6123
          %6147 = vmatpush.msra.mxu0 %v6122
          %6148 = vmatpush.msra.mxu0 %v6121
          %6149 = vmatpush.msra.mxu0 %v6120
          %6150 = vmatpush.msra.mxu0 %v6119
          %6151 = vmatpush.msra.mxu0 %v6118
          %6152 = vmatpush.msra.mxu0 %v6117
          %6153 = vmatpush.msra.mxu0 %v6116
          %6154 = vmatpush.msra.mxu0 %v6115
          %6155 = vmatpush.msra.mxu0 %v6114
          %6156 = vmatpush.msra.mxu0 %v6113
          %6157 = vmatpush.msra.mxu0 %v6112
          %6158 = vmatpush.msra.mxu0 %v6111
          %6159 = vmatpush.msra.mxu0 %v6110
          %6160 = vmatpush.msra.mxu0 %v6109
          %6161 = vmatmul.f32.gmra.mxu0 1.0
          %v6162 = vpop.f32.mrf.mxu0
          %v6163 = vadd.f32 %v6143, %v6162
          %6164 = vdwg.mxu0
          %v6165 = vld [vmem:[#allocation5] sm:$0x1]
          %v6166 = vadd.f32 %v6165, %v6091
          %6167 = vst [vmem:[#allocation5] sm:$0x1] %v6166
          %v6168 = vld [vmem:[#allocation5 + $0x1] sm:$0x1]
          %v6169 = vadd.f32 %v6168, %v6163
          %6170 = vst [vmem:[#allocation5 + $0x1] sm:$0x1] %v6169
        $region116: #{tpu_custom_call.1} parent=71 // pred_fallthru
          _
        %p6171 = scmp.eq.s32.totalorder %s39, 3
        // Predicated region
        $region117: #{tpu_custom_call.1} parent=71 // pred_check
          %p6172 = pneg %p6171
        $region118: #{tpu_custom_call.1} parent=71 // pred_check_branch
          %6174 = sbr.rel (%p6172) target = $region120
        $region119: #{tpu_custom_call.1} parent=71 // pred_region
          %v6175 = vld [vmem:[%s523] sm:$0xf]
          %v6176 = vld [vmem:[%s523 + $0x4] sm:$0xf]
          %v6177 = vld [vmem:[%s523 + $0x8] sm:$0xf]
          %v6178 = vld [vmem:[%s523 + $0xc] sm:$0xf]
          %v6179 = vld [vmem:[%s523 + $0x10] sm:$0xf]
          %v6180 = vld [vmem:[%s523 + $0x14] sm:$0xf]
          %v6181 = vld [vmem:[%s523 + $0x18] sm:$0xf]
          %v6182 = vld [vmem:[%s523 + $0x1c] sm:$0xf]
          %v6183 = vld [vmem:[%s523 + $0x20] sm:$0xf]
          %v6184 = vld [vmem:[%s523 + $0x24] sm:$0xf]
          %v6185 = vld [vmem:[%s523 + $0x28] sm:$0xf]
          %v6186 = vld [vmem:[%s523 + $0x2c] sm:$0xf]
          %v6187 = vld [vmem:[%s523 + $0x30] sm:$0xf]
          %v6188 = vld [vmem:[%s523 + $0x34] sm:$0xf]
          %v6189 = vld [vmem:[%s523 + $0x38] sm:$0xf]
          %v6190 = vld [vmem:[%s523 + $0x3c] sm:$0xf]
          %v6191 = vld [vmem:[%s523 + $0x40] sm:$0xf]
          %v6192 = vld [vmem:[%s523 + $0x44] sm:$0xf]
          %v6193 = vld [vmem:[%s523 + $0x48] sm:$0xf]
          %v6194 = vld [vmem:[%s523 + $0x4c] sm:$0xf]
          %v6195 = vld [vmem:[%s523 + $0x50] sm:$0xf]
          %v6196 = vld [vmem:[%s523 + $0x54] sm:$0xf]
          %v6197 = vld [vmem:[%s523 + $0x58] sm:$0xf]
          %v6198 = vld [vmem:[%s523 + $0x5c] sm:$0xf]
          %v6199 = vld [vmem:[%s523 + $0x60] sm:$0xf]
          %v6200 = vld [vmem:[%s523 + $0x64] sm:$0xf]
          %v6201 = vld [vmem:[%s523 + $0x68] sm:$0xf]
          %v6202 = vld [vmem:[%s523 + $0x6c] sm:$0xf]
          %v6203 = vld [vmem:[%s523 + $0x70] sm:$0xf]
          %v6204 = vld [vmem:[%s523 + $0x74] sm:$0xf]
          %v6205 = vld [vmem:[%s523 + $0x78] sm:$0xf]
          %v6206 = vld [vmem:[%s523 + $0x7c] sm:$0xf]
          %v6207 = vld [vmem:[#allocation12] sm:$0xf]
          %v6208 = vld [vmem:[#allocation12 + $0x4] sm:$0xf]
          %v6209 = vld [vmem:[#allocation12 + $0x8] sm:$0xf]
          %v6210 = vld [vmem:[#allocation12 + $0xc] sm:$0xf]
          %v6211 = vld [vmem:[#allocation12 + $0x10] sm:$0xf]
          %v6212 = vld [vmem:[#allocation12 + $0x14] sm:$0xf]
          %v6213 = vld [vmem:[#allocation12 + $0x18] sm:$0xf]
          %v6214 = vld [vmem:[#allocation12 + $0x1c] sm:$0xf]
          %v6215 = vld [vmem:[#allocation12 + $0x20] sm:$0xf]
          %v6216 = vld [vmem:[#allocation12 + $0x24] sm:$0xf]
          %v6217 = vld [vmem:[#allocation12 + $0x28] sm:$0xf]
          %v6218 = vld [vmem:[#allocation12 + $0x2c] sm:$0xf]
          %v6219 = vld [vmem:[#allocation12 + $0x30] sm:$0xf]
          %v6220 = vld [vmem:[#allocation12 + $0x34] sm:$0xf]
          %v6221 = vld [vmem:[#allocation12 + $0x38] sm:$0xf]
          %v6222 = vld [vmem:[#allocation12 + $0x3c] sm:$0xf]
          %v6255 = vunpack.c.l.b16 %v6175
          %v6256 = vunpack.c.l.b16 %v6176
          %v6257 = vunpack.c.l.b16 %v6177
          %v6258 = vunpack.c.l.b16 %v6178
          %v6259 = vunpack.c.l.b16 %v6179
          %v6260 = vunpack.c.l.b16 %v6180
          %v6261 = vunpack.c.l.b16 %v6181
          %v6262 = vunpack.c.l.b16 %v6182
          %v6263 = vunpack.c.l.b16 %v6183
          %v6264 = vunpack.c.l.b16 %v6184
          %v6265 = vunpack.c.l.b16 %v6185
          %v6266 = vunpack.c.l.b16 %v6186
          %v6267 = vunpack.c.l.b16 %v6187
          %v6268 = vunpack.c.l.b16 %v6188
          %v6269 = vunpack.c.l.b16 %v6189
          %v6270 = vunpack.c.l.b16 %v6190
          %v6271 = vunpack.c.l.b16 %v6191
          %v6272 = vunpack.c.l.b16 %v6192
          %v6273 = vunpack.c.l.b16 %v6193
          %v6274 = vunpack.c.l.b16 %v6194
          %v6275 = vunpack.c.l.b16 %v6195
          %v6276 = vunpack.c.l.b16 %v6196
          %v6277 = vunpack.c.l.b16 %v6197
          %v6278 = vunpack.c.l.b16 %v6198
          %v6279 = vunpack.c.l.b16 %v6199
          %v6280 = vunpack.c.l.b16 %v6200
          %v6281 = vunpack.c.l.b16 %v6201
          %v6282 = vunpack.c.l.b16 %v6202
          %v6283 = vunpack.c.l.b16 %v6203
          %v6284 = vunpack.c.l.b16 %v6204
          %v6285 = vunpack.c.l.b16 %v6205
          %v6286 = vunpack.c.l.b16 %v6206
          %v6287 = vpack.c.b16 %v6256, %v6255
          %v6288 = vpack.c.b16 %v6258, %v6257
          %v6289 = vpack.c.b16 %v6260, %v6259
          %v6290 = vpack.c.b16 %v6262, %v6261
          %v6291 = vpack.c.b16 %v6264, %v6263
          %v6292 = vpack.c.b16 %v6266, %v6265
          %v6293 = vpack.c.b16 %v6268, %v6267
          %v6294 = vpack.c.b16 %v6270, %v6269
          %v6295 = vpack.c.b16 %v6272, %v6271
          %v6296 = vpack.c.b16 %v6274, %v6273
          %v6297 = vpack.c.b16 %v6276, %v6275
          %v6298 = vpack.c.b16 %v6278, %v6277
          %v6299 = vpack.c.b16 %v6280, %v6279
          %v6300 = vpack.c.b16 %v6282, %v6281
          %v6301 = vpack.c.b16 %v6284, %v6283
          %v6302 = vpack.c.b16 %v6286, %v6285
          %v6335 = vunpack.c.l.b16 %v6207
          %v6336 = vunpack.c.l.b16 %v6208
          %v6337 = vunpack.c.l.b16 %v6209
          %v6338 = vunpack.c.l.b16 %v6210
          %v6339 = vunpack.c.l.b16 %v6211
          %v6340 = vunpack.c.l.b16 %v6212
          %v6341 = vunpack.c.l.b16 %v6213
          %v6342 = vunpack.c.l.b16 %v6214
          %v6343 = vunpack.c.l.b16 %v6215
          %v6344 = vunpack.c.l.b16 %v6216
          %v6345 = vunpack.c.l.b16 %v6217
          %v6346 = vunpack.c.l.b16 %v6218
          %v6347 = vunpack.c.l.b16 %v6219
          %v6348 = vunpack.c.l.b16 %v6220
          %v6349 = vunpack.c.l.b16 %v6221
          %v6350 = vunpack.c.l.b16 %v6222
          %v6351 = vpack.c.b16 %v6336, %v6335
          %v6352 = vpack.c.b16 %v6338, %v6337
          %v6353 = vpack.c.b16 %v6340, %v6339
          %v6354 = vpack.c.b16 %v6342, %v6341
          %v6355 = vpack.c.b16 %v6344, %v6343
          %v6356 = vpack.c.b16 %v6346, %v6345
          %v6357 = vpack.c.b16 %v6348, %v6347
          %v6358 = vpack.c.b16 %v6350, %v6349
          %6367 = vmatpush.bf16.msra.mxu0 %v6358
          %6368 = vmatpush.bf16.msra.mxu0 %v6357
          %6369 = vmatpush.bf16.msra.mxu0 %v6356
          %6370 = vmatpush.bf16.msra.mxu0 %v6355
          %6371 = vmatpush.bf16.msra.mxu0 %v6354
          %6372 = vmatpush.bf16.msra.mxu0 %v6353
          %6373 = vmatpush.bf16.msra.mxu0 %v6352
          %6374 = vmatpush.bf16.msra.mxu0 %v6351
          %6375 = vmatmul.bf16.gmra.mxu0 %v6287
          %v6376 = vpop.f32.mrf.mxu0
          %v6377 = vadd.f32 0.0, %v6376
          %v6378 = vpop.f32.mrf.mxu0
          %v6379 = vadd.f32 0.0, %v6378
          %6380 = vmatmul.bf16.gmra.mxu0 %v6288
          %v6381 = vpop.f32.mrf.mxu0
          %v6382 = vadd.f32 0.0, %v6381
          %v6383 = vpop.f32.mrf.mxu0
          %v6384 = vadd.f32 0.0, %v6383
          %6385 = vmatmul.bf16.gmra.mxu0 %v6289
          %v6386 = vpop.f32.mrf.mxu0
          %v6387 = vadd.f32 0.0, %v6386
          %v6388 = vpop.f32.mrf.mxu0
          %v6389 = vadd.f32 0.0, %v6388
          %6390 = vmatmul.bf16.gmra.mxu0 %v6290
          %v6391 = vpop.f32.mrf.mxu0
          %v6392 = vadd.f32 0.0, %v6391
          %v6393 = vpop.f32.mrf.mxu0
          %v6394 = vadd.f32 0.0, %v6393
          %6395 = vmatmul.bf16.gmra.mxu0 %v6291
          %v6396 = vpop.f32.mrf.mxu0
          %v6397 = vadd.f32 0.0, %v6396
          %v6398 = vpop.f32.mrf.mxu0
          %v6399 = vadd.f32 0.0, %v6398
          %6400 = vmatmul.bf16.gmra.mxu0 %v6292
          %v6401 = vpop.f32.mrf.mxu0
          %v6402 = vadd.f32 0.0, %v6401
          %v6403 = vpop.f32.mrf.mxu0
          %v6404 = vadd.f32 0.0, %v6403
          %6405 = vmatmul.bf16.gmra.mxu0 %v6293
          %v6406 = vpop.f32.mrf.mxu0
          %v6407 = vadd.f32 0.0, %v6406
          %v6408 = vpop.f32.mrf.mxu0
          %v6409 = vadd.f32 0.0, %v6408
          %6410 = vmatmul.bf16.gmra.mxu0 %v6294
          %v6411 = vpop.f32.mrf.mxu0
          %v6412 = vadd.f32 0.0, %v6411
          %v6413 = vpop.f32.mrf.mxu0
          %v6414 = vadd.f32 0.0, %v6413
          %6415 = vmatmul.bf16.gmra.mxu0 %v6295
          %v6416 = vpop.f32.mrf.mxu0
          %v6417 = vadd.f32 0.0, %v6416
          %v6418 = vpop.f32.mrf.mxu0
          %v6419 = vadd.f32 0.0, %v6418
          %6420 = vmatmul.bf16.gmra.mxu0 %v6296
          %v6421 = vpop.f32.mrf.mxu0
          %v6422 = vadd.f32 0.0, %v6421
          %v6423 = vpop.f32.mrf.mxu0
          %v6424 = vadd.f32 0.0, %v6423
          %6425 = vmatmul.bf16.gmra.mxu0 %v6297
          %v6426 = vpop.f32.mrf.mxu0
          %v6427 = vadd.f32 0.0, %v6426
          %v6428 = vpop.f32.mrf.mxu0
          %v6429 = vadd.f32 0.0, %v6428
          %6430 = vmatmul.bf16.gmra.mxu0 %v6298
          %v6431 = vpop.f32.mrf.mxu0
          %v6432 = vadd.f32 0.0, %v6431
          %v6433 = vpop.f32.mrf.mxu0
          %v6434 = vadd.f32 0.0, %v6433
          %6435 = vmatmul.bf16.gmra.mxu0 %v6299
          %v6436 = vpop.f32.mrf.mxu0
          %v6437 = vadd.f32 0.0, %v6436
          %v6438 = vpop.f32.mrf.mxu0
          %v6439 = vadd.f32 0.0, %v6438
          %6440 = vmatmul.bf16.gmra.mxu0 %v6300
          %v6441 = vpop.f32.mrf.mxu0
          %v6442 = vadd.f32 0.0, %v6441
          %v6443 = vpop.f32.mrf.mxu0
          %v6444 = vadd.f32 0.0, %v6443
          %6445 = vmatmul.bf16.gmra.mxu0 %v6301
          %v6446 = vpop.f32.mrf.mxu0
          %v6447 = vadd.f32 0.0, %v6446
          %v6448 = vpop.f32.mrf.mxu0
          %v6449 = vadd.f32 0.0, %v6448
          %6450 = vmatmul.bf16.gmra.mxu0 %v6302
          %v6451 = vpop.f32.mrf.mxu0
          %v6452 = vadd.f32 0.0, %v6451
          %v6453 = vpop.f32.mrf.mxu0
          %v6454 = vadd.f32 0.0, %v6453
          %6455 = vdwg.mxu0
          %v6456 = vld [vmem:[#allocation3] sm:$0x1]
          %v6457 = vld [vmem:[#allocation3 + $0x1] sm:$0x1]
          %v6458 = vmul.f32 %v6456, 0.001953125
          %v6459 = vmul.f32 %v6457, 0.001953125
          %v6460 = vmul.f32 %v6458, %v6458
          %v6461 = vsub.f32 %v6459, %v6460
          %v6462 = vld [vmem:[%s3] sm:$0x1]
          %v6463 = vadd.f32 %v6461, 1e-05
          %v6464 = vrsqrt.pop %v6463
          %v6465 = vmul.f32 %v6464, %v6463
          %v6466 = vmul.f32 %v6465, %v6464
          %v6467 = vmul.f32 0.5, %v6466
          %v6468 = vsub.f32 1.5, %v6467
          %v6469 = vmul.f32 %v6464, %v6468
          %vm6470 = vweird.f32 %v6463
          %vm6471 = vweird.f32 %v6464
          %vm6472 = vmor %vm6470, %vm6471
          %v6473 = vsel %vm6472, %v6464, %v6469
          %v6474 = vmul.f32 %v6462, %v6473
          %v6475 = vld [vmem:[%s4] sm:$0x1]
          %v6476 = vmul.f32 %v6458, %v6474
          %v6477 = vsub.f32 %v6475, %v6476
          %v6479 = vperm.slane %v6474, 0
          %v6481 = vmul.f32 %v6377, %v6479
          %v6482 = vmul.f32 %v6379, %v6479
          %v6483 = vmul.f32 %v6382, %v6479
          %v6484 = vmul.f32 %v6384, %v6479
          %v6485 = vmul.f32 %v6387, %v6479
          %v6486 = vmul.f32 %v6389, %v6479
          %v6487 = vmul.f32 %v6392, %v6479
          %v6488 = vmul.f32 %v6394, %v6479
          %v6489 = vmul.f32 %v6397, %v6479
          %v6490 = vmul.f32 %v6399, %v6479
          %v6491 = vmul.f32 %v6402, %v6479
          %v6492 = vmul.f32 %v6404, %v6479
          %v6493 = vmul.f32 %v6407, %v6479
          %v6494 = vmul.f32 %v6409, %v6479
          %v6495 = vmul.f32 %v6412, %v6479
          %v6496 = vmul.f32 %v6414, %v6479
          %v6497 = vmul.f32 %v6417, %v6479
          %v6498 = vmul.f32 %v6419, %v6479
          %v6499 = vmul.f32 %v6422, %v6479
          %v6500 = vmul.f32 %v6424, %v6479
          %v6501 = vmul.f32 %v6427, %v6479
          %v6502 = vmul.f32 %v6429, %v6479
          %v6503 = vmul.f32 %v6432, %v6479
          %v6504 = vmul.f32 %v6434, %v6479
          %v6505 = vmul.f32 %v6437, %v6479
          %v6506 = vmul.f32 %v6439, %v6479
          %v6507 = vmul.f32 %v6442, %v6479
          %v6508 = vmul.f32 %v6444, %v6479
          %v6509 = vmul.f32 %v6447, %v6479
          %v6510 = vmul.f32 %v6449, %v6479
          %v6511 = vmul.f32 %v6452, %v6479
          %v6512 = vmul.f32 %v6454, %v6479
          %v6514 = vperm.slane %v6477, 0
          %v6516 = vadd.f32 %v6481, %v6514
          %v6517 = vadd.f32 %v6482, %v6514
          %v6518 = vadd.f32 %v6483, %v6514
          %v6519 = vadd.f32 %v6484, %v6514
          %v6520 = vadd.f32 %v6485, %v6514
          %v6521 = vadd.f32 %v6486, %v6514
          %v6522 = vadd.f32 %v6487, %v6514
          %v6523 = vadd.f32 %v6488, %v6514
          %v6524 = vadd.f32 %v6489, %v6514
          %v6525 = vadd.f32 %v6490, %v6514
          %v6526 = vadd.f32 %v6491, %v6514
          %v6527 = vadd.f32 %v6492, %v6514
          %v6528 = vadd.f32 %v6493, %v6514
          %v6529 = vadd.f32 %v6494, %v6514
          %v6530 = vadd.f32 %v6495, %v6514
          %v6531 = vadd.f32 %v6496, %v6514
          %v6532 = vadd.f32 %v6497, %v6514
          %v6533 = vadd.f32 %v6498, %v6514
          %v6534 = vadd.f32 %v6499, %v6514
          %v6535 = vadd.f32 %v6500, %v6514
          %v6536 = vadd.f32 %v6501, %v6514
          %v6537 = vadd.f32 %v6502, %v6514
          %v6538 = vadd.f32 %v6503, %v6514
          %v6539 = vadd.f32 %v6504, %v6514
          %v6540 = vadd.f32 %v6505, %v6514
          %v6541 = vadd.f32 %v6506, %v6514
          %v6542 = vadd.f32 %v6507, %v6514
          %v6543 = vadd.f32 %v6508, %v6514
          %v6544 = vadd.f32 %v6509, %v6514
          %v6545 = vadd.f32 %v6510, %v6514
          %v6546 = vadd.f32 %v6511, %v6514
          %v6547 = vadd.f32 %v6512, %v6514
          %v6548 = vmax.f32 %v6516, 0.0
          %v6549 = vmax.f32 %v6517, 0.0
          %v6550 = vmax.f32 %v6518, 0.0
          %v6551 = vmax.f32 %v6519, 0.0
          %v6552 = vmax.f32 %v6520, 0.0
          %v6553 = vmax.f32 %v6521, 0.0
          %v6554 = vmax.f32 %v6522, 0.0
          %v6555 = vmax.f32 %v6523, 0.0
          %v6556 = vmax.f32 %v6524, 0.0
          %v6557 = vmax.f32 %v6525, 0.0
          %v6558 = vmax.f32 %v6526, 0.0
          %v6559 = vmax.f32 %v6527, 0.0
          %v6560 = vmax.f32 %v6528, 0.0
          %v6561 = vmax.f32 %v6529, 0.0
          %v6562 = vmax.f32 %v6530, 0.0
          %v6563 = vmax.f32 %v6531, 0.0
          %v6564 = vmax.f32 %v6532, 0.0
          %v6565 = vmax.f32 %v6533, 0.0
          %v6566 = vmax.f32 %v6534, 0.0
          %v6567 = vmax.f32 %v6535, 0.0
          %v6568 = vmax.f32 %v6536, 0.0
          %v6569 = vmax.f32 %v6537, 0.0
          %v6570 = vmax.f32 %v6538, 0.0
          %v6571 = vmax.f32 %v6539, 0.0
          %v6572 = vmax.f32 %v6540, 0.0
          %v6573 = vmax.f32 %v6541, 0.0
          %v6574 = vmax.f32 %v6542, 0.0
          %v6575 = vmax.f32 %v6543, 0.0
          %v6576 = vmax.f32 %v6544, 0.0
          %v6577 = vmax.f32 %v6545, 0.0
          %v6578 = vmax.f32 %v6546, 0.0
          %v6579 = vmax.f32 %v6547, 0.0
          %v6580 = vmin.f32 %v6548, 6.0
          %v6581 = vmin.f32 %v6549, 6.0
          %v6582 = vmin.f32 %v6550, 6.0
          %v6583 = vmin.f32 %v6551, 6.0
          %v6584 = vmin.f32 %v6552, 6.0
          %v6585 = vmin.f32 %v6553, 6.0
          %v6586 = vmin.f32 %v6554, 6.0
          %v6587 = vmin.f32 %v6555, 6.0
          %v6588 = vmin.f32 %v6556, 6.0
          %v6589 = vmin.f32 %v6557, 6.0
          %v6590 = vmin.f32 %v6558, 6.0
          %v6591 = vmin.f32 %v6559, 6.0
          %v6592 = vmin.f32 %v6560, 6.0
          %v6593 = vmin.f32 %v6561, 6.0
          %v6594 = vmin.f32 %v6562, 6.0
          %v6595 = vmin.f32 %v6563, 6.0
          %v6596 = vmin.f32 %v6564, 6.0
          %v6597 = vmin.f32 %v6565, 6.0
          %v6598 = vmin.f32 %v6566, 6.0
          %v6599 = vmin.f32 %v6567, 6.0
          %v6600 = vmin.f32 %v6568, 6.0
          %v6601 = vmin.f32 %v6569, 6.0
          %v6602 = vmin.f32 %v6570, 6.0
          %v6603 = vmin.f32 %v6571, 6.0
          %v6604 = vmin.f32 %v6572, 6.0
          %v6605 = vmin.f32 %v6573, 6.0
          %v6606 = vmin.f32 %v6574, 6.0
          %v6607 = vmin.f32 %v6575, 6.0
          %v6608 = vmin.f32 %v6576, 6.0
          %v6609 = vmin.f32 %v6577, 6.0
          %v6610 = vmin.f32 %v6578, 6.0
          %v6611 = vmin.f32 %v6579, 6.0
          %v6612 = vld [vmem:[#allocation13] sm:$0xff]
          %v6613 = vld [vmem:[#allocation13 + $0x8] sm:$0x1]
          %s6614 = scalar_lea.vmem [#allocation2], 24
          %6615 = vst [vmem:[%s6614 + $0x1] sm:$0xff] %v6580
          %6616 = vst [vmem:[%s6614 + $0x9] sm:$0xff] %v6581
          %6617 = vst [vmem:[%s6614 + $0x19] sm:$0xff] %v6582
          %6618 = vst [vmem:[%s6614 + $0x21] sm:$0xff] %v6583
          %6619 = vst [vmem:[%s6614 + $0x31] sm:$0xff] %v6584
          %6620 = vst [vmem:[%s6614 + $0x39] sm:$0xff] %v6585
          %6621 = vst [vmem:[%s6614 + $0x49] sm:$0xff] %v6586
          %6622 = vst [vmem:[%s6614 + $0x51] sm:$0xff] %v6587
          %6623 = vst [vmem:[%s6614 + $0x61] sm:$0xff] %v6588
          %6624 = vst [vmem:[%s6614 + $0x69] sm:$0xff] %v6589
          %6625 = vst [vmem:[%s6614 + $0x79] sm:$0xff] %v6590
          %6626 = vst [vmem:[%s6614 + $0x81] sm:$0xff] %v6591
          %6627 = vst [vmem:[%s6614 + $0x91] sm:$0xff] %v6592
          %6628 = vst [vmem:[%s6614 + $0x99] sm:$0xff] %v6593
          %6629 = vst [vmem:[%s6614 + $0xa9] sm:$0xff] %v6594
          %6630 = vst [vmem:[%s6614 + $0xb1] sm:$0xff] %v6595
          %6631 = vst [vmem:[%s6614 + $0xc1] sm:$0xff] %v6596
          %6632 = vst [vmem:[%s6614 + $0xc9] sm:$0xff] %v6597
          %6633 = vst [vmem:[%s6614 + $0xd9] sm:$0xff] %v6598
          %6634 = vst [vmem:[%s6614 + $0xe1] sm:$0xff] %v6599
          %6635 = vst [vmem:[%s6614 + $0xf1] sm:$0xff] %v6600
          %6636 = vst [vmem:[%s6614 + $0xf9] sm:$0xff] %v6601
          %6637 = vst [vmem:[%s6614 + $0x109] sm:$0xff] %v6602
          %6638 = vst [vmem:[%s6614 + $0x111] sm:$0xff] %v6603
          %6639 = vst [vmem:[%s6614 + $0x121] sm:$0xff] %v6604
          %6640 = vst [vmem:[%s6614 + $0x129] sm:$0xff] %v6605
          %6641 = vst [vmem:[%s6614 + $0x139] sm:$0xff] %v6606
          %6642 = vst [vmem:[%s6614 + $0x141] sm:$0xff] %v6607
          %6643 = vst [vmem:[%s6614 + $0x151] sm:$0xff] %v6608
          %6644 = vst [vmem:[%s6614 + $0x159] sm:$0xff] %v6609
          %6645 = vst [vmem:[%s6614 + $0x169] sm:$0xff] %v6610
          %6646 = vst [vmem:[%s6614 + $0x171] sm:$0xff] %v6611
          %v6647 = vld [vmem:[#allocation2] sm:$0xff]
          %v6648 = vld [vmem:[#allocation2 + $0x8] sm:$0xff]
          %v6649 = vld [vmem:[#allocation2 + $0x10] sm:$0x3]
          %v6650 = vld [vmem:[#allocation2 + $0x18] sm:$0xff]
          %v6651 = vld [vmem:[#allocation2 + $0x20] sm:$0xff]
          %v6652 = vld [vmem:[#allocation2 + $0x28] sm:$0x3]
          %v6653 = vld [vmem:[#allocation2 + $0x30] sm:$0xff]
          %v6654 = vld [vmem:[#allocation2 + $0x38] sm:$0xff]
          %v6655 = vld [vmem:[#allocation2 + $0x40] sm:$0x3]
          %v6656 = vld [vmem:[#allocation2 + $0x48] sm:$0xff]
          %v6657 = vld [vmem:[#allocation2 + $0x50] sm:$0xff]
          %v6658 = vld [vmem:[#allocation2 + $0x58] sm:$0x3]
          %v6659 = vld [vmem:[#allocation2 + $0x60] sm:$0xff]
          %v6660 = vld [vmem:[#allocation2 + $0x68] sm:$0xff]
          %v6661 = vld [vmem:[#allocation2 + $0x70] sm:$0x3]
          %v6662 = vld [vmem:[#allocation2 + $0x78] sm:$0xff]
          %v6663 = vld [vmem:[#allocation2 + $0x80] sm:$0xff]
          %v6664 = vld [vmem:[#allocation2 + $0x88] sm:$0x3]
          %v6665 = vld [vmem:[#allocation2 + $0x90] sm:$0xff]
          %v6666 = vld [vmem:[#allocation2 + $0x98] sm:$0xff]
          %v6667 = vld [vmem:[#allocation2 + $0xa0] sm:$0x3]
          %v6668 = vld [vmem:[#allocation2 + $0xa8] sm:$0xff]
          %v6669 = vld [vmem:[#allocation2 + $0xb0] sm:$0xff]
          %v6670 = vld [vmem:[#allocation2 + $0xb8] sm:$0x3]
          %v6671 = vld [vmem:[#allocation2 + $0xc0] sm:$0xff]
          %v6672 = vld [vmem:[#allocation2 + $0xc8] sm:$0xff]
          %v6673 = vld [vmem:[#allocation2 + $0xd0] sm:$0x3]
          %v6674 = vld [vmem:[#allocation2 + $0xd8] sm:$0xff]
          %v6675 = vld [vmem:[#allocation2 + $0xe0] sm:$0xff]
          %v6676 = vld [vmem:[#allocation2 + $0xe8] sm:$0x3]
          %v6677 = vld [vmem:[#allocation2 + $0xf0] sm:$0xff]
          %v6678 = vld [vmem:[#allocation2 + $0xf8] sm:$0xff]
          %v6679 = vld [vmem:[#allocation2 + $0x100] sm:$0x3]
          %v6680 = vld [vmem:[#allocation2 + $0x108] sm:$0xff]
          %v6681 = vld [vmem:[#allocation2 + $0x110] sm:$0xff]
          %v6682 = vld [vmem:[#allocation2 + $0x118] sm:$0x3]
          %v6683 = vld [vmem:[#allocation2 + $0x120] sm:$0xff]
          %v6684 = vld [vmem:[#allocation2 + $0x128] sm:$0xff]
          %v6685 = vld [vmem:[#allocation2 + $0x130] sm:$0x3]
          %v6686 = vld [vmem:[#allocation2 + $0x138] sm:$0xff]
          %v6687 = vld [vmem:[#allocation2 + $0x140] sm:$0xff]
          %v6688 = vld [vmem:[#allocation2 + $0x148] sm:$0x3]
          %v6689 = vld [vmem:[#allocation2 + $0x150] sm:$0xff]
          %v6690 = vld [vmem:[#allocation2 + $0x158] sm:$0xff]
          %v6691 = vld [vmem:[#allocation2 + $0x160] sm:$0x3]
          %v6692 = vld [vmem:[#allocation2 + $0x168] sm:$0xff]
          %v6693 = vld [vmem:[#allocation2 + $0x170] sm:$0xff]
          %v6694 = vld [vmem:[#allocation2 + $0x178] sm:$0x3]
          %v6695 = vld [vmem:[#allocation2 + $0x180] sm:$0xff]
          %v6696 = vld [vmem:[#allocation2 + $0x188] sm:$0xff]
          %v6697 = vld [vmem:[#allocation2 + $0x190] sm:$0x3]
          %v6698 = vld [vmem:[#allocation2 + $0x198] sm:$0xff]
          %v6699 = vld [vmem:[#allocation2 + $0x1a0] sm:$0xff]
          %v6700 = vld [vmem:[#allocation2 + $0x1a8] sm:$0x3]
          %v6701 = vperm.slane %v6612, 0
          %v6702 = vmul.f32 %v6647, %v6701
          %v6703 = vmul.f32 %v6648, %v6701
          %v6704 = vmul.f32 %v6650, %v6701
          %v6705 = vmul.f32 %v6651, %v6701
          %v6706 = vmul.f32 %v6653, %v6701
          %v6707 = vmul.f32 %v6654, %v6701
          %v6708 = vmul.f32 %v6656, %v6701
          %v6709 = vmul.f32 %v6657, %v6701
          %v6710 = vmul.f32 %v6659, %v6701
          %v6711 = vmul.f32 %v6660, %v6701
          %v6712 = vmul.f32 %v6662, %v6701
          %v6713 = vmul.f32 %v6663, %v6701
          %v6714 = vmul.f32 %v6665, %v6701
          %v6715 = vmul.f32 %v6666, %v6701
          %v6716 = vmul.f32 %v6668, %v6701
          %v6717 = vmul.f32 %v6669, %v6701
          %v6718 = vmul.f32 %v6671, %v6701
          %v6719 = vmul.f32 %v6672, %v6701
          %v6720 = vmul.f32 %v6674, %v6701
          %v6721 = vmul.f32 %v6675, %v6701
          %v6722 = vmul.f32 %v6677, %v6701
          %v6723 = vmul.f32 %v6678, %v6701
          %v6724 = vmul.f32 %v6680, %v6701
          %v6725 = vmul.f32 %v6681, %v6701
          %v6726 = vmul.f32 %v6683, %v6701
          %v6727 = vmul.f32 %v6684, %v6701
          %v6728 = vmul.f32 %v6686, %v6701
          %v6729 = vmul.f32 %v6687, %v6701
          %v6730 = vmul.f32 %v6689, %v6701
          %v6731 = vmul.f32 %v6690, %v6701
          %v6732 = vmul.f32 %v6692, %v6701
          %v6733 = vmul.f32 %v6693, %v6701
          %v6734 = vperm.slane %v6612, 1
          %v6735 = vmul.f32 %v6647, %v6734
          %v6736 = vmul.f32 %v6648, %v6734
          %v6737 = vmul.f32 %v6649, %v6734
          %v6738 = vmul.f32 %v6650, %v6734
          %v6739 = vmul.f32 %v6651, %v6734
          %v6740 = vmul.f32 %v6652, %v6734
          %v6741 = vmul.f32 %v6653, %v6734
          %v6742 = vmul.f32 %v6654, %v6734
          %v6743 = vmul.f32 %v6655, %v6734
          %v6744 = vmul.f32 %v6656, %v6734
          %v6745 = vmul.f32 %v6657, %v6734
          %v6746 = vmul.f32 %v6658, %v6734
          %v6747 = vmul.f32 %v6659, %v6734
          %v6748 = vmul.f32 %v6660, %v6734
          %v6749 = vmul.f32 %v6661, %v6734
          %v6750 = vmul.f32 %v6662, %v6734
          %v6751 = vmul.f32 %v6663, %v6734
          %v6752 = vmul.f32 %v6664, %v6734
          %v6753 = vmul.f32 %v6665, %v6734
          %v6754 = vmul.f32 %v6666, %v6734
          %v6755 = vmul.f32 %v6667, %v6734
          %v6756 = vmul.f32 %v6668, %v6734
          %v6757 = vmul.f32 %v6669, %v6734
          %v6758 = vmul.f32 %v6670, %v6734
          %v6759 = vmul.f32 %v6671, %v6734
          %v6760 = vmul.f32 %v6672, %v6734
          %v6761 = vmul.f32 %v6673, %v6734
          %v6762 = vmul.f32 %v6674, %v6734
          %v6763 = vmul.f32 %v6675, %v6734
          %v6764 = vmul.f32 %v6676, %v6734
          %v6765 = vmul.f32 %v6677, %v6734
          %v6766 = vmul.f32 %v6678, %v6734
          %v6767 = vmul.f32 %v6679, %v6734
          %v6768 = vmul.f32 %v6680, %v6734
          %v6769 = vmul.f32 %v6681, %v6734
          %v6770 = vmul.f32 %v6682, %v6734
          %v6771 = vmul.f32 %v6683, %v6734
          %v6772 = vmul.f32 %v6684, %v6734
          %v6773 = vmul.f32 %v6685, %v6734
          %v6774 = vmul.f32 %v6686, %v6734
          %v6775 = vmul.f32 %v6687, %v6734
          %v6776 = vmul.f32 %v6688, %v6734
          %v6777 = vmul.f32 %v6689, %v6734
          %v6778 = vmul.f32 %v6690, %v6734
          %v6779 = vmul.f32 %v6691, %v6734
          %v6780 = vmul.f32 %v6692, %v6734
          %v6781 = vmul.f32 %v6693, %v6734
          %v6782 = vmul.f32 %v6694, %v6734
          %vm6831 = vcmask 1046528
          %v6832 = vrot.slane %v6735, 1
          %v6833 = vrot.slane %v6736, 1
          %v6834 = vsel %vm6831, %v6832, %v6833
          %v6835 = vrot.slane %v6737, 1
          %v6836 = vsel %vm6831, %v6833, %v6835
          %v6837 = vrot.slane %v6738, 1
          %v6838 = vrot.slane %v6739, 1
          %v6839 = vsel %vm6831, %v6837, %v6838
          %v6840 = vrot.slane %v6740, 1
          %v6841 = vsel %vm6831, %v6838, %v6840
          %v6842 = vrot.slane %v6741, 1
          %v6843 = vrot.slane %v6742, 1
          %v6844 = vsel %vm6831, %v6842, %v6843
          %v6845 = vrot.slane %v6743, 1
          %v6846 = vsel %vm6831, %v6843, %v6845
          %v6847 = vrot.slane %v6744, 1
          %v6848 = vrot.slane %v6745, 1
          %v6849 = vsel %vm6831, %v6847, %v6848
          %v6850 = vrot.slane %v6746, 1
          %v6851 = vsel %vm6831, %v6848, %v6850
          %v6852 = vrot.slane %v6747, 1
          %v6853 = vrot.slane %v6748, 1
          %v6854 = vsel %vm6831, %v6852, %v6853
          %v6855 = vrot.slane %v6749, 1
          %v6856 = vsel %vm6831, %v6853, %v6855
          %v6857 = vrot.slane %v6750, 1
          %v6858 = vrot.slane %v6751, 1
          %v6859 = vsel %vm6831, %v6857, %v6858
          %v6860 = vrot.slane %v6752, 1
          %v6861 = vsel %vm6831, %v6858, %v6860
          %v6862 = vrot.slane %v6753, 1
          %v6863 = vrot.slane %v6754, 1
          %v6864 = vsel %vm6831, %v6862, %v6863
          %v6865 = vrot.slane %v6755, 1
          %v6866 = vsel %vm6831, %v6863, %v6865
          %v6867 = vrot.slane %v6756, 1
          %v6868 = vrot.slane %v6757, 1
          %v6869 = vsel %vm6831, %v6867, %v6868
          %v6870 = vrot.slane %v6758, 1
          %v6871 = vsel %vm6831, %v6868, %v6870
          %v6872 = vrot.slane %v6759, 1
          %v6873 = vrot.slane %v6760, 1
          %v6874 = vsel %vm6831, %v6872, %v6873
          %v6875 = vrot.slane %v6761, 1
          %v6876 = vsel %vm6831, %v6873, %v6875
          %v6877 = vrot.slane %v6762, 1
          %v6878 = vrot.slane %v6763, 1
          %v6879 = vsel %vm6831, %v6877, %v6878
          %v6880 = vrot.slane %v6764, 1
          %v6881 = vsel %vm6831, %v6878, %v6880
          %v6882 = vrot.slane %v6765, 1
          %v6883 = vrot.slane %v6766, 1
          %v6884 = vsel %vm6831, %v6882, %v6883
          %v6885 = vrot.slane %v6767, 1
          %v6886 = vsel %vm6831, %v6883, %v6885
          %v6887 = vrot.slane %v6768, 1
          %v6888 = vrot.slane %v6769, 1
          %v6889 = vsel %vm6831, %v6887, %v6888
          %v6890 = vrot.slane %v6770, 1
          %v6891 = vsel %vm6831, %v6888, %v6890
          %v6892 = vrot.slane %v6771, 1
          %v6893 = vrot.slane %v6772, 1
          %v6894 = vsel %vm6831, %v6892, %v6893
          %v6895 = vrot.slane %v6773, 1
          %v6896 = vsel %vm6831, %v6893, %v6895
          %v6897 = vrot.slane %v6774, 1
          %v6898 = vrot.slane %v6775, 1
          %v6899 = vsel %vm6831, %v6897, %v6898
          %v6900 = vrot.slane %v6776, 1
          %v6901 = vsel %vm6831, %v6898, %v6900
          %v6902 = vrot.slane %v6777, 1
          %v6903 = vrot.slane %v6778, 1
          %v6904 = vsel %vm6831, %v6902, %v6903
          %v6905 = vrot.slane %v6779, 1
          %v6906 = vsel %vm6831, %v6903, %v6905
          %v6907 = vrot.slane %v6780, 1
          %v6908 = vrot.slane %v6781, 1
          %v6909 = vsel %vm6831, %v6907, %v6908
          %v6910 = vrot.slane %v6782, 1
          %v6911 = vsel %vm6831, %v6908, %v6910
          %v6944 = vadd.f32 %v6702, %v6834
          %v6945 = vadd.f32 %v6703, %v6836
          %v6946 = vadd.f32 %v6704, %v6839
          %v6947 = vadd.f32 %v6705, %v6841
          %v6948 = vadd.f32 %v6706, %v6844
          %v6949 = vadd.f32 %v6707, %v6846
          %v6950 = vadd.f32 %v6708, %v6849
          %v6951 = vadd.f32 %v6709, %v6851
          %v6952 = vadd.f32 %v6710, %v6854
          %v6953 = vadd.f32 %v6711, %v6856
          %v6954 = vadd.f32 %v6712, %v6859
          %v6955 = vadd.f32 %v6713, %v6861
          %v6956 = vadd.f32 %v6714, %v6864
          %v6957 = vadd.f32 %v6715, %v6866
          %v6958 = vadd.f32 %v6716, %v6869
          %v6959 = vadd.f32 %v6717, %v6871
          %v6960 = vadd.f32 %v6718, %v6874
          %v6961 = vadd.f32 %v6719, %v6876
          %v6962 = vadd.f32 %v6720, %v6879
          %v6963 = vadd.f32 %v6721, %v6881
          %v6964 = vadd.f32 %v6722, %v6884
          %v6965 = vadd.f32 %v6723, %v6886
          %v6966 = vadd.f32 %v6724, %v6889
          %v6967 = vadd.f32 %v6725, %v6891
          %v6968 = vadd.f32 %v6726, %v6894
          %v6969 = vadd.f32 %v6727, %v6896
          %v6970 = vadd.f32 %v6728, %v6899
          %v6971 = vadd.f32 %v6729, %v6901
          %v6972 = vadd.f32 %v6730, %v6904
          %v6973 = vadd.f32 %v6731, %v6906
          %v6974 = vadd.f32 %v6732, %v6909
          %v6975 = vadd.f32 %v6733, %v6911
          %v6976 = vperm.slane %v6612, 2
          %v6977 = vmul.f32 %v6647, %v6976
          %v6978 = vmul.f32 %v6648, %v6976
          %v6979 = vmul.f32 %v6649, %v6976
          %v6980 = vmul.f32 %v6650, %v6976
          %v6981 = vmul.f32 %v6651, %v6976
          %v6982 = vmul.f32 %v6652, %v6976
          %v6983 = vmul.f32 %v6653, %v6976
          %v6984 = vmul.f32 %v6654, %v6976
          %v6985 = vmul.f32 %v6655, %v6976
          %v6986 = vmul.f32 %v6656, %v6976
          %v6987 = vmul.f32 %v6657, %v6976
          %v6988 = vmul.f32 %v6658, %v6976
          %v6989 = vmul.f32 %v6659, %v6976
          %v6990 = vmul.f32 %v6660, %v6976
          %v6991 = vmul.f32 %v6661, %v6976
          %v6992 = vmul.f32 %v6662, %v6976
          %v6993 = vmul.f32 %v6663, %v6976
          %v6994 = vmul.f32 %v6664, %v6976
          %v6995 = vmul.f32 %v6665, %v6976
          %v6996 = vmul.f32 %v6666, %v6976
          %v6997 = vmul.f32 %v6667, %v6976
          %v6998 = vmul.f32 %v6668, %v6976
          %v6999 = vmul.f32 %v6669, %v6976
          %v7000 = vmul.f32 %v6670, %v6976
          %v7001 = vmul.f32 %v6671, %v6976
          %v7002 = vmul.f32 %v6672, %v6976
          %v7003 = vmul.f32 %v6673, %v6976
          %v7004 = vmul.f32 %v6674, %v6976
          %v7005 = vmul.f32 %v6675, %v6976
          %v7006 = vmul.f32 %v6676, %v6976
          %v7007 = vmul.f32 %v6677, %v6976
          %v7008 = vmul.f32 %v6678, %v6976
          %v7009 = vmul.f32 %v6679, %v6976
          %v7010 = vmul.f32 %v6680, %v6976
          %v7011 = vmul.f32 %v6681, %v6976
          %v7012 = vmul.f32 %v6682, %v6976
          %v7013 = vmul.f32 %v6683, %v6976
          %v7014 = vmul.f32 %v6684, %v6976
          %v7015 = vmul.f32 %v6685, %v6976
          %v7016 = vmul.f32 %v6686, %v6976
          %v7017 = vmul.f32 %v6687, %v6976
          %v7018 = vmul.f32 %v6688, %v6976
          %v7019 = vmul.f32 %v6689, %v6976
          %v7020 = vmul.f32 %v6690, %v6976
          %v7021 = vmul.f32 %v6691, %v6976
          %v7022 = vmul.f32 %v6692, %v6976
          %v7023 = vmul.f32 %v6693, %v6976
          %v7024 = vmul.f32 %v6694, %v6976
          %vm7073 = vcmask 1045504
          %v7074 = vrot.slane %v6977, 2
          %v7075 = vrot.slane %v6978, 2
          %v7076 = vsel %vm7073, %v7074, %v7075
          %v7077 = vrot.slane %v6979, 2
          %v7078 = vsel %vm7073, %v7075, %v7077
          %v7079 = vrot.slane %v6980, 2
          %v7080 = vrot.slane %v6981, 2
          %v7081 = vsel %vm7073, %v7079, %v7080
          %v7082 = vrot.slane %v6982, 2
          %v7083 = vsel %vm7073, %v7080, %v7082
          %v7084 = vrot.slane %v6983, 2
          %v7085 = vrot.slane %v6984, 2
          %v7086 = vsel %vm7073, %v7084, %v7085
          %v7087 = vrot.slane %v6985, 2
          %v7088 = vsel %vm7073, %v7085, %v7087
          %v7089 = vrot.slane %v6986, 2
          %v7090 = vrot.slane %v6987, 2
          %v7091 = vsel %vm7073, %v7089, %v7090
          %v7092 = vrot.slane %v6988, 2
          %v7093 = vsel %vm7073, %v7090, %v7092
          %v7094 = vrot.slane %v6989, 2
          %v7095 = vrot.slane %v6990, 2
          %v7096 = vsel %vm7073, %v7094, %v7095
          %v7097 = vrot.slane %v6991, 2
          %v7098 = vsel %vm7073, %v7095, %v7097
          %v7099 = vrot.slane %v6992, 2
          %v7100 = vrot.slane %v6993, 2
          %v7101 = vsel %vm7073, %v7099, %v7100
          %v7102 = vrot.slane %v6994, 2
          %v7103 = vsel %vm7073, %v7100, %v7102
          %v7104 = vrot.slane %v6995, 2
          %v7105 = vrot.slane %v6996, 2
          %v7106 = vsel %vm7073, %v7104, %v7105
          %v7107 = vrot.slane %v6997, 2
          %v7108 = vsel %vm7073, %v7105, %v7107
          %v7109 = vrot.slane %v6998, 2
          %v7110 = vrot.slane %v6999, 2
          %v7111 = vsel %vm7073, %v7109, %v7110
          %v7112 = vrot.slane %v7000, 2
          %v7113 = vsel %vm7073, %v7110, %v7112
          %v7114 = vrot.slane %v7001, 2
          %v7115 = vrot.slane %v7002, 2
          %v7116 = vsel %vm7073, %v7114, %v7115
          %v7117 = vrot.slane %v7003, 2
          %v7118 = vsel %vm7073, %v7115, %v7117
          %v7119 = vrot.slane %v7004, 2
          %v7120 = vrot.slane %v7005, 2
          %v7121 = vsel %vm7073, %v7119, %v7120
          %v7122 = vrot.slane %v7006, 2
          %v7123 = vsel %vm7073, %v7120, %v7122
          %v7124 = vrot.slane %v7007, 2
          %v7125 = vrot.slane %v7008, 2
          %v7126 = vsel %vm7073, %v7124, %v7125
          %v7127 = vrot.slane %v7009, 2
          %v7128 = vsel %vm7073, %v7125, %v7127
          %v7129 = vrot.slane %v7010, 2
          %v7130 = vrot.slane %v7011, 2
          %v7131 = vsel %vm7073, %v7129, %v7130
          %v7132 = vrot.slane %v7012, 2
          %v7133 = vsel %vm7073, %v7130, %v7132
          %v7134 = vrot.slane %v7013, 2
          %v7135 = vrot.slane %v7014, 2
          %v7136 = vsel %vm7073, %v7134, %v7135
          %v7137 = vrot.slane %v7015, 2
          %v7138 = vsel %vm7073, %v7135, %v7137
          %v7139 = vrot.slane %v7016, 2
          %v7140 = vrot.slane %v7017, 2
          %v7141 = vsel %vm7073, %v7139, %v7140
          %v7142 = vrot.slane %v7018, 2
          %v7143 = vsel %vm7073, %v7140, %v7142
          %v7144 = vrot.slane %v7019, 2
          %v7145 = vrot.slane %v7020, 2
          %v7146 = vsel %vm7073, %v7144, %v7145
          %v7147 = vrot.slane %v7021, 2
          %v7148 = vsel %vm7073, %v7145, %v7147
          %v7149 = vrot.slane %v7022, 2
          %v7150 = vrot.slane %v7023, 2
          %v7151 = vsel %vm7073, %v7149, %v7150
          %v7152 = vrot.slane %v7024, 2
          %v7153 = vsel %vm7073, %v7150, %v7152
          %v7186 = vadd.f32 %v6944, %v7076
          %v7187 = vadd.f32 %v6945, %v7078
          %v7188 = vadd.f32 %v6946, %v7081
          %v7189 = vadd.f32 %v6947, %v7083
          %v7190 = vadd.f32 %v6948, %v7086
          %v7191 = vadd.f32 %v6949, %v7088
          %v7192 = vadd.f32 %v6950, %v7091
          %v7193 = vadd.f32 %v6951, %v7093
          %v7194 = vadd.f32 %v6952, %v7096
          %v7195 = vadd.f32 %v6953, %v7098
          %v7196 = vadd.f32 %v6954, %v7101
          %v7197 = vadd.f32 %v6955, %v7103
          %v7198 = vadd.f32 %v6956, %v7106
          %v7199 = vadd.f32 %v6957, %v7108
          %v7200 = vadd.f32 %v6958, %v7111
          %v7201 = vadd.f32 %v6959, %v7113
          %v7202 = vadd.f32 %v6960, %v7116
          %v7203 = vadd.f32 %v6961, %v7118
          %v7204 = vadd.f32 %v6962, %v7121
          %v7205 = vadd.f32 %v6963, %v7123
          %v7206 = vadd.f32 %v6964, %v7126
          %v7207 = vadd.f32 %v6965, %v7128
          %v7208 = vadd.f32 %v6966, %v7131
          %v7209 = vadd.f32 %v6967, %v7133
          %v7210 = vadd.f32 %v6968, %v7136
          %v7211 = vadd.f32 %v6969, %v7138
          %v7212 = vadd.f32 %v6970, %v7141
          %v7213 = vadd.f32 %v6971, %v7143
          %v7214 = vadd.f32 %v6972, %v7146
          %v7215 = vadd.f32 %v6973, %v7148
          %v7216 = vadd.f32 %v6974, %v7151
          %v7217 = vadd.f32 %v6975, %v7153
          %v7218 = vperm.slane %v6612, 3
          %v7219 = vmul.f32 %v6650, %v7218
          %v7220 = vmul.f32 %v6651, %v7218
          %v7221 = vmul.f32 %v6653, %v7218
          %v7222 = vmul.f32 %v6654, %v7218
          %v7223 = vmul.f32 %v6656, %v7218
          %v7224 = vmul.f32 %v6657, %v7218
          %v7225 = vmul.f32 %v6659, %v7218
          %v7226 = vmul.f32 %v6660, %v7218
          %v7227 = vmul.f32 %v6662, %v7218
          %v7228 = vmul.f32 %v6663, %v7218
          %v7229 = vmul.f32 %v6665, %v7218
          %v7230 = vmul.f32 %v6666, %v7218
          %v7231 = vmul.f32 %v6668, %v7218
          %v7232 = vmul.f32 %v6669, %v7218
          %v7233 = vmul.f32 %v6671, %v7218
          %v7234 = vmul.f32 %v6672, %v7218
          %v7235 = vmul.f32 %v6674, %v7218
          %v7236 = vmul.f32 %v6675, %v7218
          %v7237 = vmul.f32 %v6677, %v7218
          %v7238 = vmul.f32 %v6678, %v7218
          %v7239 = vmul.f32 %v6680, %v7218
          %v7240 = vmul.f32 %v6681, %v7218
          %v7241 = vmul.f32 %v6683, %v7218
          %v7242 = vmul.f32 %v6684, %v7218
          %v7243 = vmul.f32 %v6686, %v7218
          %v7244 = vmul.f32 %v6687, %v7218
          %v7245 = vmul.f32 %v6689, %v7218
          %v7246 = vmul.f32 %v6690, %v7218
          %v7247 = vmul.f32 %v6692, %v7218
          %v7248 = vmul.f32 %v6693, %v7218
          %v7249 = vmul.f32 %v6695, %v7218
          %v7250 = vmul.f32 %v6696, %v7218
          %v7251 = vadd.f32 %v7186, %v7219
          %v7252 = vadd.f32 %v7187, %v7220
          %v7253 = vadd.f32 %v7188, %v7221
          %v7254 = vadd.f32 %v7189, %v7222
          %v7255 = vadd.f32 %v7190, %v7223
          %v7256 = vadd.f32 %v7191, %v7224
          %v7257 = vadd.f32 %v7192, %v7225
          %v7258 = vadd.f32 %v7193, %v7226
          %v7259 = vadd.f32 %v7194, %v7227
          %v7260 = vadd.f32 %v7195, %v7228
          %v7261 = vadd.f32 %v7196, %v7229
          %v7262 = vadd.f32 %v7197, %v7230
          %v7263 = vadd.f32 %v7198, %v7231
          %v7264 = vadd.f32 %v7199, %v7232
          %v7265 = vadd.f32 %v7200, %v7233
          %v7266 = vadd.f32 %v7201, %v7234
          %v7267 = vadd.f32 %v7202, %v7235
          %v7268 = vadd.f32 %v7203, %v7236
          %v7269 = vadd.f32 %v7204, %v7237
          %v7270 = vadd.f32 %v7205, %v7238
          %v7271 = vadd.f32 %v7206, %v7239
          %v7272 = vadd.f32 %v7207, %v7240
          %v7273 = vadd.f32 %v7208, %v7241
          %v7274 = vadd.f32 %v7209, %v7242
          %v7275 = vadd.f32 %v7210, %v7243
          %v7276 = vadd.f32 %v7211, %v7244
          %v7277 = vadd.f32 %v7212, %v7245
          %v7278 = vadd.f32 %v7213, %v7246
          %v7279 = vadd.f32 %v7214, %v7247
          %v7280 = vadd.f32 %v7215, %v7248
          %v7281 = vadd.f32 %v7216, %v7249
          %v7282 = vadd.f32 %v7217, %v7250
          %v7283 = vperm.slane %v6612, 4
          %v7284 = vmul.f32 %v6650, %v7283
          %v7285 = vmul.f32 %v6651, %v7283
          %v7286 = vmul.f32 %v6652, %v7283
          %v7287 = vmul.f32 %v6653, %v7283
          %v7288 = vmul.f32 %v6654, %v7283
          %v7289 = vmul.f32 %v6655, %v7283
          %v7290 = vmul.f32 %v6656, %v7283
          %v7291 = vmul.f32 %v6657, %v7283
          %v7292 = vmul.f32 %v6658, %v7283
          %v7293 = vmul.f32 %v6659, %v7283
          %v7294 = vmul.f32 %v6660, %v7283
          %v7295 = vmul.f32 %v6661, %v7283
          %v7296 = vmul.f32 %v6662, %v7283
          %v7297 = vmul.f32 %v6663, %v7283
          %v7298 = vmul.f32 %v6664, %v7283
          %v7299 = vmul.f32 %v6665, %v7283
          %v7300 = vmul.f32 %v6666, %v7283
          %v7301 = vmul.f32 %v6667, %v7283
          %v7302 = vmul.f32 %v6668, %v7283
          %v7303 = vmul.f32 %v6669, %v7283
          %v7304 = vmul.f32 %v6670, %v7283
          %v7305 = vmul.f32 %v6671, %v7283
          %v7306 = vmul.f32 %v6672, %v7283
          %v7307 = vmul.f32 %v6673, %v7283
          %v7308 = vmul.f32 %v6674, %v7283
          %v7309 = vmul.f32 %v6675, %v7283
          %v7310 = vmul.f32 %v6676, %v7283
          %v7311 = vmul.f32 %v6677, %v7283
          %v7312 = vmul.f32 %v6678, %v7283
          %v7313 = vmul.f32 %v6679, %v7283
          %v7314 = vmul.f32 %v6680, %v7283
          %v7315 = vmul.f32 %v6681, %v7283
          %v7316 = vmul.f32 %v6682, %v7283
          %v7317 = vmul.f32 %v6683, %v7283
          %v7318 = vmul.f32 %v6684, %v7283
          %v7319 = vmul.f32 %v6685, %v7283
          %v7320 = vmul.f32 %v6686, %v7283
          %v7321 = vmul.f32 %v6687, %v7283
          %v7322 = vmul.f32 %v6688, %v7283
          %v7323 = vmul.f32 %v6689, %v7283
          %v7324 = vmul.f32 %v6690, %v7283
          %v7325 = vmul.f32 %v6691, %v7283
          %v7326 = vmul.f32 %v6692, %v7283
          %v7327 = vmul.f32 %v6693, %v7283
          %v7328 = vmul.f32 %v6694, %v7283
          %v7329 = vmul.f32 %v6695, %v7283
          %v7330 = vmul.f32 %v6696, %v7283
          %v7331 = vmul.f32 %v6697, %v7283
          %v7380 = vrot.slane %v7284, 1
          %v7381 = vrot.slane %v7285, 1
          %v7382 = vsel %vm6831, %v7380, %v7381
          %v7383 = vrot.slane %v7286, 1
          %v7384 = vsel %vm6831, %v7381, %v7383
          %v7385 = vrot.slane %v7287, 1
          %v7386 = vrot.slane %v7288, 1
          %v7387 = vsel %vm6831, %v7385, %v7386
          %v7388 = vrot.slane %v7289, 1
          %v7389 = vsel %vm6831, %v7386, %v7388
          %v7390 = vrot.slane %v7290, 1
          %v7391 = vrot.slane %v7291, 1
          %v7392 = vsel %vm6831, %v7390, %v7391
          %v7393 = vrot.slane %v7292, 1
          %v7394 = vsel %vm6831, %v7391, %v7393
          %v7395 = vrot.slane %v7293, 1
          %v7396 = vrot.slane %v7294, 1
          %v7397 = vsel %vm6831, %v7395, %v7396
          %v7398 = vrot.slane %v7295, 1
          %v7399 = vsel %vm6831, %v7396, %v7398
          %v7400 = vrot.slane %v7296, 1
          %v7401 = vrot.slane %v7297, 1
          %v7402 = vsel %vm6831, %v7400, %v7401
          %v7403 = vrot.slane %v7298, 1
          %v7404 = vsel %vm6831, %v7401, %v7403
          %v7405 = vrot.slane %v7299, 1
          %v7406 = vrot.slane %v7300, 1
          %v7407 = vsel %vm6831, %v7405, %v7406
          %v7408 = vrot.slane %v7301, 1
          %v7409 = vsel %vm6831, %v7406, %v7408
          %v7410 = vrot.slane %v7302, 1
          %v7411 = vrot.slane %v7303, 1
          %v7412 = vsel %vm6831, %v7410, %v7411
          %v7413 = vrot.slane %v7304, 1
          %v7414 = vsel %vm6831, %v7411, %v7413
          %v7415 = vrot.slane %v7305, 1
          %v7416 = vrot.slane %v7306, 1
          %v7417 = vsel %vm6831, %v7415, %v7416
          %v7418 = vrot.slane %v7307, 1
          %v7419 = vsel %vm6831, %v7416, %v7418
          %v7420 = vrot.slane %v7308, 1
          %v7421 = vrot.slane %v7309, 1
          %v7422 = vsel %vm6831, %v7420, %v7421
          %v7423 = vrot.slane %v7310, 1
          %v7424 = vsel %vm6831, %v7421, %v7423
          %v7425 = vrot.slane %v7311, 1
          %v7426 = vrot.slane %v7312, 1
          %v7427 = vsel %vm6831, %v7425, %v7426
          %v7428 = vrot.slane %v7313, 1
          %v7429 = vsel %vm6831, %v7426, %v7428
          %v7430 = vrot.slane %v7314, 1
          %v7431 = vrot.slane %v7315, 1
          %v7432 = vsel %vm6831, %v7430, %v7431
          %v7433 = vrot.slane %v7316, 1
          %v7434 = vsel %vm6831, %v7431, %v7433
          %v7435 = vrot.slane %v7317, 1
          %v7436 = vrot.slane %v7318, 1
          %v7437 = vsel %vm6831, %v7435, %v7436
          %v7438 = vrot.slane %v7319, 1
          %v7439 = vsel %vm6831, %v7436, %v7438
          %v7440 = vrot.slane %v7320, 1
          %v7441 = vrot.slane %v7321, 1
          %v7442 = vsel %vm6831, %v7440, %v7441
          %v7443 = vrot.slane %v7322, 1
          %v7444 = vsel %vm6831, %v7441, %v7443
          %v7445 = vrot.slane %v7323, 1
          %v7446 = vrot.slane %v7324, 1
          %v7447 = vsel %vm6831, %v7445, %v7446
          %v7448 = vrot.slane %v7325, 1
          %v7449 = vsel %vm6831, %v7446, %v7448
          %v7450 = vrot.slane %v7326, 1
          %v7451 = vrot.slane %v7327, 1
          %v7452 = vsel %vm6831, %v7450, %v7451
          %v7453 = vrot.slane %v7328, 1
          %v7454 = vsel %vm6831, %v7451, %v7453
          %v7455 = vrot.slane %v7329, 1
          %v7456 = vrot.slane %v7330, 1
          %v7457 = vsel %vm6831, %v7455, %v7456
          %v7458 = vrot.slane %v7331, 1
          %v7459 = vsel %vm6831, %v7456, %v7458
          %v7492 = vadd.f32 %v7251, %v7382
          %v7493 = vadd.f32 %v7252, %v7384
          %v7494 = vadd.f32 %v7253, %v7387
          %v7495 = vadd.f32 %v7254, %v7389
          %v7496 = vadd.f32 %v7255, %v7392
          %v7497 = vadd.f32 %v7256, %v7394
          %v7498 = vadd.f32 %v7257, %v7397
          %v7499 = vadd.f32 %v7258, %v7399
          %v7500 = vadd.f32 %v7259, %v7402
          %v7501 = vadd.f32 %v7260, %v7404
          %v7502 = vadd.f32 %v7261, %v7407
          %v7503 = vadd.f32 %v7262, %v7409
          %v7504 = vadd.f32 %v7263, %v7412
          %v7505 = vadd.f32 %v7264, %v7414
          %v7506 = vadd.f32 %v7265, %v7417
          %v7507 = vadd.f32 %v7266, %v7419
          %v7508 = vadd.f32 %v7267, %v7422
          %v7509 = vadd.f32 %v7268, %v7424
          %v7510 = vadd.f32 %v7269, %v7427
          %v7511 = vadd.f32 %v7270, %v7429
          %v7512 = vadd.f32 %v7271, %v7432
          %v7513 = vadd.f32 %v7272, %v7434
          %v7514 = vadd.f32 %v7273, %v7437
          %v7515 = vadd.f32 %v7274, %v7439
          %v7516 = vadd.f32 %v7275, %v7442
          %v7517 = vadd.f32 %v7276, %v7444
          %v7518 = vadd.f32 %v7277, %v7447
          %v7519 = vadd.f32 %v7278, %v7449
          %v7520 = vadd.f32 %v7279, %v7452
          %v7521 = vadd.f32 %v7280, %v7454
          %v7522 = vadd.f32 %v7281, %v7457
          %v7523 = vadd.f32 %v7282, %v7459
          %v7524 = vperm.slane %v6612, 5
          %v7525 = vmul.f32 %v6650, %v7524
          %v7526 = vmul.f32 %v6651, %v7524
          %v7527 = vmul.f32 %v6652, %v7524
          %v7528 = vmul.f32 %v6653, %v7524
          %v7529 = vmul.f32 %v6654, %v7524
          %v7530 = vmul.f32 %v6655, %v7524
          %v7531 = vmul.f32 %v6656, %v7524
          %v7532 = vmul.f32 %v6657, %v7524
          %v7533 = vmul.f32 %v6658, %v7524
          %v7534 = vmul.f32 %v6659, %v7524
          %v7535 = vmul.f32 %v6660, %v7524
          %v7536 = vmul.f32 %v6661, %v7524
          %v7537 = vmul.f32 %v6662, %v7524
          %v7538 = vmul.f32 %v6663, %v7524
          %v7539 = vmul.f32 %v6664, %v7524
          %v7540 = vmul.f32 %v6665, %v7524
          %v7541 = vmul.f32 %v6666, %v7524
          %v7542 = vmul.f32 %v6667, %v7524
          %v7543 = vmul.f32 %v6668, %v7524
          %v7544 = vmul.f32 %v6669, %v7524
          %v7545 = vmul.f32 %v6670, %v7524
          %v7546 = vmul.f32 %v6671, %v7524
          %v7547 = vmul.f32 %v6672, %v7524
          %v7548 = vmul.f32 %v6673, %v7524
          %v7549 = vmul.f32 %v6674, %v7524
          %v7550 = vmul.f32 %v6675, %v7524
          %v7551 = vmul.f32 %v6676, %v7524
          %v7552 = vmul.f32 %v6677, %v7524
          %v7553 = vmul.f32 %v6678, %v7524
          %v7554 = vmul.f32 %v6679, %v7524
          %v7555 = vmul.f32 %v6680, %v7524
          %v7556 = vmul.f32 %v6681, %v7524
          %v7557 = vmul.f32 %v6682, %v7524
          %v7558 = vmul.f32 %v6683, %v7524
          %v7559 = vmul.f32 %v6684, %v7524
          %v7560 = vmul.f32 %v6685, %v7524
          %v7561 = vmul.f32 %v6686, %v7524
          %v7562 = vmul.f32 %v6687, %v7524
          %v7563 = vmul.f32 %v6688, %v7524
          %v7564 = vmul.f32 %v6689, %v7524
          %v7565 = vmul.f32 %v6690, %v7524
          %v7566 = vmul.f32 %v6691, %v7524
          %v7567 = vmul.f32 %v6692, %v7524
          %v7568 = vmul.f32 %v6693, %v7524
          %v7569 = vmul.f32 %v6694, %v7524
          %v7570 = vmul.f32 %v6695, %v7524
          %v7571 = vmul.f32 %v6696, %v7524
          %v7572 = vmul.f32 %v6697, %v7524
          %v7621 = vrot.slane %v7525, 2
          %v7622 = vrot.slane %v7526, 2
          %v7623 = vsel %vm7073, %v7621, %v7622
          %v7624 = vrot.slane %v7527, 2
          %v7625 = vsel %vm7073, %v7622, %v7624
          %v7626 = vrot.slane %v7528, 2
          %v7627 = vrot.slane %v7529, 2
          %v7628 = vsel %vm7073, %v7626, %v7627
          %v7629 = vrot.slane %v7530, 2
          %v7630 = vsel %vm7073, %v7627, %v7629
          %v7631 = vrot.slane %v7531, 2
          %v7632 = vrot.slane %v7532, 2
          %v7633 = vsel %vm7073, %v7631, %v7632
          %v7634 = vrot.slane %v7533, 2
          %v7635 = vsel %vm7073, %v7632, %v7634
          %v7636 = vrot.slane %v7534, 2
          %v7637 = vrot.slane %v7535, 2
          %v7638 = vsel %vm7073, %v7636, %v7637
          %v7639 = vrot.slane %v7536, 2
          %v7640 = vsel %vm7073, %v7637, %v7639
          %v7641 = vrot.slane %v7537, 2
          %v7642 = vrot.slane %v7538, 2
          %v7643 = vsel %vm7073, %v7641, %v7642
          %v7644 = vrot.slane %v7539, 2
          %v7645 = vsel %vm7073, %v7642, %v7644
          %v7646 = vrot.slane %v7540, 2
          %v7647 = vrot.slane %v7541, 2
          %v7648 = vsel %vm7073, %v7646, %v7647
          %v7649 = vrot.slane %v7542, 2
          %v7650 = vsel %vm7073, %v7647, %v7649
          %v7651 = vrot.slane %v7543, 2
          %v7652 = vrot.slane %v7544, 2
          %v7653 = vsel %vm7073, %v7651, %v7652
          %v7654 = vrot.slane %v7545, 2
          %v7655 = vsel %vm7073, %v7652, %v7654
          %v7656 = vrot.slane %v7546, 2
          %v7657 = vrot.slane %v7547, 2
          %v7658 = vsel %vm7073, %v7656, %v7657
          %v7659 = vrot.slane %v7548, 2
          %v7660 = vsel %vm7073, %v7657, %v7659
          %v7661 = vrot.slane %v7549, 2
          %v7662 = vrot.slane %v7550, 2
          %v7663 = vsel %vm7073, %v7661, %v7662
          %v7664 = vrot.slane %v7551, 2
          %v7665 = vsel %vm7073, %v7662, %v7664
          %v7666 = vrot.slane %v7552, 2
          %v7667 = vrot.slane %v7553, 2
          %v7668 = vsel %vm7073, %v7666, %v7667
          %v7669 = vrot.slane %v7554, 2
          %v7670 = vsel %vm7073, %v7667, %v7669
          %v7671 = vrot.slane %v7555, 2
          %v7672 = vrot.slane %v7556, 2
          %v7673 = vsel %vm7073, %v7671, %v7672
          %v7674 = vrot.slane %v7557, 2
          %v7675 = vsel %vm7073, %v7672, %v7674
          %v7676 = vrot.slane %v7558, 2
          %v7677 = vrot.slane %v7559, 2
          %v7678 = vsel %vm7073, %v7676, %v7677
          %v7679 = vrot.slane %v7560, 2
          %v7680 = vsel %vm7073, %v7677, %v7679
          %v7681 = vrot.slane %v7561, 2
          %v7682 = vrot.slane %v7562, 2
          %v7683 = vsel %vm7073, %v7681, %v7682
          %v7684 = vrot.slane %v7563, 2
          %v7685 = vsel %vm7073, %v7682, %v7684
          %v7686 = vrot.slane %v7564, 2
          %v7687 = vrot.slane %v7565, 2
          %v7688 = vsel %vm7073, %v7686, %v7687
          %v7689 = vrot.slane %v7566, 2
          %v7690 = vsel %vm7073, %v7687, %v7689
          %v7691 = vrot.slane %v7567, 2
          %v7692 = vrot.slane %v7568, 2
          %v7693 = vsel %vm7073, %v7691, %v7692
          %v7694 = vrot.slane %v7569, 2
          %v7695 = vsel %vm7073, %v7692, %v7694
          %v7696 = vrot.slane %v7570, 2
          %v7697 = vrot.slane %v7571, 2
          %v7698 = vsel %vm7073, %v7696, %v7697
          %v7699 = vrot.slane %v7572, 2
          %v7700 = vsel %vm7073, %v7697, %v7699
          %v7733 = vadd.f32 %v7492, %v7623
          %v7734 = vadd.f32 %v7493, %v7625
          %v7735 = vadd.f32 %v7494, %v7628
          %v7736 = vadd.f32 %v7495, %v7630
          %v7737 = vadd.f32 %v7496, %v7633
          %v7738 = vadd.f32 %v7497, %v7635
          %v7739 = vadd.f32 %v7498, %v7638
          %v7740 = vadd.f32 %v7499, %v7640
          %v7741 = vadd.f32 %v7500, %v7643
          %v7742 = vadd.f32 %v7501, %v7645
          %v7743 = vadd.f32 %v7502, %v7648
          %v7744 = vadd.f32 %v7503, %v7650
          %v7745 = vadd.f32 %v7504, %v7653
          %v7746 = vadd.f32 %v7505, %v7655
          %v7747 = vadd.f32 %v7506, %v7658
          %v7748 = vadd.f32 %v7507, %v7660
          %v7749 = vadd.f32 %v7508, %v7663
          %v7750 = vadd.f32 %v7509, %v7665
          %v7751 = vadd.f32 %v7510, %v7668
          %v7752 = vadd.f32 %v7511, %v7670
          %v7753 = vadd.f32 %v7512, %v7673
          %v7754 = vadd.f32 %v7513, %v7675
          %v7755 = vadd.f32 %v7514, %v7678
          %v7756 = vadd.f32 %v7515, %v7680
          %v7757 = vadd.f32 %v7516, %v7683
          %v7758 = vadd.f32 %v7517, %v7685
          %v7759 = vadd.f32 %v7518, %v7688
          %v7760 = vadd.f32 %v7519, %v7690
          %v7761 = vadd.f32 %v7520, %v7693
          %v7762 = vadd.f32 %v7521, %v7695
          %v7763 = vadd.f32 %v7522, %v7698
          %v7764 = vadd.f32 %v7523, %v7700
          %v7765 = vperm.slane %v6612, 6
          %v7766 = vmul.f32 %v6653, %v7765
          %v7767 = vmul.f32 %v6654, %v7765
          %v7768 = vmul.f32 %v6656, %v7765
          %v7769 = vmul.f32 %v6657, %v7765
          %v7770 = vmul.f32 %v6659, %v7765
          %v7771 = vmul.f32 %v6660, %v7765
          %v7772 = vmul.f32 %v6662, %v7765
          %v7773 = vmul.f32 %v6663, %v7765
          %v7774 = vmul.f32 %v6665, %v7765
          %v7775 = vmul.f32 %v6666, %v7765
          %v7776 = vmul.f32 %v6668, %v7765
          %v7777 = vmul.f32 %v6669, %v7765
          %v7778 = vmul.f32 %v6671, %v7765
          %v7779 = vmul.f32 %v6672, %v7765
          %v7780 = vmul.f32 %v6674, %v7765
          %v7781 = vmul.f32 %v6675, %v7765
          %v7782 = vmul.f32 %v6677, %v7765
          %v7783 = vmul.f32 %v6678, %v7765
          %v7784 = vmul.f32 %v6680, %v7765
          %v7785 = vmul.f32 %v6681, %v7765
          %v7786 = vmul.f32 %v6683, %v7765
          %v7787 = vmul.f32 %v6684, %v7765
          %v7788 = vmul.f32 %v6686, %v7765
          %v7789 = vmul.f32 %v6687, %v7765
          %v7790 = vmul.f32 %v6689, %v7765
          %v7791 = vmul.f32 %v6690, %v7765
          %v7792 = vmul.f32 %v6692, %v7765
          %v7793 = vmul.f32 %v6693, %v7765
          %v7794 = vmul.f32 %v6695, %v7765
          %v7795 = vmul.f32 %v6696, %v7765
          %v7796 = vmul.f32 %v6698, %v7765
          %v7797 = vmul.f32 %v6699, %v7765
          %v7798 = vadd.f32 %v7733, %v7766
          %v7799 = vadd.f32 %v7734, %v7767
          %v7800 = vadd.f32 %v7735, %v7768
          %v7801 = vadd.f32 %v7736, %v7769
          %v7802 = vadd.f32 %v7737, %v7770
          %v7803 = vadd.f32 %v7738, %v7771
          %v7804 = vadd.f32 %v7739, %v7772
          %v7805 = vadd.f32 %v7740, %v7773
          %v7806 = vadd.f32 %v7741, %v7774
          %v7807 = vadd.f32 %v7742, %v7775
          %v7808 = vadd.f32 %v7743, %v7776
          %v7809 = vadd.f32 %v7744, %v7777
          %v7810 = vadd.f32 %v7745, %v7778
          %v7811 = vadd.f32 %v7746, %v7779
          %v7812 = vadd.f32 %v7747, %v7780
          %v7813 = vadd.f32 %v7748, %v7781
          %v7814 = vadd.f32 %v7749, %v7782
          %v7815 = vadd.f32 %v7750, %v7783
          %v7816 = vadd.f32 %v7751, %v7784
          %v7817 = vadd.f32 %v7752, %v7785
          %v7818 = vadd.f32 %v7753, %v7786
          %v7819 = vadd.f32 %v7754, %v7787
          %v7820 = vadd.f32 %v7755, %v7788
          %v7821 = vadd.f32 %v7756, %v7789
          %v7822 = vadd.f32 %v7757, %v7790
          %v7823 = vadd.f32 %v7758, %v7791
          %v7824 = vadd.f32 %v7759, %v7792
          %v7825 = vadd.f32 %v7760, %v7793
          %v7826 = vadd.f32 %v7761, %v7794
          %v7827 = vadd.f32 %v7762, %v7795
          %v7828 = vadd.f32 %v7763, %v7796
          %v7829 = vadd.f32 %v7764, %v7797
          %v7830 = vperm.slane %v6612, 7
          %v7831 = vmul.f32 %v6653, %v7830
          %v7832 = vmul.f32 %v6654, %v7830
          %v7833 = vmul.f32 %v6655, %v7830
          %v7834 = vmul.f32 %v6656, %v7830
          %v7835 = vmul.f32 %v6657, %v7830
          %v7836 = vmul.f32 %v6658, %v7830
          %v7837 = vmul.f32 %v6659, %v7830
          %v7838 = vmul.f32 %v6660, %v7830
          %v7839 = vmul.f32 %v6661, %v7830
          %v7840 = vmul.f32 %v6662, %v7830
          %v7841 = vmul.f32 %v6663, %v7830
          %v7842 = vmul.f32 %v6664, %v7830
          %v7843 = vmul.f32 %v6665, %v7830
          %v7844 = vmul.f32 %v6666, %v7830
          %v7845 = vmul.f32 %v6667, %v7830
          %v7846 = vmul.f32 %v6668, %v7830
          %v7847 = vmul.f32 %v6669, %v7830
          %v7848 = vmul.f32 %v6670, %v7830
          %v7849 = vmul.f32 %v6671, %v7830
          %v7850 = vmul.f32 %v6672, %v7830
          %v7851 = vmul.f32 %v6673, %v7830
          %v7852 = vmul.f32 %v6674, %v7830
          %v7853 = vmul.f32 %v6675, %v7830
          %v7854 = vmul.f32 %v6676, %v7830
          %v7855 = vmul.f32 %v6677, %v7830
          %v7856 = vmul.f32 %v6678, %v7830
          %v7857 = vmul.f32 %v6679, %v7830
          %v7858 = vmul.f32 %v6680, %v7830
          %v7859 = vmul.f32 %v6681, %v7830
          %v7860 = vmul.f32 %v6682, %v7830
          %v7861 = vmul.f32 %v6683, %v7830
          %v7862 = vmul.f32 %v6684, %v7830
          %v7863 = vmul.f32 %v6685, %v7830
          %v7864 = vmul.f32 %v6686, %v7830
          %v7865 = vmul.f32 %v6687, %v7830
          %v7866 = vmul.f32 %v6688, %v7830
          %v7867 = vmul.f32 %v6689, %v7830
          %v7868 = vmul.f32 %v6690, %v7830
          %v7869 = vmul.f32 %v6691, %v7830
          %v7870 = vmul.f32 %v6692, %v7830
          %v7871 = vmul.f32 %v6693, %v7830
          %v7872 = vmul.f32 %v6694, %v7830
          %v7873 = vmul.f32 %v6695, %v7830
          %v7874 = vmul.f32 %v6696, %v7830
          %v7875 = vmul.f32 %v6697, %v7830
          %v7876 = vmul.f32 %v6698, %v7830
          %v7877 = vmul.f32 %v6699, %v7830
          %v7878 = vmul.f32 %v6700, %v7830
          %v7927 = vrot.slane %v7831, 1
          %v7928 = vrot.slane %v7832, 1
          %v7929 = vsel %vm6831, %v7927, %v7928
          %v7930 = vrot.slane %v7833, 1
          %v7931 = vsel %vm6831, %v7928, %v7930
          %v7932 = vrot.slane %v7834, 1
          %v7933 = vrot.slane %v7835, 1
          %v7934 = vsel %vm6831, %v7932, %v7933
          %v7935 = vrot.slane %v7836, 1
          %v7936 = vsel %vm6831, %v7933, %v7935
          %v7937 = vrot.slane %v7837, 1
          %v7938 = vrot.slane %v7838, 1
          %v7939 = vsel %vm6831, %v7937, %v7938
          %v7940 = vrot.slane %v7839, 1
          %v7941 = vsel %vm6831, %v7938, %v7940
          %v7942 = vrot.slane %v7840, 1
          %v7943 = vrot.slane %v7841, 1
          %v7944 = vsel %vm6831, %v7942, %v7943
          %v7945 = vrot.slane %v7842, 1
          %v7946 = vsel %vm6831, %v7943, %v7945
          %v7947 = vrot.slane %v7843, 1
          %v7948 = vrot.slane %v7844, 1
          %v7949 = vsel %vm6831, %v7947, %v7948
          %v7950 = vrot.slane %v7845, 1
          %v7951 = vsel %vm6831, %v7948, %v7950
          %v7952 = vrot.slane %v7846, 1
          %v7953 = vrot.slane %v7847, 1
          %v7954 = vsel %vm6831, %v7952, %v7953
          %v7955 = vrot.slane %v7848, 1
          %v7956 = vsel %vm6831, %v7953, %v7955
          %v7957 = vrot.slane %v7849, 1
          %v7958 = vrot.slane %v7850, 1
          %v7959 = vsel %vm6831, %v7957, %v7958
          %v7960 = vrot.slane %v7851, 1
          %v7961 = vsel %vm6831, %v7958, %v7960
          %v7962 = vrot.slane %v7852, 1
          %v7963 = vrot.slane %v7853, 1
          %v7964 = vsel %vm6831, %v7962, %v7963
          %v7965 = vrot.slane %v7854, 1
          %v7966 = vsel %vm6831, %v7963, %v7965
          %v7967 = vrot.slane %v7855, 1
          %v7968 = vrot.slane %v7856, 1
          %v7969 = vsel %vm6831, %v7967, %v7968
          %v7970 = vrot.slane %v7857, 1
          %v7971 = vsel %vm6831, %v7968, %v7970
          %v7972 = vrot.slane %v7858, 1
          %v7973 = vrot.slane %v7859, 1
          %v7974 = vsel %vm6831, %v7972, %v7973
          %v7975 = vrot.slane %v7860, 1
          %v7976 = vsel %vm6831, %v7973, %v7975
          %v7977 = vrot.slane %v7861, 1
          %v7978 = vrot.slane %v7862, 1
          %v7979 = vsel %vm6831, %v7977, %v7978
          %v7980 = vrot.slane %v7863, 1
          %v7981 = vsel %vm6831, %v7978, %v7980
          %v7982 = vrot.slane %v7864, 1
          %v7983 = vrot.slane %v7865, 1
          %v7984 = vsel %vm6831, %v7982, %v7983
          %v7985 = vrot.slane %v7866, 1
          %v7986 = vsel %vm6831, %v7983, %v7985
          %v7987 = vrot.slane %v7867, 1
          %v7988 = vrot.slane %v7868, 1
          %v7989 = vsel %vm6831, %v7987, %v7988
          %v7990 = vrot.slane %v7869, 1
          %v7991 = vsel %vm6831, %v7988, %v7990
          %v7992 = vrot.slane %v7870, 1
          %v7993 = vrot.slane %v7871, 1
          %v7994 = vsel %vm6831, %v7992, %v7993
          %v7995 = vrot.slane %v7872, 1
          %v7996 = vsel %vm6831, %v7993, %v7995
          %v7997 = vrot.slane %v7873, 1
          %v7998 = vrot.slane %v7874, 1
          %v7999 = vsel %vm6831, %v7997, %v7998
          %v8000 = vrot.slane %v7875, 1
          %v8001 = vsel %vm6831, %v7998, %v8000
          %v8002 = vrot.slane %v7876, 1
          %v8003 = vrot.slane %v7877, 1
          %v8004 = vsel %vm6831, %v8002, %v8003
          %v8005 = vrot.slane %v7878, 1
          %v8006 = vsel %vm6831, %v8003, %v8005
          %v8039 = vadd.f32 %v7798, %v7929
          %v8040 = vadd.f32 %v7799, %v7931
          %v8041 = vadd.f32 %v7800, %v7934
          %v8042 = vadd.f32 %v7801, %v7936
          %v8043 = vadd.f32 %v7802, %v7939
          %v8044 = vadd.f32 %v7803, %v7941
          %v8045 = vadd.f32 %v7804, %v7944
          %v8046 = vadd.f32 %v7805, %v7946
          %v8047 = vadd.f32 %v7806, %v7949
          %v8048 = vadd.f32 %v7807, %v7951
          %v8049 = vadd.f32 %v7808, %v7954
          %v8050 = vadd.f32 %v7809, %v7956
          %v8051 = vadd.f32 %v7810, %v7959
          %v8052 = vadd.f32 %v7811, %v7961
          %v8053 = vadd.f32 %v7812, %v7964
          %v8054 = vadd.f32 %v7813, %v7966
          %v8055 = vadd.f32 %v7814, %v7969
          %v8056 = vadd.f32 %v7815, %v7971
          %v8057 = vadd.f32 %v7816, %v7974
          %v8058 = vadd.f32 %v7817, %v7976
          %v8059 = vadd.f32 %v7818, %v7979
          %v8060 = vadd.f32 %v7819, %v7981
          %v8061 = vadd.f32 %v7820, %v7984
          %v8062 = vadd.f32 %v7821, %v7986
          %v8063 = vadd.f32 %v7822, %v7989
          %v8064 = vadd.f32 %v7823, %v7991
          %v8065 = vadd.f32 %v7824, %v7994
          %v8066 = vadd.f32 %v7825, %v7996
          %v8067 = vadd.f32 %v7826, %v7999
          %v8068 = vadd.f32 %v7827, %v8001
          %v8069 = vadd.f32 %v7828, %v8004
          %v8070 = vadd.f32 %v7829, %v8006
          %v8071 = vperm.slane %v6613, 0
          %v8072 = vmul.f32 %v6653, %v8071
          %v8073 = vmul.f32 %v6654, %v8071
          %v8074 = vmul.f32 %v6655, %v8071
          %v8075 = vmul.f32 %v6656, %v8071
          %v8076 = vmul.f32 %v6657, %v8071
          %v8077 = vmul.f32 %v6658, %v8071
          %v8078 = vmul.f32 %v6659, %v8071
          %v8079 = vmul.f32 %v6660, %v8071
          %v8080 = vmul.f32 %v6661, %v8071
          %v8081 = vmul.f32 %v6662, %v8071
          %v8082 = vmul.f32 %v6663, %v8071
          %v8083 = vmul.f32 %v6664, %v8071
          %v8084 = vmul.f32 %v6665, %v8071
          %v8085 = vmul.f32 %v6666, %v8071
          %v8086 = vmul.f32 %v6667, %v8071
          %v8087 = vmul.f32 %v6668, %v8071
          %v8088 = vmul.f32 %v6669, %v8071
          %v8089 = vmul.f32 %v6670, %v8071
          %v8090 = vmul.f32 %v6671, %v8071
          %v8091 = vmul.f32 %v6672, %v8071
          %v8092 = vmul.f32 %v6673, %v8071
          %v8093 = vmul.f32 %v6674, %v8071
          %v8094 = vmul.f32 %v6675, %v8071
          %v8095 = vmul.f32 %v6676, %v8071
          %v8096 = vmul.f32 %v6677, %v8071
          %v8097 = vmul.f32 %v6678, %v8071
          %v8098 = vmul.f32 %v6679, %v8071
          %v8099 = vmul.f32 %v6680, %v8071
          %v8100 = vmul.f32 %v6681, %v8071
          %v8101 = vmul.f32 %v6682, %v8071
          %v8102 = vmul.f32 %v6683, %v8071
          %v8103 = vmul.f32 %v6684, %v8071
          %v8104 = vmul.f32 %v6685, %v8071
          %v8105 = vmul.f32 %v6686, %v8071
          %v8106 = vmul.f32 %v6687, %v8071
          %v8107 = vmul.f32 %v6688, %v8071
          %v8108 = vmul.f32 %v6689, %v8071
          %v8109 = vmul.f32 %v6690, %v8071
          %v8110 = vmul.f32 %v6691, %v8071
          %v8111 = vmul.f32 %v6692, %v8071
          %v8112 = vmul.f32 %v6693, %v8071
          %v8113 = vmul.f32 %v6694, %v8071
          %v8114 = vmul.f32 %v6695, %v8071
          %v8115 = vmul.f32 %v6696, %v8071
          %v8116 = vmul.f32 %v6697, %v8071
          %v8117 = vmul.f32 %v6698, %v8071
          %v8118 = vmul.f32 %v6699, %v8071
          %v8119 = vmul.f32 %v6700, %v8071
          %v8168 = vrot.slane %v8072, 2
          %v8169 = vrot.slane %v8073, 2
          %v8170 = vsel %vm7073, %v8168, %v8169
          %v8171 = vrot.slane %v8074, 2
          %v8172 = vsel %vm7073, %v8169, %v8171
          %v8173 = vrot.slane %v8075, 2
          %v8174 = vrot.slane %v8076, 2
          %v8175 = vsel %vm7073, %v8173, %v8174
          %v8176 = vrot.slane %v8077, 2
          %v8177 = vsel %vm7073, %v8174, %v8176
          %v8178 = vrot.slane %v8078, 2
          %v8179 = vrot.slane %v8079, 2
          %v8180 = vsel %vm7073, %v8178, %v8179
          %v8181 = vrot.slane %v8080, 2
          %v8182 = vsel %vm7073, %v8179, %v8181
          %v8183 = vrot.slane %v8081, 2
          %v8184 = vrot.slane %v8082, 2
          %v8185 = vsel %vm7073, %v8183, %v8184
          %v8186 = vrot.slane %v8083, 2
          %v8187 = vsel %vm7073, %v8184, %v8186
          %v8188 = vrot.slane %v8084, 2
          %v8189 = vrot.slane %v8085, 2
          %v8190 = vsel %vm7073, %v8188, %v8189
          %v8191 = vrot.slane %v8086, 2
          %v8192 = vsel %vm7073, %v8189, %v8191
          %v8193 = vrot.slane %v8087, 2
          %v8194 = vrot.slane %v8088, 2
          %v8195 = vsel %vm7073, %v8193, %v8194
          %v8196 = vrot.slane %v8089, 2
          %v8197 = vsel %vm7073, %v8194, %v8196
          %v8198 = vrot.slane %v8090, 2
          %v8199 = vrot.slane %v8091, 2
          %v8200 = vsel %vm7073, %v8198, %v8199
          %v8201 = vrot.slane %v8092, 2
          %v8202 = vsel %vm7073, %v8199, %v8201
          %v8203 = vrot.slane %v8093, 2
          %v8204 = vrot.slane %v8094, 2
          %v8205 = vsel %vm7073, %v8203, %v8204
          %v8206 = vrot.slane %v8095, 2
          %v8207 = vsel %vm7073, %v8204, %v8206
          %v8208 = vrot.slane %v8096, 2
          %v8209 = vrot.slane %v8097, 2
          %v8210 = vsel %vm7073, %v8208, %v8209
          %v8211 = vrot.slane %v8098, 2
          %v8212 = vsel %vm7073, %v8209, %v8211
          %v8213 = vrot.slane %v8099, 2
          %v8214 = vrot.slane %v8100, 2
          %v8215 = vsel %vm7073, %v8213, %v8214
          %v8216 = vrot.slane %v8101, 2
          %v8217 = vsel %vm7073, %v8214, %v8216
          %v8218 = vrot.slane %v8102, 2
          %v8219 = vrot.slane %v8103, 2
          %v8220 = vsel %vm7073, %v8218, %v8219
          %v8221 = vrot.slane %v8104, 2
          %v8222 = vsel %vm7073, %v8219, %v8221
          %v8223 = vrot.slane %v8105, 2
          %v8224 = vrot.slane %v8106, 2
          %v8225 = vsel %vm7073, %v8223, %v8224
          %v8226 = vrot.slane %v8107, 2
          %v8227 = vsel %vm7073, %v8224, %v8226
          %v8228 = vrot.slane %v8108, 2
          %v8229 = vrot.slane %v8109, 2
          %v8230 = vsel %vm7073, %v8228, %v8229
          %v8231 = vrot.slane %v8110, 2
          %v8232 = vsel %vm7073, %v8229, %v8231
          %v8233 = vrot.slane %v8111, 2
          %v8234 = vrot.slane %v8112, 2
          %v8235 = vsel %vm7073, %v8233, %v8234
          %v8236 = vrot.slane %v8113, 2
          %v8237 = vsel %vm7073, %v8234, %v8236
          %v8238 = vrot.slane %v8114, 2
          %v8239 = vrot.slane %v8115, 2
          %v8240 = vsel %vm7073, %v8238, %v8239
          %v8241 = vrot.slane %v8116, 2
          %v8242 = vsel %vm7073, %v8239, %v8241
          %v8243 = vrot.slane %v8117, 2
          %v8244 = vrot.slane %v8118, 2
          %v8245 = vsel %vm7073, %v8243, %v8244
          %v8246 = vrot.slane %v8119, 2
          %v8247 = vsel %vm7073, %v8244, %v8246
          %v8280 = vadd.f32 %v8039, %v8170
          %v8281 = vadd.f32 %v8040, %v8172
          %v8282 = vadd.f32 %v8041, %v8175
          %v8283 = vadd.f32 %v8042, %v8177
          %v8284 = vadd.f32 %v8043, %v8180
          %v8285 = vadd.f32 %v8044, %v8182
          %v8286 = vadd.f32 %v8045, %v8185
          %v8287 = vadd.f32 %v8046, %v8187
          %v8288 = vadd.f32 %v8047, %v8190
          %v8289 = vadd.f32 %v8048, %v8192
          %v8290 = vadd.f32 %v8049, %v8195
          %v8291 = vadd.f32 %v8050, %v8197
          %v8292 = vadd.f32 %v8051, %v8200
          %v8293 = vadd.f32 %v8052, %v8202
          %v8294 = vadd.f32 %v8053, %v8205
          %v8295 = vadd.f32 %v8054, %v8207
          %v8296 = vadd.f32 %v8055, %v8210
          %v8297 = vadd.f32 %v8056, %v8212
          %v8298 = vadd.f32 %v8057, %v8215
          %v8299 = vadd.f32 %v8058, %v8217
          %v8300 = vadd.f32 %v8059, %v8220
          %v8301 = vadd.f32 %v8060, %v8222
          %v8302 = vadd.f32 %v8061, %v8225
          %v8303 = vadd.f32 %v8062, %v8227
          %v8304 = vadd.f32 %v8063, %v8230
          %v8305 = vadd.f32 %v8064, %v8232
          %v8306 = vadd.f32 %v8065, %v8235
          %v8307 = vadd.f32 %v8066, %v8237
          %v8308 = vadd.f32 %v8067, %v8240
          %v8309 = vadd.f32 %v8068, %v8242
          %v8310 = vadd.f32 %v8069, %v8245
          %v8311 = vadd.f32 %v8070, %v8247
          %v8312 = vld [vmem:[#allocation4] sm:$0x1]
          %v8313 = vld [vmem:[#allocation4 + $0x1] sm:$0x1]
          %v8314 = vmul.f32 %v8312, 0.001953125
          %v8315 = vmul.f32 %v8313, 0.001953125
          %v8316 = vmul.f32 %v8314, %v8314
          %v8317 = vsub.f32 %v8315, %v8316
          %v8318 = vld [vmem:[%s6] sm:$0x1]
          %v8319 = vadd.f32 %v8317, 1e-05
          %v8320 = vrsqrt.pop %v8319
          %v8321 = vmul.f32 %v8320, %v8319
          %v8322 = vmul.f32 %v8321, %v8320
          %v8323 = vmul.f32 0.5, %v8322
          %v8324 = vsub.f32 1.5, %v8323
          %v8325 = vmul.f32 %v8320, %v8324
          %vm8326 = vweird.f32 %v8319
          %vm8327 = vweird.f32 %v8320
          %vm8328 = vmor %vm8326, %vm8327
          %v8329 = vsel %vm8328, %v8320, %v8325
          %v8330 = vmul.f32 %v8318, %v8329
          %v8331 = vld [vmem:[%s7] sm:$0x1]
          %v8332 = vmul.f32 %v8314, %v8330
          %v8333 = vsub.f32 %v8331, %v8332
          %v8335 = vperm.slane %v8330, 0
          %v8337 = vmul.f32 %v8280, %v8335
          %v8338 = vmul.f32 %v8281, %v8335
          %v8339 = vmul.f32 %v8282, %v8335
          %v8340 = vmul.f32 %v8283, %v8335
          %v8341 = vmul.f32 %v8284, %v8335
          %v8342 = vmul.f32 %v8285, %v8335
          %v8343 = vmul.f32 %v8286, %v8335
          %v8344 = vmul.f32 %v8287, %v8335
          %v8345 = vmul.f32 %v8288, %v8335
          %v8346 = vmul.f32 %v8289, %v8335
          %v8347 = vmul.f32 %v8290, %v8335
          %v8348 = vmul.f32 %v8291, %v8335
          %v8349 = vmul.f32 %v8292, %v8335
          %v8350 = vmul.f32 %v8293, %v8335
          %v8351 = vmul.f32 %v8294, %v8335
          %v8352 = vmul.f32 %v8295, %v8335
          %v8353 = vmul.f32 %v8296, %v8335
          %v8354 = vmul.f32 %v8297, %v8335
          %v8355 = vmul.f32 %v8298, %v8335
          %v8356 = vmul.f32 %v8299, %v8335
          %v8357 = vmul.f32 %v8300, %v8335
          %v8358 = vmul.f32 %v8301, %v8335
          %v8359 = vmul.f32 %v8302, %v8335
          %v8360 = vmul.f32 %v8303, %v8335
          %v8361 = vmul.f32 %v8304, %v8335
          %v8362 = vmul.f32 %v8305, %v8335
          %v8363 = vmul.f32 %v8306, %v8335
          %v8364 = vmul.f32 %v8307, %v8335
          %v8365 = vmul.f32 %v8308, %v8335
          %v8366 = vmul.f32 %v8309, %v8335
          %v8367 = vmul.f32 %v8310, %v8335
          %v8368 = vmul.f32 %v8311, %v8335
          %v8370 = vperm.slane %v8333, 0
          %v8372 = vadd.f32 %v8337, %v8370
          %v8373 = vadd.f32 %v8338, %v8370
          %v8374 = vadd.f32 %v8339, %v8370
          %v8375 = vadd.f32 %v8340, %v8370
          %v8376 = vadd.f32 %v8341, %v8370
          %v8377 = vadd.f32 %v8342, %v8370
          %v8378 = vadd.f32 %v8343, %v8370
          %v8379 = vadd.f32 %v8344, %v8370
          %v8380 = vadd.f32 %v8345, %v8370
          %v8381 = vadd.f32 %v8346, %v8370
          %v8382 = vadd.f32 %v8347, %v8370
          %v8383 = vadd.f32 %v8348, %v8370
          %v8384 = vadd.f32 %v8349, %v8370
          %v8385 = vadd.f32 %v8350, %v8370
          %v8386 = vadd.f32 %v8351, %v8370
          %v8387 = vadd.f32 %v8352, %v8370
          %v8388 = vadd.f32 %v8353, %v8370
          %v8389 = vadd.f32 %v8354, %v8370
          %v8390 = vadd.f32 %v8355, %v8370
          %v8391 = vadd.f32 %v8356, %v8370
          %v8392 = vadd.f32 %v8357, %v8370
          %v8393 = vadd.f32 %v8358, %v8370
          %v8394 = vadd.f32 %v8359, %v8370
          %v8395 = vadd.f32 %v8360, %v8370
          %v8396 = vadd.f32 %v8361, %v8370
          %v8397 = vadd.f32 %v8362, %v8370
          %v8398 = vadd.f32 %v8363, %v8370
          %v8399 = vadd.f32 %v8364, %v8370
          %v8400 = vadd.f32 %v8365, %v8370
          %v8401 = vadd.f32 %v8366, %v8370
          %v8402 = vadd.f32 %v8367, %v8370
          %v8403 = vadd.f32 %v8368, %v8370
          %v8404 = vmax.f32 %v8372, 0.0
          %v8405 = vmax.f32 %v8373, 0.0
          %v8406 = vmax.f32 %v8374, 0.0
          %v8407 = vmax.f32 %v8375, 0.0
          %v8408 = vmax.f32 %v8376, 0.0
          %v8409 = vmax.f32 %v8377, 0.0
          %v8410 = vmax.f32 %v8378, 0.0
          %v8411 = vmax.f32 %v8379, 0.0
          %v8412 = vmax.f32 %v8380, 0.0
          %v8413 = vmax.f32 %v8381, 0.0
          %v8414 = vmax.f32 %v8382, 0.0
          %v8415 = vmax.f32 %v8383, 0.0
          %v8416 = vmax.f32 %v8384, 0.0
          %v8417 = vmax.f32 %v8385, 0.0
          %v8418 = vmax.f32 %v8386, 0.0
          %v8419 = vmax.f32 %v8387, 0.0
          %v8420 = vmax.f32 %v8388, 0.0
          %v8421 = vmax.f32 %v8389, 0.0
          %v8422 = vmax.f32 %v8390, 0.0
          %v8423 = vmax.f32 %v8391, 0.0
          %v8424 = vmax.f32 %v8392, 0.0
          %v8425 = vmax.f32 %v8393, 0.0
          %v8426 = vmax.f32 %v8394, 0.0
          %v8427 = vmax.f32 %v8395, 0.0
          %v8428 = vmax.f32 %v8396, 0.0
          %v8429 = vmax.f32 %v8397, 0.0
          %v8430 = vmax.f32 %v8398, 0.0
          %v8431 = vmax.f32 %v8399, 0.0
          %v8432 = vmax.f32 %v8400, 0.0
          %v8433 = vmax.f32 %v8401, 0.0
          %v8434 = vmax.f32 %v8402, 0.0
          %v8435 = vmax.f32 %v8403, 0.0
          %v8436 = vmin.f32 %v8404, 6.0
          %v8437 = vmin.f32 %v8405, 6.0
          %v8438 = vmin.f32 %v8406, 6.0
          %v8439 = vmin.f32 %v8407, 6.0
          %v8440 = vmin.f32 %v8408, 6.0
          %v8441 = vmin.f32 %v8409, 6.0
          %v8442 = vmin.f32 %v8410, 6.0
          %v8443 = vmin.f32 %v8411, 6.0
          %v8444 = vmin.f32 %v8412, 6.0
          %v8445 = vmin.f32 %v8413, 6.0
          %v8446 = vmin.f32 %v8414, 6.0
          %v8447 = vmin.f32 %v8415, 6.0
          %v8448 = vmin.f32 %v8416, 6.0
          %v8449 = vmin.f32 %v8417, 6.0
          %v8450 = vmin.f32 %v8418, 6.0
          %v8451 = vmin.f32 %v8419, 6.0
          %v8452 = vmin.f32 %v8420, 6.0
          %v8453 = vmin.f32 %v8421, 6.0
          %v8454 = vmin.f32 %v8422, 6.0
          %v8455 = vmin.f32 %v8423, 6.0
          %v8456 = vmin.f32 %v8424, 6.0
          %v8457 = vmin.f32 %v8425, 6.0
          %v8458 = vmin.f32 %v8426, 6.0
          %v8459 = vmin.f32 %v8427, 6.0
          %v8460 = vmin.f32 %v8428, 6.0
          %v8461 = vmin.f32 %v8429, 6.0
          %v8462 = vmin.f32 %v8430, 6.0
          %v8463 = vmin.f32 %v8431, 6.0
          %v8464 = vmin.f32 %v8432, 6.0
          %v8465 = vmin.f32 %v8433, 6.0
          %v8466 = vmin.f32 %v8434, 6.0
          %v8467 = vmin.f32 %v8435, 6.0
          %s8468 = scalar_lea.vmem [#allocation6], %s40
          %v8469 = vld [vmem:[%s8468] sm:$0x1]
          %v8471 = vperm.slane %v8469, 0
          %v8473 = vmul.f32 %v8436, %v8471
          %v8474 = vmul.f32 %v8437, %v8471
          %v8475 = vmul.f32 %v8438, %v8471
          %v8476 = vmul.f32 %v8439, %v8471
          %v8477 = vmul.f32 %v8440, %v8471
          %v8478 = vmul.f32 %v8441, %v8471
          %v8479 = vmul.f32 %v8442, %v8471
          %v8480 = vmul.f32 %v8443, %v8471
          %v8481 = vmul.f32 %v8444, %v8471
          %v8482 = vmul.f32 %v8445, %v8471
          %v8483 = vmul.f32 %v8446, %v8471
          %v8484 = vmul.f32 %v8447, %v8471
          %v8485 = vmul.f32 %v8448, %v8471
          %v8486 = vmul.f32 %v8449, %v8471
          %v8487 = vmul.f32 %v8450, %v8471
          %v8488 = vmul.f32 %v8451, %v8471
          %v8489 = vmul.f32 %v8452, %v8471
          %v8490 = vmul.f32 %v8453, %v8471
          %v8491 = vmul.f32 %v8454, %v8471
          %v8492 = vmul.f32 %v8455, %v8471
          %v8493 = vmul.f32 %v8456, %v8471
          %v8494 = vmul.f32 %v8457, %v8471
          %v8495 = vmul.f32 %v8458, %v8471
          %v8496 = vmul.f32 %v8459, %v8471
          %v8497 = vmul.f32 %v8460, %v8471
          %v8498 = vmul.f32 %v8461, %v8471
          %v8499 = vmul.f32 %v8462, %v8471
          %v8500 = vmul.f32 %v8463, %v8471
          %v8501 = vmul.f32 %v8464, %v8471
          %v8502 = vmul.f32 %v8465, %v8471
          %v8503 = vmul.f32 %v8466, %v8471
          %v8504 = vmul.f32 %v8467, %v8471
          %v8505 = vpack.c.bf16 %v8474, %v8473
          %v8506 = vpack.c.bf16 %v8476, %v8475
          %v8507 = vpack.c.bf16 %v8478, %v8477
          %v8508 = vpack.c.bf16 %v8480, %v8479
          %v8509 = vpack.c.bf16 %v8482, %v8481
          %v8510 = vpack.c.bf16 %v8484, %v8483
          %v8511 = vpack.c.bf16 %v8486, %v8485
          %v8512 = vpack.c.bf16 %v8488, %v8487
          %v8513 = vpack.c.bf16 %v8490, %v8489
          %v8514 = vpack.c.bf16 %v8492, %v8491
          %v8515 = vpack.c.bf16 %v8494, %v8493
          %v8516 = vpack.c.bf16 %v8496, %v8495
          %v8517 = vpack.c.bf16 %v8498, %v8497
          %v8518 = vpack.c.bf16 %v8500, %v8499
          %v8519 = vpack.c.bf16 %v8502, %v8501
          %v8520 = vpack.c.bf16 %v8504, %v8503
          %v8521 = vld [vmem:[#allocation18] sm:$0xf]
          %v8522 = vld [vmem:[#allocation18 + $0x4] sm:$0xf]
          %v8523 = vld [vmem:[#allocation18 + $0x8] sm:$0xf]
          %v8524 = vld [vmem:[#allocation18 + $0xc] sm:$0xf]
          %v8525 = vld [vmem:[#allocation18 + $0x10] sm:$0xf]
          %v8526 = vld [vmem:[#allocation18 + $0x14] sm:$0xf]
          %v8527 = vld [vmem:[#allocation18 + $0x18] sm:$0xf]
          %v8528 = vld [vmem:[#allocation18 + $0x1c] sm:$0xf]
          %v8529 = vld [vmem:[#allocation18 + $0x20] sm:$0xf]
          %v8530 = vld [vmem:[#allocation18 + $0x24] sm:$0xf]
          %v8531 = vld [vmem:[#allocation18 + $0x28] sm:$0xf]
          %v8532 = vld [vmem:[#allocation18 + $0x2c] sm:$0xf]
          %v8533 = vld [vmem:[#allocation18 + $0x30] sm:$0xf]
          %v8534 = vld [vmem:[#allocation18 + $0x34] sm:$0xf]
          %v8535 = vld [vmem:[#allocation18 + $0x38] sm:$0xf]
          %v8536 = vld [vmem:[#allocation18 + $0x3c] sm:$0xf]
          %v8553 = vunpack.c.l.b16 %v8521
          %v8554 = vunpack.c.l.b16 %v8522
          %v8555 = vunpack.c.l.b16 %v8523
          %v8556 = vunpack.c.l.b16 %v8524
          %v8557 = vunpack.c.l.b16 %v8525
          %v8558 = vunpack.c.l.b16 %v8526
          %v8559 = vunpack.c.l.b16 %v8527
          %v8560 = vunpack.c.l.b16 %v8528
          %v8561 = vunpack.c.l.b16 %v8529
          %v8562 = vunpack.c.l.b16 %v8530
          %v8563 = vunpack.c.l.b16 %v8531
          %v8564 = vunpack.c.l.b16 %v8532
          %v8565 = vunpack.c.l.b16 %v8533
          %v8566 = vunpack.c.l.b16 %v8534
          %v8567 = vunpack.c.l.b16 %v8535
          %v8568 = vunpack.c.l.b16 %v8536
          %v8569 = vpack.c.b16 %v8554, %v8553
          %v8570 = vpack.c.b16 %v8556, %v8555
          %v8571 = vpack.c.b16 %v8558, %v8557
          %v8572 = vpack.c.b16 %v8560, %v8559
          %v8573 = vpack.c.b16 %v8562, %v8561
          %v8574 = vpack.c.b16 %v8564, %v8563
          %v8575 = vpack.c.b16 %v8566, %v8565
          %v8576 = vpack.c.b16 %v8568, %v8567
          %8585 = vmatpush.bf16.msra.mxu0 %v8576
          %8586 = vmatpush.bf16.msra.mxu0 %v8575
          %8587 = vmatpush.bf16.msra.mxu0 %v8574
          %8588 = vmatpush.bf16.msra.mxu0 %v8573
          %8589 = vmatpush.bf16.msra.mxu0 %v8572
          %8590 = vmatpush.bf16.msra.mxu0 %v8571
          %8591 = vmatpush.bf16.msra.mxu0 %v8570
          %8592 = vmatpush.bf16.msra.mxu0 %v8569
          %8593 = vmatmul.bf16.gmra.mxu0 %v8505
          %v8594 = vpop.f32.mrf.mxu0
          %v8595 = vadd.f32 0.0, %v8594
          %v8596 = vpop.f32.mrf.mxu0
          %v8597 = vadd.f32 0.0, %v8596
          %8598 = vmatmul.bf16.gmra.mxu0 %v8506
          %v8599 = vpop.f32.mrf.mxu0
          %v8600 = vadd.f32 0.0, %v8599
          %v8601 = vpop.f32.mrf.mxu0
          %v8602 = vadd.f32 0.0, %v8601
          %8603 = vmatmul.bf16.gmra.mxu0 %v8507
          %v8604 = vpop.f32.mrf.mxu0
          %v8605 = vadd.f32 0.0, %v8604
          %v8606 = vpop.f32.mrf.mxu0
          %v8607 = vadd.f32 0.0, %v8606
          %8608 = vmatmul.bf16.gmra.mxu0 %v8508
          %v8609 = vpop.f32.mrf.mxu0
          %v8610 = vadd.f32 0.0, %v8609
          %v8611 = vpop.f32.mrf.mxu0
          %v8612 = vadd.f32 0.0, %v8611
          %8613 = vmatmul.bf16.gmra.mxu0 %v8509
          %v8614 = vpop.f32.mrf.mxu0
          %v8615 = vadd.f32 0.0, %v8614
          %v8616 = vpop.f32.mrf.mxu0
          %v8617 = vadd.f32 0.0, %v8616
          %8618 = vmatmul.bf16.gmra.mxu0 %v8510
          %v8619 = vpop.f32.mrf.mxu0
          %v8620 = vadd.f32 0.0, %v8619
          %v8621 = vpop.f32.mrf.mxu0
          %v8622 = vadd.f32 0.0, %v8621
          %8623 = vmatmul.bf16.gmra.mxu0 %v8511
          %v8624 = vpop.f32.mrf.mxu0
          %v8625 = vadd.f32 0.0, %v8624
          %v8626 = vpop.f32.mrf.mxu0
          %v8627 = vadd.f32 0.0, %v8626
          %8628 = vmatmul.bf16.gmra.mxu0 %v8512
          %v8629 = vpop.f32.mrf.mxu0
          %v8630 = vadd.f32 0.0, %v8629
          %v8631 = vpop.f32.mrf.mxu0
          %v8632 = vadd.f32 0.0, %v8631
          %8633 = vmatmul.bf16.gmra.mxu0 %v8513
          %v8634 = vpop.f32.mrf.mxu0
          %v8635 = vadd.f32 0.0, %v8634
          %v8636 = vpop.f32.mrf.mxu0
          %v8637 = vadd.f32 0.0, %v8636
          %8638 = vmatmul.bf16.gmra.mxu0 %v8514
          %v8639 = vpop.f32.mrf.mxu0
          %v8640 = vadd.f32 0.0, %v8639
          %v8641 = vpop.f32.mrf.mxu0
          %v8642 = vadd.f32 0.0, %v8641
          %8643 = vmatmul.bf16.gmra.mxu0 %v8515
          %v8644 = vpop.f32.mrf.mxu0
          %v8645 = vadd.f32 0.0, %v8644
          %v8646 = vpop.f32.mrf.mxu0
          %v8647 = vadd.f32 0.0, %v8646
          %8648 = vmatmul.bf16.gmra.mxu0 %v8516
          %v8649 = vpop.f32.mrf.mxu0
          %v8650 = vadd.f32 0.0, %v8649
          %v8651 = vpop.f32.mrf.mxu0
          %v8652 = vadd.f32 0.0, %v8651
          %8653 = vmatmul.bf16.gmra.mxu0 %v8517
          %v8654 = vpop.f32.mrf.mxu0
          %v8655 = vadd.f32 0.0, %v8654
          %v8656 = vpop.f32.mrf.mxu0
          %v8657 = vadd.f32 0.0, %v8656
          %8658 = vmatmul.bf16.gmra.mxu0 %v8518
          %v8659 = vpop.f32.mrf.mxu0
          %v8660 = vadd.f32 0.0, %v8659
          %v8661 = vpop.f32.mrf.mxu0
          %v8662 = vadd.f32 0.0, %v8661
          %8663 = vmatmul.bf16.gmra.mxu0 %v8519
          %v8664 = vpop.f32.mrf.mxu0
          %v8665 = vadd.f32 0.0, %v8664
          %v8666 = vpop.f32.mrf.mxu0
          %v8667 = vadd.f32 0.0, %v8666
          %8668 = vmatmul.bf16.gmra.mxu0 %v8520
          %v8669 = vpop.f32.mrf.mxu0
          %v8670 = vadd.f32 0.0, %v8669
          %v8671 = vpop.f32.mrf.mxu0
          %v8672 = vadd.f32 0.0, %v8671
          %8673 = vdwg.mxu0
          %v8674 = vld [vmem:[#allocation5] sm:$0x1]
          %v8675 = vld [vmem:[#allocation5 + $0x1] sm:$0x1]
          %v8676 = vmul.f32 %v8674, 0.001953125
          %v8677 = vmul.f32 %v8675, 0.001953125
          %v8678 = vmul.f32 %v8676, %v8676
          %v8679 = vsub.f32 %v8677, %v8678
          %v8680 = vld [vmem:[%s11] sm:$0x1]
          %v8681 = vadd.f32 %v8679, 1e-05
          %v8682 = vrsqrt.pop %v8681
          %v8683 = vmul.f32 %v8682, %v8681
          %v8684 = vmul.f32 %v8683, %v8682
          %v8685 = vmul.f32 0.5, %v8684
          %v8686 = vsub.f32 1.5, %v8685
          %v8687 = vmul.f32 %v8682, %v8686
          %vm8688 = vweird.f32 %v8681
          %vm8689 = vweird.f32 %v8682
          %vm8690 = vmor %vm8688, %vm8689
          %v8691 = vsel %vm8690, %v8682, %v8687
          %v8692 = vmul.f32 %v8680, %v8691
          %v8693 = vld [vmem:[%s12] sm:$0x1]
          %v8694 = vmul.f32 %v8676, %v8692
          %v8695 = vsub.f32 %v8693, %v8694
          %v8697 = vperm.slane %v8692, 0
          %v8699 = vmul.f32 %v8595, %v8697
          %v8700 = vmul.f32 %v8597, %v8697
          %v8701 = vmul.f32 %v8600, %v8697
          %v8702 = vmul.f32 %v8602, %v8697
          %v8703 = vmul.f32 %v8605, %v8697
          %v8704 = vmul.f32 %v8607, %v8697
          %v8705 = vmul.f32 %v8610, %v8697
          %v8706 = vmul.f32 %v8612, %v8697
          %v8707 = vmul.f32 %v8615, %v8697
          %v8708 = vmul.f32 %v8617, %v8697
          %v8709 = vmul.f32 %v8620, %v8697
          %v8710 = vmul.f32 %v8622, %v8697
          %v8711 = vmul.f32 %v8625, %v8697
          %v8712 = vmul.f32 %v8627, %v8697
          %v8713 = vmul.f32 %v8630, %v8697
          %v8714 = vmul.f32 %v8632, %v8697
          %v8715 = vmul.f32 %v8635, %v8697
          %v8716 = vmul.f32 %v8637, %v8697
          %v8717 = vmul.f32 %v8640, %v8697
          %v8718 = vmul.f32 %v8642, %v8697
          %v8719 = vmul.f32 %v8645, %v8697
          %v8720 = vmul.f32 %v8647, %v8697
          %v8721 = vmul.f32 %v8650, %v8697
          %v8722 = vmul.f32 %v8652, %v8697
          %v8723 = vmul.f32 %v8655, %v8697
          %v8724 = vmul.f32 %v8657, %v8697
          %v8725 = vmul.f32 %v8660, %v8697
          %v8726 = vmul.f32 %v8662, %v8697
          %v8727 = vmul.f32 %v8665, %v8697
          %v8728 = vmul.f32 %v8667, %v8697
          %v8729 = vmul.f32 %v8670, %v8697
          %v8730 = vmul.f32 %v8672, %v8697
          %v8732 = vperm.slane %v8695, 0
          %v8734 = vadd.f32 %v8699, %v8732
          %v8735 = vadd.f32 %v8700, %v8732
          %v8736 = vadd.f32 %v8701, %v8732
          %v8737 = vadd.f32 %v8702, %v8732
          %v8738 = vadd.f32 %v8703, %v8732
          %v8739 = vadd.f32 %v8704, %v8732
          %v8740 = vadd.f32 %v8705, %v8732
          %v8741 = vadd.f32 %v8706, %v8732
          %v8742 = vadd.f32 %v8707, %v8732
          %v8743 = vadd.f32 %v8708, %v8732
          %v8744 = vadd.f32 %v8709, %v8732
          %v8745 = vadd.f32 %v8710, %v8732
          %v8746 = vadd.f32 %v8711, %v8732
          %v8747 = vadd.f32 %v8712, %v8732
          %v8748 = vadd.f32 %v8713, %v8732
          %v8749 = vadd.f32 %v8714, %v8732
          %v8750 = vadd.f32 %v8715, %v8732
          %v8751 = vadd.f32 %v8716, %v8732
          %v8752 = vadd.f32 %v8717, %v8732
          %v8753 = vadd.f32 %v8718, %v8732
          %v8754 = vadd.f32 %v8719, %v8732
          %v8755 = vadd.f32 %v8720, %v8732
          %v8756 = vadd.f32 %v8721, %v8732
          %v8757 = vadd.f32 %v8722, %v8732
          %v8758 = vadd.f32 %v8723, %v8732
          %v8759 = vadd.f32 %v8724, %v8732
          %v8760 = vadd.f32 %v8725, %v8732
          %v8761 = vadd.f32 %v8726, %v8732
          %v8762 = vadd.f32 %v8727, %v8732
          %v8763 = vadd.f32 %v8728, %v8732
          %v8764 = vadd.f32 %v8729, %v8732
          %v8765 = vadd.f32 %v8730, %v8732
          %v8766 = vld [vmem:[%s533] sm:$0xff]
          %v8767 = vld [vmem:[%s533 + $0x8] sm:$0xff]
          %v8768 = vld [vmem:[%s533 + $0x10] sm:$0xff]
          %v8769 = vld [vmem:[%s533 + $0x18] sm:$0xff]
          %v8770 = vld [vmem:[%s533 + $0x20] sm:$0xff]
          %v8771 = vld [vmem:[%s533 + $0x28] sm:$0xff]
          %v8772 = vld [vmem:[%s533 + $0x30] sm:$0xff]
          %v8773 = vld [vmem:[%s533 + $0x38] sm:$0xff]
          %v8774 = vld [vmem:[%s533 + $0x40] sm:$0xff]
          %v8775 = vld [vmem:[%s533 + $0x48] sm:$0xff]
          %v8776 = vld [vmem:[%s533 + $0x50] sm:$0xff]
          %v8777 = vld [vmem:[%s533 + $0x58] sm:$0xff]
          %v8778 = vld [vmem:[%s533 + $0x60] sm:$0xff]
          %v8779 = vld [vmem:[%s533 + $0x68] sm:$0xff]
          %v8780 = vld [vmem:[%s533 + $0x70] sm:$0xff]
          %v8781 = vld [vmem:[%s533 + $0x78] sm:$0xff]
          %v8782 = vld [vmem:[%s533 + $0x80] sm:$0xff]
          %v8783 = vld [vmem:[%s533 + $0x88] sm:$0xff]
          %v8784 = vld [vmem:[%s533 + $0x90] sm:$0xff]
          %v8785 = vld [vmem:[%s533 + $0x98] sm:$0xff]
          %v8786 = vld [vmem:[%s533 + $0xa0] sm:$0xff]
          %v8787 = vld [vmem:[%s533 + $0xa8] sm:$0xff]
          %v8788 = vld [vmem:[%s533 + $0xb0] sm:$0xff]
          %v8789 = vld [vmem:[%s533 + $0xb8] sm:$0xff]
          %v8790 = vld [vmem:[%s533 + $0xc0] sm:$0xff]
          %v8791 = vld [vmem:[%s533 + $0xc8] sm:$0xff]
          %v8792 = vld [vmem:[%s533 + $0xd0] sm:$0xff]
          %v8793 = vld [vmem:[%s533 + $0xd8] sm:$0xff]
          %v8794 = vld [vmem:[%s533 + $0xe0] sm:$0xff]
          %v8795 = vld [vmem:[%s533 + $0xe8] sm:$0xff]
          %v8796 = vld [vmem:[%s533 + $0xf0] sm:$0xff]
          %v8797 = vld [vmem:[%s533 + $0xf8] sm:$0xff]
          %v8798 = vadd.f32 %v8734, %v8766
          %v8799 = vadd.f32 %v8735, %v8767
          %v8800 = vadd.f32 %v8736, %v8768
          %v8801 = vadd.f32 %v8737, %v8769
          %v8802 = vadd.f32 %v8738, %v8770
          %v8803 = vadd.f32 %v8739, %v8771
          %v8804 = vadd.f32 %v8740, %v8772
          %v8805 = vadd.f32 %v8741, %v8773
          %v8806 = vadd.f32 %v8742, %v8774
          %v8807 = vadd.f32 %v8743, %v8775
          %v8808 = vadd.f32 %v8744, %v8776
          %v8809 = vadd.f32 %v8745, %v8777
          %v8810 = vadd.f32 %v8746, %v8778
          %v8811 = vadd.f32 %v8747, %v8779
          %v8812 = vadd.f32 %v8748, %v8780
          %v8813 = vadd.f32 %v8749, %v8781
          %v8814 = vadd.f32 %v8750, %v8782
          %v8815 = vadd.f32 %v8751, %v8783
          %v8816 = vadd.f32 %v8752, %v8784
          %v8817 = vadd.f32 %v8753, %v8785
          %v8818 = vadd.f32 %v8754, %v8786
          %v8819 = vadd.f32 %v8755, %v8787
          %v8820 = vadd.f32 %v8756, %v8788
          %v8821 = vadd.f32 %v8757, %v8789
          %v8822 = vadd.f32 %v8758, %v8790
          %v8823 = vadd.f32 %v8759, %v8791
          %v8824 = vadd.f32 %v8760, %v8792
          %v8825 = vadd.f32 %v8761, %v8793
          %v8826 = vadd.f32 %v8762, %v8794
          %v8827 = vadd.f32 %v8763, %v8795
          %v8828 = vadd.f32 %v8764, %v8796
          %v8829 = vadd.f32 %v8765, %v8797
          %8830 = vst [vmem:[%s606] sm:$0xff] %v8798
          %8831 = vst [vmem:[%s606 + $0x8] sm:$0xff] %v8799
          %8832 = vst [vmem:[%s606 + $0x10] sm:$0xff] %v8800
          %8833 = vst [vmem:[%s606 + $0x18] sm:$0xff] %v8801
          %8834 = vst [vmem:[%s606 + $0x20] sm:$0xff] %v8802
          %8835 = vst [vmem:[%s606 + $0x28] sm:$0xff] %v8803
          %8836 = vst [vmem:[%s606 + $0x30] sm:$0xff] %v8804
          %8837 = vst [vmem:[%s606 + $0x38] sm:$0xff] %v8805
          %8838 = vst [vmem:[%s606 + $0x40] sm:$0xff] %v8806
          %8839 = vst [vmem:[%s606 + $0x48] sm:$0xff] %v8807
          %8840 = vst [vmem:[%s606 + $0x50] sm:$0xff] %v8808
          %8841 = vst [vmem:[%s606 + $0x58] sm:$0xff] %v8809
          %8842 = vst [vmem:[%s606 + $0x60] sm:$0xff] %v8810
          %8843 = vst [vmem:[%s606 + $0x68] sm:$0xff] %v8811
          %8844 = vst [vmem:[%s606 + $0x70] sm:$0xff] %v8812
          %8845 = vst [vmem:[%s606 + $0x78] sm:$0xff] %v8813
          %8846 = vst [vmem:[%s606 + $0x80] sm:$0xff] %v8814
          %8847 = vst [vmem:[%s606 + $0x88] sm:$0xff] %v8815
          %8848 = vst [vmem:[%s606 + $0x90] sm:$0xff] %v8816
          %8849 = vst [vmem:[%s606 + $0x98] sm:$0xff] %v8817
          %8850 = vst [vmem:[%s606 + $0xa0] sm:$0xff] %v8818
          %8851 = vst [vmem:[%s606 + $0xa8] sm:$0xff] %v8819
          %8852 = vst [vmem:[%s606 + $0xb0] sm:$0xff] %v8820
          %8853 = vst [vmem:[%s606 + $0xb8] sm:$0xff] %v8821
          %8854 = vst [vmem:[%s606 + $0xc0] sm:$0xff] %v8822
          %8855 = vst [vmem:[%s606 + $0xc8] sm:$0xff] %v8823
          %8856 = vst [vmem:[%s606 + $0xd0] sm:$0xff] %v8824
          %8857 = vst [vmem:[%s606 + $0xd8] sm:$0xff] %v8825
          %8858 = vst [vmem:[%s606 + $0xe0] sm:$0xff] %v8826
          %8859 = vst [vmem:[%s606 + $0xe8] sm:$0xff] %v8827
          %8860 = vst [vmem:[%s606 + $0xf0] sm:$0xff] %v8828
          %8861 = vst [vmem:[%s606 + $0xf8] sm:$0xff] %v8829
        $region120: #{tpu_custom_call.1} parent=71 // pred_fallthru
          _
        %s8862 = sand.u32 %s346, 1
        %s8863 = scalar_lea.sflag [#allocation9], %s8862
        %s8864 = sand.u32 %s346, 1
        %s8865 = smul.addr %s8864, 256
        %s8866 = scalar_lea.vmem [#allocation19], %s8865
        // Predicated region
        $region121: #{tpu_custom_call.1} parent=71 // pred_check
          %p8867 = pneg %p356
        $region122: #{tpu_custom_call.1} parent=71 // pred_check_branch
          %8869 = sbr.rel (%p8867) target = $region124
        $region123: #{tpu_custom_call.1} parent=71 // pred_region
          %p8870 = scmp.eq.s32.totalorder %s39, 3
          %s8871 = scalar_select %p8870, %s40, 0
          %8873 = vsyncadd %s8863, 0
          %s8874 = smul.addr %s8871, 32
          %s8875 = smul.addr %s8874, 8
          %s8876 = scalar_lea.hbm %s13, %s8875
          %s8877 = sshll.u32 %s8866, 4
          %s8878 = int_to_ptr.vmem [resolvable:$true] %s8877
          %s8879 = sshll.u32 %s8876, 4
          %s8880 = int_to_ptr.hbm [resolvable:$true] %s8879
          %8885 = dma.vmem_to_hbm [thread:$0]  %s8878, 4096, %s8880, %s8863, 128, 128, 8
        $region124: #{tpu_custom_call.1} parent=71 // pred_fallthru
          _
      $region72: #{tpu_custom_call.1} parent=5 // pred_fallthru
        _
      %p8886 = scmp.le.s32.totalorder 2, %s30
      // Predicated region
      $region125: #{tpu_custom_call.1} parent=5 // pred_check
        %p8887 = pneg %p8886
      $region126: #{tpu_custom_call.1} parent=5 // pred_check_branch
        %8889 = sbr.rel (%p8887) target = $region128
      $region127: #{tpu_custom_call.1} parent=5 // pred_region
        %s8890 = ssub.s32 %s30, 2
        // Predicated region
        $region129: #{tpu_custom_call.1} parent=127 // pred_check
          %p8891 = pneg %p362
        $region130: #{tpu_custom_call.1} parent=127 // pred_check_branch
          %8893 = sbr.rel (%p8891) target = $region132
        $region131: #{tpu_custom_call.1} parent=127 // pred_region
          %s8894 = sand.u32 %s347, 1
          %s8895 = scalar_lea.sflag [#allocation9], %s8894
          %s8896 = sand.u32 %s347, 1
          %s8897 = smul.addr %s8896, 256
          %s8898 = scalar_lea.vmem [#allocation19], %s8897
          %8900 = dma.done %s8895, 4096
        $region132: #{tpu_custom_call.1} parent=127 // pred_fallthru
          _
      $region128: #{tpu_custom_call.1} parent=5 // pred_fallthru
        _
    $region6: #{tpu_custom_call.1} parent=1 // loop_footer
      %s34 = sadd.s32 1, %s30
    $region7: #{tpu_custom_call.1} parent=1 // loop_footer_branch
      %29 = sbr.rel target = $region3
    $region8: #{tpu_custom_call.1} parent=1 // loop_exit
      _
    %8901 = vsyncpa [#allocation8], 1
    %s8902 = scalar_lea.sflag [#allocation8], 1
    %8903 = vsyncpa %s8902, 1
    %8904 = vsyncpa [#allocation11], 1
    %s8905 = scalar_lea.sflag [#allocation11], 1
    %8906 = vsyncpa %s8905, 1
    %8907 = vsyncpa [#allocation14], 1
    %8908 = vsyncpa [#allocation17], 1
    %8909 = vsyncpa [#allocation9], 1
    %s8910 = scalar_lea.sflag [#allocation9], 1
    %8911 = vsyncpa %s8910, 1

</llo_original>
